<compile_context>
chip_gen: v7x
topology: tpu7x:2x2x1
jax: 0.10.0
libtpu: 0.0.40
codegen_flags: <defaults>
</compile_context>

<pallas_src>
from functools import partial

import jax
import jax.numpy as jnp
from jax.experimental import pallas as pl
from jax.experimental.pallas import tpu as pltpu

LEAKY_VALUE = 0.1  # cfg.NETWORK.LEAKY_VALUE (synthetic config constant)


def resnet_block_kernel(xpad_ref, w1_ref, b1_ref, w2_ref, b2_ref,
                        o_ref, mid_ref, *, K, d1, d2, H, W, p1, p2):
    """Fused per-image block: y = conv2(leaky_relu(conv1(x))) + x.

    xpad_ref: (1, H+2p1, W+2p1, C)   padded input tile (input dtype)
    o_ref   : (1, H, W, C)           output tile
    mid_ref : (1, H+2p2, W+2p2, C)   scratch for the conv1 intermediate (input dtype)
    """
    C = o_ref.shape[-1]
    cdtype = mid_ref.dtype                      # MXU operand dtype == input dtype
    Wp2 = W + 2 * p2

    # ---------------- conv1 (dilated, 'same'): bias folded into accumulator init ----
    acc1 = jnp.broadcast_to(
        b1_ref[...].astype(jnp.float32).reshape(1, 1, 1, C), (1, H, W, C))
    for kh in range(K):
        for kw in range(K):
            patch = xpad_ref[:, kh * d1:kh * d1 + H, kw * d1:kw * d1 + W, :]
            acc1 = acc1 + jax.lax.dot_general(
                patch, w1_ref[kh, kw],
                dimension_numbers=(((3,), (0,)), ((), ())),
                preferred_element_type=jnp.float32)

    # LeakyReLU, then store the intermediate once (interior only).
    y1 = jnp.where(acc1 >= 0, acc1, LEAKY_VALUE * acc1).astype(cdtype)

    # Zero only the p2-wide border of the scratch (not the whole buffer), write interior.
    if p2 > 0:
        mid_ref[:, :p2, :, :] = jnp.zeros((1, p2, Wp2, C), cdtype)
        mid_ref[:, p2 + H:, :, :] = jnp.zeros((1, p2, Wp2, C), cdtype)
        mid_ref[:, p2:p2 + H, :p2, :] = jnp.zeros((1, H, p2, C), cdtype)
        mid_ref[:, p2:p2 + H, p2 + W:, :] = jnp.zeros((1, H, p2, C), cdtype)
    mid_ref[:, p2:p2 + H, p2:p2 + W, :] = y1

    # ---------------- conv2 (dilated): bias AND residual folded into accumulator init --
    resid = xpad_ref[:, p1:p1 + H, p1:p1 + W, :].astype(jnp.float32)
    acc2 = resid + b2_ref[...].astype(jnp.float32).reshape(1, 1, 1, C)
    for kh in range(K):
        for kw in range(K):
            patch = mid_ref[:, kh * d2:kh * d2 + H, kw * d2:kw * d2 + W, :]
            acc2 = acc2 + jax.lax.dot_general(
                patch, w2_ref[kh, kw],
                dimension_numbers=(((3,), (0,)), ((), ())),
                preferred_element_type=jnp.float32)

    o_ref[...] = acc2.astype(o_ref.dtype)


def resnet_block(x_nchw, w1_oihw, b1, w2_oihw, b2, *, kernel_size, dilation):
    """Wrapper: NCHW/OIHW (PyTorch convention) in, NCHW out."""
    N, C, H, W = x_nchw.shape
    K = kernel_size
    d1, d2 = dilation
    p1 = (K - 1) // 2 * d1      # 'same' padding for conv1 (odd K)
    p2 = (K - 1) // 2 * d2      # 'same' padding for conv2

    # Glue: layout conversion + single pad for conv1.  Residual comes from xpad interior.
    x = jnp.transpose(x_nchw, (0, 2, 3, 1))                       # NHWC
    xpad = jnp.pad(x, ((0, 0), (p1, p1), (p1, p1), (0, 0)))
    w1 = jnp.transpose(w1_oihw, (2, 3, 1, 0)).astype(x.dtype)     # (K,K,Cin,Cout)
    w2 = jnp.transpose(w2_oihw, (2, 3, 1, 0)).astype(x.dtype)
    b1r = b1.reshape(1, C)
    b2r = b2.reshape(1, C)

    Hp1, Wp1 = H + 2 * p1, W + 2 * p1
    Hp2, Wp2 = H + 2 * p2, W + 2 * p2

    kernel = partial(resnet_block_kernel, K=K, d1=d1, d2=d2, H=H, W=W, p1=p1, p2=p2)

    # VMEM budget (double-buffered tiles + scratch + weights) and cost estimate.
    itemsize = jnp.dtype(x.dtype).itemsize
    tile_in = Hp1 * Wp1 * C * itemsize
    tile_out = H * W * C * itemsize
    scratch_bytes = Hp2 * Wp2 * C * itemsize
    w_bytes = 2 * K * K * C * C * itemsize
    need = 2 * (tile_in + tile_out) + scratch_bytes + 2 * w_bytes + (4 << 20)
    vmem_limit = int(min(100 << 20, max(32 << 20, need)))

    flops = int(2 * 2 * N * H * W * C * C * K * K + 6 * N * H * W * C)
    bytes_accessed = int(N * (tile_in + tile_out) + w_bytes + 2 * C * itemsize)

    grid_spec = pltpu.PrefetchScalarGridSpec(
        num_scalar_prefetch=0,
        grid=(N,),
        in_specs=[
            pl.BlockSpec((1, Hp1, Wp1, C), lambda n: (n, 0, 0, 0)),   # padded activation
            pl.BlockSpec((K, K, C, C), lambda n: (0, 0, 0, 0)),       # w1 (resident)
            pl.BlockSpec((1, C), lambda n: (0, 0)),                   # b1
            pl.BlockSpec((K, K, C, C), lambda n: (0, 0, 0, 0)),       # w2 (resident)
            pl.BlockSpec((1, C), lambda n: (0, 0)),                   # b2
        ],
        out_specs=pl.BlockSpec((1, H, W, C), lambda n: (n, 0, 0, 0)),
        scratch_shapes=[pltpu.VMEM((1, Hp2, Wp2, C), x.dtype)],
    )

    out_nhwc = pl.pallas_call(
        kernel,
        out_shape=jax.ShapeDtypeStruct((N, H, W, C), x_nchw.dtype),
        grid_spec=grid_spec,
        compiler_params=pltpu.CompilerParams(
            dimension_semantics=("parallel",),        # shard batch over TCs (v7x)
            vmem_limit_bytes=vmem_limit),
        cost_estimate=pl.CostEstimate(flops=flops, transcendentals=0,
                                      bytes_accessed=bytes_accessed),
    )(xpad, w1, b1r, w2, b2r)

    return jnp.transpose(out_nhwc, (0, 3, 1, 2))                  # back to NCHW


def resnet_block_reference(x, w1, b1, w2, b2, *, kernel_size, dilation):
    """Pure-JAX reference (matches the PyTorch ResnetBlock.forward)."""
    K = kernel_size
    d1, d2 = dilation
    p1 = (K - 1) // 2 * d1
    p2 = (K - 1) // 2 * d2
    dn = ('NCHW', 'OIHW', 'NCHW')
    y = jax.lax.conv_general_dilated(
        x, w1, (1, 1), [(p1, p1), (p1, p1)], rhs_dilation=(d1, d1),
        dimension_numbers=dn) + b1.reshape(1, -1, 1, 1)
    y = jnp.where(y >= 0, y, LEAKY_VALUE * y)
    y = jax.lax.conv_general_dilated(
        y, w2, (1, 1), [(p2, p2), (p2, p2)], rhs_dilation=(d2, d2),
        dimension_numbers=dn) + b2.reshape(1, -1, 1, 1)
    return y + x


if __name__ == "__main__":
    # Module hyperparameters (small, consistent with ResnetBlock.__init__).
    N, C, H, W = 2, 4, 16, 16
    kernel_size = 3
    dilation = (1, 2)

    key = jax.random.PRNGKey(0)
    kx, kw1, kb1, kw2, kb2 = jax.random.split(key, 5)

    x = jax.random.normal(kx, (N, C, H, W), dtype=jnp.float32)
    # Deterministic synthetic parameters (PyTorch OIHW weight layout, bias=True).
    w1 = 0.1 * jax.random.normal(kw1, (C, C, kernel_size, kernel_size), dtype=jnp.float32)
    b1 = 0.1 * jax.random.normal(kb1, (C,), dtype=jnp.float32)
    w2 = 0.1 * jax.random.normal(kw2, (C, C, kernel_size, kernel_size), dtype=jnp.float32)
    b2 = 0.1 * jax.random.normal(kb2, (C,), dtype=jnp.float32)

    out = resnet_block(x, w1, b1, w2, b2, kernel_size=kernel_size, dilation=dilation)
    out = jax.block_until_ready(out)

    ref = resnet_block_reference(x, w1, b1, w2, b2,
                                 kernel_size=kernel_size, dilation=dilation)
    ref = jax.block_until_ready(ref)

    assert out.shape == (N, C, H, W)
    assert jnp.allclose(out, ref, atol=1e-4, rtol=1e-4), "mismatch vs reference"
    print("KERNEL_OK")
</pallas_src>

<mosaic_0001>
module attributes {stable_mosaic.version = 11 : i64} {
  func.func @resnet_block_kernel(%arg0: i32, %arg1: memref<1x18x18x4xf32, #tpu.memory_space<vmem>>, %arg2: memref<3x3x4x4xf32, #tpu.memory_space<vmem>>, %arg3: memref<1x4xf32, #tpu.memory_space<vmem>>, %arg4: memref<3x3x4x4xf32, #tpu.memory_space<vmem>>, %arg5: memref<1x4xf32, #tpu.memory_space<vmem>>, %arg6: memref<1x16x16x4xf32, #tpu.memory_space<vmem>>, %arg7: memref<1x20x20x4xf32, #tpu.memory_space<vmem>>) attributes {dimension_semantics = [#tpu.dimension_semantics<parallel>], iteration_bounds = array<i64: 2>, scalar_prefetch = 0 : i64, scratch_operands = 1 : i64, tpu.core_type = #tpu.core_type<tc>, window_params = [{transform_indices = @transform_0, window_bounds = array<i64: 1, 18, 18, 4>}, {pipeline_mode = #tpu.pipeline_mode<synchronous>, transform_indices = @transform_1, window_bounds = array<i64: 3, 3, 4, 4>}, {pipeline_mode = #tpu.pipeline_mode<synchronous>, transform_indices = @transform_2, window_bounds = array<i64: 1, 4>}, {pipeline_mode = #tpu.pipeline_mode<synchronous>, transform_indices = @transform_3, window_bounds = array<i64: 3, 3, 4, 4>}, {pipeline_mode = #tpu.pipeline_mode<synchronous>, transform_indices = @transform_4, window_bounds = array<i64: 1, 4>}, {transform_indices = @transform_5, window_bounds = array<i64: 1, 16, 16, 4>}]} {
    %c0 = arith.constant 0 : index
    %c0_0 = arith.constant 0 : index
    %0 = vector.load %arg3[%c0, %c0_0] : memref<1x4xf32, #tpu.memory_space<vmem>>, vector<1x4xf32>
    %1 = vector.shape_cast %0 : vector<1x4xf32> to vector<1x1x1x4xf32>
    %2 = vector.shape_cast %1 : vector<1x1x1x4xf32> to vector<1x1x1x4xf32>
    %3 = vector.broadcast %2 : vector<1x1x1x4xf32> to vector<1x16x16x4xf32>
    %c0_1 = arith.constant 0 : index
    %c0_2 = arith.constant 0 : index
    %c0_3 = arith.constant 0 : index
    %c0_4 = arith.constant 0 : index
    %4 = vector.load %arg1[%c0_1, %c0_2, %c0_3, %c0_4] : memref<1x18x18x4xf32, #tpu.memory_space<vmem>>, vector<1x16x16x4xf32>
    %c0_5 = arith.constant 0 : index
    %c0_6 = arith.constant 0 : index
    %c0_7 = arith.constant 0 : index
    %c0_8 = arith.constant 0 : index
    %5 = vector.load %arg2[%c0_5, %c0_6, %c0_7, %c0_8] : memref<3x3x4x4xf32, #tpu.memory_space<vmem>>, vector<1x1x4x4xf32>
    %6 = vector.shape_cast %5 : vector<1x1x4x4xf32> to vector<4x4xf32>
    %cst = arith.constant dense<0.000000e+00> : vector<1x16x16x4xf32>
    %7 = tpu.matmul %4, %6, %cst {dimension_numbers = #tpu.dot_dimension_numbers<[3], [0], [0, 1, 2], [1], [0, 0, 0, 1, 0, 2, 1, 1], [], []>} : vector<1x16x16x4xf32>, vector<4x4xf32>, vector<1x16x16x4xf32> -> vector<1x16x16x4xf32>
    %8 = arith.addf %3, %7 : vector<1x16x16x4xf32>
    %c0_9 = arith.constant 0 : index
    %c0_10 = arith.constant 0 : index
    %c1 = arith.constant 1 : index
    %c0_11 = arith.constant 0 : index
    %9 = vector.load %arg1[%c0_9, %c0_10, %c1, %c0_11] : memref<1x18x18x4xf32, #tpu.memory_space<vmem>>, vector<1x16x16x4xf32>
    %c0_12 = arith.constant 0 : index
    %c1_13 = arith.constant 1 : index
    %c0_14 = arith.constant 0 : index
    %c0_15 = arith.constant 0 : index
    %10 = vector.load %arg2[%c0_12, %c1_13, %c0_14, %c0_15] : memref<3x3x4x4xf32, #tpu.memory_space<vmem>>, vector<1x1x4x4xf32>
    %11 = vector.shape_cast %10 : vector<1x1x4x4xf32> to vector<4x4xf32>
    %cst_16 = arith.constant dense<0.000000e+00> : vector<1x16x16x4xf32>
    %12 = tpu.matmul %9, %11, %cst_16 {dimension_numbers = #tpu.dot_dimension_numbers<[3], [0], [0, 1, 2], [1], [0, 0, 0, 1, 0, 2, 1, 1], [], []>} : vector<1x16x16x4xf32>, vector<4x4xf32>, vector<1x16x16x4xf32> -> vector<1x16x16x4xf32>
    %13 = arith.addf %8, %12 : vector<1x16x16x4xf32>
    %c0_17 = arith.constant 0 : index
    %c0_18 = arith.constant 0 : index
    %c2 = arith.constant 2 : index
    %c0_19 = arith.constant 0 : index
    %14 = vector.load %arg1[%c0_17, %c0_18, %c2, %c0_19] : memref<1x18x18x4xf32, #tpu.memory_space<vmem>>, vector<1x16x16x4xf32>
    %c0_20 = arith.constant 0 : index
    %c2_21 = arith.constant 2 : index
    %c0_22 = arith.constant 0 : index
    %c0_23 = arith.constant 0 : index
    %15 = vector.load %arg2[%c0_20, %c2_21, %c0_22, %c0_23] : memref<3x3x4x4xf32, #tpu.memory_space<vmem>>, vector<1x1x4x4xf32>
    %16 = vector.shape_cast %15 : vector<1x1x4x4xf32> to vector<4x4xf32>
    %cst_24 = arith.constant dense<0.000000e+00> : vector<1x16x16x4xf32>
    %17 = tpu.matmul %14, %16, %cst_24 {dimension_numbers = #tpu.dot_dimension_numbers<[3], [0], [0, 1, 2], [1], [0, 0, 0, 1, 0, 2, 1, 1], [], []>} : vector<1x16x16x4xf32>, vector<4x4xf32>, vector<1x16x16x4xf32> -> vector<1x16x16x4xf32>
    %18 = arith.addf %13, %17 : vector<1x16x16x4xf32>
    %c0_25 = arith.constant 0 : index
    %c1_26 = arith.constant 1 : index
    %c0_27 = arith.constant 0 : index
    %c0_28 = arith.constant 0 : index
    %19 = vector.load %arg1[%c0_25, %c1_26, %c0_27, %c0_28] : memref<1x18x18x4xf32, #tpu.memory_space<vmem>>, vector<1x16x16x4xf32>
    %c1_29 = arith.constant 1 : index
    %c0_30 = arith.constant 0 : index
    %c0_31 = arith.constant 0 : index
    %c0_32 = arith.constant 0 : index
    %20 = vector.load %arg2[%c1_29, %c0_30, %c0_31, %c0_32] : memref<3x3x4x4xf32, #tpu.memory_space<vmem>>, vector<1x1x4x4xf32>
    %21 = vector.shape_cast %20 : vector<1x1x4x4xf32> to vector<4x4xf32>
    %cst_33 = arith.constant dense<0.000000e+00> : vector<1x16x16x4xf32>
    %22 = tpu.matmul %19, %21, %cst_33 {dimension_numbers = #tpu.dot_dimension_numbers<[3], [0], [0, 1, 2], [1], [0, 0, 0, 1, 0, 2, 1, 1], [], []>} : vector<1x16x16x4xf32>, vector<4x4xf32>, vector<1x16x16x4xf32> -> vector<1x16x16x4xf32>
    %23 = arith.addf %18, %22 : vector<1x16x16x4xf32>
    %c0_34 = arith.constant 0 : index
    %c1_35 = arith.constant 1 : index
    %c1_36 = arith.constant 1 : index
    %c0_37 = arith.constant 0 : index
    %24 = vector.load %arg1[%c0_34, %c1_35, %c1_36, %c0_37] : memref<1x18x18x4xf32, #tpu.memory_space<vmem>>, vector<1x16x16x4xf32>
    %c1_38 = arith.constant 1 : index
    %c1_39 = arith.constant 1 : index
    %c0_40 = arith.constant 0 : index
    %c0_41 = arith.constant 0 : index
    %25 = vector.load %arg2[%c1_38, %c1_39, %c0_40, %c0_41] : memref<3x3x4x4xf32, #tpu.memory_space<vmem>>, vector<1x1x4x4xf32>
    %26 = vector.shape_cast %25 : vector<1x1x4x4xf32> to vector<4x4xf32>
    %cst_42 = arith.constant dense<0.000000e+00> : vector<1x16x16x4xf32>
    %27 = tpu.matmul %24, %26, %cst_42 {dimension_numbers = #tpu.dot_dimension_numbers<[3], [0], [0, 1, 2], [1], [0, 0, 0, 1, 0, 2, 1, 1], [], []>} : vector<1x16x16x4xf32>, vector<4x4xf32>, vector<1x16x16x4xf32> -> vector<1x16x16x4xf32>
    %28 = arith.addf %23, %27 : vector<1x16x16x4xf32>
    %c0_43 = arith.constant 0 : index
    %c1_44 = arith.constant 1 : index
    %c2_45 = arith.constant 2 : index
    %c0_46 = arith.constant 0 : index
    %29 = vector.load %arg1[%c0_43, %c1_44, %c2_45, %c0_46] : memref<1x18x18x4xf32, #tpu.memory_space<vmem>>, vector<1x16x16x4xf32>
    %c1_47 = arith.constant 1 : index
    %c2_48 = arith.constant 2 : index
    %c0_49 = arith.constant 0 : index
    %c0_50 = arith.constant 0 : index
    %30 = vector.load %arg2[%c1_47, %c2_48, %c0_49, %c0_50] : memref<3x3x4x4xf32, #tpu.memory_space<vmem>>, vector<1x1x4x4xf32>
    %31 = vector.shape_cast %30 : vector<1x1x4x4xf32> to vector<4x4xf32>
    %cst_51 = arith.constant dense<0.000000e+00> : vector<1x16x16x4xf32>
    %32 = tpu.matmul %29, %31, %cst_51 {dimension_numbers = #tpu.dot_dimension_numbers<[3], [0], [0, 1, 2], [1], [0, 0, 0, 1, 0, 2, 1, 1], [], []>} : vector<1x16x16x4xf32>, vector<4x4xf32>, vector<1x16x16x4xf32> -> vector<1x16x16x4xf32>
    %33 = arith.addf %28, %32 : vector<1x16x16x4xf32>
    %c0_52 = arith.constant 0 : index
    %c2_53 = arith.constant 2 : index
    %c0_54 = arith.constant 0 : index
    %c0_55 = arith.constant 0 : index
    %34 = vector.load %arg1[%c0_52, %c2_53, %c0_54, %c0_55] : memref<1x18x18x4xf32, #tpu.memory_space<vmem>>, vector<1x16x16x4xf32>
    %c2_56 = arith.constant 2 : index
    %c0_57 = arith.constant 0 : index
    %c0_58 = arith.constant 0 : index
    %c0_59 = arith.constant 0 : index
    %35 = vector.load %arg2[%c2_56, %c0_57, %c0_58, %c0_59] : memref<3x3x4x4xf32, #tpu.memory_space<vmem>>, vector<1x1x4x4xf32>
    %36 = vector.shape_cast %35 : vector<1x1x4x4xf32> to vector<4x4xf32>
    %cst_60 = arith.constant dense<0.000000e+00> : vector<1x16x16x4xf32>
    %37 = tpu.matmul %34, %36, %cst_60 {dimension_numbers = #tpu.dot_dimension_numbers<[3], [0], [0, 1, 2], [1], [0, 0, 0, 1, 0, 2, 1, 1], [], []>} : vector<1x16x16x4xf32>, vector<4x4xf32>, vector<1x16x16x4xf32> -> vector<1x16x16x4xf32>
    %38 = arith.addf %33, %37 : vector<1x16x16x4xf32>
    %c0_61 = arith.constant 0 : index
    %c2_62 = arith.constant 2 : index
    %c1_63 = arith.constant 1 : index
    %c0_64 = arith.constant 0 : index
    %39 = vector.load %arg1[%c0_61, %c2_62, %c1_63, %c0_64] : memref<1x18x18x4xf32, #tpu.memory_space<vmem>>, vector<1x16x16x4xf32>
    %c2_65 = arith.constant 2 : index
    %c1_66 = arith.constant 1 : index
    %c0_67 = arith.constant 0 : index
    %c0_68 = arith.constant 0 : index
    %40 = vector.load %arg2[%c2_65, %c1_66, %c0_67, %c0_68] : memref<3x3x4x4xf32, #tpu.memory_space<vmem>>, vector<1x1x4x4xf32>
    %41 = vector.shape_cast %40 : vector<1x1x4x4xf32> to vector<4x4xf32>
    %cst_69 = arith.constant dense<0.000000e+00> : vector<1x16x16x4xf32>
    %42 = tpu.matmul %39, %41, %cst_69 {dimension_numbers = #tpu.dot_dimension_numbers<[3], [0], [0, 1, 2], [1], [0, 0, 0, 1, 0, 2, 1, 1], [], []>} : vector<1x16x16x4xf32>, vector<4x4xf32>, vector<1x16x16x4xf32> -> vector<1x16x16x4xf32>
    %43 = arith.addf %38, %42 : vector<1x16x16x4xf32>
    %c0_70 = arith.constant 0 : index
    %c2_71 = arith.constant 2 : index
    %c2_72 = arith.constant 2 : index
    %c0_73 = arith.constant 0 : index
    %44 = vector.load %arg1[%c0_70, %c2_71, %c2_72, %c0_73] : memref<1x18x18x4xf32, #tpu.memory_space<vmem>>, vector<1x16x16x4xf32>
    %c2_74 = arith.constant 2 : index
    %c2_75 = arith.constant 2 : index
    %c0_76 = arith.constant 0 : index
    %c0_77 = arith.constant 0 : index
    %45 = vector.load %arg2[%c2_74, %c2_75, %c0_76, %c0_77] : memref<3x3x4x4xf32, #tpu.memory_space<vmem>>, vector<1x1x4x4xf32>
    %46 = vector.shape_cast %45 : vector<1x1x4x4xf32> to vector<4x4xf32>
    %cst_78 = arith.constant dense<0.000000e+00> : vector<1x16x16x4xf32>
    %47 = tpu.matmul %44, %46, %cst_78 {dimension_numbers = #tpu.dot_dimension_numbers<[3], [0], [0, 1, 2], [1], [0, 0, 0, 1, 0, 2, 1, 1], [], []>} : vector<1x16x16x4xf32>, vector<4x4xf32>, vector<1x16x16x4xf32> -> vector<1x16x16x4xf32>
    %48 = arith.addf %43, %47 : vector<1x16x16x4xf32>
    %cst_79 = arith.constant 0.000000e+00 : f32
    %49 = vector.broadcast %cst_79 : f32 to vector<1x16x16x4xf32>
    %50 = arith.cmpf oge, %48, %49 : vector<1x16x16x4xf32>
    %cst_80 = arith.constant 1.000000e-01 : f32
    %51 = vector.broadcast %cst_80 : f32 to vector<1x16x16x4xf32>
    %52 = arith.mulf %51, %48 : vector<1x16x16x4xf32>
    %53 = arith.select %50, %48, %52 : vector<1x16x16x4xi1>, vector<1x16x16x4xf32>
    %cst_81 = arith.constant 0.000000e+00 : f32
    %54 = vector.broadcast %cst_81 : f32 to vector<1x2x20x4xf32>
    %c0_82 = arith.constant 0 : index
    %c0_83 = arith.constant 0 : index
    %c0_84 = arith.constant 0 : index
    %c0_85 = arith.constant 0 : index
    %55 = vector.load %arg7[%c0_82, %c0_83, %c0_84, %c0_85] : memref<1x20x20x4xf32, #tpu.memory_space<vmem>>, vector<1x2x20x4xf32>
    tpu.vector_store %arg7[%c0_82, %c0_83, %c0_84, %c0_85], %54 {strides = array<i32>} : memref<1x20x20x4xf32, #tpu.memory_space<vmem>>, vector<1x2x20x4xf32>,
    %cst_86 = arith.constant 0.000000e+00 : f32
    %56 = vector.broadcast %cst_86 : f32 to vector<1x2x20x4xf32>
    %c0_87 = arith.constant 0 : index
    %c18 = arith.constant 18 : index
    %c0_88 = arith.constant 0 : index
    %c0_89 = arith.constant 0 : index
    %57 = vector.load %arg7[%c0_87, %c18, %c0_88, %c0_89] : memref<1x20x20x4xf32, #tpu.memory_space<vmem>>, vector<1x2x20x4xf32>
    tpu.vector_store %arg7[%c0_87, %c18, %c0_88, %c0_89], %56 {strides = array<i32>} : memref<1x20x20x4xf32, #tpu.memory_space<vmem>>, vector<1x2x20x4xf32>,
    %cst_90 = arith.constant 0.000000e+00 : f32
    %58 = vector.broadcast %cst_90 : f32 to vector<1x16x2x4xf32>
    %c0_91 = arith.constant 0 : index
    %c2_92 = arith.constant 2 : index
    %c0_93 = arith.constant 0 : index
    %c0_94 = arith.constant 0 : index
    %59 = vector.load %arg7[%c0_91, %c2_92, %c0_93, %c0_94] : memref<1x20x20x4xf32, #tpu.memory_space<vmem>>, vector<1x16x2x4xf32>
    tpu.vector_store %arg7[%c0_91, %c2_92, %c0_93, %c0_94], %58 {strides = array<i32>} : memref<1x20x20x4xf32, #tpu.memory_space<vmem>>, vector<1x16x2x4xf32>,
    %cst_95 = arith.constant 0.000000e+00 : f32
    %60 = vector.broadcast %cst_95 : f32 to vector<1x16x2x4xf32>
    %c0_96 = arith.constant 0 : index
    %c2_97 = arith.constant 2 : index
    %c18_98 = arith.constant 18 : index
    %c0_99 = arith.constant 0 : index
    %61 = vector.load %arg7[%c0_96, %c2_97, %c18_98, %c0_99] : memref<1x20x20x4xf32, #tpu.memory_space<vmem>>, vector<1x16x2x4xf32>
    tpu.vector_store %arg7[%c0_96, %c2_97, %c18_98, %c0_99], %60 {strides = array<i32>} : memref<1x20x20x4xf32, #tpu.memory_space<vmem>>, vector<1x16x2x4xf32>,
    %c0_100 = arith.constant 0 : index
    %c2_101 = arith.constant 2 : index
    %c2_102 = arith.constant 2 : index
    %c0_103 = arith.constant 0 : index
    %62 = vector.load %arg7[%c0_100, %c2_101, %c2_102, %c0_103] : memref<1x20x20x4xf32, #tpu.memory_space<vmem>>, vector<1x16x16x4xf32>
    tpu.vector_store %arg7[%c0_100, %c2_101, %c2_102, %c0_103], %53 {strides = array<i32>} : memref<1x20x20x4xf32, #tpu.memory_space<vmem>>, vector<1x16x16x4xf32>,
    %c0_104 = arith.constant 0 : index
    %c1_105 = arith.constant 1 : index
    %c1_106 = arith.constant 1 : index
    %c0_107 = arith.constant 0 : index
    %63 = vector.load %arg1[%c0_104, %c1_105, %c1_106, %c0_107] : memref<1x18x18x4xf32, #tpu.memory_space<vmem>>, vector<1x16x16x4xf32>
    %c0_108 = arith.constant 0 : index
    %c0_109 = arith.constant 0 : index
    %64 = vector.load %arg5[%c0_108, %c0_109] : memref<1x4xf32, #tpu.memory_space<vmem>>, vector<1x4xf32>
    %65 = vector.shape_cast %64 : vector<1x4xf32> to vector<1x1x1x4xf32>
    %66 = vector.broadcast %65 : vector<1x1x1x4xf32> to vector<1x16x16x4xf32>
    %67 = arith.addf %63, %66 : vector<1x16x16x4xf32>
    %c0_110 = arith.constant 0 : index
    %c0_111 = arith.constant 0 : index
    %c0_112 = arith.constant 0 : index
    %c0_113 = arith.constant 0 : index
    %68 = vector.load %arg7[%c0_110, %c0_111, %c0_112, %c0_113] : memref<1x20x20x4xf32, #tpu.memory_space<vmem>>, vector<1x16x16x4xf32>
    %c0_114 = arith.constant 0 : index
    %c0_115 = arith.constant 0 : index
    %c0_116 = arith.constant 0 : index
    %c0_117 = arith.constant 0 : index
    %69 = vector.load %arg4[%c0_114, %c0_115, %c0_116, %c0_117] : memref<3x3x4x4xf32, #tpu.memory_space<vmem>>, vector<1x1x4x4xf32>
    %70 = vector.shape_cast %69 : vector<1x1x4x4xf32> to vector<4x4xf32>
    %cst_118 = arith.constant dense<0.000000e+00> : vector<1x16x16x4xf32>
    %71 = tpu.matmul %68, %70, %cst_118 {dimension_numbers = #tpu.dot_dimension_numbers<[3], [0], [0, 1, 2], [1], [0, 0, 0, 1, 0, 2, 1, 1], [], []>} : vector<1x16x16x4xf32>, vector<4x4xf32>, vector<1x16x16x4xf32> -> vector<1x16x16x4xf32>
    %72 = arith.addf %67, %71 : vector<1x16x16x4xf32>
    %c0_119 = arith.constant 0 : index
    %c0_120 = arith.constant 0 : index
    %c2_121 = arith.constant 2 : index
    %c0_122 = arith.constant 0 : index
    %73 = vector.load %arg7[%c0_119, %c0_120, %c2_121, %c0_122] : memref<1x20x20x4xf32, #tpu.memory_space<vmem>>, vector<1x16x16x4xf32>
    %c0_123 = arith.constant 0 : index
    %c1_124 = arith.constant 1 : index
    %c0_125 = arith.constant 0 : index
    %c0_126 = arith.constant 0 : index
    %74 = vector.load %arg4[%c0_123, %c1_124, %c0_125, %c0_126] : memref<3x3x4x4xf32, #tpu.memory_space<vmem>>, vector<1x1x4x4xf32>
    %75 = vector.shape_cast %74 : vector<1x1x4x4xf32> to vector<4x4xf32>
    %cst_127 = arith.constant dense<0.000000e+00> : vector<1x16x16x4xf32>
    %76 = tpu.matmul %73, %75, %cst_127 {dimension_numbers = #tpu.dot_dimension_numbers<[3], [0], [0, 1, 2], [1], [0, 0, 0, 1, 0, 2, 1, 1], [], []>} : vector<1x16x16x4xf32>, vector<4x4xf32>, vector<1x16x16x4xf32> -> vector<1x16x16x4xf32>
    %77 = arith.addf %72, %76 : vector<1x16x16x4xf32>
    %c0_128 = arith.constant 0 : index
    %c0_129 = arith.constant 0 : index
    %c4 = arith.constant 4 : index
    %c0_130 = arith.constant 0 : index
    %78 = vector.load %arg7[%c0_128, %c0_129, %c4, %c0_130] : memref<1x20x20x4xf32, #tpu.memory_space<vmem>>, vector<1x16x16x4xf32>
    %c0_131 = arith.constant 0 : index
    %c2_132 = arith.constant 2 : index
    %c0_133 = arith.constant 0 : index
    %c0_134 = arith.constant 0 : index
    %79 = vector.load %arg4[%c0_131, %c2_132, %c0_133, %c0_134] : memref<3x3x4x4xf32, #tpu.memory_space<vmem>>, vector<1x1x4x4xf32>
    %80 = vector.shape_cast %79 : vector<1x1x4x4xf32> to vector<4x4xf32>
    %cst_135 = arith.constant dense<0.000000e+00> : vector<1x16x16x4xf32>
    %81 = tpu.matmul %78, %80, %cst_135 {dimension_numbers = #tpu.dot_dimension_numbers<[3], [0], [0, 1, 2], [1], [0, 0, 0, 1, 0, 2, 1, 1], [], []>} : vector<1x16x16x4xf32>, vector<4x4xf32>, vector<1x16x16x4xf32> -> vector<1x16x16x4xf32>
    %82 = arith.addf %77, %81 : vector<1x16x16x4xf32>
    %c0_136 = arith.constant 0 : index
    %c2_137 = arith.constant 2 : index
    %c0_138 = arith.constant 0 : index
    %c0_139 = arith.constant 0 : index
    %83 = vector.load %arg7[%c0_136, %c2_137, %c0_138, %c0_139] : memref<1x20x20x4xf32, #tpu.memory_space<vmem>>, vector<1x16x16x4xf32>
    %c1_140 = arith.constant 1 : index
    %c0_141 = arith.constant 0 : index
    %c0_142 = arith.constant 0 : index
    %c0_143 = arith.constant 0 : index
    %84 = vector.load %arg4[%c1_140, %c0_141, %c0_142, %c0_143] : memref<3x3x4x4xf32, #tpu.memory_space<vmem>>, vector<1x1x4x4xf32>
    %85 = vector.shape_cast %84 : vector<1x1x4x4xf32> to vector<4x4xf32>
    %cst_144 = arith.constant dense<0.000000e+00> : vector<1x16x16x4xf32>
    %86 = tpu.matmul %83, %85, %cst_144 {dimension_numbers = #tpu.dot_dimension_numbers<[3], [0], [0, 1, 2], [1], [0, 0, 0, 1, 0, 2, 1, 1], [], []>} : vector<1x16x16x4xf32>, vector<4x4xf32>, vector<1x16x16x4xf32> -> vector<1x16x16x4xf32>
    %87 = arith.addf %82, %86 : vector<1x16x16x4xf32>
    %c0_145 = arith.constant 0 : index
    %c2_146 = arith.constant 2 : index
    %c2_147 = arith.constant 2 : index
    %c0_148 = arith.constant 0 : index
    %88 = vector.load %arg7[%c0_145, %c2_146, %c2_147, %c0_148] : memref<1x20x20x4xf32, #tpu.memory_space<vmem>>, vector<1x16x16x4xf32>
    %c1_149 = arith.constant 1 : index
    %c1_150 = arith.constant 1 : index
    %c0_151 = arith.constant 0 : index
    %c0_152 = arith.constant 0 : index
    %89 = vector.load %arg4[%c1_149, %c1_150, %c0_151, %c0_152] : memref<3x3x4x4xf32, #tpu.memory_space<vmem>>, vector<1x1x4x4xf32>
    %90 = vector.shape_cast %89 : vector<1x1x4x4xf32> to vector<4x4xf32>
    %cst_153 = arith.constant dense<0.000000e+00> : vector<1x16x16x4xf32>
    %91 = tpu.matmul %88, %90, %cst_153 {dimension_numbers = #tpu.dot_dimension_numbers<[3], [0], [0, 1, 2], [1], [0, 0, 0, 1, 0, 2, 1, 1], [], []>} : vector<1x16x16x4xf32>, vector<4x4xf32>, vector<1x16x16x4xf32> -> vector<1x16x16x4xf32>
    %92 = arith.addf %87, %91 : vector<1x16x16x4xf32>
    %c0_154 = arith.constant 0 : index
    %c2_155 = arith.constant 2 : index
    %c4_156 = arith.constant 4 : index
    %c0_157 = arith.constant 0 : index
    %93 = vector.load %arg7[%c0_154, %c2_155, %c4_156, %c0_157] : memref<1x20x20x4xf32, #tpu.memory_space<vmem>>, vector<1x16x16x4xf32>
    %c1_158 = arith.constant 1 : index
    %c2_159 = arith.constant 2 : index
    %c0_160 = arith.constant 0 : index
    %c0_161 = arith.constant 0 : index
    %94 = vector.load %arg4[%c1_158, %c2_159, %c0_160, %c0_161] : memref<3x3x4x4xf32, #tpu.memory_space<vmem>>, vector<1x1x4x4xf32>
    %95 = vector.shape_cast %94 : vector<1x1x4x4xf32> to vector<4x4xf32>
    %cst_162 = arith.constant dense<0.000000e+00> : vector<1x16x16x4xf32>
    %96 = tpu.matmul %93, %95, %cst_162 {dimension_numbers = #tpu.dot_dimension_numbers<[3], [0], [0, 1, 2], [1], [0, 0, 0, 1, 0, 2, 1, 1], [], []>} : vector<1x16x16x4xf32>, vector<4x4xf32>, vector<1x16x16x4xf32> -> vector<1x16x16x4xf32>
    %97 = arith.addf %92, %96 : vector<1x16x16x4xf32>
    %c0_163 = arith.constant 0 : index
    %c4_164 = arith.constant 4 : index
    %c0_165 = arith.constant 0 : index
    %c0_166 = arith.constant 0 : index
    %98 = vector.load %arg7[%c0_163, %c4_164, %c0_165, %c0_166] : memref<1x20x20x4xf32, #tpu.memory_space<vmem>>, vector<1x16x16x4xf32>
    %c2_167 = arith.constant 2 : index
    %c0_168 = arith.constant 0 : index
    %c0_169 = arith.constant 0 : index
    %c0_170 = arith.constant 0 : index
    %99 = vector.load %arg4[%c2_167, %c0_168, %c0_169, %c0_170] : memref<3x3x4x4xf32, #tpu.memory_space<vmem>>, vector<1x1x4x4xf32>
    %100 = vector.shape_cast %99 : vector<1x1x4x4xf32> to vector<4x4xf32>
    %cst_171 = arith.constant dense<0.000000e+00> : vector<1x16x16x4xf32>
    %101 = tpu.matmul %98, %100, %cst_171 {dimension_numbers = #tpu.dot_dimension_numbers<[3], [0], [0, 1, 2], [1], [0, 0, 0, 1, 0, 2, 1, 1], [], []>} : vector<1x16x16x4xf32>, vector<4x4xf32>, vector<1x16x16x4xf32> -> vector<1x16x16x4xf32>
    %102 = arith.addf %97, %101 : vector<1x16x16x4xf32>
    %c0_172 = arith.constant 0 : index
    %c4_173 = arith.constant 4 : index
    %c2_174 = arith.constant 2 : index
    %c0_175 = arith.constant 0 : index
    %103 = vector.load %arg7[%c0_172, %c4_173, %c2_174, %c0_175] : memref<1x20x20x4xf32, #tpu.memory_space<vmem>>, vector<1x16x16x4xf32>
    %c2_176 = arith.constant 2 : index
    %c1_177 = arith.constant 1 : index
    %c0_178 = arith.constant 0 : index
    %c0_179 = arith.constant 0 : index
    %104 = vector.load %arg4[%c2_176, %c1_177, %c0_178, %c0_179] : memref<3x3x4x4xf32, #tpu.memory_space<vmem>>, vector<1x1x4x4xf32>
    %105 = vector.shape_cast %104 : vector<1x1x4x4xf32> to vector<4x4xf32>
    %cst_180 = arith.constant dense<0.000000e+00> : vector<1x16x16x4xf32>
    %106 = tpu.matmul %103, %105, %cst_180 {dimension_numbers = #tpu.dot_dimension_numbers<[3], [0], [0, 1, 2], [1], [0, 0, 0, 1, 0, 2, 1, 1], [], []>} : vector<1x16x16x4xf32>, vector<4x4xf32>, vector<1x16x16x4xf32> -> vector<1x16x16x4xf32>
    %107 = arith.addf %102, %106 : vector<1x16x16x4xf32>
    %c0_181 = arith.constant 0 : index
    %c4_182 = arith.constant 4 : index
    %c4_183 = arith.constant 4 : index
    %c0_184 = arith.constant 0 : index
    %108 = vector.load %arg7[%c0_181, %c4_182, %c4_183, %c0_184] : memref<1x20x20x4xf32, #tpu.memory_space<vmem>>, vector<1x16x16x4xf32>
    %c2_185 = arith.constant 2 : index
    %c2_186 = arith.constant 2 : index
    %c0_187 = arith.constant 0 : index
    %c0_188 = arith.constant 0 : index
    %109 = vector.load %arg4[%c2_185, %c2_186, %c0_187, %c0_188] : memref<3x3x4x4xf32, #tpu.memory_space<vmem>>, vector<1x1x4x4xf32>
    %110 = vector.shape_cast %109 : vector<1x1x4x4xf32> to vector<4x4xf32>
    %cst_189 = arith.constant dense<0.000000e+00> : vector<1x16x16x4xf32>
    %111 = tpu.matmul %108, %110, %cst_189 {dimension_numbers = #tpu.dot_dimension_numbers<[3], [0], [0, 1, 2], [1], [0, 0, 0, 1, 0, 2, 1, 1], [], []>} : vector<1x16x16x4xf32>, vector<4x4xf32>, vector<1x16x16x4xf32> -> vector<1x16x16x4xf32>
    %112 = arith.addf %107, %111 : vector<1x16x16x4xf32>
    %c0_190 = arith.constant 0 : index
    %c0_191 = arith.constant 0 : index
    %c0_192 = arith.constant 0 : index
    %c0_193 = arith.constant 0 : index
    %113 = vector.load %arg6[%c0_190, %c0_191, %c0_192, %c0_193] : memref<1x16x16x4xf32, #tpu.memory_space<vmem>>, vector<1x16x16x4xf32>
    tpu.vector_store %arg6[%c0_190, %c0_191, %c0_192, %c0_193], %112 {strides = array<i32>} : memref<1x16x16x4xf32, #tpu.memory_space<vmem>>, vector<1x16x16x4xf32>,
    return
  }
  func.func @transform_0(%arg0: i32) -> (i32, i32, i32, i32) {
    %c0_i32 = arith.constant 0 : i32
    %c0_i32_0 = arith.constant 0 : i32
    %c0_i32_1 = arith.constant 0 : i32
    %c0_i32_2 = arith.constant 0 : i32
    return %arg0, %c0_i32, %c0_i32_0, %c0_i32_1 : i32, i32, i32, i32
  }
  func.func @transform_1(%arg0: i32) -> (i32, i32, i32, i32) {
    %c0_i32 = arith.constant 0 : i32
    %c0_i32_0 = arith.constant 0 : i32
    %c0_i32_1 = arith.constant 0 : i32
    %c0_i32_2 = arith.constant 0 : i32
    %c0_i32_3 = arith.constant 0 : i32
    return %c0_i32, %c0_i32_0, %c0_i32_1, %c0_i32_2 : i32, i32, i32, i32
  }
  func.func @transform_2(%arg0: i32) -> (i32, i32) {
    %c0_i32 = arith.constant 0 : i32
    %c0_i32_0 = arith.constant 0 : i32
    %c0_i32_1 = arith.constant 0 : i32
    return %c0_i32, %c0_i32_0 : i32, i32
  }
  func.func @transform_3(%arg0: i32) -> (i32, i32, i32, i32) {
    %c0_i32 = arith.constant 0 : i32
    %c0_i32_0 = arith.constant 0 : i32
    %c0_i32_1 = arith.constant 0 : i32
    %c0_i32_2 = arith.constant 0 : i32
    %c0_i32_3 = arith.constant 0 : i32
    return %c0_i32, %c0_i32_0, %c0_i32_1, %c0_i32_2 : i32, i32, i32, i32
  }
  func.func @transform_4(%arg0: i32) -> (i32, i32) {
    %c0_i32 = arith.constant 0 : i32
    %c0_i32_0 = arith.constant 0 : i32
    %c0_i32_1 = arith.constant 0 : i32
    return %c0_i32, %c0_i32_0 : i32, i32
  }
  func.func @transform_5(%arg0: i32) -> (i32, i32, i32, i32) {
    %c0_i32 = arith.constant 0 : i32
    %c0_i32_0 = arith.constant 0 : i32
    %c0_i32_1 = arith.constant 0 : i32
    %c0_i32_2 = arith.constant 0 : i32
    return %arg0, %c0_i32, %c0_i32_0, %c0_i32_1 : i32, i32, i32, i32
  }
}

</mosaic_0001>

<llo_original>
// kernel: tpu_custom_call.1
$region0: #{tpu_custom_call.1}
  #allocation0 [shape = 'u32[]', space=smem, size = 0x4, offset = 0x4, fixed_abs, tag = 'smem constant byte address 0x4 - core index']
  #allocation1 [shape = 'u32[144,128]{1,0:T(1,128)}', space=vmem, size = 0x12000, scoped, tag = 'internal scratch']
  #allocation2 [shape = 'f32[1,20,20,4]{3,2,1,0:T(8,128)}', space=vmem, size = 0x3c000, scoped, tag = 'scratch operand']
  %s0 = inlined_call_operand.vmem [shape: f32[2,18,18,4], index: 0, kind: input, shape index: {}]
  %s1 = inlined_call_operand.vmem [shape: f32[3,3,4,4], index: 1, kind: input, shape index: {}]
  %s2 = inlined_call_operand.vmem [shape: f32[1,4], index: 2, kind: input, shape index: {}]
  %s3 = inlined_call_operand.vmem [shape: f32[3,3,4,4], index: 3, kind: input, shape index: {}]
  %s4 = inlined_call_operand.vmem [shape: f32[1,4], index: 4, kind: input, shape index: {}]
  %s5 = inlined_call_operand.vmem [shape: f32[2,16,16,4], index: 5, kind: output, shape index: {}]
  %s6 = sld [smem:[#allocation0]]
  $region53: #{tpu_custom_call.1} parent=0
    _
  %s8 = ssub.s32 1, %s6
  %s9 = scalar_select 0, %s8, %s6
  loop: start=0, step=1, limit=4
  $region2: #{tpu_custom_call.1} parent=0 // loop_pre_header
    _
  $region3: #{tpu_custom_call.1} parent=0 // loop_header
    %s11 = sphi 0, %s15
    %p12 = scmp.ge.s32.totalorder %s11, 4
    %s21 = sphi 0, %s23
    %s24 = sphi 0, %s21
    %s25 = sphi 0, %s24
    %s41 = sphi 0, %s25
    %s45 = sphi 0, %s45
    %s47 = sphi 0, %s45
    %s48 = sphi 0, %s47
    %s62 = sphi 0, %s48
    %s66 = sphi 0, %s66
    %s68 = sphi 0, %s66
    %s69 = sphi 0, %s68
    %s83 = sphi 0, %s69
    %s87 = sphi 0, %s87
    %s89 = sphi 0, %s87
    %s90 = sphi 0, %s89
    %s104 = sphi 0, %s90
    %s108 = sphi 0, %s108
    %s110 = sphi 0, %s108
    %s111 = sphi 0, %s110
    %s125 = sphi 0, %s111
    %s131 = sphi 0, %s133
    %s134 = sphi 0, %s131
    %s135 = sphi 0, %s134
    %s151 = sphi 0, %s135
  $region4: #{tpu_custom_call.1} parent=0 // loop_header_branch
    %14 = sbr.rel (%p12) target = $region8
  $region5: #{tpu_custom_call.1} parent=0 // loop_body
    %s16 = ssub.s32 %s11, 1
    %s17 = ssub.s32 %s11, 2
    %s18 = sadd.s32 %s11, 1
    %s19 = ssub.s32 %s11, %s18
    %p20 = scmp.eq.s32.totalorder %s19, 0
    %s22 = sadd.s32 %s21, 1
    %s23 = scalar_select %p20, %s21, %s22
    %p26 = pneg %p20
    %p27 = scmp.eq.s32.totalorder %s11, 1
    %p28 = por %p26, %p27
    %p29 = scmp.ne.s32.totalorder %s21, %s24
    %p30 = scmp.eq.s32.totalorder %s11, 0
    %p31 = por %p29, %p30
    %p32 = scmp.ne.s32.totalorder %s21, %s24
    %p33 = scmp.eq.s32.totalorder %s16, 1
    %p34 = por %p32, %p33
    %p35 = scmp.ne.s32.totalorder %s24, %s25
    %p36 = scmp.eq.s32.totalorder %s16, 0
    %p37 = por %p35, %p36
    %p38 = scmp.ne.s32.totalorder %s24, %s25
    %p39 = scmp.eq.s32.totalorder %s17, 1
    %p40 = por %p38, %p39
    %p42 = scmp.ne.s32.totalorder %s25, %s41
    %p43 = scmp.eq.s32.totalorder %s17, 0
    %p44 = por %p42, %p43
    %s46 = sadd.s32 %s45, 1
    %p49 = scmp.eq.s32.totalorder %s11, 1
    %p50 = scmp.ne.s32.totalorder %s45, %s47
    %p51 = scmp.eq.s32.totalorder %s11, 0
    %p52 = por %p50, %p51
    %p53 = scmp.ne.s32.totalorder %s45, %s47
    %p54 = scmp.eq.s32.totalorder %s16, 1
    %p55 = por %p53, %p54
    %p56 = scmp.ne.s32.totalorder %s47, %s48
    %p57 = scmp.eq.s32.totalorder %s16, 0
    %p58 = por %p56, %p57
    %p59 = scmp.ne.s32.totalorder %s47, %s48
    %p60 = scmp.eq.s32.totalorder %s17, 1
    %p61 = por %p59, %p60
    %p63 = scmp.ne.s32.totalorder %s48, %s62
    %p64 = scmp.eq.s32.totalorder %s17, 0
    %p65 = por %p63, %p64
    %s67 = sadd.s32 %s66, 1
    %p70 = scmp.eq.s32.totalorder %s11, 1
    %p71 = scmp.ne.s32.totalorder %s66, %s68
    %p72 = scmp.eq.s32.totalorder %s11, 0
    %p73 = por %p71, %p72
    %p74 = scmp.ne.s32.totalorder %s66, %s68
    %p75 = scmp.eq.s32.totalorder %s16, 1
    %p76 = por %p74, %p75
    %p77 = scmp.ne.s32.totalorder %s68, %s69
    %p78 = scmp.eq.s32.totalorder %s16, 0
    %p79 = por %p77, %p78
    %p80 = scmp.ne.s32.totalorder %s68, %s69
    %p81 = scmp.eq.s32.totalorder %s17, 1
    %p82 = por %p80, %p81
    %p84 = scmp.ne.s32.totalorder %s69, %s83
    %p85 = scmp.eq.s32.totalorder %s17, 0
    %p86 = por %p84, %p85
    %s88 = sadd.s32 %s87, 1
    %p91 = scmp.eq.s32.totalorder %s11, 1
    %p92 = scmp.ne.s32.totalorder %s87, %s89
    %p93 = scmp.eq.s32.totalorder %s11, 0
    %p94 = por %p92, %p93
    %p95 = scmp.ne.s32.totalorder %s87, %s89
    %p96 = scmp.eq.s32.totalorder %s16, 1
    %p97 = por %p95, %p96
    %p98 = scmp.ne.s32.totalorder %s89, %s90
    %p99 = scmp.eq.s32.totalorder %s16, 0
    %p100 = por %p98, %p99
    %p101 = scmp.ne.s32.totalorder %s89, %s90
    %p102 = scmp.eq.s32.totalorder %s17, 1
    %p103 = por %p101, %p102
    %p105 = scmp.ne.s32.totalorder %s90, %s104
    %p106 = scmp.eq.s32.totalorder %s17, 0
    %p107 = por %p105, %p106
    %s109 = sadd.s32 %s108, 1
    %p112 = scmp.eq.s32.totalorder %s11, 1
    %p113 = scmp.ne.s32.totalorder %s108, %s110
    %p114 = scmp.eq.s32.totalorder %s11, 0
    %p115 = por %p113, %p114
    %p116 = scmp.ne.s32.totalorder %s108, %s110
    %p117 = scmp.eq.s32.totalorder %s16, 1
    %p118 = por %p116, %p117
    %p119 = scmp.ne.s32.totalorder %s110, %s111
    %p120 = scmp.eq.s32.totalorder %s16, 0
    %p121 = por %p119, %p120
    %p122 = scmp.ne.s32.totalorder %s110, %s111
    %p123 = scmp.eq.s32.totalorder %s17, 1
    %p124 = por %p122, %p123
    %p126 = scmp.ne.s32.totalorder %s111, %s125
    %p127 = scmp.eq.s32.totalorder %s17, 0
    %p128 = por %p126, %p127
    %s129 = ssub.s32 %s11, %s18
    %p130 = scmp.eq.s32.totalorder %s129, 0
    %s132 = sadd.s32 %s131, 1
    %s133 = scalar_select %p130, %s131, %s132
    %p136 = pneg %p130
    %p137 = scmp.eq.s32.totalorder %s11, 1
    %p138 = por %p136, %p137
    %p139 = scmp.ne.s32.totalorder %s131, %s134
    %p140 = scmp.eq.s32.totalorder %s11, 0
    %p141 = por %p139, %p140
    %p142 = scmp.ne.s32.totalorder %s131, %s134
    %p143 = scmp.eq.s32.totalorder %s16, 1
    %p144 = por %p142, %p143
    %p145 = scmp.ne.s32.totalorder %s134, %s135
    %p146 = scmp.eq.s32.totalorder %s16, 0
    %p147 = por %p145, %p146
    %p148 = scmp.ne.s32.totalorder %s134, %s135
    %p149 = scmp.eq.s32.totalorder %s17, 1
    %p150 = por %p148, %p149
    %p152 = scmp.ne.s32.totalorder %s135, %s151
    %p153 = scmp.eq.s32.totalorder %s17, 0
    %p154 = por %p152, %p153
    %p155 = scmp.le.s32.totalorder 1, %s11
    %p156 = scmp.lt.s32.totalorder %s11, 3
    %p157 = pnand %p155, %p156
    %p158 = pneg %p157
    // Predicated region
    $region9: #{tpu_custom_call.1} parent=5 // pred_check
      _
    $region10: #{tpu_custom_call.1} parent=5 // pred_check_branch
      %160 = sbr.rel (%p157) target = $region12
    $region11: #{tpu_custom_call.1} parent=5 // pred_region
      %s161 = ssub.s32 %s11, 1
      // Predicated region
      $region13: #{tpu_custom_call.1} parent=11 // pred_check
        %p162 = pneg %p58
      $region14: #{tpu_custom_call.1} parent=11 // pred_check_branch
        %164 = sbr.rel (%p162) target = $region16
      $region15: #{tpu_custom_call.1} parent=11 // pred_region
        _
      $region16: #{tpu_custom_call.1} parent=11 // pred_fallthru
        _
      // Predicated region
      $region17: #{tpu_custom_call.1} parent=11 // pred_check
        %p165 = pneg %p79
      $region18: #{tpu_custom_call.1} parent=11 // pred_check_branch
        %167 = sbr.rel (%p165) target = $region20
      $region19: #{tpu_custom_call.1} parent=11 // pred_region
        _
      $region20: #{tpu_custom_call.1} parent=11 // pred_fallthru
        _
      // Predicated region
      $region21: #{tpu_custom_call.1} parent=11 // pred_check
        %p168 = pneg %p100
      $region22: #{tpu_custom_call.1} parent=11 // pred_check_branch
        %170 = sbr.rel (%p168) target = $region24
      $region23: #{tpu_custom_call.1} parent=11 // pred_region
        _
      $region24: #{tpu_custom_call.1} parent=11 // pred_fallthru
        _
      // Predicated region
      $region25: #{tpu_custom_call.1} parent=11 // pred_check
        %p171 = pneg %p121
      $region26: #{tpu_custom_call.1} parent=11 // pred_check_branch
        %173 = sbr.rel (%p171) target = $region28
      $region27: #{tpu_custom_call.1} parent=11 // pred_region
        _
      $region28: #{tpu_custom_call.1} parent=11 // pred_fallthru
        _
    $region12: #{tpu_custom_call.1} parent=5 // pred_fallthru
      _
    %p174 = scmp.lt.s32.totalorder %s11, 2
    // Predicated region
    $region29: #{tpu_custom_call.1} parent=5 // pred_check
      %p175 = pneg %p174
    $region30: #{tpu_custom_call.1} parent=5 // pred_check_branch
      %177 = sbr.rel (%p175) target = $region32
    $region31: #{tpu_custom_call.1} parent=5 // pred_region
      // Predicated region
      $region33: #{tpu_custom_call.1} parent=31 // pred_check
        %p178 = pneg %p31
      $region34: #{tpu_custom_call.1} parent=31 // pred_check_branch
        %180 = sbr.rel (%p178) target = $region36
      $region35: #{tpu_custom_call.1} parent=31 // pred_region
        %p181 = scmp.lt.s32.totalorder %s11, 1
        %s182 = scalar_select %p181, %s11, 1
        %s183 = smul.addr %s182, 54
        %s184 = smul.addr %s183, 8
        %s185 = scalar_lea.vmem %s0, %s184
      $region36: #{tpu_custom_call.1} parent=31 // pred_fallthru
        _
    $region32: #{tpu_custom_call.1} parent=5 // pred_fallthru
      _
    %p186 = scmp.le.s32.totalorder 1, %s11
    %p187 = scmp.lt.s32.totalorder %s11, 3
    %p188 = pnand %p186, %p187
    %p189 = pneg %p188
    // Predicated region
    $region37: #{tpu_custom_call.1} parent=5 // pred_check
      _
    $region38: #{tpu_custom_call.1} parent=5 // pred_check_branch
      %191 = sbr.rel (%p188) target = $region40
    $region39: #{tpu_custom_call.1} parent=5 // pred_region
      %s192 = ssub.s32 %s11, 1
      %p193 = scmp.lt.s32.totalorder %s16, 1
      %s194 = scalar_select %p193, %s16, 1
      %s195 = smul.addr %s194, 54
      %s196 = smul.addr %s195, 8
      %s197 = scalar_lea.vmem %s0, %s196
      %p198 = pneg %p37
      %p199 = pneg %p34
      %p200 = pneg %p58
      %p201 = pneg %p55
      %p202 = pneg %p79
      %p203 = pneg %p76
      %p204 = pneg %p100
      %p205 = pneg %p97
      %p206 = pneg %p121
      %p207 = pneg %p118
      %p208 = pneg %p147
      %p209 = pneg %p144
      %p210 = scmp.lt.s32.totalorder %s16, 1
      %s211 = scalar_select %p210, %s16, 1
      %s212 = smul.addr %s211, 32
      %s213 = smul.addr %s212, 8
      %s214 = scalar_lea.vmem %s5, %s213
      %p215 = scmp.lt.s32.totalorder %s16, 1
      %s216 = scalar_select %p215, %s16, 1
      %s217 = smul.addr %s216, 54
      %s218 = smul.addr %s217, 8
      %s219 = scalar_lea.vmem %s0, %s218
      %p220 = scmp.lt.s32.totalorder %s16, 1
      %s221 = scalar_select %p220, %s16, 1
      %s222 = smul.addr %s221, 32
      %s223 = smul.addr %s222, 8
      %s224 = scalar_lea.vmem %s5, %s223
      %v225 = vld [vmem:[%s2] sm:$0x1]
      %v227 = vlaneseq
      %v228 = vshrl.u32 %v227, 7
      %v229 = vsub.s32 0, %v228
      %v230 = vrot.slane %v225, %v229
      %v232 = vld [vmem:[%s219] sm:$0xff]
      %v233 = vld [vmem:[%s219 + $0x8] sm:$0xff]
      %v234 = vld [vmem:[%s219 + $0x18] sm:$0xff]
      %v235 = vld [vmem:[%s219 + $0x20] sm:$0xff]
      %v236 = vld [vmem:[%s219 + $0x30] sm:$0xff]
      %v237 = vld [vmem:[%s219 + $0x38] sm:$0xff]
      %v238 = vld [vmem:[%s219 + $0x48] sm:$0xff]
      %v239 = vld [vmem:[%s219 + $0x50] sm:$0xff]
      %v240 = vld [vmem:[%s219 + $0x60] sm:$0xff]
      %v241 = vld [vmem:[%s219 + $0x68] sm:$0xff]
      %v242 = vld [vmem:[%s219 + $0x78] sm:$0xff]
      %v243 = vld [vmem:[%s219 + $0x80] sm:$0xff]
      %v244 = vld [vmem:[%s219 + $0x90] sm:$0xff]
      %v245 = vld [vmem:[%s219 + $0x98] sm:$0xff]
      %v246 = vld [vmem:[%s219 + $0xa8] sm:$0xff]
      %v247 = vld [vmem:[%s219 + $0xb0] sm:$0xff]
      %v248 = vld [vmem:[%s219 + $0xc0] sm:$0xff]
      %v249 = vld [vmem:[%s219 + $0xc8] sm:$0xff]
      %v250 = vld [vmem:[%s219 + $0xd8] sm:$0xff]
      %v251 = vld [vmem:[%s219 + $0xe0] sm:$0xff]
      %v252 = vld [vmem:[%s219 + $0xf0] sm:$0xff]
      %v253 = vld [vmem:[%s219 + $0xf8] sm:$0xff]
      %v254 = vld [vmem:[%s219 + $0x108] sm:$0xff]
      %v255 = vld [vmem:[%s219 + $0x110] sm:$0xff]
      %v256 = vld [vmem:[%s219 + $0x120] sm:$0xff]
      %v257 = vld [vmem:[%s219 + $0x128] sm:$0xff]
      %v258 = vld [vmem:[%s219 + $0x138] sm:$0xff]
      %v259 = vld [vmem:[%s219 + $0x140] sm:$0xff]
      %v260 = vld [vmem:[%s219 + $0x150] sm:$0xff]
      %v261 = vld [vmem:[%s219 + $0x158] sm:$0xff]
      %v262 = vld [vmem:[%s219 + $0x168] sm:$0xff]
      %v263 = vld [vmem:[%s219 + $0x170] sm:$0xff]
      %v264 = vld [vmem:[%s1] sm:$0xf]
      %vm265 = vcmask 31744
      %v267 = vsel %vm265, %v232, 0
      %v270 = vsel %vm265, %v233, 0
      %v273 = vsel %vm265, %v234, 0
      %v276 = vsel %vm265, %v235, 0
      %v279 = vsel %vm265, %v236, 0
      %v282 = vsel %vm265, %v237, 0
      %v285 = vsel %vm265, %v238, 0
      %v288 = vsel %vm265, %v239, 0
      %v291 = vsel %vm265, %v240, 0
      %v294 = vsel %vm265, %v241, 0
      %v297 = vsel %vm265, %v242, 0
      %v300 = vsel %vm265, %v243, 0
      %v303 = vsel %vm265, %v244, 0
      %v306 = vsel %vm265, %v245, 0
      %v309 = vsel %vm265, %v246, 0
      %v312 = vsel %vm265, %v247, 0
      %v315 = vsel %vm265, %v248, 0
      %v318 = vsel %vm265, %v249, 0
      %v321 = vsel %vm265, %v250, 0
      %v324 = vsel %vm265, %v251, 0
      %v327 = vsel %vm265, %v252, 0
      %v330 = vsel %vm265, %v253, 0
      %v333 = vsel %vm265, %v254, 0
      %v336 = vsel %vm265, %v255, 0
      %v339 = vsel %vm265, %v256, 0
      %v342 = vsel %vm265, %v257, 0
      %v345 = vsel %vm265, %v258, 0
      %v348 = vsel %vm265, %v259, 0
      %v351 = vsel %vm265, %v260, 0
      %v354 = vsel %vm265, %v261, 0
      %v357 = vsel %vm265, %v262, 0
      %v360 = vsel %vm265, %v263, 0
      %vm362 = vcmask 1043456
      %v364 = vsel %vm362, %v264, 0
      %366 = vmatprep.subr.mxu0 0.0
      %367 = vmatpush1.msra.mxu0 %v364
      %368 = vmatprep.subr.mxu0 0.0
      %369 = vmatpush1.msra.mxu0 0.0
      %370 = vmatprep.subr.mxu0 0.0
      %371 = vmatpush1.msra.mxu0 0.0
      %372 = vmatprep.subr.mxu0 0.0
      %373 = vmatpush1.msra.mxu0 0.0
      %374 = vmatprep.subr.mxu0 0.0
      %375 = vmatpush1.msra.mxu0 0.0
      %376 = vmatprep.subr.mxu0 0.0
      %377 = vmatpush1.msra.mxu0 0.0
      %378 = vmatprep.subr.mxu0 0.0
      %379 = vmatpush1.msra.mxu0 0.0
      %380 = vmatprep.subr.mxu0 0.0
      %381 = vmatpush1.msra.mxu0 0.0
      %382 = vmatprep.subr.mxu0 0.0
      %383 = vmatpush1.msra.mxu0 0.0
      %384 = vmatprep.subr.mxu0 0.0
      %385 = vmatpush1.msra.mxu0 0.0
      %386 = vmatprep.subr.mxu0 0.0
      %387 = vmatpush1.msra.mxu0 0.0
      %388 = vmatprep.subr.mxu0 0.0
      %389 = vmatpush1.msra.mxu0 0.0
      %390 = vmatprep.subr.mxu0 0.0
      %391 = vmatpush1.msra.mxu0 0.0
      %392 = vmatprep.subr.mxu0 0.0
      %393 = vmatpush1.msra.mxu0 0.0
      %394 = vmatprep.subr.mxu0 0.0
      %395 = vmatpush1.msra.mxu0 0.0
      %396 = vmatprep.subr.mxu0 0.0
      %397 = vmatpush1.msra.mxu0 0.0
      %398 = vmatprep.subr.mxu0 0.0
      %399 = vmatpush1.msra.mxu0 0.0
      %400 = vmatprep.subr.mxu0 0.0
      %401 = vmatpush1.msra.mxu0 0.0
      %402 = vmatprep.subr.mxu0 0.0
      %403 = vmatpush1.msra.mxu0 0.0
      %404 = vmatprep.subr.mxu0 0.0
      %405 = vmatpush1.msra.mxu0 0.0
      %406 = vmatprep.subr.mxu0 0.0
      %407 = vmatpush1.msra.mxu0 0.0
      %408 = vmatprep.subr.mxu0 0.0
      %409 = vmatpush1.msra.mxu0 0.0
      %410 = vmatprep.subr.mxu0 0.0
      %411 = vmatpush1.msra.mxu0 0.0
      %412 = vmatprep.subr.mxu0 0.0
      %413 = vmatpush1.msra.mxu0 0.0
      %414 = vmatprep.subr.mxu0 0.0
      %415 = vmatpush1.msra.mxu0 0.0
      %416 = vmatprep.subr.mxu0 0.0
      %417 = vmatpush1.msra.mxu0 0.0
      %418 = vmatprep.subr.mxu0 0.0
      %419 = vmatpush1.msra.mxu0 0.0
      %420 = vmatprep.subr.mxu0 0.0
      %421 = vmatpush1.msra.mxu0 0.0
      %422 = vmatprep.subr.mxu0 0.0
      %423 = vmatpush1.msra.mxu0 0.0
      %424 = vmatprep.subr.mxu0 0.0
      %425 = vmatpush1.msra.mxu0 0.0
      %426 = vmatprep.subr.mxu0 0.0
      %427 = vmatpush1.msra.mxu0 0.0
      %428 = vmatprep.subr.mxu0 0.0
      %429 = vmatpush1.msra.mxu0 0.0
      %430 = vmatprep.mubr.f32.mxu0 0.0
      %431 = vmatmul.mubr.f32.gmra.mrb[0].mxu0 %v267
      %v432 = vpop.f32.mrb[0].mxu0
      %v433 = vadd.f32 0.0, %v432
      %v434 = vpop.f32.mrb[0].mxu0
      %435 = vmatprep.mubr.f32.mxu0 0.0
      %436 = vmatmul.mubr.f32.gmra.mrb[0].mxu0 %v270
      %v437 = vpop.f32.mrb[0].mxu0
      %v438 = vadd.f32 0.0, %v437
      %v439 = vpop.f32.mrb[0].mxu0
      %440 = vmatprep.mubr.f32.mxu0 0.0
      %441 = vmatmul.mubr.f32.gmra.mrb[0].mxu0 %v273
      %v442 = vpop.f32.mrb[0].mxu0
      %v443 = vadd.f32 0.0, %v442
      %v444 = vpop.f32.mrb[0].mxu0
      %445 = vmatprep.mubr.f32.mxu0 0.0
      %446 = vmatmul.mubr.f32.gmra.mrb[0].mxu0 %v276
      %v447 = vpop.f32.mrb[0].mxu0
      %v448 = vadd.f32 0.0, %v447
      %v449 = vpop.f32.mrb[0].mxu0
      %450 = vmatprep.mubr.f32.mxu0 0.0
      %451 = vmatmul.mubr.f32.gmra.mrb[0].mxu0 %v279
      %v452 = vpop.f32.mrb[0].mxu0
      %v453 = vadd.f32 0.0, %v452
      %v454 = vpop.f32.mrb[0].mxu0
      %455 = vmatprep.mubr.f32.mxu0 0.0
      %456 = vmatmul.mubr.f32.gmra.mrb[0].mxu0 %v282
      %v457 = vpop.f32.mrb[0].mxu0
      %v458 = vadd.f32 0.0, %v457
      %v459 = vpop.f32.mrb[0].mxu0
      %460 = vmatprep.mubr.f32.mxu0 0.0
      %461 = vmatmul.mubr.f32.gmra.mrb[0].mxu0 %v285
      %v462 = vpop.f32.mrb[0].mxu0
      %v463 = vadd.f32 0.0, %v462
      %v464 = vpop.f32.mrb[0].mxu0
      %465 = vmatprep.mubr.f32.mxu0 0.0
      %466 = vmatmul.mubr.f32.gmra.mrb[0].mxu0 %v288
      %v467 = vpop.f32.mrb[0].mxu0
      %v468 = vadd.f32 0.0, %v467
      %v469 = vpop.f32.mrb[0].mxu0
      %470 = vmatprep.mubr.f32.mxu0 0.0
      %471 = vmatmul.mubr.f32.gmra.mrb[0].mxu0 %v291
      %v472 = vpop.f32.mrb[0].mxu0
      %v473 = vadd.f32 0.0, %v472
      %v474 = vpop.f32.mrb[0].mxu0
      %475 = vmatprep.mubr.f32.mxu0 0.0
      %476 = vmatmul.mubr.f32.gmra.mrb[0].mxu0 %v294
      %v477 = vpop.f32.mrb[0].mxu0
      %v478 = vadd.f32 0.0, %v477
      %v479 = vpop.f32.mrb[0].mxu0
      %480 = vmatprep.mubr.f32.mxu0 0.0
      %481 = vmatmul.mubr.f32.gmra.mrb[0].mxu0 %v297
      %v482 = vpop.f32.mrb[0].mxu0
      %v483 = vadd.f32 0.0, %v482
      %v484 = vpop.f32.mrb[0].mxu0
      %485 = vmatprep.mubr.f32.mxu0 0.0
      %486 = vmatmul.mubr.f32.gmra.mrb[0].mxu0 %v300
      %v487 = vpop.f32.mrb[0].mxu0
      %v488 = vadd.f32 0.0, %v487
      %v489 = vpop.f32.mrb[0].mxu0
      %490 = vmatprep.mubr.f32.mxu0 0.0
      %491 = vmatmul.mubr.f32.gmra.mrb[0].mxu0 %v303
      %v492 = vpop.f32.mrb[0].mxu0
      %v493 = vadd.f32 0.0, %v492
      %v494 = vpop.f32.mrb[0].mxu0
      %495 = vmatprep.mubr.f32.mxu0 0.0
      %496 = vmatmul.mubr.f32.gmra.mrb[0].mxu0 %v306
      %v497 = vpop.f32.mrb[0].mxu0
      %v498 = vadd.f32 0.0, %v497
      %v499 = vpop.f32.mrb[0].mxu0
      %500 = vmatprep.mubr.f32.mxu0 0.0
      %501 = vmatmul.mubr.f32.gmra.mrb[0].mxu0 %v309
      %v502 = vpop.f32.mrb[0].mxu0
      %v503 = vadd.f32 0.0, %v502
      %v504 = vpop.f32.mrb[0].mxu0
      %505 = vmatprep.mubr.f32.mxu0 0.0
      %506 = vmatmul.mubr.f32.gmra.mrb[0].mxu0 %v312
      %v507 = vpop.f32.mrb[0].mxu0
      %v508 = vadd.f32 0.0, %v507
      %v509 = vpop.f32.mrb[0].mxu0
      %510 = vmatprep.mubr.f32.mxu0 0.0
      %511 = vmatmul.mubr.f32.gmra.mrb[0].mxu0 %v315
      %v512 = vpop.f32.mrb[0].mxu0
      %v513 = vadd.f32 0.0, %v512
      %v514 = vpop.f32.mrb[0].mxu0
      %515 = vmatprep.mubr.f32.mxu0 0.0
      %516 = vmatmul.mubr.f32.gmra.mrb[0].mxu0 %v318
      %v517 = vpop.f32.mrb[0].mxu0
      %v518 = vadd.f32 0.0, %v517
      %v519 = vpop.f32.mrb[0].mxu0
      %520 = vmatprep.mubr.f32.mxu0 0.0
      %521 = vmatmul.mubr.f32.gmra.mrb[0].mxu0 %v321
      %v522 = vpop.f32.mrb[0].mxu0
      %v523 = vadd.f32 0.0, %v522
      %v524 = vpop.f32.mrb[0].mxu0
      %525 = vmatprep.mubr.f32.mxu0 0.0
      %526 = vmatmul.mubr.f32.gmra.mrb[0].mxu0 %v324
      %v527 = vpop.f32.mrb[0].mxu0
      %v528 = vadd.f32 0.0, %v527
      %v529 = vpop.f32.mrb[0].mxu0
      %530 = vmatprep.mubr.f32.mxu0 0.0
      %531 = vmatmul.mubr.f32.gmra.mrb[0].mxu0 %v327
      %v532 = vpop.f32.mrb[0].mxu0
      %v533 = vadd.f32 0.0, %v532
      %v534 = vpop.f32.mrb[0].mxu0
      %535 = vmatprep.mubr.f32.mxu0 0.0
      %536 = vmatmul.mubr.f32.gmra.mrb[0].mxu0 %v330
      %v537 = vpop.f32.mrb[0].mxu0
      %v538 = vadd.f32 0.0, %v537
      %v539 = vpop.f32.mrb[0].mxu0
      %540 = vmatprep.mubr.f32.mxu0 0.0
      %541 = vmatmul.mubr.f32.gmra.mrb[0].mxu0 %v333
      %v542 = vpop.f32.mrb[0].mxu0
      %v543 = vadd.f32 0.0, %v542
      %v544 = vpop.f32.mrb[0].mxu0
      %545 = vmatprep.mubr.f32.mxu0 0.0
      %546 = vmatmul.mubr.f32.gmra.mrb[0].mxu0 %v336
      %v547 = vpop.f32.mrb[0].mxu0
      %v548 = vadd.f32 0.0, %v547
      %v549 = vpop.f32.mrb[0].mxu0
      %550 = vmatprep.mubr.f32.mxu0 0.0
      %551 = vmatmul.mubr.f32.gmra.mrb[0].mxu0 %v339
      %v552 = vpop.f32.mrb[0].mxu0
      %v553 = vadd.f32 0.0, %v552
      %v554 = vpop.f32.mrb[0].mxu0
      %555 = vmatprep.mubr.f32.mxu0 0.0
      %556 = vmatmul.mubr.f32.gmra.mrb[0].mxu0 %v342
      %v557 = vpop.f32.mrb[0].mxu0
      %v558 = vadd.f32 0.0, %v557
      %v559 = vpop.f32.mrb[0].mxu0
      %560 = vmatprep.mubr.f32.mxu0 0.0
      %561 = vmatmul.mubr.f32.gmra.mrb[0].mxu0 %v345
      %v562 = vpop.f32.mrb[0].mxu0
      %v563 = vadd.f32 0.0, %v562
      %v564 = vpop.f32.mrb[0].mxu0
      %565 = vmatprep.mubr.f32.mxu0 0.0
      %566 = vmatmul.mubr.f32.gmra.mrb[0].mxu0 %v348
      %v567 = vpop.f32.mrb[0].mxu0
      %v568 = vadd.f32 0.0, %v567
      %v569 = vpop.f32.mrb[0].mxu0
      %570 = vmatprep.mubr.f32.mxu0 0.0
      %571 = vmatmul.mubr.f32.gmra.mrb[0].mxu0 %v351
      %v572 = vpop.f32.mrb[0].mxu0
      %v573 = vadd.f32 0.0, %v572
      %v574 = vpop.f32.mrb[0].mxu0
      %575 = vmatprep.mubr.f32.mxu0 0.0
      %576 = vmatmul.mubr.f32.gmra.mrb[0].mxu0 %v354
      %v577 = vpop.f32.mrb[0].mxu0
      %v578 = vadd.f32 0.0, %v577
      %v579 = vpop.f32.mrb[0].mxu0
      %580 = vmatprep.mubr.f32.mxu0 0.0
      %581 = vmatmul.mubr.f32.gmra.mrb[0].mxu0 %v357
      %v582 = vpop.f32.mrb[0].mxu0
      %v583 = vadd.f32 0.0, %v582
      %v584 = vpop.f32.mrb[0].mxu0
      %585 = vmatprep.mubr.f32.mxu0 0.0
      %586 = vmatmul.mubr.f32.gmra.mrb[0].mxu0 %v360
      %v587 = vpop.f32.mrb[0].mxu0
      %v588 = vadd.f32 0.0, %v587
      %v589 = vpop.f32.mrb[0].mxu0
      %590 = vdwg.mxu0
      %v591 = vadd.f32 %v230, %v433
      %v592 = vadd.f32 %v230, %v438
      %v593 = vadd.f32 %v230, %v443
      %v594 = vadd.f32 %v230, %v448
      %v595 = vadd.f32 %v230, %v453
      %v596 = vadd.f32 %v230, %v458
      %v597 = vadd.f32 %v230, %v463
      %v598 = vadd.f32 %v230, %v468
      %v599 = vadd.f32 %v230, %v473
      %v600 = vadd.f32 %v230, %v478
      %v601 = vadd.f32 %v230, %v483
      %v602 = vadd.f32 %v230, %v488
      %v603 = vadd.f32 %v230, %v493
      %v604 = vadd.f32 %v230, %v498
      %v605 = vadd.f32 %v230, %v503
      %v606 = vadd.f32 %v230, %v508
      %v607 = vadd.f32 %v230, %v513
      %v608 = vadd.f32 %v230, %v518
      %v609 = vadd.f32 %v230, %v523
      %v610 = vadd.f32 %v230, %v528
      %v611 = vadd.f32 %v230, %v533
      %v612 = vadd.f32 %v230, %v538
      %v613 = vadd.f32 %v230, %v543
      %v614 = vadd.f32 %v230, %v548
      %v615 = vadd.f32 %v230, %v553
      %v616 = vadd.f32 %v230, %v558
      %v617 = vadd.f32 %v230, %v563
      %v618 = vadd.f32 %v230, %v568
      %v619 = vadd.f32 %v230, %v573
      %v620 = vadd.f32 %v230, %v578
      %v621 = vadd.f32 %v230, %v583
      %v622 = vadd.f32 %v230, %v588
      %v623 = vld [vmem:[%s219 + $0x1] sm:$0xff]
      %v624 = vld [vmem:[%s219 + $0x9] sm:$0xff]
      %v625 = vld [vmem:[%s219 + $0x19] sm:$0xff]
      %v626 = vld [vmem:[%s219 + $0x21] sm:$0xff]
      %v627 = vld [vmem:[%s219 + $0x31] sm:$0xff]
      %v628 = vld [vmem:[%s219 + $0x39] sm:$0xff]
      %v629 = vld [vmem:[%s219 + $0x49] sm:$0xff]
      %v630 = vld [vmem:[%s219 + $0x51] sm:$0xff]
      %v631 = vld [vmem:[%s219 + $0x61] sm:$0xff]
      %v632 = vld [vmem:[%s219 + $0x69] sm:$0xff]
      %v633 = vld [vmem:[%s219 + $0x79] sm:$0xff]
      %v634 = vld [vmem:[%s219 + $0x81] sm:$0xff]
      %v635 = vld [vmem:[%s219 + $0x91] sm:$0xff]
      %v636 = vld [vmem:[%s219 + $0x99] sm:$0xff]
      %v637 = vld [vmem:[%s219 + $0xa9] sm:$0xff]
      %v638 = vld [vmem:[%s219 + $0xb1] sm:$0xff]
      %v639 = vld [vmem:[%s219 + $0xc1] sm:$0xff]
      %v640 = vld [vmem:[%s219 + $0xc9] sm:$0xff]
      %v641 = vld [vmem:[%s219 + $0xd9] sm:$0xff]
      %v642 = vld [vmem:[%s219 + $0xe1] sm:$0xff]
      %v643 = vld [vmem:[%s219 + $0xf1] sm:$0xff]
      %v644 = vld [vmem:[%s219 + $0xf9] sm:$0xff]
      %v645 = vld [vmem:[%s219 + $0x109] sm:$0xff]
      %v646 = vld [vmem:[%s219 + $0x111] sm:$0xff]
      %v647 = vld [vmem:[%s219 + $0x121] sm:$0xff]
      %v648 = vld [vmem:[%s219 + $0x129] sm:$0xff]
      %v649 = vld [vmem:[%s219 + $0x139] sm:$0xff]
      %v650 = vld [vmem:[%s219 + $0x141] sm:$0xff]
      %v651 = vld [vmem:[%s219 + $0x151] sm:$0xff]
      %v652 = vld [vmem:[%s219 + $0x159] sm:$0xff]
      %v653 = vld [vmem:[%s219 + $0x169] sm:$0xff]
      %v654 = vld [vmem:[%s219 + $0x171] sm:$0xff]
      %s655 = scalar_lea.vmem %s1, 4
      %v656 = vld [vmem:[%s655] sm:$0xf]
      %v658 = vsel %vm265, %v623, 0
      %v661 = vsel %vm265, %v624, 0
      %v664 = vsel %vm265, %v625, 0
      %v667 = vsel %vm265, %v626, 0
      %v670 = vsel %vm265, %v627, 0
      %v673 = vsel %vm265, %v628, 0
      %v676 = vsel %vm265, %v629, 0
      %v679 = vsel %vm265, %v630, 0
      %v682 = vsel %vm265, %v631, 0
      %v685 = vsel %vm265, %v632, 0
      %v688 = vsel %vm265, %v633, 0
      %v691 = vsel %vm265, %v634, 0
      %v694 = vsel %vm265, %v635, 0
      %v697 = vsel %vm265, %v636, 0
      %v700 = vsel %vm265, %v637, 0
      %v703 = vsel %vm265, %v638, 0
      %v706 = vsel %vm265, %v639, 0
      %v709 = vsel %vm265, %v640, 0
      %v712 = vsel %vm265, %v641, 0
      %v715 = vsel %vm265, %v642, 0
      %v718 = vsel %vm265, %v643, 0
      %v721 = vsel %vm265, %v644, 0
      %v724 = vsel %vm265, %v645, 0
      %v727 = vsel %vm265, %v646, 0
      %v730 = vsel %vm265, %v647, 0
      %v733 = vsel %vm265, %v648, 0
      %v736 = vsel %vm265, %v649, 0
      %v739 = vsel %vm265, %v650, 0
      %v742 = vsel %vm265, %v651, 0
      %v745 = vsel %vm265, %v652, 0
      %v748 = vsel %vm265, %v653, 0
      %v751 = vsel %vm265, %v654, 0
      %v754 = vsel %vm362, %v656, 0
      %756 = vmatprep.subr.mxu0 0.0
      %757 = vmatpush1.msra.mxu0 %v754
      %758 = vmatprep.subr.mxu0 0.0
      %759 = vmatpush1.msra.mxu0 0.0
      %760 = vmatprep.subr.mxu0 0.0
      %761 = vmatpush1.msra.mxu0 0.0
      %762 = vmatprep.subr.mxu0 0.0
      %763 = vmatpush1.msra.mxu0 0.0
      %764 = vmatprep.subr.mxu0 0.0
      %765 = vmatpush1.msra.mxu0 0.0
      %766 = vmatprep.subr.mxu0 0.0
      %767 = vmatpush1.msra.mxu0 0.0
      %768 = vmatprep.subr.mxu0 0.0
      %769 = vmatpush1.msra.mxu0 0.0
      %770 = vmatprep.subr.mxu0 0.0
      %771 = vmatpush1.msra.mxu0 0.0
      %772 = vmatprep.subr.mxu0 0.0
      %773 = vmatpush1.msra.mxu0 0.0
      %774 = vmatprep.subr.mxu0 0.0
      %775 = vmatpush1.msra.mxu0 0.0
      %776 = vmatprep.subr.mxu0 0.0
      %777 = vmatpush1.msra.mxu0 0.0
      %778 = vmatprep.subr.mxu0 0.0
      %779 = vmatpush1.msra.mxu0 0.0
      %780 = vmatprep.subr.mxu0 0.0
      %781 = vmatpush1.msra.mxu0 0.0
      %782 = vmatprep.subr.mxu0 0.0
      %783 = vmatpush1.msra.mxu0 0.0
      %784 = vmatprep.subr.mxu0 0.0
      %785 = vmatpush1.msra.mxu0 0.0
      %786 = vmatprep.subr.mxu0 0.0
      %787 = vmatpush1.msra.mxu0 0.0
      %788 = vmatprep.subr.mxu0 0.0
      %789 = vmatpush1.msra.mxu0 0.0
      %790 = vmatprep.subr.mxu0 0.0
      %791 = vmatpush1.msra.mxu0 0.0
      %792 = vmatprep.subr.mxu0 0.0
      %793 = vmatpush1.msra.mxu0 0.0
      %794 = vmatprep.subr.mxu0 0.0
      %795 = vmatpush1.msra.mxu0 0.0
      %796 = vmatprep.subr.mxu0 0.0
      %797 = vmatpush1.msra.mxu0 0.0
      %798 = vmatprep.subr.mxu0 0.0
      %799 = vmatpush1.msra.mxu0 0.0
      %800 = vmatprep.subr.mxu0 0.0
      %801 = vmatpush1.msra.mxu0 0.0
      %802 = vmatprep.subr.mxu0 0.0
      %803 = vmatpush1.msra.mxu0 0.0
      %804 = vmatprep.subr.mxu0 0.0
      %805 = vmatpush1.msra.mxu0 0.0
      %806 = vmatprep.subr.mxu0 0.0
      %807 = vmatpush1.msra.mxu0 0.0
      %808 = vmatprep.subr.mxu0 0.0
      %809 = vmatpush1.msra.mxu0 0.0
      %810 = vmatprep.subr.mxu0 0.0
      %811 = vmatpush1.msra.mxu0 0.0
      %812 = vmatprep.subr.mxu0 0.0
      %813 = vmatpush1.msra.mxu0 0.0
      %814 = vmatprep.subr.mxu0 0.0
      %815 = vmatpush1.msra.mxu0 0.0
      %816 = vmatprep.subr.mxu0 0.0
      %817 = vmatpush1.msra.mxu0 0.0
      %818 = vmatprep.subr.mxu0 0.0
      %819 = vmatpush1.msra.mxu0 0.0
      %820 = vmatprep.mubr.f32.mxu0 0.0
      %821 = vmatmul.mubr.f32.gmra.mrb[0].mxu0 %v658
      %v822 = vpop.f32.mrb[0].mxu0
      %v823 = vadd.f32 0.0, %v822
      %v824 = vpop.f32.mrb[0].mxu0
      %825 = vmatprep.mubr.f32.mxu0 0.0
      %826 = vmatmul.mubr.f32.gmra.mrb[0].mxu0 %v661
      %v827 = vpop.f32.mrb[0].mxu0
      %v828 = vadd.f32 0.0, %v827
      %v829 = vpop.f32.mrb[0].mxu0
      %830 = vmatprep.mubr.f32.mxu0 0.0
      %831 = vmatmul.mubr.f32.gmra.mrb[0].mxu0 %v664
      %v832 = vpop.f32.mrb[0].mxu0
      %v833 = vadd.f32 0.0, %v832
      %v834 = vpop.f32.mrb[0].mxu0
      %835 = vmatprep.mubr.f32.mxu0 0.0
      %836 = vmatmul.mubr.f32.gmra.mrb[0].mxu0 %v667
      %v837 = vpop.f32.mrb[0].mxu0
      %v838 = vadd.f32 0.0, %v837
      %v839 = vpop.f32.mrb[0].mxu0
      %840 = vmatprep.mubr.f32.mxu0 0.0
      %841 = vmatmul.mubr.f32.gmra.mrb[0].mxu0 %v670
      %v842 = vpop.f32.mrb[0].mxu0
      %v843 = vadd.f32 0.0, %v842
      %v844 = vpop.f32.mrb[0].mxu0
      %845 = vmatprep.mubr.f32.mxu0 0.0
      %846 = vmatmul.mubr.f32.gmra.mrb[0].mxu0 %v673
      %v847 = vpop.f32.mrb[0].mxu0
      %v848 = vadd.f32 0.0, %v847
      %v849 = vpop.f32.mrb[0].mxu0
      %850 = vmatprep.mubr.f32.mxu0 0.0
      %851 = vmatmul.mubr.f32.gmra.mrb[0].mxu0 %v676
      %v852 = vpop.f32.mrb[0].mxu0
      %v853 = vadd.f32 0.0, %v852
      %v854 = vpop.f32.mrb[0].mxu0
      %855 = vmatprep.mubr.f32.mxu0 0.0
      %856 = vmatmul.mubr.f32.gmra.mrb[0].mxu0 %v679
      %v857 = vpop.f32.mrb[0].mxu0
      %v858 = vadd.f32 0.0, %v857
      %v859 = vpop.f32.mrb[0].mxu0
      %860 = vmatprep.mubr.f32.mxu0 0.0
      %861 = vmatmul.mubr.f32.gmra.mrb[0].mxu0 %v682
      %v862 = vpop.f32.mrb[0].mxu0
      %v863 = vadd.f32 0.0, %v862
      %v864 = vpop.f32.mrb[0].mxu0
      %865 = vmatprep.mubr.f32.mxu0 0.0
      %866 = vmatmul.mubr.f32.gmra.mrb[0].mxu0 %v685
      %v867 = vpop.f32.mrb[0].mxu0
      %v868 = vadd.f32 0.0, %v867
      %v869 = vpop.f32.mrb[0].mxu0
      %870 = vmatprep.mubr.f32.mxu0 0.0
      %871 = vmatmul.mubr.f32.gmra.mrb[0].mxu0 %v688
      %v872 = vpop.f32.mrb[0].mxu0
      %v873 = vadd.f32 0.0, %v872
      %v874 = vpop.f32.mrb[0].mxu0
      %875 = vmatprep.mubr.f32.mxu0 0.0
      %876 = vmatmul.mubr.f32.gmra.mrb[0].mxu0 %v691
      %v877 = vpop.f32.mrb[0].mxu0
      %v878 = vadd.f32 0.0, %v877
      %v879 = vpop.f32.mrb[0].mxu0
      %880 = vmatprep.mubr.f32.mxu0 0.0
      %881 = vmatmul.mubr.f32.gmra.mrb[0].mxu0 %v694
      %v882 = vpop.f32.mrb[0].mxu0
      %v883 = vadd.f32 0.0, %v882
      %v884 = vpop.f32.mrb[0].mxu0
      %885 = vmatprep.mubr.f32.mxu0 0.0
      %886 = vmatmul.mubr.f32.gmra.mrb[0].mxu0 %v697
      %v887 = vpop.f32.mrb[0].mxu0
      %v888 = vadd.f32 0.0, %v887
      %v889 = vpop.f32.mrb[0].mxu0
      %890 = vmatprep.mubr.f32.mxu0 0.0
      %891 = vmatmul.mubr.f32.gmra.mrb[0].mxu0 %v700
      %v892 = vpop.f32.mrb[0].mxu0
      %v893 = vadd.f32 0.0, %v892
      %v894 = vpop.f32.mrb[0].mxu0
      %895 = vmatprep.mubr.f32.mxu0 0.0
      %896 = vmatmul.mubr.f32.gmra.mrb[0].mxu0 %v703
      %v897 = vpop.f32.mrb[0].mxu0
      %v898 = vadd.f32 0.0, %v897
      %v899 = vpop.f32.mrb[0].mxu0
      %900 = vmatprep.mubr.f32.mxu0 0.0
      %901 = vmatmul.mubr.f32.gmra.mrb[0].mxu0 %v706
      %v902 = vpop.f32.mrb[0].mxu0
      %v903 = vadd.f32 0.0, %v902
      %v904 = vpop.f32.mrb[0].mxu0
      %905 = vmatprep.mubr.f32.mxu0 0.0
      %906 = vmatmul.mubr.f32.gmra.mrb[0].mxu0 %v709
      %v907 = vpop.f32.mrb[0].mxu0
      %v908 = vadd.f32 0.0, %v907
      %v909 = vpop.f32.mrb[0].mxu0
      %910 = vmatprep.mubr.f32.mxu0 0.0
      %911 = vmatmul.mubr.f32.gmra.mrb[0].mxu0 %v712
      %v912 = vpop.f32.mrb[0].mxu0
      %v913 = vadd.f32 0.0, %v912
      %v914 = vpop.f32.mrb[0].mxu0
      %915 = vmatprep.mubr.f32.mxu0 0.0
      %916 = vmatmul.mubr.f32.gmra.mrb[0].mxu0 %v715
      %v917 = vpop.f32.mrb[0].mxu0
      %v918 = vadd.f32 0.0, %v917
      %v919 = vpop.f32.mrb[0].mxu0
      %920 = vmatprep.mubr.f32.mxu0 0.0
      %921 = vmatmul.mubr.f32.gmra.mrb[0].mxu0 %v718
      %v922 = vpop.f32.mrb[0].mxu0
      %v923 = vadd.f32 0.0, %v922
      %v924 = vpop.f32.mrb[0].mxu0
      %925 = vmatprep.mubr.f32.mxu0 0.0
      %926 = vmatmul.mubr.f32.gmra.mrb[0].mxu0 %v721
      %v927 = vpop.f32.mrb[0].mxu0
      %v928 = vadd.f32 0.0, %v927
      %v929 = vpop.f32.mrb[0].mxu0
      %930 = vmatprep.mubr.f32.mxu0 0.0
      %931 = vmatmul.mubr.f32.gmra.mrb[0].mxu0 %v724
      %v932 = vpop.f32.mrb[0].mxu0
      %v933 = vadd.f32 0.0, %v932
      %v934 = vpop.f32.mrb[0].mxu0
      %935 = vmatprep.mubr.f32.mxu0 0.0
      %936 = vmatmul.mubr.f32.gmra.mrb[0].mxu0 %v727
      %v937 = vpop.f32.mrb[0].mxu0
      %v938 = vadd.f32 0.0, %v937
      %v939 = vpop.f32.mrb[0].mxu0
      %940 = vmatprep.mubr.f32.mxu0 0.0
      %941 = vmatmul.mubr.f32.gmra.mrb[0].mxu0 %v730
      %v942 = vpop.f32.mrb[0].mxu0
      %v943 = vadd.f32 0.0, %v942
      %v944 = vpop.f32.mrb[0].mxu0
      %945 = vmatprep.mubr.f32.mxu0 0.0
      %946 = vmatmul.mubr.f32.gmra.mrb[0].mxu0 %v733
      %v947 = vpop.f32.mrb[0].mxu0
      %v948 = vadd.f32 0.0, %v947
      %v949 = vpop.f32.mrb[0].mxu0
      %950 = vmatprep.mubr.f32.mxu0 0.0
      %951 = vmatmul.mubr.f32.gmra.mrb[0].mxu0 %v736
      %v952 = vpop.f32.mrb[0].mxu0
      %v953 = vadd.f32 0.0, %v952
      %v954 = vpop.f32.mrb[0].mxu0
      %955 = vmatprep.mubr.f32.mxu0 0.0
      %956 = vmatmul.mubr.f32.gmra.mrb[0].mxu0 %v739
      %v957 = vpop.f32.mrb[0].mxu0
      %v958 = vadd.f32 0.0, %v957
      %v959 = vpop.f32.mrb[0].mxu0
      %960 = vmatprep.mubr.f32.mxu0 0.0
      %961 = vmatmul.mubr.f32.gmra.mrb[0].mxu0 %v742
      %v962 = vpop.f32.mrb[0].mxu0
      %v963 = vadd.f32 0.0, %v962
      %v964 = vpop.f32.mrb[0].mxu0
      %965 = vmatprep.mubr.f32.mxu0 0.0
      %966 = vmatmul.mubr.f32.gmra.mrb[0].mxu0 %v745
      %v967 = vpop.f32.mrb[0].mxu0
      %v968 = vadd.f32 0.0, %v967
      %v969 = vpop.f32.mrb[0].mxu0
      %970 = vmatprep.mubr.f32.mxu0 0.0
      %971 = vmatmul.mubr.f32.gmra.mrb[0].mxu0 %v748
      %v972 = vpop.f32.mrb[0].mxu0
      %v973 = vadd.f32 0.0, %v972
      %v974 = vpop.f32.mrb[0].mxu0
      %975 = vmatprep.mubr.f32.mxu0 0.0
      %976 = vmatmul.mubr.f32.gmra.mrb[0].mxu0 %v751
      %v977 = vpop.f32.mrb[0].mxu0
      %v978 = vadd.f32 0.0, %v977
      %v979 = vpop.f32.mrb[0].mxu0
      %980 = vdwg.mxu0
      %v981 = vadd.f32 %v591, %v823
      %v982 = vadd.f32 %v592, %v828
      %v983 = vadd.f32 %v593, %v833
      %v984 = vadd.f32 %v594, %v838
      %v985 = vadd.f32 %v595, %v843
      %v986 = vadd.f32 %v596, %v848
      %v987 = vadd.f32 %v597, %v853
      %v988 = vadd.f32 %v598, %v858
      %v989 = vadd.f32 %v599, %v863
      %v990 = vadd.f32 %v600, %v868
      %v991 = vadd.f32 %v601, %v873
      %v992 = vadd.f32 %v602, %v878
      %v993 = vadd.f32 %v603, %v883
      %v994 = vadd.f32 %v604, %v888
      %v995 = vadd.f32 %v605, %v893
      %v996 = vadd.f32 %v606, %v898
      %v997 = vadd.f32 %v607, %v903
      %v998 = vadd.f32 %v608, %v908
      %v999 = vadd.f32 %v609, %v913
      %v1000 = vadd.f32 %v610, %v918
      %v1001 = vadd.f32 %v611, %v923
      %v1002 = vadd.f32 %v612, %v928
      %v1003 = vadd.f32 %v613, %v933
      %v1004 = vadd.f32 %v614, %v938
      %v1005 = vadd.f32 %v615, %v943
      %v1006 = vadd.f32 %v616, %v948
      %v1007 = vadd.f32 %v617, %v953
      %v1008 = vadd.f32 %v618, %v958
      %v1009 = vadd.f32 %v619, %v963
      %v1010 = vadd.f32 %v620, %v968
      %v1011 = vadd.f32 %v621, %v973
      %v1012 = vadd.f32 %v622, %v978
      %v1013 = vld [vmem:[%s219 + $0x2] sm:$0xff]
      %v1014 = vld [vmem:[%s219 + $0xa] sm:$0xff]
      %v1015 = vld [vmem:[%s219 + $0x1a] sm:$0xff]
      %v1016 = vld [vmem:[%s219 + $0x22] sm:$0xff]
      %v1017 = vld [vmem:[%s219 + $0x32] sm:$0xff]
      %v1018 = vld [vmem:[%s219 + $0x3a] sm:$0xff]
      %v1019 = vld [vmem:[%s219 + $0x4a] sm:$0xff]
      %v1020 = vld [vmem:[%s219 + $0x52] sm:$0xff]
      %v1021 = vld [vmem:[%s219 + $0x62] sm:$0xff]
      %v1022 = vld [vmem:[%s219 + $0x6a] sm:$0xff]
      %v1023 = vld [vmem:[%s219 + $0x7a] sm:$0xff]
      %v1024 = vld [vmem:[%s219 + $0x82] sm:$0xff]
      %v1025 = vld [vmem:[%s219 + $0x92] sm:$0xff]
      %v1026 = vld [vmem:[%s219 + $0x9a] sm:$0xff]
      %v1027 = vld [vmem:[%s219 + $0xaa] sm:$0xff]
      %v1028 = vld [vmem:[%s219 + $0xb2] sm:$0xff]
      %v1029 = vld [vmem:[%s219 + $0xc2] sm:$0xff]
      %v1030 = vld [vmem:[%s219 + $0xca] sm:$0xff]
      %v1031 = vld [vmem:[%s219 + $0xda] sm:$0xff]
      %v1032 = vld [vmem:[%s219 + $0xe2] sm:$0xff]
      %v1033 = vld [vmem:[%s219 + $0xf2] sm:$0xff]
      %v1034 = vld [vmem:[%s219 + $0xfa] sm:$0xff]
      %v1035 = vld [vmem:[%s219 + $0x10a] sm:$0xff]
      %v1036 = vld [vmem:[%s219 + $0x112] sm:$0xff]
      %v1037 = vld [vmem:[%s219 + $0x122] sm:$0xff]
      %v1038 = vld [vmem:[%s219 + $0x12a] sm:$0xff]
      %v1039 = vld [vmem:[%s219 + $0x13a] sm:$0xff]
      %v1040 = vld [vmem:[%s219 + $0x142] sm:$0xff]
      %v1041 = vld [vmem:[%s219 + $0x152] sm:$0xff]
      %v1042 = vld [vmem:[%s219 + $0x15a] sm:$0xff]
      %v1043 = vld [vmem:[%s219 + $0x16a] sm:$0xff]
      %v1044 = vld [vmem:[%s219 + $0x172] sm:$0xff]
      %s1045 = scalar_lea.vmem %s1, 8
      %v1046 = vld [vmem:[%s1045] sm:$0xf]
      %v1048 = vsel %vm265, %v1013, 0
      %v1051 = vsel %vm265, %v1014, 0
      %v1054 = vsel %vm265, %v1015, 0
      %v1057 = vsel %vm265, %v1016, 0
      %v1060 = vsel %vm265, %v1017, 0
      %v1063 = vsel %vm265, %v1018, 0
      %v1066 = vsel %vm265, %v1019, 0
      %v1069 = vsel %vm265, %v1020, 0
      %v1072 = vsel %vm265, %v1021, 0
      %v1075 = vsel %vm265, %v1022, 0
      %v1078 = vsel %vm265, %v1023, 0
      %v1081 = vsel %vm265, %v1024, 0
      %v1084 = vsel %vm265, %v1025, 0
      %v1087 = vsel %vm265, %v1026, 0
      %v1090 = vsel %vm265, %v1027, 0
      %v1093 = vsel %vm265, %v1028, 0
      %v1096 = vsel %vm265, %v1029, 0
      %v1099 = vsel %vm265, %v1030, 0
      %v1102 = vsel %vm265, %v1031, 0
      %v1105 = vsel %vm265, %v1032, 0
      %v1108 = vsel %vm265, %v1033, 0
      %v1111 = vsel %vm265, %v1034, 0
      %v1114 = vsel %vm265, %v1035, 0
      %v1117 = vsel %vm265, %v1036, 0
      %v1120 = vsel %vm265, %v1037, 0
      %v1123 = vsel %vm265, %v1038, 0
      %v1126 = vsel %vm265, %v1039, 0
      %v1129 = vsel %vm265, %v1040, 0
      %v1132 = vsel %vm265, %v1041, 0
      %v1135 = vsel %vm265, %v1042, 0
      %v1138 = vsel %vm265, %v1043, 0
      %v1141 = vsel %vm265, %v1044, 0
      %v1144 = vsel %vm362, %v1046, 0
      %1146 = vmatprep.subr.mxu0 0.0
      %1147 = vmatpush1.msra.mxu0 %v1144
      %1148 = vmatprep.subr.mxu0 0.0
      %1149 = vmatpush1.msra.mxu0 0.0
      %1150 = vmatprep.subr.mxu0 0.0
      %1151 = vmatpush1.msra.mxu0 0.0
      %1152 = vmatprep.subr.mxu0 0.0
      %1153 = vmatpush1.msra.mxu0 0.0
      %1154 = vmatprep.subr.mxu0 0.0
      %1155 = vmatpush1.msra.mxu0 0.0
      %1156 = vmatprep.subr.mxu0 0.0
      %1157 = vmatpush1.msra.mxu0 0.0
      %1158 = vmatprep.subr.mxu0 0.0
      %1159 = vmatpush1.msra.mxu0 0.0
      %1160 = vmatprep.subr.mxu0 0.0
      %1161 = vmatpush1.msra.mxu0 0.0
      %1162 = vmatprep.subr.mxu0 0.0
      %1163 = vmatpush1.msra.mxu0 0.0
      %1164 = vmatprep.subr.mxu0 0.0
      %1165 = vmatpush1.msra.mxu0 0.0
      %1166 = vmatprep.subr.mxu0 0.0
      %1167 = vmatpush1.msra.mxu0 0.0
      %1168 = vmatprep.subr.mxu0 0.0
      %1169 = vmatpush1.msra.mxu0 0.0
      %1170 = vmatprep.subr.mxu0 0.0
      %1171 = vmatpush1.msra.mxu0 0.0
      %1172 = vmatprep.subr.mxu0 0.0
      %1173 = vmatpush1.msra.mxu0 0.0
      %1174 = vmatprep.subr.mxu0 0.0
      %1175 = vmatpush1.msra.mxu0 0.0
      %1176 = vmatprep.subr.mxu0 0.0
      %1177 = vmatpush1.msra.mxu0 0.0
      %1178 = vmatprep.subr.mxu0 0.0
      %1179 = vmatpush1.msra.mxu0 0.0
      %1180 = vmatprep.subr.mxu0 0.0
      %1181 = vmatpush1.msra.mxu0 0.0
      %1182 = vmatprep.subr.mxu0 0.0
      %1183 = vmatpush1.msra.mxu0 0.0
      %1184 = vmatprep.subr.mxu0 0.0
      %1185 = vmatpush1.msra.mxu0 0.0
      %1186 = vmatprep.subr.mxu0 0.0
      %1187 = vmatpush1.msra.mxu0 0.0
      %1188 = vmatprep.subr.mxu0 0.0
      %1189 = vmatpush1.msra.mxu0 0.0
      %1190 = vmatprep.subr.mxu0 0.0
      %1191 = vmatpush1.msra.mxu0 0.0
      %1192 = vmatprep.subr.mxu0 0.0
      %1193 = vmatpush1.msra.mxu0 0.0
      %1194 = vmatprep.subr.mxu0 0.0
      %1195 = vmatpush1.msra.mxu0 0.0
      %1196 = vmatprep.subr.mxu0 0.0
      %1197 = vmatpush1.msra.mxu0 0.0
      %1198 = vmatprep.subr.mxu0 0.0
      %1199 = vmatpush1.msra.mxu0 0.0
      %1200 = vmatprep.subr.mxu0 0.0
      %1201 = vmatpush1.msra.mxu0 0.0
      %1202 = vmatprep.subr.mxu0 0.0
      %1203 = vmatpush1.msra.mxu0 0.0
      %1204 = vmatprep.subr.mxu0 0.0
      %1205 = vmatpush1.msra.mxu0 0.0
      %1206 = vmatprep.subr.mxu0 0.0
      %1207 = vmatpush1.msra.mxu0 0.0
      %1208 = vmatprep.subr.mxu0 0.0
      %1209 = vmatpush1.msra.mxu0 0.0
      %1210 = vmatprep.mubr.f32.mxu0 0.0
      %1211 = vmatmul.mubr.f32.gmra.mrb[0].mxu0 %v1048
      %v1212 = vpop.f32.mrb[0].mxu0
      %v1213 = vadd.f32 0.0, %v1212
      %v1214 = vpop.f32.mrb[0].mxu0
      %1215 = vmatprep.mubr.f32.mxu0 0.0
      %1216 = vmatmul.mubr.f32.gmra.mrb[0].mxu0 %v1051
      %v1217 = vpop.f32.mrb[0].mxu0
      %v1218 = vadd.f32 0.0, %v1217
      %v1219 = vpop.f32.mrb[0].mxu0
      %1220 = vmatprep.mubr.f32.mxu0 0.0
      %1221 = vmatmul.mubr.f32.gmra.mrb[0].mxu0 %v1054
      %v1222 = vpop.f32.mrb[0].mxu0
      %v1223 = vadd.f32 0.0, %v1222
      %v1224 = vpop.f32.mrb[0].mxu0
      %1225 = vmatprep.mubr.f32.mxu0 0.0
      %1226 = vmatmul.mubr.f32.gmra.mrb[0].mxu0 %v1057
      %v1227 = vpop.f32.mrb[0].mxu0
      %v1228 = vadd.f32 0.0, %v1227
      %v1229 = vpop.f32.mrb[0].mxu0
      %1230 = vmatprep.mubr.f32.mxu0 0.0
      %1231 = vmatmul.mubr.f32.gmra.mrb[0].mxu0 %v1060
      %v1232 = vpop.f32.mrb[0].mxu0
      %v1233 = vadd.f32 0.0, %v1232
      %v1234 = vpop.f32.mrb[0].mxu0
      %1235 = vmatprep.mubr.f32.mxu0 0.0
      %1236 = vmatmul.mubr.f32.gmra.mrb[0].mxu0 %v1063
      %v1237 = vpop.f32.mrb[0].mxu0
      %v1238 = vadd.f32 0.0, %v1237
      %v1239 = vpop.f32.mrb[0].mxu0
      %1240 = vmatprep.mubr.f32.mxu0 0.0
      %1241 = vmatmul.mubr.f32.gmra.mrb[0].mxu0 %v1066
      %v1242 = vpop.f32.mrb[0].mxu0
      %v1243 = vadd.f32 0.0, %v1242
      %v1244 = vpop.f32.mrb[0].mxu0
      %1245 = vmatprep.mubr.f32.mxu0 0.0
      %1246 = vmatmul.mubr.f32.gmra.mrb[0].mxu0 %v1069
      %v1247 = vpop.f32.mrb[0].mxu0
      %v1248 = vadd.f32 0.0, %v1247
      %v1249 = vpop.f32.mrb[0].mxu0
      %1250 = vmatprep.mubr.f32.mxu0 0.0
      %1251 = vmatmul.mubr.f32.gmra.mrb[0].mxu0 %v1072
      %v1252 = vpop.f32.mrb[0].mxu0
      %v1253 = vadd.f32 0.0, %v1252
      %v1254 = vpop.f32.mrb[0].mxu0
      %1255 = vmatprep.mubr.f32.mxu0 0.0
      %1256 = vmatmul.mubr.f32.gmra.mrb[0].mxu0 %v1075
      %v1257 = vpop.f32.mrb[0].mxu0
      %v1258 = vadd.f32 0.0, %v1257
      %v1259 = vpop.f32.mrb[0].mxu0
      %1260 = vmatprep.mubr.f32.mxu0 0.0
      %1261 = vmatmul.mubr.f32.gmra.mrb[0].mxu0 %v1078
      %v1262 = vpop.f32.mrb[0].mxu0
      %v1263 = vadd.f32 0.0, %v1262
      %v1264 = vpop.f32.mrb[0].mxu0
      %1265 = vmatprep.mubr.f32.mxu0 0.0
      %1266 = vmatmul.mubr.f32.gmra.mrb[0].mxu0 %v1081
      %v1267 = vpop.f32.mrb[0].mxu0
      %v1268 = vadd.f32 0.0, %v1267
      %v1269 = vpop.f32.mrb[0].mxu0
      %1270 = vmatprep.mubr.f32.mxu0 0.0
      %1271 = vmatmul.mubr.f32.gmra.mrb[0].mxu0 %v1084
      %v1272 = vpop.f32.mrb[0].mxu0
      %v1273 = vadd.f32 0.0, %v1272
      %v1274 = vpop.f32.mrb[0].mxu0
      %1275 = vmatprep.mubr.f32.mxu0 0.0
      %1276 = vmatmul.mubr.f32.gmra.mrb[0].mxu0 %v1087
      %v1277 = vpop.f32.mrb[0].mxu0
      %v1278 = vadd.f32 0.0, %v1277
      %v1279 = vpop.f32.mrb[0].mxu0
      %1280 = vmatprep.mubr.f32.mxu0 0.0
      %1281 = vmatmul.mubr.f32.gmra.mrb[0].mxu0 %v1090
      %v1282 = vpop.f32.mrb[0].mxu0
      %v1283 = vadd.f32 0.0, %v1282
      %v1284 = vpop.f32.mrb[0].mxu0
      %1285 = vmatprep.mubr.f32.mxu0 0.0
      %1286 = vmatmul.mubr.f32.gmra.mrb[0].mxu0 %v1093
      %v1287 = vpop.f32.mrb[0].mxu0
      %v1288 = vadd.f32 0.0, %v1287
      %v1289 = vpop.f32.mrb[0].mxu0
      %1290 = vmatprep.mubr.f32.mxu0 0.0
      %1291 = vmatmul.mubr.f32.gmra.mrb[0].mxu0 %v1096
      %v1292 = vpop.f32.mrb[0].mxu0
      %v1293 = vadd.f32 0.0, %v1292
      %v1294 = vpop.f32.mrb[0].mxu0
      %1295 = vmatprep.mubr.f32.mxu0 0.0
      %1296 = vmatmul.mubr.f32.gmra.mrb[0].mxu0 %v1099
      %v1297 = vpop.f32.mrb[0].mxu0
      %v1298 = vadd.f32 0.0, %v1297
      %v1299 = vpop.f32.mrb[0].mxu0
      %1300 = vmatprep.mubr.f32.mxu0 0.0
      %1301 = vmatmul.mubr.f32.gmra.mrb[0].mxu0 %v1102
      %v1302 = vpop.f32.mrb[0].mxu0
      %v1303 = vadd.f32 0.0, %v1302
      %v1304 = vpop.f32.mrb[0].mxu0
      %1305 = vmatprep.mubr.f32.mxu0 0.0
      %1306 = vmatmul.mubr.f32.gmra.mrb[0].mxu0 %v1105
      %v1307 = vpop.f32.mrb[0].mxu0
      %v1308 = vadd.f32 0.0, %v1307
      %v1309 = vpop.f32.mrb[0].mxu0
      %1310 = vmatprep.mubr.f32.mxu0 0.0
      %1311 = vmatmul.mubr.f32.gmra.mrb[0].mxu0 %v1108
      %v1312 = vpop.f32.mrb[0].mxu0
      %v1313 = vadd.f32 0.0, %v1312
      %v1314 = vpop.f32.mrb[0].mxu0
      %1315 = vmatprep.mubr.f32.mxu0 0.0
      %1316 = vmatmul.mubr.f32.gmra.mrb[0].mxu0 %v1111
      %v1317 = vpop.f32.mrb[0].mxu0
      %v1318 = vadd.f32 0.0, %v1317
      %v1319 = vpop.f32.mrb[0].mxu0
      %1320 = vmatprep.mubr.f32.mxu0 0.0
      %1321 = vmatmul.mubr.f32.gmra.mrb[0].mxu0 %v1114
      %v1322 = vpop.f32.mrb[0].mxu0
      %v1323 = vadd.f32 0.0, %v1322
      %v1324 = vpop.f32.mrb[0].mxu0
      %1325 = vmatprep.mubr.f32.mxu0 0.0
      %1326 = vmatmul.mubr.f32.gmra.mrb[0].mxu0 %v1117
      %v1327 = vpop.f32.mrb[0].mxu0
      %v1328 = vadd.f32 0.0, %v1327
      %v1329 = vpop.f32.mrb[0].mxu0
      %1330 = vmatprep.mubr.f32.mxu0 0.0
      %1331 = vmatmul.mubr.f32.gmra.mrb[0].mxu0 %v1120
      %v1332 = vpop.f32.mrb[0].mxu0
      %v1333 = vadd.f32 0.0, %v1332
      %v1334 = vpop.f32.mrb[0].mxu0
      %1335 = vmatprep.mubr.f32.mxu0 0.0
      %1336 = vmatmul.mubr.f32.gmra.mrb[0].mxu0 %v1123
      %v1337 = vpop.f32.mrb[0].mxu0
      %v1338 = vadd.f32 0.0, %v1337
      %v1339 = vpop.f32.mrb[0].mxu0
      %1340 = vmatprep.mubr.f32.mxu0 0.0
      %1341 = vmatmul.mubr.f32.gmra.mrb[0].mxu0 %v1126
      %v1342 = vpop.f32.mrb[0].mxu0
      %v1343 = vadd.f32 0.0, %v1342
      %v1344 = vpop.f32.mrb[0].mxu0
      %1345 = vmatprep.mubr.f32.mxu0 0.0
      %1346 = vmatmul.mubr.f32.gmra.mrb[0].mxu0 %v1129
      %v1347 = vpop.f32.mrb[0].mxu0
      %v1348 = vadd.f32 0.0, %v1347
      %v1349 = vpop.f32.mrb[0].mxu0
      %1350 = vmatprep.mubr.f32.mxu0 0.0
      %1351 = vmatmul.mubr.f32.gmra.mrb[0].mxu0 %v1132
      %v1352 = vpop.f32.mrb[0].mxu0
      %v1353 = vadd.f32 0.0, %v1352
      %v1354 = vpop.f32.mrb[0].mxu0
      %1355 = vmatprep.mubr.f32.mxu0 0.0
      %1356 = vmatmul.mubr.f32.gmra.mrb[0].mxu0 %v1135
      %v1357 = vpop.f32.mrb[0].mxu0
      %v1358 = vadd.f32 0.0, %v1357
      %v1359 = vpop.f32.mrb[0].mxu0
      %1360 = vmatprep.mubr.f32.mxu0 0.0
      %1361 = vmatmul.mubr.f32.gmra.mrb[0].mxu0 %v1138
      %v1362 = vpop.f32.mrb[0].mxu0
      %v1363 = vadd.f32 0.0, %v1362
      %v1364 = vpop.f32.mrb[0].mxu0
      %1365 = vmatprep.mubr.f32.mxu0 0.0
      %1366 = vmatmul.mubr.f32.gmra.mrb[0].mxu0 %v1141
      %v1367 = vpop.f32.mrb[0].mxu0
      %v1368 = vadd.f32 0.0, %v1367
      %v1369 = vpop.f32.mrb[0].mxu0
      %1370 = vdwg.mxu0
      %v1371 = vadd.f32 %v981, %v1213
      %v1372 = vadd.f32 %v982, %v1218
      %v1373 = vadd.f32 %v983, %v1223
      %v1374 = vadd.f32 %v984, %v1228
      %v1375 = vadd.f32 %v985, %v1233
      %v1376 = vadd.f32 %v986, %v1238
      %v1377 = vadd.f32 %v987, %v1243
      %v1378 = vadd.f32 %v988, %v1248
      %v1379 = vadd.f32 %v989, %v1253
      %v1380 = vadd.f32 %v990, %v1258
      %v1381 = vadd.f32 %v991, %v1263
      %v1382 = vadd.f32 %v992, %v1268
      %v1383 = vadd.f32 %v993, %v1273
      %v1384 = vadd.f32 %v994, %v1278
      %v1385 = vadd.f32 %v995, %v1283
      %v1386 = vadd.f32 %v996, %v1288
      %v1387 = vadd.f32 %v997, %v1293
      %v1388 = vadd.f32 %v998, %v1298
      %v1389 = vadd.f32 %v999, %v1303
      %v1390 = vadd.f32 %v1000, %v1308
      %v1391 = vadd.f32 %v1001, %v1313
      %v1392 = vadd.f32 %v1002, %v1318
      %v1393 = vadd.f32 %v1003, %v1323
      %v1394 = vadd.f32 %v1004, %v1328
      %v1395 = vadd.f32 %v1005, %v1333
      %v1396 = vadd.f32 %v1006, %v1338
      %v1397 = vadd.f32 %v1007, %v1343
      %v1398 = vadd.f32 %v1008, %v1348
      %v1399 = vadd.f32 %v1009, %v1353
      %v1400 = vadd.f32 %v1010, %v1358
      %v1401 = vadd.f32 %v1011, %v1363
      %v1402 = vadd.f32 %v1012, %v1368
      %s1403 = scalar_lea.vmem %s219, 24
      %v1404 = vld [vmem:[%s1403] sm:$0xff]
      %v1405 = vld [vmem:[%s1403 + $0x8] sm:$0xff]
      %v1406 = vld [vmem:[%s1403 + $0x18] sm:$0xff]
      %v1407 = vld [vmem:[%s1403 + $0x20] sm:$0xff]
      %v1408 = vld [vmem:[%s1403 + $0x30] sm:$0xff]
      %v1409 = vld [vmem:[%s1403 + $0x38] sm:$0xff]
      %v1410 = vld [vmem:[%s1403 + $0x48] sm:$0xff]
      %v1411 = vld [vmem:[%s1403 + $0x50] sm:$0xff]
      %v1412 = vld [vmem:[%s1403 + $0x60] sm:$0xff]
      %v1413 = vld [vmem:[%s1403 + $0x68] sm:$0xff]
      %v1414 = vld [vmem:[%s1403 + $0x78] sm:$0xff]
      %v1415 = vld [vmem:[%s1403 + $0x80] sm:$0xff]
      %v1416 = vld [vmem:[%s1403 + $0x90] sm:$0xff]
      %v1417 = vld [vmem:[%s1403 + $0x98] sm:$0xff]
      %v1418 = vld [vmem:[%s1403 + $0xa8] sm:$0xff]
      %v1419 = vld [vmem:[%s1403 + $0xb0] sm:$0xff]
      %v1420 = vld [vmem:[%s1403 + $0xc0] sm:$0xff]
      %v1421 = vld [vmem:[%s1403 + $0xc8] sm:$0xff]
      %v1422 = vld [vmem:[%s1403 + $0xd8] sm:$0xff]
      %v1423 = vld [vmem:[%s1403 + $0xe0] sm:$0xff]
      %v1424 = vld [vmem:[%s1403 + $0xf0] sm:$0xff]
      %v1425 = vld [vmem:[%s1403 + $0xf8] sm:$0xff]
      %v1426 = vld [vmem:[%s1403 + $0x108] sm:$0xff]
      %v1427 = vld [vmem:[%s1403 + $0x110] sm:$0xff]
      %v1428 = vld [vmem:[%s1403 + $0x120] sm:$0xff]
      %v1429 = vld [vmem:[%s1403 + $0x128] sm:$0xff]
      %v1430 = vld [vmem:[%s1403 + $0x138] sm:$0xff]
      %v1431 = vld [vmem:[%s1403 + $0x140] sm:$0xff]
      %v1432 = vld [vmem:[%s1403 + $0x150] sm:$0xff]
      %v1433 = vld [vmem:[%s1403 + $0x158] sm:$0xff]
      %v1434 = vld [vmem:[%s1403 + $0x168] sm:$0xff]
      %v1435 = vld [vmem:[%s1403 + $0x170] sm:$0xff]
      %s1436 = scalar_lea.vmem %s1, 12
      %v1437 = vld [vmem:[%s1436] sm:$0xf]
      %v1439 = vsel %vm265, %v1404, 0
      %v1442 = vsel %vm265, %v1405, 0
      %v1445 = vsel %vm265, %v1406, 0
      %v1448 = vsel %vm265, %v1407, 0
      %v1451 = vsel %vm265, %v1408, 0
      %v1454 = vsel %vm265, %v1409, 0
      %v1457 = vsel %vm265, %v1410, 0
      %v1460 = vsel %vm265, %v1411, 0
      %v1463 = vsel %vm265, %v1412, 0
      %v1466 = vsel %vm265, %v1413, 0
      %v1469 = vsel %vm265, %v1414, 0
      %v1472 = vsel %vm265, %v1415, 0
      %v1475 = vsel %vm265, %v1416, 0
      %v1478 = vsel %vm265, %v1417, 0
      %v1481 = vsel %vm265, %v1418, 0
      %v1484 = vsel %vm265, %v1419, 0
      %v1487 = vsel %vm265, %v1420, 0
      %v1490 = vsel %vm265, %v1421, 0
      %v1493 = vsel %vm265, %v1422, 0
      %v1496 = vsel %vm265, %v1423, 0
      %v1499 = vsel %vm265, %v1424, 0
      %v1502 = vsel %vm265, %v1425, 0
      %v1505 = vsel %vm265, %v1426, 0
      %v1508 = vsel %vm265, %v1427, 0
      %v1511 = vsel %vm265, %v1428, 0
      %v1514 = vsel %vm265, %v1429, 0
      %v1517 = vsel %vm265, %v1430, 0
      %v1520 = vsel %vm265, %v1431, 0
      %v1523 = vsel %vm265, %v1432, 0
      %v1526 = vsel %vm265, %v1433, 0
      %v1529 = vsel %vm265, %v1434, 0
      %v1532 = vsel %vm265, %v1435, 0
      %v1535 = vsel %vm362, %v1437, 0
      %1537 = vmatprep.subr.mxu0 0.0
      %1538 = vmatpush1.msra.mxu0 %v1535
      %1539 = vmatprep.subr.mxu0 0.0
      %1540 = vmatpush1.msra.mxu0 0.0
      %1541 = vmatprep.subr.mxu0 0.0
      %1542 = vmatpush1.msra.mxu0 0.0
      %1543 = vmatprep.subr.mxu0 0.0
      %1544 = vmatpush1.msra.mxu0 0.0
      %1545 = vmatprep.subr.mxu0 0.0
      %1546 = vmatpush1.msra.mxu0 0.0
      %1547 = vmatprep.subr.mxu0 0.0
      %1548 = vmatpush1.msra.mxu0 0.0
      %1549 = vmatprep.subr.mxu0 0.0
      %1550 = vmatpush1.msra.mxu0 0.0
      %1551 = vmatprep.subr.mxu0 0.0
      %1552 = vmatpush1.msra.mxu0 0.0
      %1553 = vmatprep.subr.mxu0 0.0
      %1554 = vmatpush1.msra.mxu0 0.0
      %1555 = vmatprep.subr.mxu0 0.0
      %1556 = vmatpush1.msra.mxu0 0.0
      %1557 = vmatprep.subr.mxu0 0.0
      %1558 = vmatpush1.msra.mxu0 0.0
      %1559 = vmatprep.subr.mxu0 0.0
      %1560 = vmatpush1.msra.mxu0 0.0
      %1561 = vmatprep.subr.mxu0 0.0
      %1562 = vmatpush1.msra.mxu0 0.0
      %1563 = vmatprep.subr.mxu0 0.0
      %1564 = vmatpush1.msra.mxu0 0.0
      %1565 = vmatprep.subr.mxu0 0.0
      %1566 = vmatpush1.msra.mxu0 0.0
      %1567 = vmatprep.subr.mxu0 0.0
      %1568 = vmatpush1.msra.mxu0 0.0
      %1569 = vmatprep.subr.mxu0 0.0
      %1570 = vmatpush1.msra.mxu0 0.0
      %1571 = vmatprep.subr.mxu0 0.0
      %1572 = vmatpush1.msra.mxu0 0.0
      %1573 = vmatprep.subr.mxu0 0.0
      %1574 = vmatpush1.msra.mxu0 0.0
      %1575 = vmatprep.subr.mxu0 0.0
      %1576 = vmatpush1.msra.mxu0 0.0
      %1577 = vmatprep.subr.mxu0 0.0
      %1578 = vmatpush1.msra.mxu0 0.0
      %1579 = vmatprep.subr.mxu0 0.0
      %1580 = vmatpush1.msra.mxu0 0.0
      %1581 = vmatprep.subr.mxu0 0.0
      %1582 = vmatpush1.msra.mxu0 0.0
      %1583 = vmatprep.subr.mxu0 0.0
      %1584 = vmatpush1.msra.mxu0 0.0
      %1585 = vmatprep.subr.mxu0 0.0
      %1586 = vmatpush1.msra.mxu0 0.0
      %1587 = vmatprep.subr.mxu0 0.0
      %1588 = vmatpush1.msra.mxu0 0.0
      %1589 = vmatprep.subr.mxu0 0.0
      %1590 = vmatpush1.msra.mxu0 0.0
      %1591 = vmatprep.subr.mxu0 0.0
      %1592 = vmatpush1.msra.mxu0 0.0
      %1593 = vmatprep.subr.mxu0 0.0
      %1594 = vmatpush1.msra.mxu0 0.0
      %1595 = vmatprep.subr.mxu0 0.0
      %1596 = vmatpush1.msra.mxu0 0.0
      %1597 = vmatprep.subr.mxu0 0.0
      %1598 = vmatpush1.msra.mxu0 0.0
      %1599 = vmatprep.subr.mxu0 0.0
      %1600 = vmatpush1.msra.mxu0 0.0
      %1601 = vmatprep.mubr.f32.mxu0 0.0
      %1602 = vmatmul.mubr.f32.gmra.mrb[0].mxu0 %v1439
      %v1603 = vpop.f32.mrb[0].mxu0
      %v1604 = vadd.f32 0.0, %v1603
      %v1605 = vpop.f32.mrb[0].mxu0
      %1606 = vmatprep.mubr.f32.mxu0 0.0
      %1607 = vmatmul.mubr.f32.gmra.mrb[0].mxu0 %v1442
      %v1608 = vpop.f32.mrb[0].mxu0
      %v1609 = vadd.f32 0.0, %v1608
      %v1610 = vpop.f32.mrb[0].mxu0
      %1611 = vmatprep.mubr.f32.mxu0 0.0
      %1612 = vmatmul.mubr.f32.gmra.mrb[0].mxu0 %v1445
      %v1613 = vpop.f32.mrb[0].mxu0
      %v1614 = vadd.f32 0.0, %v1613
      %v1615 = vpop.f32.mrb[0].mxu0
      %1616 = vmatprep.mubr.f32.mxu0 0.0
      %1617 = vmatmul.mubr.f32.gmra.mrb[0].mxu0 %v1448
      %v1618 = vpop.f32.mrb[0].mxu0
      %v1619 = vadd.f32 0.0, %v1618
      %v1620 = vpop.f32.mrb[0].mxu0
      %1621 = vmatprep.mubr.f32.mxu0 0.0
      %1622 = vmatmul.mubr.f32.gmra.mrb[0].mxu0 %v1451
      %v1623 = vpop.f32.mrb[0].mxu0
      %v1624 = vadd.f32 0.0, %v1623
      %v1625 = vpop.f32.mrb[0].mxu0
      %1626 = vmatprep.mubr.f32.mxu0 0.0
      %1627 = vmatmul.mubr.f32.gmra.mrb[0].mxu0 %v1454
      %v1628 = vpop.f32.mrb[0].mxu0
      %v1629 = vadd.f32 0.0, %v1628
      %v1630 = vpop.f32.mrb[0].mxu0
      %1631 = vmatprep.mubr.f32.mxu0 0.0
      %1632 = vmatmul.mubr.f32.gmra.mrb[0].mxu0 %v1457
      %v1633 = vpop.f32.mrb[0].mxu0
      %v1634 = vadd.f32 0.0, %v1633
      %v1635 = vpop.f32.mrb[0].mxu0
      %1636 = vmatprep.mubr.f32.mxu0 0.0
      %1637 = vmatmul.mubr.f32.gmra.mrb[0].mxu0 %v1460
      %v1638 = vpop.f32.mrb[0].mxu0
      %v1639 = vadd.f32 0.0, %v1638
      %v1640 = vpop.f32.mrb[0].mxu0
      %1641 = vmatprep.mubr.f32.mxu0 0.0
      %1642 = vmatmul.mubr.f32.gmra.mrb[0].mxu0 %v1463
      %v1643 = vpop.f32.mrb[0].mxu0
      %v1644 = vadd.f32 0.0, %v1643
      %v1645 = vpop.f32.mrb[0].mxu0
      %1646 = vmatprep.mubr.f32.mxu0 0.0
      %1647 = vmatmul.mubr.f32.gmra.mrb[0].mxu0 %v1466
      %v1648 = vpop.f32.mrb[0].mxu0
      %v1649 = vadd.f32 0.0, %v1648
      %v1650 = vpop.f32.mrb[0].mxu0
      %1651 = vmatprep.mubr.f32.mxu0 0.0
      %1652 = vmatmul.mubr.f32.gmra.mrb[0].mxu0 %v1469
      %v1653 = vpop.f32.mrb[0].mxu0
      %v1654 = vadd.f32 0.0, %v1653
      %v1655 = vpop.f32.mrb[0].mxu0
      %1656 = vmatprep.mubr.f32.mxu0 0.0
      %1657 = vmatmul.mubr.f32.gmra.mrb[0].mxu0 %v1472
      %v1658 = vpop.f32.mrb[0].mxu0
      %v1659 = vadd.f32 0.0, %v1658
      %v1660 = vpop.f32.mrb[0].mxu0
      %1661 = vmatprep.mubr.f32.mxu0 0.0
      %1662 = vmatmul.mubr.f32.gmra.mrb[0].mxu0 %v1475
      %v1663 = vpop.f32.mrb[0].mxu0
      %v1664 = vadd.f32 0.0, %v1663
      %v1665 = vpop.f32.mrb[0].mxu0
      %1666 = vmatprep.mubr.f32.mxu0 0.0
      %1667 = vmatmul.mubr.f32.gmra.mrb[0].mxu0 %v1478
      %v1668 = vpop.f32.mrb[0].mxu0
      %v1669 = vadd.f32 0.0, %v1668
      %v1670 = vpop.f32.mrb[0].mxu0
      %1671 = vmatprep.mubr.f32.mxu0 0.0
      %1672 = vmatmul.mubr.f32.gmra.mrb[0].mxu0 %v1481
      %v1673 = vpop.f32.mrb[0].mxu0
      %v1674 = vadd.f32 0.0, %v1673
      %v1675 = vpop.f32.mrb[0].mxu0
      %1676 = vmatprep.mubr.f32.mxu0 0.0
      %1677 = vmatmul.mubr.f32.gmra.mrb[0].mxu0 %v1484
      %v1678 = vpop.f32.mrb[0].mxu0
      %v1679 = vadd.f32 0.0, %v1678
      %v1680 = vpop.f32.mrb[0].mxu0
      %1681 = vmatprep.mubr.f32.mxu0 0.0
      %1682 = vmatmul.mubr.f32.gmra.mrb[0].mxu0 %v1487
      %v1683 = vpop.f32.mrb[0].mxu0
      %v1684 = vadd.f32 0.0, %v1683
      %v1685 = vpop.f32.mrb[0].mxu0
      %1686 = vmatprep.mubr.f32.mxu0 0.0
      %1687 = vmatmul.mubr.f32.gmra.mrb[0].mxu0 %v1490
      %v1688 = vpop.f32.mrb[0].mxu0
      %v1689 = vadd.f32 0.0, %v1688
      %v1690 = vpop.f32.mrb[0].mxu0
      %1691 = vmatprep.mubr.f32.mxu0 0.0
      %1692 = vmatmul.mubr.f32.gmra.mrb[0].mxu0 %v1493
      %v1693 = vpop.f32.mrb[0].mxu0
      %v1694 = vadd.f32 0.0, %v1693
      %v1695 = vpop.f32.mrb[0].mxu0
      %1696 = vmatprep.mubr.f32.mxu0 0.0
      %1697 = vmatmul.mubr.f32.gmra.mrb[0].mxu0 %v1496
      %v1698 = vpop.f32.mrb[0].mxu0
      %v1699 = vadd.f32 0.0, %v1698
      %v1700 = vpop.f32.mrb[0].mxu0
      %1701 = vmatprep.mubr.f32.mxu0 0.0
      %1702 = vmatmul.mubr.f32.gmra.mrb[0].mxu0 %v1499
      %v1703 = vpop.f32.mrb[0].mxu0
      %v1704 = vadd.f32 0.0, %v1703
      %v1705 = vpop.f32.mrb[0].mxu0
      %1706 = vmatprep.mubr.f32.mxu0 0.0
      %1707 = vmatmul.mubr.f32.gmra.mrb[0].mxu0 %v1502
      %v1708 = vpop.f32.mrb[0].mxu0
      %v1709 = vadd.f32 0.0, %v1708
      %v1710 = vpop.f32.mrb[0].mxu0
      %1711 = vmatprep.mubr.f32.mxu0 0.0
      %1712 = vmatmul.mubr.f32.gmra.mrb[0].mxu0 %v1505
      %v1713 = vpop.f32.mrb[0].mxu0
      %v1714 = vadd.f32 0.0, %v1713
      %v1715 = vpop.f32.mrb[0].mxu0
      %1716 = vmatprep.mubr.f32.mxu0 0.0
      %1717 = vmatmul.mubr.f32.gmra.mrb[0].mxu0 %v1508
      %v1718 = vpop.f32.mrb[0].mxu0
      %v1719 = vadd.f32 0.0, %v1718
      %v1720 = vpop.f32.mrb[0].mxu0
      %1721 = vmatprep.mubr.f32.mxu0 0.0
      %1722 = vmatmul.mubr.f32.gmra.mrb[0].mxu0 %v1511
      %v1723 = vpop.f32.mrb[0].mxu0
      %v1724 = vadd.f32 0.0, %v1723
      %v1725 = vpop.f32.mrb[0].mxu0
      %1726 = vmatprep.mubr.f32.mxu0 0.0
      %1727 = vmatmul.mubr.f32.gmra.mrb[0].mxu0 %v1514
      %v1728 = vpop.f32.mrb[0].mxu0
      %v1729 = vadd.f32 0.0, %v1728
      %v1730 = vpop.f32.mrb[0].mxu0
      %1731 = vmatprep.mubr.f32.mxu0 0.0
      %1732 = vmatmul.mubr.f32.gmra.mrb[0].mxu0 %v1517
      %v1733 = vpop.f32.mrb[0].mxu0
      %v1734 = vadd.f32 0.0, %v1733
      %v1735 = vpop.f32.mrb[0].mxu0
      %1736 = vmatprep.mubr.f32.mxu0 0.0
      %1737 = vmatmul.mubr.f32.gmra.mrb[0].mxu0 %v1520
      %v1738 = vpop.f32.mrb[0].mxu0
      %v1739 = vadd.f32 0.0, %v1738
      %v1740 = vpop.f32.mrb[0].mxu0
      %1741 = vmatprep.mubr.f32.mxu0 0.0
      %1742 = vmatmul.mubr.f32.gmra.mrb[0].mxu0 %v1523
      %v1743 = vpop.f32.mrb[0].mxu0
      %v1744 = vadd.f32 0.0, %v1743
      %v1745 = vpop.f32.mrb[0].mxu0
      %1746 = vmatprep.mubr.f32.mxu0 0.0
      %1747 = vmatmul.mubr.f32.gmra.mrb[0].mxu0 %v1526
      %v1748 = vpop.f32.mrb[0].mxu0
      %v1749 = vadd.f32 0.0, %v1748
      %v1750 = vpop.f32.mrb[0].mxu0
      %1751 = vmatprep.mubr.f32.mxu0 0.0
      %1752 = vmatmul.mubr.f32.gmra.mrb[0].mxu0 %v1529
      %v1753 = vpop.f32.mrb[0].mxu0
      %v1754 = vadd.f32 0.0, %v1753
      %v1755 = vpop.f32.mrb[0].mxu0
      %1756 = vmatprep.mubr.f32.mxu0 0.0
      %1757 = vmatmul.mubr.f32.gmra.mrb[0].mxu0 %v1532
      %v1758 = vpop.f32.mrb[0].mxu0
      %v1759 = vadd.f32 0.0, %v1758
      %v1760 = vpop.f32.mrb[0].mxu0
      %1761 = vdwg.mxu0
      %v1762 = vadd.f32 %v1371, %v1604
      %v1763 = vadd.f32 %v1372, %v1609
      %v1764 = vadd.f32 %v1373, %v1614
      %v1765 = vadd.f32 %v1374, %v1619
      %v1766 = vadd.f32 %v1375, %v1624
      %v1767 = vadd.f32 %v1376, %v1629
      %v1768 = vadd.f32 %v1377, %v1634
      %v1769 = vadd.f32 %v1378, %v1639
      %v1770 = vadd.f32 %v1379, %v1644
      %v1771 = vadd.f32 %v1380, %v1649
      %v1772 = vadd.f32 %v1381, %v1654
      %v1773 = vadd.f32 %v1382, %v1659
      %v1774 = vadd.f32 %v1383, %v1664
      %v1775 = vadd.f32 %v1384, %v1669
      %v1776 = vadd.f32 %v1385, %v1674
      %v1777 = vadd.f32 %v1386, %v1679
      %v1778 = vadd.f32 %v1387, %v1684
      %v1779 = vadd.f32 %v1388, %v1689
      %v1780 = vadd.f32 %v1389, %v1694
      %v1781 = vadd.f32 %v1390, %v1699
      %v1782 = vadd.f32 %v1391, %v1704
      %v1783 = vadd.f32 %v1392, %v1709
      %v1784 = vadd.f32 %v1393, %v1714
      %v1785 = vadd.f32 %v1394, %v1719
      %v1786 = vadd.f32 %v1395, %v1724
      %v1787 = vadd.f32 %v1396, %v1729
      %v1788 = vadd.f32 %v1397, %v1734
      %v1789 = vadd.f32 %v1398, %v1739
      %v1790 = vadd.f32 %v1399, %v1744
      %v1791 = vadd.f32 %v1400, %v1749
      %v1792 = vadd.f32 %v1401, %v1754
      %v1793 = vadd.f32 %v1402, %v1759
      %v1794 = vld [vmem:[%s1403 + $0x1] sm:$0xff]
      %v1795 = vld [vmem:[%s1403 + $0x9] sm:$0xff]
      %v1796 = vld [vmem:[%s1403 + $0x19] sm:$0xff]
      %v1797 = vld [vmem:[%s1403 + $0x21] sm:$0xff]
      %v1798 = vld [vmem:[%s1403 + $0x31] sm:$0xff]
      %v1799 = vld [vmem:[%s1403 + $0x39] sm:$0xff]
      %v1800 = vld [vmem:[%s1403 + $0x49] sm:$0xff]
      %v1801 = vld [vmem:[%s1403 + $0x51] sm:$0xff]
      %v1802 = vld [vmem:[%s1403 + $0x61] sm:$0xff]
      %v1803 = vld [vmem:[%s1403 + $0x69] sm:$0xff]
      %v1804 = vld [vmem:[%s1403 + $0x79] sm:$0xff]
      %v1805 = vld [vmem:[%s1403 + $0x81] sm:$0xff]
      %v1806 = vld [vmem:[%s1403 + $0x91] sm:$0xff]
      %v1807 = vld [vmem:[%s1403 + $0x99] sm:$0xff]
      %v1808 = vld [vmem:[%s1403 + $0xa9] sm:$0xff]
      %v1809 = vld [vmem:[%s1403 + $0xb1] sm:$0xff]
      %v1810 = vld [vmem:[%s1403 + $0xc1] sm:$0xff]
      %v1811 = vld [vmem:[%s1403 + $0xc9] sm:$0xff]
      %v1812 = vld [vmem:[%s1403 + $0xd9] sm:$0xff]
      %v1813 = vld [vmem:[%s1403 + $0xe1] sm:$0xff]
      %v1814 = vld [vmem:[%s1403 + $0xf1] sm:$0xff]
      %v1815 = vld [vmem:[%s1403 + $0xf9] sm:$0xff]
      %v1816 = vld [vmem:[%s1403 + $0x109] sm:$0xff]
      %v1817 = vld [vmem:[%s1403 + $0x111] sm:$0xff]
      %v1818 = vld [vmem:[%s1403 + $0x121] sm:$0xff]
      %v1819 = vld [vmem:[%s1403 + $0x129] sm:$0xff]
      %v1820 = vld [vmem:[%s1403 + $0x139] sm:$0xff]
      %v1821 = vld [vmem:[%s1403 + $0x141] sm:$0xff]
      %v1822 = vld [vmem:[%s1403 + $0x151] sm:$0xff]
      %v1823 = vld [vmem:[%s1403 + $0x159] sm:$0xff]
      %v1824 = vld [vmem:[%s1403 + $0x169] sm:$0xff]
      %v1825 = vld [vmem:[%s1403 + $0x171] sm:$0xff]
      %s1826 = scalar_lea.vmem %s1, 16
      %v1827 = vld [vmem:[%s1826] sm:$0xf]
      %v1829 = vsel %vm265, %v1794, 0
      %v1832 = vsel %vm265, %v1795, 0
      %v1835 = vsel %vm265, %v1796, 0
      %v1838 = vsel %vm265, %v1797, 0
      %v1841 = vsel %vm265, %v1798, 0
      %v1844 = vsel %vm265, %v1799, 0
      %v1847 = vsel %vm265, %v1800, 0
      %v1850 = vsel %vm265, %v1801, 0
      %v1853 = vsel %vm265, %v1802, 0
      %v1856 = vsel %vm265, %v1803, 0
      %v1859 = vsel %vm265, %v1804, 0
      %v1862 = vsel %vm265, %v1805, 0
      %v1865 = vsel %vm265, %v1806, 0
      %v1868 = vsel %vm265, %v1807, 0
      %v1871 = vsel %vm265, %v1808, 0
      %v1874 = vsel %vm265, %v1809, 0
      %v1877 = vsel %vm265, %v1810, 0
      %v1880 = vsel %vm265, %v1811, 0
      %v1883 = vsel %vm265, %v1812, 0
      %v1886 = vsel %vm265, %v1813, 0
      %v1889 = vsel %vm265, %v1814, 0
      %v1892 = vsel %vm265, %v1815, 0
      %v1895 = vsel %vm265, %v1816, 0
      %v1898 = vsel %vm265, %v1817, 0
      %v1901 = vsel %vm265, %v1818, 0
      %v1904 = vsel %vm265, %v1819, 0
      %v1907 = vsel %vm265, %v1820, 0
      %v1910 = vsel %vm265, %v1821, 0
      %v1913 = vsel %vm265, %v1822, 0
      %v1916 = vsel %vm265, %v1823, 0
      %v1919 = vsel %vm265, %v1824, 0
      %v1922 = vsel %vm265, %v1825, 0
      %v1925 = vsel %vm362, %v1827, 0
      %1927 = vmatprep.subr.mxu0 0.0
      %1928 = vmatpush1.msra.mxu0 %v1925
      %1929 = vmatprep.subr.mxu0 0.0
      %1930 = vmatpush1.msra.mxu0 0.0
      %1931 = vmatprep.subr.mxu0 0.0
      %1932 = vmatpush1.msra.mxu0 0.0
      %1933 = vmatprep.subr.mxu0 0.0
      %1934 = vmatpush1.msra.mxu0 0.0
      %1935 = vmatprep.subr.mxu0 0.0
      %1936 = vmatpush1.msra.mxu0 0.0
      %1937 = vmatprep.subr.mxu0 0.0
      %1938 = vmatpush1.msra.mxu0 0.0
      %1939 = vmatprep.subr.mxu0 0.0
      %1940 = vmatpush1.msra.mxu0 0.0
      %1941 = vmatprep.subr.mxu0 0.0
      %1942 = vmatpush1.msra.mxu0 0.0
      %1943 = vmatprep.subr.mxu0 0.0
      %1944 = vmatpush1.msra.mxu0 0.0
      %1945 = vmatprep.subr.mxu0 0.0
      %1946 = vmatpush1.msra.mxu0 0.0
      %1947 = vmatprep.subr.mxu0 0.0
      %1948 = vmatpush1.msra.mxu0 0.0
      %1949 = vmatprep.subr.mxu0 0.0
      %1950 = vmatpush1.msra.mxu0 0.0
      %1951 = vmatprep.subr.mxu0 0.0
      %1952 = vmatpush1.msra.mxu0 0.0
      %1953 = vmatprep.subr.mxu0 0.0
      %1954 = vmatpush1.msra.mxu0 0.0
      %1955 = vmatprep.subr.mxu0 0.0
      %1956 = vmatpush1.msra.mxu0 0.0
      %1957 = vmatprep.subr.mxu0 0.0
      %1958 = vmatpush1.msra.mxu0 0.0
      %1959 = vmatprep.subr.mxu0 0.0
      %1960 = vmatpush1.msra.mxu0 0.0
      %1961 = vmatprep.subr.mxu0 0.0
      %1962 = vmatpush1.msra.mxu0 0.0
      %1963 = vmatprep.subr.mxu0 0.0
      %1964 = vmatpush1.msra.mxu0 0.0
      %1965 = vmatprep.subr.mxu0 0.0
      %1966 = vmatpush1.msra.mxu0 0.0
      %1967 = vmatprep.subr.mxu0 0.0
      %1968 = vmatpush1.msra.mxu0 0.0
      %1969 = vmatprep.subr.mxu0 0.0
      %1970 = vmatpush1.msra.mxu0 0.0
      %1971 = vmatprep.subr.mxu0 0.0
      %1972 = vmatpush1.msra.mxu0 0.0
      %1973 = vmatprep.subr.mxu0 0.0
      %1974 = vmatpush1.msra.mxu0 0.0
      %1975 = vmatprep.subr.mxu0 0.0
      %1976 = vmatpush1.msra.mxu0 0.0
      %1977 = vmatprep.subr.mxu0 0.0
      %1978 = vmatpush1.msra.mxu0 0.0
      %1979 = vmatprep.subr.mxu0 0.0
      %1980 = vmatpush1.msra.mxu0 0.0
      %1981 = vmatprep.subr.mxu0 0.0
      %1982 = vmatpush1.msra.mxu0 0.0
      %1983 = vmatprep.subr.mxu0 0.0
      %1984 = vmatpush1.msra.mxu0 0.0
      %1985 = vmatprep.subr.mxu0 0.0
      %1986 = vmatpush1.msra.mxu0 0.0
      %1987 = vmatprep.subr.mxu0 0.0
      %1988 = vmatpush1.msra.mxu0 0.0
      %1989 = vmatprep.subr.mxu0 0.0
      %1990 = vmatpush1.msra.mxu0 0.0
      %1991 = vmatprep.mubr.f32.mxu0 0.0
      %1992 = vmatmul.mubr.f32.gmra.mrb[0].mxu0 %v1829
      %v1993 = vpop.f32.mrb[0].mxu0
      %v1994 = vadd.f32 0.0, %v1993
      %v1995 = vpop.f32.mrb[0].mxu0
      %1996 = vmatprep.mubr.f32.mxu0 0.0
      %1997 = vmatmul.mubr.f32.gmra.mrb[0].mxu0 %v1832
      %v1998 = vpop.f32.mrb[0].mxu0
      %v1999 = vadd.f32 0.0, %v1998
      %v2000 = vpop.f32.mrb[0].mxu0
      %2001 = vmatprep.mubr.f32.mxu0 0.0
      %2002 = vmatmul.mubr.f32.gmra.mrb[0].mxu0 %v1835
      %v2003 = vpop.f32.mrb[0].mxu0
      %v2004 = vadd.f32 0.0, %v2003
      %v2005 = vpop.f32.mrb[0].mxu0
      %2006 = vmatprep.mubr.f32.mxu0 0.0
      %2007 = vmatmul.mubr.f32.gmra.mrb[0].mxu0 %v1838
      %v2008 = vpop.f32.mrb[0].mxu0
      %v2009 = vadd.f32 0.0, %v2008
      %v2010 = vpop.f32.mrb[0].mxu0
      %2011 = vmatprep.mubr.f32.mxu0 0.0
      %2012 = vmatmul.mubr.f32.gmra.mrb[0].mxu0 %v1841
      %v2013 = vpop.f32.mrb[0].mxu0
      %v2014 = vadd.f32 0.0, %v2013
      %v2015 = vpop.f32.mrb[0].mxu0
      %2016 = vmatprep.mubr.f32.mxu0 0.0
      %2017 = vmatmul.mubr.f32.gmra.mrb[0].mxu0 %v1844
      %v2018 = vpop.f32.mrb[0].mxu0
      %v2019 = vadd.f32 0.0, %v2018
      %v2020 = vpop.f32.mrb[0].mxu0
      %2021 = vmatprep.mubr.f32.mxu0 0.0
      %2022 = vmatmul.mubr.f32.gmra.mrb[0].mxu0 %v1847
      %v2023 = vpop.f32.mrb[0].mxu0
      %v2024 = vadd.f32 0.0, %v2023
      %v2025 = vpop.f32.mrb[0].mxu0
      %2026 = vmatprep.mubr.f32.mxu0 0.0
      %2027 = vmatmul.mubr.f32.gmra.mrb[0].mxu0 %v1850
      %v2028 = vpop.f32.mrb[0].mxu0
      %v2029 = vadd.f32 0.0, %v2028
      %v2030 = vpop.f32.mrb[0].mxu0
      %2031 = vmatprep.mubr.f32.mxu0 0.0
      %2032 = vmatmul.mubr.f32.gmra.mrb[0].mxu0 %v1853
      %v2033 = vpop.f32.mrb[0].mxu0
      %v2034 = vadd.f32 0.0, %v2033
      %v2035 = vpop.f32.mrb[0].mxu0
      %2036 = vmatprep.mubr.f32.mxu0 0.0
      %2037 = vmatmul.mubr.f32.gmra.mrb[0].mxu0 %v1856
      %v2038 = vpop.f32.mrb[0].mxu0
      %v2039 = vadd.f32 0.0, %v2038
      %v2040 = vpop.f32.mrb[0].mxu0
      %2041 = vmatprep.mubr.f32.mxu0 0.0
      %2042 = vmatmul.mubr.f32.gmra.mrb[0].mxu0 %v1859
      %v2043 = vpop.f32.mrb[0].mxu0
      %v2044 = vadd.f32 0.0, %v2043
      %v2045 = vpop.f32.mrb[0].mxu0
      %2046 = vmatprep.mubr.f32.mxu0 0.0
      %2047 = vmatmul.mubr.f32.gmra.mrb[0].mxu0 %v1862
      %v2048 = vpop.f32.mrb[0].mxu0
      %v2049 = vadd.f32 0.0, %v2048
      %v2050 = vpop.f32.mrb[0].mxu0
      %2051 = vmatprep.mubr.f32.mxu0 0.0
      %2052 = vmatmul.mubr.f32.gmra.mrb[0].mxu0 %v1865
      %v2053 = vpop.f32.mrb[0].mxu0
      %v2054 = vadd.f32 0.0, %v2053
      %v2055 = vpop.f32.mrb[0].mxu0
      %2056 = vmatprep.mubr.f32.mxu0 0.0
      %2057 = vmatmul.mubr.f32.gmra.mrb[0].mxu0 %v1868
      %v2058 = vpop.f32.mrb[0].mxu0
      %v2059 = vadd.f32 0.0, %v2058
      %v2060 = vpop.f32.mrb[0].mxu0
      %2061 = vmatprep.mubr.f32.mxu0 0.0
      %2062 = vmatmul.mubr.f32.gmra.mrb[0].mxu0 %v1871
      %v2063 = vpop.f32.mrb[0].mxu0
      %v2064 = vadd.f32 0.0, %v2063
      %v2065 = vpop.f32.mrb[0].mxu0
      %2066 = vmatprep.mubr.f32.mxu0 0.0
      %2067 = vmatmul.mubr.f32.gmra.mrb[0].mxu0 %v1874
      %v2068 = vpop.f32.mrb[0].mxu0
      %v2069 = vadd.f32 0.0, %v2068
      %v2070 = vpop.f32.mrb[0].mxu0
      %2071 = vmatprep.mubr.f32.mxu0 0.0
      %2072 = vmatmul.mubr.f32.gmra.mrb[0].mxu0 %v1877
      %v2073 = vpop.f32.mrb[0].mxu0
      %v2074 = vadd.f32 0.0, %v2073
      %v2075 = vpop.f32.mrb[0].mxu0
      %2076 = vmatprep.mubr.f32.mxu0 0.0
      %2077 = vmatmul.mubr.f32.gmra.mrb[0].mxu0 %v1880
      %v2078 = vpop.f32.mrb[0].mxu0
      %v2079 = vadd.f32 0.0, %v2078
      %v2080 = vpop.f32.mrb[0].mxu0
      %2081 = vmatprep.mubr.f32.mxu0 0.0
      %2082 = vmatmul.mubr.f32.gmra.mrb[0].mxu0 %v1883
      %v2083 = vpop.f32.mrb[0].mxu0
      %v2084 = vadd.f32 0.0, %v2083
      %v2085 = vpop.f32.mrb[0].mxu0
      %2086 = vmatprep.mubr.f32.mxu0 0.0
      %2087 = vmatmul.mubr.f32.gmra.mrb[0].mxu0 %v1886
      %v2088 = vpop.f32.mrb[0].mxu0
      %v2089 = vadd.f32 0.0, %v2088
      %v2090 = vpop.f32.mrb[0].mxu0
      %2091 = vmatprep.mubr.f32.mxu0 0.0
      %2092 = vmatmul.mubr.f32.gmra.mrb[0].mxu0 %v1889
      %v2093 = vpop.f32.mrb[0].mxu0
      %v2094 = vadd.f32 0.0, %v2093
      %v2095 = vpop.f32.mrb[0].mxu0
      %2096 = vmatprep.mubr.f32.mxu0 0.0
      %2097 = vmatmul.mubr.f32.gmra.mrb[0].mxu0 %v1892
      %v2098 = vpop.f32.mrb[0].mxu0
      %v2099 = vadd.f32 0.0, %v2098
      %v2100 = vpop.f32.mrb[0].mxu0
      %2101 = vmatprep.mubr.f32.mxu0 0.0
      %2102 = vmatmul.mubr.f32.gmra.mrb[0].mxu0 %v1895
      %v2103 = vpop.f32.mrb[0].mxu0
      %v2104 = vadd.f32 0.0, %v2103
      %v2105 = vpop.f32.mrb[0].mxu0
      %2106 = vmatprep.mubr.f32.mxu0 0.0
      %2107 = vmatmul.mubr.f32.gmra.mrb[0].mxu0 %v1898
      %v2108 = vpop.f32.mrb[0].mxu0
      %v2109 = vadd.f32 0.0, %v2108
      %v2110 = vpop.f32.mrb[0].mxu0
      %2111 = vmatprep.mubr.f32.mxu0 0.0
      %2112 = vmatmul.mubr.f32.gmra.mrb[0].mxu0 %v1901
      %v2113 = vpop.f32.mrb[0].mxu0
      %v2114 = vadd.f32 0.0, %v2113
      %v2115 = vpop.f32.mrb[0].mxu0
      %2116 = vmatprep.mubr.f32.mxu0 0.0
      %2117 = vmatmul.mubr.f32.gmra.mrb[0].mxu0 %v1904
      %v2118 = vpop.f32.mrb[0].mxu0
      %v2119 = vadd.f32 0.0, %v2118
      %v2120 = vpop.f32.mrb[0].mxu0
      %2121 = vmatprep.mubr.f32.mxu0 0.0
      %2122 = vmatmul.mubr.f32.gmra.mrb[0].mxu0 %v1907
      %v2123 = vpop.f32.mrb[0].mxu0
      %v2124 = vadd.f32 0.0, %v2123
      %v2125 = vpop.f32.mrb[0].mxu0
      %2126 = vmatprep.mubr.f32.mxu0 0.0
      %2127 = vmatmul.mubr.f32.gmra.mrb[0].mxu0 %v1910
      %v2128 = vpop.f32.mrb[0].mxu0
      %v2129 = vadd.f32 0.0, %v2128
      %v2130 = vpop.f32.mrb[0].mxu0
      %2131 = vmatprep.mubr.f32.mxu0 0.0
      %2132 = vmatmul.mubr.f32.gmra.mrb[0].mxu0 %v1913
      %v2133 = vpop.f32.mrb[0].mxu0
      %v2134 = vadd.f32 0.0, %v2133
      %v2135 = vpop.f32.mrb[0].mxu0
      %2136 = vmatprep.mubr.f32.mxu0 0.0
      %2137 = vmatmul.mubr.f32.gmra.mrb[0].mxu0 %v1916
      %v2138 = vpop.f32.mrb[0].mxu0
      %v2139 = vadd.f32 0.0, %v2138
      %v2140 = vpop.f32.mrb[0].mxu0
      %2141 = vmatprep.mubr.f32.mxu0 0.0
      %2142 = vmatmul.mubr.f32.gmra.mrb[0].mxu0 %v1919
      %v2143 = vpop.f32.mrb[0].mxu0
      %v2144 = vadd.f32 0.0, %v2143
      %v2145 = vpop.f32.mrb[0].mxu0
      %2146 = vmatprep.mubr.f32.mxu0 0.0
      %2147 = vmatmul.mubr.f32.gmra.mrb[0].mxu0 %v1922
      %v2148 = vpop.f32.mrb[0].mxu0
      %v2149 = vadd.f32 0.0, %v2148
      %v2150 = vpop.f32.mrb[0].mxu0
      %2151 = vdwg.mxu0
      %v2152 = vadd.f32 %v1762, %v1994
      %v2153 = vadd.f32 %v1763, %v1999
      %v2154 = vadd.f32 %v1764, %v2004
      %v2155 = vadd.f32 %v1765, %v2009
      %v2156 = vadd.f32 %v1766, %v2014
      %v2157 = vadd.f32 %v1767, %v2019
      %v2158 = vadd.f32 %v1768, %v2024
      %v2159 = vadd.f32 %v1769, %v2029
      %v2160 = vadd.f32 %v1770, %v2034
      %v2161 = vadd.f32 %v1771, %v2039
      %v2162 = vadd.f32 %v1772, %v2044
      %v2163 = vadd.f32 %v1773, %v2049
      %v2164 = vadd.f32 %v1774, %v2054
      %v2165 = vadd.f32 %v1775, %v2059
      %v2166 = vadd.f32 %v1776, %v2064
      %v2167 = vadd.f32 %v1777, %v2069
      %v2168 = vadd.f32 %v1778, %v2074
      %v2169 = vadd.f32 %v1779, %v2079
      %v2170 = vadd.f32 %v1780, %v2084
      %v2171 = vadd.f32 %v1781, %v2089
      %v2172 = vadd.f32 %v1782, %v2094
      %v2173 = vadd.f32 %v1783, %v2099
      %v2174 = vadd.f32 %v1784, %v2104
      %v2175 = vadd.f32 %v1785, %v2109
      %v2176 = vadd.f32 %v1786, %v2114
      %v2177 = vadd.f32 %v1787, %v2119
      %v2178 = vadd.f32 %v1788, %v2124
      %v2179 = vadd.f32 %v1789, %v2129
      %v2180 = vadd.f32 %v1790, %v2134
      %v2181 = vadd.f32 %v1791, %v2139
      %v2182 = vadd.f32 %v1792, %v2144
      %v2183 = vadd.f32 %v1793, %v2149
      %v2184 = vld [vmem:[%s1403 + $0x2] sm:$0xff]
      %v2185 = vld [vmem:[%s1403 + $0xa] sm:$0xff]
      %v2186 = vld [vmem:[%s1403 + $0x1a] sm:$0xff]
      %v2187 = vld [vmem:[%s1403 + $0x22] sm:$0xff]
      %v2188 = vld [vmem:[%s1403 + $0x32] sm:$0xff]
      %v2189 = vld [vmem:[%s1403 + $0x3a] sm:$0xff]
      %v2190 = vld [vmem:[%s1403 + $0x4a] sm:$0xff]
      %v2191 = vld [vmem:[%s1403 + $0x52] sm:$0xff]
      %v2192 = vld [vmem:[%s1403 + $0x62] sm:$0xff]
      %v2193 = vld [vmem:[%s1403 + $0x6a] sm:$0xff]
      %v2194 = vld [vmem:[%s1403 + $0x7a] sm:$0xff]
      %v2195 = vld [vmem:[%s1403 + $0x82] sm:$0xff]
      %v2196 = vld [vmem:[%s1403 + $0x92] sm:$0xff]
      %v2197 = vld [vmem:[%s1403 + $0x9a] sm:$0xff]
      %v2198 = vld [vmem:[%s1403 + $0xaa] sm:$0xff]
      %v2199 = vld [vmem:[%s1403 + $0xb2] sm:$0xff]
      %v2200 = vld [vmem:[%s1403 + $0xc2] sm:$0xff]
      %v2201 = vld [vmem:[%s1403 + $0xca] sm:$0xff]
      %v2202 = vld [vmem:[%s1403 + $0xda] sm:$0xff]
      %v2203 = vld [vmem:[%s1403 + $0xe2] sm:$0xff]
      %v2204 = vld [vmem:[%s1403 + $0xf2] sm:$0xff]
      %v2205 = vld [vmem:[%s1403 + $0xfa] sm:$0xff]
      %v2206 = vld [vmem:[%s1403 + $0x10a] sm:$0xff]
      %v2207 = vld [vmem:[%s1403 + $0x112] sm:$0xff]
      %v2208 = vld [vmem:[%s1403 + $0x122] sm:$0xff]
      %v2209 = vld [vmem:[%s1403 + $0x12a] sm:$0xff]
      %v2210 = vld [vmem:[%s1403 + $0x13a] sm:$0xff]
      %v2211 = vld [vmem:[%s1403 + $0x142] sm:$0xff]
      %v2212 = vld [vmem:[%s1403 + $0x152] sm:$0xff]
      %v2213 = vld [vmem:[%s1403 + $0x15a] sm:$0xff]
      %v2214 = vld [vmem:[%s1403 + $0x16a] sm:$0xff]
      %v2215 = vld [vmem:[%s1403 + $0x172] sm:$0xff]
      %s2216 = scalar_lea.vmem %s1, 20
      %v2217 = vld [vmem:[%s2216] sm:$0xf]
      %v2219 = vsel %vm265, %v2184, 0
      %v2222 = vsel %vm265, %v2185, 0
      %v2225 = vsel %vm265, %v2186, 0
      %v2228 = vsel %vm265, %v2187, 0
      %v2231 = vsel %vm265, %v2188, 0
      %v2234 = vsel %vm265, %v2189, 0
      %v2237 = vsel %vm265, %v2190, 0
      %v2240 = vsel %vm265, %v2191, 0
      %v2243 = vsel %vm265, %v2192, 0
      %v2246 = vsel %vm265, %v2193, 0
      %v2249 = vsel %vm265, %v2194, 0
      %v2252 = vsel %vm265, %v2195, 0
      %v2255 = vsel %vm265, %v2196, 0
      %v2258 = vsel %vm265, %v2197, 0
      %v2261 = vsel %vm265, %v2198, 0
      %v2264 = vsel %vm265, %v2199, 0
      %v2267 = vsel %vm265, %v2200, 0
      %v2270 = vsel %vm265, %v2201, 0
      %v2273 = vsel %vm265, %v2202, 0
      %v2276 = vsel %vm265, %v2203, 0
      %v2279 = vsel %vm265, %v2204, 0
      %v2282 = vsel %vm265, %v2205, 0
      %v2285 = vsel %vm265, %v2206, 0
      %v2288 = vsel %vm265, %v2207, 0
      %v2291 = vsel %vm265, %v2208, 0
      %v2294 = vsel %vm265, %v2209, 0
      %v2297 = vsel %vm265, %v2210, 0
      %v2300 = vsel %vm265, %v2211, 0
      %v2303 = vsel %vm265, %v2212, 0
      %v2306 = vsel %vm265, %v2213, 0
      %v2309 = vsel %vm265, %v2214, 0
      %v2312 = vsel %vm265, %v2215, 0
      %v2315 = vsel %vm362, %v2217, 0
      %2317 = vmatprep.subr.mxu0 0.0
      %2318 = vmatpush1.msra.mxu0 %v2315
      %2319 = vmatprep.subr.mxu0 0.0
      %2320 = vmatpush1.msra.mxu0 0.0
      %2321 = vmatprep.subr.mxu0 0.0
      %2322 = vmatpush1.msra.mxu0 0.0
      %2323 = vmatprep.subr.mxu0 0.0
      %2324 = vmatpush1.msra.mxu0 0.0
      %2325 = vmatprep.subr.mxu0 0.0
      %2326 = vmatpush1.msra.mxu0 0.0
      %2327 = vmatprep.subr.mxu0 0.0
      %2328 = vmatpush1.msra.mxu0 0.0
      %2329 = vmatprep.subr.mxu0 0.0
      %2330 = vmatpush1.msra.mxu0 0.0
      %2331 = vmatprep.subr.mxu0 0.0
      %2332 = vmatpush1.msra.mxu0 0.0
      %2333 = vmatprep.subr.mxu0 0.0
      %2334 = vmatpush1.msra.mxu0 0.0
      %2335 = vmatprep.subr.mxu0 0.0
      %2336 = vmatpush1.msra.mxu0 0.0
      %2337 = vmatprep.subr.mxu0 0.0
      %2338 = vmatpush1.msra.mxu0 0.0
      %2339 = vmatprep.subr.mxu0 0.0
      %2340 = vmatpush1.msra.mxu0 0.0
      %2341 = vmatprep.subr.mxu0 0.0
      %2342 = vmatpush1.msra.mxu0 0.0
      %2343 = vmatprep.subr.mxu0 0.0
      %2344 = vmatpush1.msra.mxu0 0.0
      %2345 = vmatprep.subr.mxu0 0.0
      %2346 = vmatpush1.msra.mxu0 0.0
      %2347 = vmatprep.subr.mxu0 0.0
      %2348 = vmatpush1.msra.mxu0 0.0
      %2349 = vmatprep.subr.mxu0 0.0
      %2350 = vmatpush1.msra.mxu0 0.0
      %2351 = vmatprep.subr.mxu0 0.0
      %2352 = vmatpush1.msra.mxu0 0.0
      %2353 = vmatprep.subr.mxu0 0.0
      %2354 = vmatpush1.msra.mxu0 0.0
      %2355 = vmatprep.subr.mxu0 0.0
      %2356 = vmatpush1.msra.mxu0 0.0
      %2357 = vmatprep.subr.mxu0 0.0
      %2358 = vmatpush1.msra.mxu0 0.0
      %2359 = vmatprep.subr.mxu0 0.0
      %2360 = vmatpush1.msra.mxu0 0.0
      %2361 = vmatprep.subr.mxu0 0.0
      %2362 = vmatpush1.msra.mxu0 0.0
      %2363 = vmatprep.subr.mxu0 0.0
      %2364 = vmatpush1.msra.mxu0 0.0
      %2365 = vmatprep.subr.mxu0 0.0
      %2366 = vmatpush1.msra.mxu0 0.0
      %2367 = vmatprep.subr.mxu0 0.0
      %2368 = vmatpush1.msra.mxu0 0.0
      %2369 = vmatprep.subr.mxu0 0.0
      %2370 = vmatpush1.msra.mxu0 0.0
      %2371 = vmatprep.subr.mxu0 0.0
      %2372 = vmatpush1.msra.mxu0 0.0
      %2373 = vmatprep.subr.mxu0 0.0
      %2374 = vmatpush1.msra.mxu0 0.0
      %2375 = vmatprep.subr.mxu0 0.0
      %2376 = vmatpush1.msra.mxu0 0.0
      %2377 = vmatprep.subr.mxu0 0.0
      %2378 = vmatpush1.msra.mxu0 0.0
      %2379 = vmatprep.subr.mxu0 0.0
      %2380 = vmatpush1.msra.mxu0 0.0
      %2381 = vmatprep.mubr.f32.mxu0 0.0
      %2382 = vmatmul.mubr.f32.gmra.mrb[0].mxu0 %v2219
      %v2383 = vpop.f32.mrb[0].mxu0
      %v2384 = vadd.f32 0.0, %v2383
      %v2385 = vpop.f32.mrb[0].mxu0
      %2386 = vmatprep.mubr.f32.mxu0 0.0
      %2387 = vmatmul.mubr.f32.gmra.mrb[0].mxu0 %v2222
      %v2388 = vpop.f32.mrb[0].mxu0
      %v2389 = vadd.f32 0.0, %v2388
      %v2390 = vpop.f32.mrb[0].mxu0
      %2391 = vmatprep.mubr.f32.mxu0 0.0
      %2392 = vmatmul.mubr.f32.gmra.mrb[0].mxu0 %v2225
      %v2393 = vpop.f32.mrb[0].mxu0
      %v2394 = vadd.f32 0.0, %v2393
      %v2395 = vpop.f32.mrb[0].mxu0
      %2396 = vmatprep.mubr.f32.mxu0 0.0
      %2397 = vmatmul.mubr.f32.gmra.mrb[0].mxu0 %v2228
      %v2398 = vpop.f32.mrb[0].mxu0
      %v2399 = vadd.f32 0.0, %v2398
      %v2400 = vpop.f32.mrb[0].mxu0
      %2401 = vmatprep.mubr.f32.mxu0 0.0
      %2402 = vmatmul.mubr.f32.gmra.mrb[0].mxu0 %v2231
      %v2403 = vpop.f32.mrb[0].mxu0
      %v2404 = vadd.f32 0.0, %v2403
      %v2405 = vpop.f32.mrb[0].mxu0
      %2406 = vmatprep.mubr.f32.mxu0 0.0
      %2407 = vmatmul.mubr.f32.gmra.mrb[0].mxu0 %v2234
      %v2408 = vpop.f32.mrb[0].mxu0
      %v2409 = vadd.f32 0.0, %v2408
      %v2410 = vpop.f32.mrb[0].mxu0
      %2411 = vmatprep.mubr.f32.mxu0 0.0
      %2412 = vmatmul.mubr.f32.gmra.mrb[0].mxu0 %v2237
      %v2413 = vpop.f32.mrb[0].mxu0
      %v2414 = vadd.f32 0.0, %v2413
      %v2415 = vpop.f32.mrb[0].mxu0
      %2416 = vmatprep.mubr.f32.mxu0 0.0
      %2417 = vmatmul.mubr.f32.gmra.mrb[0].mxu0 %v2240
      %v2418 = vpop.f32.mrb[0].mxu0
      %v2419 = vadd.f32 0.0, %v2418
      %v2420 = vpop.f32.mrb[0].mxu0
      %2421 = vmatprep.mubr.f32.mxu0 0.0
      %2422 = vmatmul.mubr.f32.gmra.mrb[0].mxu0 %v2243
      %v2423 = vpop.f32.mrb[0].mxu0
      %v2424 = vadd.f32 0.0, %v2423
      %v2425 = vpop.f32.mrb[0].mxu0
      %2426 = vmatprep.mubr.f32.mxu0 0.0
      %2427 = vmatmul.mubr.f32.gmra.mrb[0].mxu0 %v2246
      %v2428 = vpop.f32.mrb[0].mxu0
      %v2429 = vadd.f32 0.0, %v2428
      %v2430 = vpop.f32.mrb[0].mxu0
      %2431 = vmatprep.mubr.f32.mxu0 0.0
      %2432 = vmatmul.mubr.f32.gmra.mrb[0].mxu0 %v2249
      %v2433 = vpop.f32.mrb[0].mxu0
      %v2434 = vadd.f32 0.0, %v2433
      %v2435 = vpop.f32.mrb[0].mxu0
      %2436 = vmatprep.mubr.f32.mxu0 0.0
      %2437 = vmatmul.mubr.f32.gmra.mrb[0].mxu0 %v2252
      %v2438 = vpop.f32.mrb[0].mxu0
      %v2439 = vadd.f32 0.0, %v2438
      %v2440 = vpop.f32.mrb[0].mxu0
      %2441 = vmatprep.mubr.f32.mxu0 0.0
      %2442 = vmatmul.mubr.f32.gmra.mrb[0].mxu0 %v2255
      %v2443 = vpop.f32.mrb[0].mxu0
      %v2444 = vadd.f32 0.0, %v2443
      %v2445 = vpop.f32.mrb[0].mxu0
      %2446 = vmatprep.mubr.f32.mxu0 0.0
      %2447 = vmatmul.mubr.f32.gmra.mrb[0].mxu0 %v2258
      %v2448 = vpop.f32.mrb[0].mxu0
      %v2449 = vadd.f32 0.0, %v2448
      %v2450 = vpop.f32.mrb[0].mxu0
      %2451 = vmatprep.mubr.f32.mxu0 0.0
      %2452 = vmatmul.mubr.f32.gmra.mrb[0].mxu0 %v2261
      %v2453 = vpop.f32.mrb[0].mxu0
      %v2454 = vadd.f32 0.0, %v2453
      %v2455 = vpop.f32.mrb[0].mxu0
      %2456 = vmatprep.mubr.f32.mxu0 0.0
      %2457 = vmatmul.mubr.f32.gmra.mrb[0].mxu0 %v2264
      %v2458 = vpop.f32.mrb[0].mxu0
      %v2459 = vadd.f32 0.0, %v2458
      %v2460 = vpop.f32.mrb[0].mxu0
      %2461 = vmatprep.mubr.f32.mxu0 0.0
      %2462 = vmatmul.mubr.f32.gmra.mrb[0].mxu0 %v2267
      %v2463 = vpop.f32.mrb[0].mxu0
      %v2464 = vadd.f32 0.0, %v2463
      %v2465 = vpop.f32.mrb[0].mxu0
      %2466 = vmatprep.mubr.f32.mxu0 0.0
      %2467 = vmatmul.mubr.f32.gmra.mrb[0].mxu0 %v2270
      %v2468 = vpop.f32.mrb[0].mxu0
      %v2469 = vadd.f32 0.0, %v2468
      %v2470 = vpop.f32.mrb[0].mxu0
      %2471 = vmatprep.mubr.f32.mxu0 0.0
      %2472 = vmatmul.mubr.f32.gmra.mrb[0].mxu0 %v2273
      %v2473 = vpop.f32.mrb[0].mxu0
      %v2474 = vadd.f32 0.0, %v2473
      %v2475 = vpop.f32.mrb[0].mxu0
      %2476 = vmatprep.mubr.f32.mxu0 0.0
      %2477 = vmatmul.mubr.f32.gmra.mrb[0].mxu0 %v2276
      %v2478 = vpop.f32.mrb[0].mxu0
      %v2479 = vadd.f32 0.0, %v2478
      %v2480 = vpop.f32.mrb[0].mxu0
      %2481 = vmatprep.mubr.f32.mxu0 0.0
      %2482 = vmatmul.mubr.f32.gmra.mrb[0].mxu0 %v2279
      %v2483 = vpop.f32.mrb[0].mxu0
      %v2484 = vadd.f32 0.0, %v2483
      %v2485 = vpop.f32.mrb[0].mxu0
      %2486 = vmatprep.mubr.f32.mxu0 0.0
      %2487 = vmatmul.mubr.f32.gmra.mrb[0].mxu0 %v2282
      %v2488 = vpop.f32.mrb[0].mxu0
      %v2489 = vadd.f32 0.0, %v2488
      %v2490 = vpop.f32.mrb[0].mxu0
      %2491 = vmatprep.mubr.f32.mxu0 0.0
      %2492 = vmatmul.mubr.f32.gmra.mrb[0].mxu0 %v2285
      %v2493 = vpop.f32.mrb[0].mxu0
      %v2494 = vadd.f32 0.0, %v2493
      %v2495 = vpop.f32.mrb[0].mxu0
      %2496 = vmatprep.mubr.f32.mxu0 0.0
      %2497 = vmatmul.mubr.f32.gmra.mrb[0].mxu0 %v2288
      %v2498 = vpop.f32.mrb[0].mxu0
      %v2499 = vadd.f32 0.0, %v2498
      %v2500 = vpop.f32.mrb[0].mxu0
      %2501 = vmatprep.mubr.f32.mxu0 0.0
      %2502 = vmatmul.mubr.f32.gmra.mrb[0].mxu0 %v2291
      %v2503 = vpop.f32.mrb[0].mxu0
      %v2504 = vadd.f32 0.0, %v2503
      %v2505 = vpop.f32.mrb[0].mxu0
      %2506 = vmatprep.mubr.f32.mxu0 0.0
      %2507 = vmatmul.mubr.f32.gmra.mrb[0].mxu0 %v2294
      %v2508 = vpop.f32.mrb[0].mxu0
      %v2509 = vadd.f32 0.0, %v2508
      %v2510 = vpop.f32.mrb[0].mxu0
      %2511 = vmatprep.mubr.f32.mxu0 0.0
      %2512 = vmatmul.mubr.f32.gmra.mrb[0].mxu0 %v2297
      %v2513 = vpop.f32.mrb[0].mxu0
      %v2514 = vadd.f32 0.0, %v2513
      %v2515 = vpop.f32.mrb[0].mxu0
      %2516 = vmatprep.mubr.f32.mxu0 0.0
      %2517 = vmatmul.mubr.f32.gmra.mrb[0].mxu0 %v2300
      %v2518 = vpop.f32.mrb[0].mxu0
      %v2519 = vadd.f32 0.0, %v2518
      %v2520 = vpop.f32.mrb[0].mxu0
      %2521 = vmatprep.mubr.f32.mxu0 0.0
      %2522 = vmatmul.mubr.f32.gmra.mrb[0].mxu0 %v2303
      %v2523 = vpop.f32.mrb[0].mxu0
      %v2524 = vadd.f32 0.0, %v2523
      %v2525 = vpop.f32.mrb[0].mxu0
      %2526 = vmatprep.mubr.f32.mxu0 0.0
      %2527 = vmatmul.mubr.f32.gmra.mrb[0].mxu0 %v2306
      %v2528 = vpop.f32.mrb[0].mxu0
      %v2529 = vadd.f32 0.0, %v2528
      %v2530 = vpop.f32.mrb[0].mxu0
      %2531 = vmatprep.mubr.f32.mxu0 0.0
      %2532 = vmatmul.mubr.f32.gmra.mrb[0].mxu0 %v2309
      %v2533 = vpop.f32.mrb[0].mxu0
      %v2534 = vadd.f32 0.0, %v2533
      %v2535 = vpop.f32.mrb[0].mxu0
      %2536 = vmatprep.mubr.f32.mxu0 0.0
      %2537 = vmatmul.mubr.f32.gmra.mrb[0].mxu0 %v2312
      %v2538 = vpop.f32.mrb[0].mxu0
      %v2539 = vadd.f32 0.0, %v2538
      %v2540 = vpop.f32.mrb[0].mxu0
      %2541 = vdwg.mxu0
      %v2542 = vadd.f32 %v2152, %v2384
      %v2543 = vadd.f32 %v2153, %v2389
      %v2544 = vadd.f32 %v2154, %v2394
      %v2545 = vadd.f32 %v2155, %v2399
      %v2546 = vadd.f32 %v2156, %v2404
      %v2547 = vadd.f32 %v2157, %v2409
      %v2548 = vadd.f32 %v2158, %v2414
      %v2549 = vadd.f32 %v2159, %v2419
      %v2550 = vadd.f32 %v2160, %v2424
      %v2551 = vadd.f32 %v2161, %v2429
      %v2552 = vadd.f32 %v2162, %v2434
      %v2553 = vadd.f32 %v2163, %v2439
      %v2554 = vadd.f32 %v2164, %v2444
      %v2555 = vadd.f32 %v2165, %v2449
      %v2556 = vadd.f32 %v2166, %v2454
      %v2557 = vadd.f32 %v2167, %v2459
      %v2558 = vadd.f32 %v2168, %v2464
      %v2559 = vadd.f32 %v2169, %v2469
      %v2560 = vadd.f32 %v2170, %v2474
      %v2561 = vadd.f32 %v2171, %v2479
      %v2562 = vadd.f32 %v2172, %v2484
      %v2563 = vadd.f32 %v2173, %v2489
      %v2564 = vadd.f32 %v2174, %v2494
      %v2565 = vadd.f32 %v2175, %v2499
      %v2566 = vadd.f32 %v2176, %v2504
      %v2567 = vadd.f32 %v2177, %v2509
      %v2568 = vadd.f32 %v2178, %v2514
      %v2569 = vadd.f32 %v2179, %v2519
      %v2570 = vadd.f32 %v2180, %v2524
      %v2571 = vadd.f32 %v2181, %v2529
      %v2572 = vadd.f32 %v2182, %v2534
      %v2573 = vadd.f32 %v2183, %v2539
      %s2574 = scalar_lea.vmem %s219, 48
      %v2575 = vld [vmem:[%s2574] sm:$0xff]
      %v2576 = vld [vmem:[%s2574 + $0x8] sm:$0xff]
      %v2577 = vld [vmem:[%s2574 + $0x18] sm:$0xff]
      %v2578 = vld [vmem:[%s2574 + $0x20] sm:$0xff]
      %v2579 = vld [vmem:[%s2574 + $0x30] sm:$0xff]
      %v2580 = vld [vmem:[%s2574 + $0x38] sm:$0xff]
      %v2581 = vld [vmem:[%s2574 + $0x48] sm:$0xff]
      %v2582 = vld [vmem:[%s2574 + $0x50] sm:$0xff]
      %v2583 = vld [vmem:[%s2574 + $0x60] sm:$0xff]
      %v2584 = vld [vmem:[%s2574 + $0x68] sm:$0xff]
      %v2585 = vld [vmem:[%s2574 + $0x78] sm:$0xff]
      %v2586 = vld [vmem:[%s2574 + $0x80] sm:$0xff]
      %v2587 = vld [vmem:[%s2574 + $0x90] sm:$0xff]
      %v2588 = vld [vmem:[%s2574 + $0x98] sm:$0xff]
      %v2589 = vld [vmem:[%s2574 + $0xa8] sm:$0xff]
      %v2590 = vld [vmem:[%s2574 + $0xb0] sm:$0xff]
      %v2591 = vld [vmem:[%s2574 + $0xc0] sm:$0xff]
      %v2592 = vld [vmem:[%s2574 + $0xc8] sm:$0xff]
      %v2593 = vld [vmem:[%s2574 + $0xd8] sm:$0xff]
      %v2594 = vld [vmem:[%s2574 + $0xe0] sm:$0xff]
      %v2595 = vld [vmem:[%s2574 + $0xf0] sm:$0xff]
      %v2596 = vld [vmem:[%s2574 + $0xf8] sm:$0xff]
      %v2597 = vld [vmem:[%s2574 + $0x108] sm:$0xff]
      %v2598 = vld [vmem:[%s2574 + $0x110] sm:$0xff]
      %v2599 = vld [vmem:[%s2574 + $0x120] sm:$0xff]
      %v2600 = vld [vmem:[%s2574 + $0x128] sm:$0xff]
      %v2601 = vld [vmem:[%s2574 + $0x138] sm:$0xff]
      %v2602 = vld [vmem:[%s2574 + $0x140] sm:$0xff]
      %v2603 = vld [vmem:[%s2574 + $0x150] sm:$0xff]
      %v2604 = vld [vmem:[%s2574 + $0x158] sm:$0xff]
      %v2605 = vld [vmem:[%s2574 + $0x168] sm:$0xff]
      %v2606 = vld [vmem:[%s2574 + $0x170] sm:$0xff]
      %s2607 = scalar_lea.vmem %s1, 24
      %v2608 = vld [vmem:[%s2607] sm:$0xf]
      %v2610 = vsel %vm265, %v2575, 0
      %v2613 = vsel %vm265, %v2576, 0
      %v2616 = vsel %vm265, %v2577, 0
      %v2619 = vsel %vm265, %v2578, 0
      %v2622 = vsel %vm265, %v2579, 0
      %v2625 = vsel %vm265, %v2580, 0
      %v2628 = vsel %vm265, %v2581, 0
      %v2631 = vsel %vm265, %v2582, 0
      %v2634 = vsel %vm265, %v2583, 0
      %v2637 = vsel %vm265, %v2584, 0
      %v2640 = vsel %vm265, %v2585, 0
      %v2643 = vsel %vm265, %v2586, 0
      %v2646 = vsel %vm265, %v2587, 0
      %v2649 = vsel %vm265, %v2588, 0
      %v2652 = vsel %vm265, %v2589, 0
      %v2655 = vsel %vm265, %v2590, 0
      %v2658 = vsel %vm265, %v2591, 0
      %v2661 = vsel %vm265, %v2592, 0
      %v2664 = vsel %vm265, %v2593, 0
      %v2667 = vsel %vm265, %v2594, 0
      %v2670 = vsel %vm265, %v2595, 0
      %v2673 = vsel %vm265, %v2596, 0
      %v2676 = vsel %vm265, %v2597, 0
      %v2679 = vsel %vm265, %v2598, 0
      %v2682 = vsel %vm265, %v2599, 0
      %v2685 = vsel %vm265, %v2600, 0
      %v2688 = vsel %vm265, %v2601, 0
      %v2691 = vsel %vm265, %v2602, 0
      %v2694 = vsel %vm265, %v2603, 0
      %v2697 = vsel %vm265, %v2604, 0
      %v2700 = vsel %vm265, %v2605, 0
      %v2703 = vsel %vm265, %v2606, 0
      %v2706 = vsel %vm362, %v2608, 0
      %2708 = vmatprep.subr.mxu0 0.0
      %2709 = vmatpush1.msra.mxu0 %v2706
      %2710 = vmatprep.subr.mxu0 0.0
      %2711 = vmatpush1.msra.mxu0 0.0
      %2712 = vmatprep.subr.mxu0 0.0
      %2713 = vmatpush1.msra.mxu0 0.0
      %2714 = vmatprep.subr.mxu0 0.0
      %2715 = vmatpush1.msra.mxu0 0.0
      %2716 = vmatprep.subr.mxu0 0.0
      %2717 = vmatpush1.msra.mxu0 0.0
      %2718 = vmatprep.subr.mxu0 0.0
      %2719 = vmatpush1.msra.mxu0 0.0
      %2720 = vmatprep.subr.mxu0 0.0
      %2721 = vmatpush1.msra.mxu0 0.0
      %2722 = vmatprep.subr.mxu0 0.0
      %2723 = vmatpush1.msra.mxu0 0.0
      %2724 = vmatprep.subr.mxu0 0.0
      %2725 = vmatpush1.msra.mxu0 0.0
      %2726 = vmatprep.subr.mxu0 0.0
      %2727 = vmatpush1.msra.mxu0 0.0
      %2728 = vmatprep.subr.mxu0 0.0
      %2729 = vmatpush1.msra.mxu0 0.0
      %2730 = vmatprep.subr.mxu0 0.0
      %2731 = vmatpush1.msra.mxu0 0.0
      %2732 = vmatprep.subr.mxu0 0.0
      %2733 = vmatpush1.msra.mxu0 0.0
      %2734 = vmatprep.subr.mxu0 0.0
      %2735 = vmatpush1.msra.mxu0 0.0
      %2736 = vmatprep.subr.mxu0 0.0
      %2737 = vmatpush1.msra.mxu0 0.0
      %2738 = vmatprep.subr.mxu0 0.0
      %2739 = vmatpush1.msra.mxu0 0.0
      %2740 = vmatprep.subr.mxu0 0.0
      %2741 = vmatpush1.msra.mxu0 0.0
      %2742 = vmatprep.subr.mxu0 0.0
      %2743 = vmatpush1.msra.mxu0 0.0
      %2744 = vmatprep.subr.mxu0 0.0
      %2745 = vmatpush1.msra.mxu0 0.0
      %2746 = vmatprep.subr.mxu0 0.0
      %2747 = vmatpush1.msra.mxu0 0.0
      %2748 = vmatprep.subr.mxu0 0.0
      %2749 = vmatpush1.msra.mxu0 0.0
      %2750 = vmatprep.subr.mxu0 0.0
      %2751 = vmatpush1.msra.mxu0 0.0
      %2752 = vmatprep.subr.mxu0 0.0
      %2753 = vmatpush1.msra.mxu0 0.0
      %2754 = vmatprep.subr.mxu0 0.0
      %2755 = vmatpush1.msra.mxu0 0.0
      %2756 = vmatprep.subr.mxu0 0.0
      %2757 = vmatpush1.msra.mxu0 0.0
      %2758 = vmatprep.subr.mxu0 0.0
      %2759 = vmatpush1.msra.mxu0 0.0
      %2760 = vmatprep.subr.mxu0 0.0
      %2761 = vmatpush1.msra.mxu0 0.0
      %2762 = vmatprep.subr.mxu0 0.0
      %2763 = vmatpush1.msra.mxu0 0.0
      %2764 = vmatprep.subr.mxu0 0.0
      %2765 = vmatpush1.msra.mxu0 0.0
      %2766 = vmatprep.subr.mxu0 0.0
      %2767 = vmatpush1.msra.mxu0 0.0
      %2768 = vmatprep.subr.mxu0 0.0
      %2769 = vmatpush1.msra.mxu0 0.0
      %2770 = vmatprep.subr.mxu0 0.0
      %2771 = vmatpush1.msra.mxu0 0.0
      %2772 = vmatprep.mubr.f32.mxu0 0.0
      %2773 = vmatmul.mubr.f32.gmra.mrb[0].mxu0 %v2610
      %v2774 = vpop.f32.mrb[0].mxu0
      %v2775 = vadd.f32 0.0, %v2774
      %v2776 = vpop.f32.mrb[0].mxu0
      %2777 = vmatprep.mubr.f32.mxu0 0.0
      %2778 = vmatmul.mubr.f32.gmra.mrb[0].mxu0 %v2613
      %v2779 = vpop.f32.mrb[0].mxu0
      %v2780 = vadd.f32 0.0, %v2779
      %v2781 = vpop.f32.mrb[0].mxu0
      %2782 = vmatprep.mubr.f32.mxu0 0.0
      %2783 = vmatmul.mubr.f32.gmra.mrb[0].mxu0 %v2616
      %v2784 = vpop.f32.mrb[0].mxu0
      %v2785 = vadd.f32 0.0, %v2784
      %v2786 = vpop.f32.mrb[0].mxu0
      %2787 = vmatprep.mubr.f32.mxu0 0.0
      %2788 = vmatmul.mubr.f32.gmra.mrb[0].mxu0 %v2619
      %v2789 = vpop.f32.mrb[0].mxu0
      %v2790 = vadd.f32 0.0, %v2789
      %v2791 = vpop.f32.mrb[0].mxu0
      %2792 = vmatprep.mubr.f32.mxu0 0.0
      %2793 = vmatmul.mubr.f32.gmra.mrb[0].mxu0 %v2622
      %v2794 = vpop.f32.mrb[0].mxu0
      %v2795 = vadd.f32 0.0, %v2794
      %v2796 = vpop.f32.mrb[0].mxu0
      %2797 = vmatprep.mubr.f32.mxu0 0.0
      %2798 = vmatmul.mubr.f32.gmra.mrb[0].mxu0 %v2625
      %v2799 = vpop.f32.mrb[0].mxu0
      %v2800 = vadd.f32 0.0, %v2799
      %v2801 = vpop.f32.mrb[0].mxu0
      %2802 = vmatprep.mubr.f32.mxu0 0.0
      %2803 = vmatmul.mubr.f32.gmra.mrb[0].mxu0 %v2628
      %v2804 = vpop.f32.mrb[0].mxu0
      %v2805 = vadd.f32 0.0, %v2804
      %v2806 = vpop.f32.mrb[0].mxu0
      %2807 = vmatprep.mubr.f32.mxu0 0.0
      %2808 = vmatmul.mubr.f32.gmra.mrb[0].mxu0 %v2631
      %v2809 = vpop.f32.mrb[0].mxu0
      %v2810 = vadd.f32 0.0, %v2809
      %v2811 = vpop.f32.mrb[0].mxu0
      %2812 = vmatprep.mubr.f32.mxu0 0.0
      %2813 = vmatmul.mubr.f32.gmra.mrb[0].mxu0 %v2634
      %v2814 = vpop.f32.mrb[0].mxu0
      %v2815 = vadd.f32 0.0, %v2814
      %v2816 = vpop.f32.mrb[0].mxu0
      %2817 = vmatprep.mubr.f32.mxu0 0.0
      %2818 = vmatmul.mubr.f32.gmra.mrb[0].mxu0 %v2637
      %v2819 = vpop.f32.mrb[0].mxu0
      %v2820 = vadd.f32 0.0, %v2819
      %v2821 = vpop.f32.mrb[0].mxu0
      %2822 = vmatprep.mubr.f32.mxu0 0.0
      %2823 = vmatmul.mubr.f32.gmra.mrb[0].mxu0 %v2640
      %v2824 = vpop.f32.mrb[0].mxu0
      %v2825 = vadd.f32 0.0, %v2824
      %v2826 = vpop.f32.mrb[0].mxu0
      %2827 = vmatprep.mubr.f32.mxu0 0.0
      %2828 = vmatmul.mubr.f32.gmra.mrb[0].mxu0 %v2643
      %v2829 = vpop.f32.mrb[0].mxu0
      %v2830 = vadd.f32 0.0, %v2829
      %v2831 = vpop.f32.mrb[0].mxu0
      %2832 = vmatprep.mubr.f32.mxu0 0.0
      %2833 = vmatmul.mubr.f32.gmra.mrb[0].mxu0 %v2646
      %v2834 = vpop.f32.mrb[0].mxu0
      %v2835 = vadd.f32 0.0, %v2834
      %v2836 = vpop.f32.mrb[0].mxu0
      %2837 = vmatprep.mubr.f32.mxu0 0.0
      %2838 = vmatmul.mubr.f32.gmra.mrb[0].mxu0 %v2649
      %v2839 = vpop.f32.mrb[0].mxu0
      %v2840 = vadd.f32 0.0, %v2839
      %v2841 = vpop.f32.mrb[0].mxu0
      %2842 = vmatprep.mubr.f32.mxu0 0.0
      %2843 = vmatmul.mubr.f32.gmra.mrb[0].mxu0 %v2652
      %v2844 = vpop.f32.mrb[0].mxu0
      %v2845 = vadd.f32 0.0, %v2844
      %v2846 = vpop.f32.mrb[0].mxu0
      %2847 = vmatprep.mubr.f32.mxu0 0.0
      %2848 = vmatmul.mubr.f32.gmra.mrb[0].mxu0 %v2655
      %v2849 = vpop.f32.mrb[0].mxu0
      %v2850 = vadd.f32 0.0, %v2849
      %v2851 = vpop.f32.mrb[0].mxu0
      %2852 = vmatprep.mubr.f32.mxu0 0.0
      %2853 = vmatmul.mubr.f32.gmra.mrb[0].mxu0 %v2658
      %v2854 = vpop.f32.mrb[0].mxu0
      %v2855 = vadd.f32 0.0, %v2854
      %v2856 = vpop.f32.mrb[0].mxu0
      %2857 = vmatprep.mubr.f32.mxu0 0.0
      %2858 = vmatmul.mubr.f32.gmra.mrb[0].mxu0 %v2661
      %v2859 = vpop.f32.mrb[0].mxu0
      %v2860 = vadd.f32 0.0, %v2859
      %v2861 = vpop.f32.mrb[0].mxu0
      %2862 = vmatprep.mubr.f32.mxu0 0.0
      %2863 = vmatmul.mubr.f32.gmra.mrb[0].mxu0 %v2664
      %v2864 = vpop.f32.mrb[0].mxu0
      %v2865 = vadd.f32 0.0, %v2864
      %v2866 = vpop.f32.mrb[0].mxu0
      %2867 = vmatprep.mubr.f32.mxu0 0.0
      %2868 = vmatmul.mubr.f32.gmra.mrb[0].mxu0 %v2667
      %v2869 = vpop.f32.mrb[0].mxu0
      %v2870 = vadd.f32 0.0, %v2869
      %v2871 = vpop.f32.mrb[0].mxu0
      %2872 = vmatprep.mubr.f32.mxu0 0.0
      %2873 = vmatmul.mubr.f32.gmra.mrb[0].mxu0 %v2670
      %v2874 = vpop.f32.mrb[0].mxu0
      %v2875 = vadd.f32 0.0, %v2874
      %v2876 = vpop.f32.mrb[0].mxu0
      %2877 = vmatprep.mubr.f32.mxu0 0.0
      %2878 = vmatmul.mubr.f32.gmra.mrb[0].mxu0 %v2673
      %v2879 = vpop.f32.mrb[0].mxu0
      %v2880 = vadd.f32 0.0, %v2879
      %v2881 = vpop.f32.mrb[0].mxu0
      %2882 = vmatprep.mubr.f32.mxu0 0.0
      %2883 = vmatmul.mubr.f32.gmra.mrb[0].mxu0 %v2676
      %v2884 = vpop.f32.mrb[0].mxu0
      %v2885 = vadd.f32 0.0, %v2884
      %v2886 = vpop.f32.mrb[0].mxu0
      %2887 = vmatprep.mubr.f32.mxu0 0.0
      %2888 = vmatmul.mubr.f32.gmra.mrb[0].mxu0 %v2679
      %v2889 = vpop.f32.mrb[0].mxu0
      %v2890 = vadd.f32 0.0, %v2889
      %v2891 = vpop.f32.mrb[0].mxu0
      %2892 = vmatprep.mubr.f32.mxu0 0.0
      %2893 = vmatmul.mubr.f32.gmra.mrb[0].mxu0 %v2682
      %v2894 = vpop.f32.mrb[0].mxu0
      %v2895 = vadd.f32 0.0, %v2894
      %v2896 = vpop.f32.mrb[0].mxu0
      %2897 = vmatprep.mubr.f32.mxu0 0.0
      %2898 = vmatmul.mubr.f32.gmra.mrb[0].mxu0 %v2685
      %v2899 = vpop.f32.mrb[0].mxu0
      %v2900 = vadd.f32 0.0, %v2899
      %v2901 = vpop.f32.mrb[0].mxu0
      %2902 = vmatprep.mubr.f32.mxu0 0.0
      %2903 = vmatmul.mubr.f32.gmra.mrb[0].mxu0 %v2688
      %v2904 = vpop.f32.mrb[0].mxu0
      %v2905 = vadd.f32 0.0, %v2904
      %v2906 = vpop.f32.mrb[0].mxu0
      %2907 = vmatprep.mubr.f32.mxu0 0.0
      %2908 = vmatmul.mubr.f32.gmra.mrb[0].mxu0 %v2691
      %v2909 = vpop.f32.mrb[0].mxu0
      %v2910 = vadd.f32 0.0, %v2909
      %v2911 = vpop.f32.mrb[0].mxu0
      %2912 = vmatprep.mubr.f32.mxu0 0.0
      %2913 = vmatmul.mubr.f32.gmra.mrb[0].mxu0 %v2694
      %v2914 = vpop.f32.mrb[0].mxu0
      %v2915 = vadd.f32 0.0, %v2914
      %v2916 = vpop.f32.mrb[0].mxu0
      %2917 = vmatprep.mubr.f32.mxu0 0.0
      %2918 = vmatmul.mubr.f32.gmra.mrb[0].mxu0 %v2697
      %v2919 = vpop.f32.mrb[0].mxu0
      %v2920 = vadd.f32 0.0, %v2919
      %v2921 = vpop.f32.mrb[0].mxu0
      %2922 = vmatprep.mubr.f32.mxu0 0.0
      %2923 = vmatmul.mubr.f32.gmra.mrb[0].mxu0 %v2700
      %v2924 = vpop.f32.mrb[0].mxu0
      %v2925 = vadd.f32 0.0, %v2924
      %v2926 = vpop.f32.mrb[0].mxu0
      %2927 = vmatprep.mubr.f32.mxu0 0.0
      %2928 = vmatmul.mubr.f32.gmra.mrb[0].mxu0 %v2703
      %v2929 = vpop.f32.mrb[0].mxu0
      %v2930 = vadd.f32 0.0, %v2929
      %v2931 = vpop.f32.mrb[0].mxu0
      %2932 = vdwg.mxu0
      %v2933 = vadd.f32 %v2542, %v2775
      %v2934 = vadd.f32 %v2543, %v2780
      %v2935 = vadd.f32 %v2544, %v2785
      %v2936 = vadd.f32 %v2545, %v2790
      %v2937 = vadd.f32 %v2546, %v2795
      %v2938 = vadd.f32 %v2547, %v2800
      %v2939 = vadd.f32 %v2548, %v2805
      %v2940 = vadd.f32 %v2549, %v2810
      %v2941 = vadd.f32 %v2550, %v2815
      %v2942 = vadd.f32 %v2551, %v2820
      %v2943 = vadd.f32 %v2552, %v2825
      %v2944 = vadd.f32 %v2553, %v2830
      %v2945 = vadd.f32 %v2554, %v2835
      %v2946 = vadd.f32 %v2555, %v2840
      %v2947 = vadd.f32 %v2556, %v2845
      %v2948 = vadd.f32 %v2557, %v2850
      %v2949 = vadd.f32 %v2558, %v2855
      %v2950 = vadd.f32 %v2559, %v2860
      %v2951 = vadd.f32 %v2560, %v2865
      %v2952 = vadd.f32 %v2561, %v2870
      %v2953 = vadd.f32 %v2562, %v2875
      %v2954 = vadd.f32 %v2563, %v2880
      %v2955 = vadd.f32 %v2564, %v2885
      %v2956 = vadd.f32 %v2565, %v2890
      %v2957 = vadd.f32 %v2566, %v2895
      %v2958 = vadd.f32 %v2567, %v2900
      %v2959 = vadd.f32 %v2568, %v2905
      %v2960 = vadd.f32 %v2569, %v2910
      %v2961 = vadd.f32 %v2570, %v2915
      %v2962 = vadd.f32 %v2571, %v2920
      %v2963 = vadd.f32 %v2572, %v2925
      %v2964 = vadd.f32 %v2573, %v2930
      %v2965 = vld [vmem:[%s2574 + $0x1] sm:$0xff]
      %v2966 = vld [vmem:[%s2574 + $0x9] sm:$0xff]
      %v2967 = vld [vmem:[%s2574 + $0x19] sm:$0xff]
      %v2968 = vld [vmem:[%s2574 + $0x21] sm:$0xff]
      %v2969 = vld [vmem:[%s2574 + $0x31] sm:$0xff]
      %v2970 = vld [vmem:[%s2574 + $0x39] sm:$0xff]
      %v2971 = vld [vmem:[%s2574 + $0x49] sm:$0xff]
      %v2972 = vld [vmem:[%s2574 + $0x51] sm:$0xff]
      %v2973 = vld [vmem:[%s2574 + $0x61] sm:$0xff]
      %v2974 = vld [vmem:[%s2574 + $0x69] sm:$0xff]
      %v2975 = vld [vmem:[%s2574 + $0x79] sm:$0xff]
      %v2976 = vld [vmem:[%s2574 + $0x81] sm:$0xff]
      %v2977 = vld [vmem:[%s2574 + $0x91] sm:$0xff]
      %v2978 = vld [vmem:[%s2574 + $0x99] sm:$0xff]
      %v2979 = vld [vmem:[%s2574 + $0xa9] sm:$0xff]
      %v2980 = vld [vmem:[%s2574 + $0xb1] sm:$0xff]
      %v2981 = vld [vmem:[%s2574 + $0xc1] sm:$0xff]
      %v2982 = vld [vmem:[%s2574 + $0xc9] sm:$0xff]
      %v2983 = vld [vmem:[%s2574 + $0xd9] sm:$0xff]
      %v2984 = vld [vmem:[%s2574 + $0xe1] sm:$0xff]
      %v2985 = vld [vmem:[%s2574 + $0xf1] sm:$0xff]
      %v2986 = vld [vmem:[%s2574 + $0xf9] sm:$0xff]
      %v2987 = vld [vmem:[%s2574 + $0x109] sm:$0xff]
      %v2988 = vld [vmem:[%s2574 + $0x111] sm:$0xff]
      %v2989 = vld [vmem:[%s2574 + $0x121] sm:$0xff]
      %v2990 = vld [vmem:[%s2574 + $0x129] sm:$0xff]
      %v2991 = vld [vmem:[%s2574 + $0x139] sm:$0xff]
      %v2992 = vld [vmem:[%s2574 + $0x141] sm:$0xff]
      %v2993 = vld [vmem:[%s2574 + $0x151] sm:$0xff]
      %v2994 = vld [vmem:[%s2574 + $0x159] sm:$0xff]
      %v2995 = vld [vmem:[%s2574 + $0x169] sm:$0xff]
      %v2996 = vld [vmem:[%s2574 + $0x171] sm:$0xff]
      %s2997 = scalar_lea.vmem %s1, 28
      %v2998 = vld [vmem:[%s2997] sm:$0xf]
      %v3000 = vsel %vm265, %v2965, 0
      %v3003 = vsel %vm265, %v2966, 0
      %v3006 = vsel %vm265, %v2967, 0
      %v3009 = vsel %vm265, %v2968, 0
      %v3012 = vsel %vm265, %v2969, 0
      %v3015 = vsel %vm265, %v2970, 0
      %v3018 = vsel %vm265, %v2971, 0
      %v3021 = vsel %vm265, %v2972, 0
      %v3024 = vsel %vm265, %v2973, 0
      %v3027 = vsel %vm265, %v2974, 0
      %v3030 = vsel %vm265, %v2975, 0
      %v3033 = vsel %vm265, %v2976, 0
      %v3036 = vsel %vm265, %v2977, 0
      %v3039 = vsel %vm265, %v2978, 0
      %v3042 = vsel %vm265, %v2979, 0
      %v3045 = vsel %vm265, %v2980, 0
      %v3048 = vsel %vm265, %v2981, 0
      %v3051 = vsel %vm265, %v2982, 0
      %v3054 = vsel %vm265, %v2983, 0
      %v3057 = vsel %vm265, %v2984, 0
      %v3060 = vsel %vm265, %v2985, 0
      %v3063 = vsel %vm265, %v2986, 0
      %v3066 = vsel %vm265, %v2987, 0
      %v3069 = vsel %vm265, %v2988, 0
      %v3072 = vsel %vm265, %v2989, 0
      %v3075 = vsel %vm265, %v2990, 0
      %v3078 = vsel %vm265, %v2991, 0
      %v3081 = vsel %vm265, %v2992, 0
      %v3084 = vsel %vm265, %v2993, 0
      %v3087 = vsel %vm265, %v2994, 0
      %v3090 = vsel %vm265, %v2995, 0
      %v3093 = vsel %vm265, %v2996, 0
      %v3096 = vsel %vm362, %v2998, 0
      %3098 = vmatprep.subr.mxu0 0.0
      %3099 = vmatpush1.msra.mxu0 %v3096
      %3100 = vmatprep.subr.mxu0 0.0
      %3101 = vmatpush1.msra.mxu0 0.0
      %3102 = vmatprep.subr.mxu0 0.0
      %3103 = vmatpush1.msra.mxu0 0.0
      %3104 = vmatprep.subr.mxu0 0.0
      %3105 = vmatpush1.msra.mxu0 0.0
      %3106 = vmatprep.subr.mxu0 0.0
      %3107 = vmatpush1.msra.mxu0 0.0
      %3108 = vmatprep.subr.mxu0 0.0
      %3109 = vmatpush1.msra.mxu0 0.0
      %3110 = vmatprep.subr.mxu0 0.0
      %3111 = vmatpush1.msra.mxu0 0.0
      %3112 = vmatprep.subr.mxu0 0.0
      %3113 = vmatpush1.msra.mxu0 0.0
      %3114 = vmatprep.subr.mxu0 0.0
      %3115 = vmatpush1.msra.mxu0 0.0
      %3116 = vmatprep.subr.mxu0 0.0
      %3117 = vmatpush1.msra.mxu0 0.0
      %3118 = vmatprep.subr.mxu0 0.0
      %3119 = vmatpush1.msra.mxu0 0.0
      %3120 = vmatprep.subr.mxu0 0.0
      %3121 = vmatpush1.msra.mxu0 0.0
      %3122 = vmatprep.subr.mxu0 0.0
      %3123 = vmatpush1.msra.mxu0 0.0
      %3124 = vmatprep.subr.mxu0 0.0
      %3125 = vmatpush1.msra.mxu0 0.0
      %3126 = vmatprep.subr.mxu0 0.0
      %3127 = vmatpush1.msra.mxu0 0.0
      %3128 = vmatprep.subr.mxu0 0.0
      %3129 = vmatpush1.msra.mxu0 0.0
      %3130 = vmatprep.subr.mxu0 0.0
      %3131 = vmatpush1.msra.mxu0 0.0
      %3132 = vmatprep.subr.mxu0 0.0
      %3133 = vmatpush1.msra.mxu0 0.0
      %3134 = vmatprep.subr.mxu0 0.0
      %3135 = vmatpush1.msra.mxu0 0.0
      %3136 = vmatprep.subr.mxu0 0.0
      %3137 = vmatpush1.msra.mxu0 0.0
      %3138 = vmatprep.subr.mxu0 0.0
      %3139 = vmatpush1.msra.mxu0 0.0
      %3140 = vmatprep.subr.mxu0 0.0
      %3141 = vmatpush1.msra.mxu0 0.0
      %3142 = vmatprep.subr.mxu0 0.0
      %3143 = vmatpush1.msra.mxu0 0.0
      %3144 = vmatprep.subr.mxu0 0.0
      %3145 = vmatpush1.msra.mxu0 0.0
      %3146 = vmatprep.subr.mxu0 0.0
      %3147 = vmatpush1.msra.mxu0 0.0
      %3148 = vmatprep.subr.mxu0 0.0
      %3149 = vmatpush1.msra.mxu0 0.0
      %3150 = vmatprep.subr.mxu0 0.0
      %3151 = vmatpush1.msra.mxu0 0.0
      %3152 = vmatprep.subr.mxu0 0.0
      %3153 = vmatpush1.msra.mxu0 0.0
      %3154 = vmatprep.subr.mxu0 0.0
      %3155 = vmatpush1.msra.mxu0 0.0
      %3156 = vmatprep.subr.mxu0 0.0
      %3157 = vmatpush1.msra.mxu0 0.0
      %3158 = vmatprep.subr.mxu0 0.0
      %3159 = vmatpush1.msra.mxu0 0.0
      %3160 = vmatprep.subr.mxu0 0.0
      %3161 = vmatpush1.msra.mxu0 0.0
      %3162 = vmatprep.mubr.f32.mxu0 0.0
      %3163 = vmatmul.mubr.f32.gmra.mrb[0].mxu0 %v3000
      %v3164 = vpop.f32.mrb[0].mxu0
      %v3165 = vadd.f32 0.0, %v3164
      %v3166 = vpop.f32.mrb[0].mxu0
      %3167 = vmatprep.mubr.f32.mxu0 0.0
      %3168 = vmatmul.mubr.f32.gmra.mrb[0].mxu0 %v3003
      %v3169 = vpop.f32.mrb[0].mxu0
      %v3170 = vadd.f32 0.0, %v3169
      %v3171 = vpop.f32.mrb[0].mxu0
      %3172 = vmatprep.mubr.f32.mxu0 0.0
      %3173 = vmatmul.mubr.f32.gmra.mrb[0].mxu0 %v3006
      %v3174 = vpop.f32.mrb[0].mxu0
      %v3175 = vadd.f32 0.0, %v3174
      %v3176 = vpop.f32.mrb[0].mxu0
      %3177 = vmatprep.mubr.f32.mxu0 0.0
      %3178 = vmatmul.mubr.f32.gmra.mrb[0].mxu0 %v3009
      %v3179 = vpop.f32.mrb[0].mxu0
      %v3180 = vadd.f32 0.0, %v3179
      %v3181 = vpop.f32.mrb[0].mxu0
      %3182 = vmatprep.mubr.f32.mxu0 0.0
      %3183 = vmatmul.mubr.f32.gmra.mrb[0].mxu0 %v3012
      %v3184 = vpop.f32.mrb[0].mxu0
      %v3185 = vadd.f32 0.0, %v3184
      %v3186 = vpop.f32.mrb[0].mxu0
      %3187 = vmatprep.mubr.f32.mxu0 0.0
      %3188 = vmatmul.mubr.f32.gmra.mrb[0].mxu0 %v3015
      %v3189 = vpop.f32.mrb[0].mxu0
      %v3190 = vadd.f32 0.0, %v3189
      %v3191 = vpop.f32.mrb[0].mxu0
      %3192 = vmatprep.mubr.f32.mxu0 0.0
      %3193 = vmatmul.mubr.f32.gmra.mrb[0].mxu0 %v3018
      %v3194 = vpop.f32.mrb[0].mxu0
      %v3195 = vadd.f32 0.0, %v3194
      %v3196 = vpop.f32.mrb[0].mxu0
      %3197 = vmatprep.mubr.f32.mxu0 0.0
      %3198 = vmatmul.mubr.f32.gmra.mrb[0].mxu0 %v3021
      %v3199 = vpop.f32.mrb[0].mxu0
      %v3200 = vadd.f32 0.0, %v3199
      %v3201 = vpop.f32.mrb[0].mxu0
      %3202 = vmatprep.mubr.f32.mxu0 0.0
      %3203 = vmatmul.mubr.f32.gmra.mrb[0].mxu0 %v3024
      %v3204 = vpop.f32.mrb[0].mxu0
      %v3205 = vadd.f32 0.0, %v3204
      %v3206 = vpop.f32.mrb[0].mxu0
      %3207 = vmatprep.mubr.f32.mxu0 0.0
      %3208 = vmatmul.mubr.f32.gmra.mrb[0].mxu0 %v3027
      %v3209 = vpop.f32.mrb[0].mxu0
      %v3210 = vadd.f32 0.0, %v3209
      %v3211 = vpop.f32.mrb[0].mxu0
      %3212 = vmatprep.mubr.f32.mxu0 0.0
      %3213 = vmatmul.mubr.f32.gmra.mrb[0].mxu0 %v3030
      %v3214 = vpop.f32.mrb[0].mxu0
      %v3215 = vadd.f32 0.0, %v3214
      %v3216 = vpop.f32.mrb[0].mxu0
      %3217 = vmatprep.mubr.f32.mxu0 0.0
      %3218 = vmatmul.mubr.f32.gmra.mrb[0].mxu0 %v3033
      %v3219 = vpop.f32.mrb[0].mxu0
      %v3220 = vadd.f32 0.0, %v3219
      %v3221 = vpop.f32.mrb[0].mxu0
      %3222 = vmatprep.mubr.f32.mxu0 0.0
      %3223 = vmatmul.mubr.f32.gmra.mrb[0].mxu0 %v3036
      %v3224 = vpop.f32.mrb[0].mxu0
      %v3225 = vadd.f32 0.0, %v3224
      %v3226 = vpop.f32.mrb[0].mxu0
      %3227 = vmatprep.mubr.f32.mxu0 0.0
      %3228 = vmatmul.mubr.f32.gmra.mrb[0].mxu0 %v3039
      %v3229 = vpop.f32.mrb[0].mxu0
      %v3230 = vadd.f32 0.0, %v3229
      %v3231 = vpop.f32.mrb[0].mxu0
      %3232 = vmatprep.mubr.f32.mxu0 0.0
      %3233 = vmatmul.mubr.f32.gmra.mrb[0].mxu0 %v3042
      %v3234 = vpop.f32.mrb[0].mxu0
      %v3235 = vadd.f32 0.0, %v3234
      %v3236 = vpop.f32.mrb[0].mxu0
      %3237 = vmatprep.mubr.f32.mxu0 0.0
      %3238 = vmatmul.mubr.f32.gmra.mrb[0].mxu0 %v3045
      %v3239 = vpop.f32.mrb[0].mxu0
      %v3240 = vadd.f32 0.0, %v3239
      %v3241 = vpop.f32.mrb[0].mxu0
      %3242 = vmatprep.mubr.f32.mxu0 0.0
      %3243 = vmatmul.mubr.f32.gmra.mrb[0].mxu0 %v3048
      %v3244 = vpop.f32.mrb[0].mxu0
      %v3245 = vadd.f32 0.0, %v3244
      %v3246 = vpop.f32.mrb[0].mxu0
      %3247 = vmatprep.mubr.f32.mxu0 0.0
      %3248 = vmatmul.mubr.f32.gmra.mrb[0].mxu0 %v3051
      %v3249 = vpop.f32.mrb[0].mxu0
      %v3250 = vadd.f32 0.0, %v3249
      %v3251 = vpop.f32.mrb[0].mxu0
      %3252 = vmatprep.mubr.f32.mxu0 0.0
      %3253 = vmatmul.mubr.f32.gmra.mrb[0].mxu0 %v3054
      %v3254 = vpop.f32.mrb[0].mxu0
      %v3255 = vadd.f32 0.0, %v3254
      %v3256 = vpop.f32.mrb[0].mxu0
      %3257 = vmatprep.mubr.f32.mxu0 0.0
      %3258 = vmatmul.mubr.f32.gmra.mrb[0].mxu0 %v3057
      %v3259 = vpop.f32.mrb[0].mxu0
      %v3260 = vadd.f32 0.0, %v3259
      %v3261 = vpop.f32.mrb[0].mxu0
      %3262 = vmatprep.mubr.f32.mxu0 0.0
      %3263 = vmatmul.mubr.f32.gmra.mrb[0].mxu0 %v3060
      %v3264 = vpop.f32.mrb[0].mxu0
      %v3265 = vadd.f32 0.0, %v3264
      %v3266 = vpop.f32.mrb[0].mxu0
      %3267 = vmatprep.mubr.f32.mxu0 0.0
      %3268 = vmatmul.mubr.f32.gmra.mrb[0].mxu0 %v3063
      %v3269 = vpop.f32.mrb[0].mxu0
      %v3270 = vadd.f32 0.0, %v3269
      %v3271 = vpop.f32.mrb[0].mxu0
      %3272 = vmatprep.mubr.f32.mxu0 0.0
      %3273 = vmatmul.mubr.f32.gmra.mrb[0].mxu0 %v3066
      %v3274 = vpop.f32.mrb[0].mxu0
      %v3275 = vadd.f32 0.0, %v3274
      %v3276 = vpop.f32.mrb[0].mxu0
      %3277 = vmatprep.mubr.f32.mxu0 0.0
      %3278 = vmatmul.mubr.f32.gmra.mrb[0].mxu0 %v3069
      %v3279 = vpop.f32.mrb[0].mxu0
      %v3280 = vadd.f32 0.0, %v3279
      %v3281 = vpop.f32.mrb[0].mxu0
      %3282 = vmatprep.mubr.f32.mxu0 0.0
      %3283 = vmatmul.mubr.f32.gmra.mrb[0].mxu0 %v3072
      %v3284 = vpop.f32.mrb[0].mxu0
      %v3285 = vadd.f32 0.0, %v3284
      %v3286 = vpop.f32.mrb[0].mxu0
      %3287 = vmatprep.mubr.f32.mxu0 0.0
      %3288 = vmatmul.mubr.f32.gmra.mrb[0].mxu0 %v3075
      %v3289 = vpop.f32.mrb[0].mxu0
      %v3290 = vadd.f32 0.0, %v3289
      %v3291 = vpop.f32.mrb[0].mxu0
      %3292 = vmatprep.mubr.f32.mxu0 0.0
      %3293 = vmatmul.mubr.f32.gmra.mrb[0].mxu0 %v3078
      %v3294 = vpop.f32.mrb[0].mxu0
      %v3295 = vadd.f32 0.0, %v3294
      %v3296 = vpop.f32.mrb[0].mxu0
      %3297 = vmatprep.mubr.f32.mxu0 0.0
      %3298 = vmatmul.mubr.f32.gmra.mrb[0].mxu0 %v3081
      %v3299 = vpop.f32.mrb[0].mxu0
      %v3300 = vadd.f32 0.0, %v3299
      %v3301 = vpop.f32.mrb[0].mxu0
      %3302 = vmatprep.mubr.f32.mxu0 0.0
      %3303 = vmatmul.mubr.f32.gmra.mrb[0].mxu0 %v3084
      %v3304 = vpop.f32.mrb[0].mxu0
      %v3305 = vadd.f32 0.0, %v3304
      %v3306 = vpop.f32.mrb[0].mxu0
      %3307 = vmatprep.mubr.f32.mxu0 0.0
      %3308 = vmatmul.mubr.f32.gmra.mrb[0].mxu0 %v3087
      %v3309 = vpop.f32.mrb[0].mxu0
      %v3310 = vadd.f32 0.0, %v3309
      %v3311 = vpop.f32.mrb[0].mxu0
      %3312 = vmatprep.mubr.f32.mxu0 0.0
      %3313 = vmatmul.mubr.f32.gmra.mrb[0].mxu0 %v3090
      %v3314 = vpop.f32.mrb[0].mxu0
      %v3315 = vadd.f32 0.0, %v3314
      %v3316 = vpop.f32.mrb[0].mxu0
      %3317 = vmatprep.mubr.f32.mxu0 0.0
      %3318 = vmatmul.mubr.f32.gmra.mrb[0].mxu0 %v3093
      %v3319 = vpop.f32.mrb[0].mxu0
      %v3320 = vadd.f32 0.0, %v3319
      %v3321 = vpop.f32.mrb[0].mxu0
      %3322 = vdwg.mxu0
      %v3323 = vadd.f32 %v2933, %v3165
      %v3324 = vadd.f32 %v2934, %v3170
      %v3325 = vadd.f32 %v2935, %v3175
      %v3326 = vadd.f32 %v2936, %v3180
      %v3327 = vadd.f32 %v2937, %v3185
      %v3328 = vadd.f32 %v2938, %v3190
      %v3329 = vadd.f32 %v2939, %v3195
      %v3330 = vadd.f32 %v2940, %v3200
      %v3331 = vadd.f32 %v2941, %v3205
      %v3332 = vadd.f32 %v2942, %v3210
      %v3333 = vadd.f32 %v2943, %v3215
      %v3334 = vadd.f32 %v2944, %v3220
      %v3335 = vadd.f32 %v2945, %v3225
      %v3336 = vadd.f32 %v2946, %v3230
      %v3337 = vadd.f32 %v2947, %v3235
      %v3338 = vadd.f32 %v2948, %v3240
      %v3339 = vadd.f32 %v2949, %v3245
      %v3340 = vadd.f32 %v2950, %v3250
      %v3341 = vadd.f32 %v2951, %v3255
      %v3342 = vadd.f32 %v2952, %v3260
      %v3343 = vadd.f32 %v2953, %v3265
      %v3344 = vadd.f32 %v2954, %v3270
      %v3345 = vadd.f32 %v2955, %v3275
      %v3346 = vadd.f32 %v2956, %v3280
      %v3347 = vadd.f32 %v2957, %v3285
      %v3348 = vadd.f32 %v2958, %v3290
      %v3349 = vadd.f32 %v2959, %v3295
      %v3350 = vadd.f32 %v2960, %v3300
      %v3351 = vadd.f32 %v2961, %v3305
      %v3352 = vadd.f32 %v2962, %v3310
      %v3353 = vadd.f32 %v2963, %v3315
      %v3354 = vadd.f32 %v2964, %v3320
      %v3355 = vld [vmem:[%s2574 + $0x2] sm:$0xff]
      %v3356 = vld [vmem:[%s2574 + $0xa] sm:$0xff]
      %v3357 = vld [vmem:[%s2574 + $0x1a] sm:$0xff]
      %v3358 = vld [vmem:[%s2574 + $0x22] sm:$0xff]
      %v3359 = vld [vmem:[%s2574 + $0x32] sm:$0xff]
      %v3360 = vld [vmem:[%s2574 + $0x3a] sm:$0xff]
      %v3361 = vld [vmem:[%s2574 + $0x4a] sm:$0xff]
      %v3362 = vld [vmem:[%s2574 + $0x52] sm:$0xff]
      %v3363 = vld [vmem:[%s2574 + $0x62] sm:$0xff]
      %v3364 = vld [vmem:[%s2574 + $0x6a] sm:$0xff]
      %v3365 = vld [vmem:[%s2574 + $0x7a] sm:$0xff]
      %v3366 = vld [vmem:[%s2574 + $0x82] sm:$0xff]
      %v3367 = vld [vmem:[%s2574 + $0x92] sm:$0xff]
      %v3368 = vld [vmem:[%s2574 + $0x9a] sm:$0xff]
      %v3369 = vld [vmem:[%s2574 + $0xaa] sm:$0xff]
      %v3370 = vld [vmem:[%s2574 + $0xb2] sm:$0xff]
      %v3371 = vld [vmem:[%s2574 + $0xc2] sm:$0xff]
      %v3372 = vld [vmem:[%s2574 + $0xca] sm:$0xff]
      %v3373 = vld [vmem:[%s2574 + $0xda] sm:$0xff]
      %v3374 = vld [vmem:[%s2574 + $0xe2] sm:$0xff]
      %v3375 = vld [vmem:[%s2574 + $0xf2] sm:$0xff]
      %v3376 = vld [vmem:[%s2574 + $0xfa] sm:$0xff]
      %v3377 = vld [vmem:[%s2574 + $0x10a] sm:$0xff]
      %v3378 = vld [vmem:[%s2574 + $0x112] sm:$0xff]
      %v3379 = vld [vmem:[%s2574 + $0x122] sm:$0xff]
      %v3380 = vld [vmem:[%s2574 + $0x12a] sm:$0xff]
      %v3381 = vld [vmem:[%s2574 + $0x13a] sm:$0xff]
      %v3382 = vld [vmem:[%s2574 + $0x142] sm:$0xff]
      %v3383 = vld [vmem:[%s2574 + $0x152] sm:$0xff]
      %v3384 = vld [vmem:[%s2574 + $0x15a] sm:$0xff]
      %v3385 = vld [vmem:[%s2574 + $0x16a] sm:$0xff]
      %v3386 = vld [vmem:[%s2574 + $0x172] sm:$0xff]
      %s3387 = scalar_lea.vmem %s1, 32
      %v3388 = vld [vmem:[%s3387] sm:$0xf]
      %v3390 = vsel %vm265, %v3355, 0
      %v3393 = vsel %vm265, %v3356, 0
      %v3396 = vsel %vm265, %v3357, 0
      %v3399 = vsel %vm265, %v3358, 0
      %v3402 = vsel %vm265, %v3359, 0
      %v3405 = vsel %vm265, %v3360, 0
      %v3408 = vsel %vm265, %v3361, 0
      %v3411 = vsel %vm265, %v3362, 0
      %v3414 = vsel %vm265, %v3363, 0
      %v3417 = vsel %vm265, %v3364, 0
      %v3420 = vsel %vm265, %v3365, 0
      %v3423 = vsel %vm265, %v3366, 0
      %v3426 = vsel %vm265, %v3367, 0
      %v3429 = vsel %vm265, %v3368, 0
      %v3432 = vsel %vm265, %v3369, 0
      %v3435 = vsel %vm265, %v3370, 0
      %v3438 = vsel %vm265, %v3371, 0
      %v3441 = vsel %vm265, %v3372, 0
      %v3444 = vsel %vm265, %v3373, 0
      %v3447 = vsel %vm265, %v3374, 0
      %v3450 = vsel %vm265, %v3375, 0
      %v3453 = vsel %vm265, %v3376, 0
      %v3456 = vsel %vm265, %v3377, 0
      %v3459 = vsel %vm265, %v3378, 0
      %v3462 = vsel %vm265, %v3379, 0
      %v3465 = vsel %vm265, %v3380, 0
      %v3468 = vsel %vm265, %v3381, 0
      %v3471 = vsel %vm265, %v3382, 0
      %v3474 = vsel %vm265, %v3383, 0
      %v3477 = vsel %vm265, %v3384, 0
      %v3480 = vsel %vm265, %v3385, 0
      %v3483 = vsel %vm265, %v3386, 0
      %v3486 = vsel %vm362, %v3388, 0
      %3488 = vmatprep.subr.mxu0 0.0
      %3489 = vmatpush1.msra.mxu0 %v3486
      %3490 = vmatprep.subr.mxu0 0.0
      %3491 = vmatpush1.msra.mxu0 0.0
      %3492 = vmatprep.subr.mxu0 0.0
      %3493 = vmatpush1.msra.mxu0 0.0
      %3494 = vmatprep.subr.mxu0 0.0
      %3495 = vmatpush1.msra.mxu0 0.0
      %3496 = vmatprep.subr.mxu0 0.0
      %3497 = vmatpush1.msra.mxu0 0.0
      %3498 = vmatprep.subr.mxu0 0.0
      %3499 = vmatpush1.msra.mxu0 0.0
      %3500 = vmatprep.subr.mxu0 0.0
      %3501 = vmatpush1.msra.mxu0 0.0
      %3502 = vmatprep.subr.mxu0 0.0
      %3503 = vmatpush1.msra.mxu0 0.0
      %3504 = vmatprep.subr.mxu0 0.0
      %3505 = vmatpush1.msra.mxu0 0.0
      %3506 = vmatprep.subr.mxu0 0.0
      %3507 = vmatpush1.msra.mxu0 0.0
      %3508 = vmatprep.subr.mxu0 0.0
      %3509 = vmatpush1.msra.mxu0 0.0
      %3510 = vmatprep.subr.mxu0 0.0
      %3511 = vmatpush1.msra.mxu0 0.0
      %3512 = vmatprep.subr.mxu0 0.0
      %3513 = vmatpush1.msra.mxu0 0.0
      %3514 = vmatprep.subr.mxu0 0.0
      %3515 = vmatpush1.msra.mxu0 0.0
      %3516 = vmatprep.subr.mxu0 0.0
      %3517 = vmatpush1.msra.mxu0 0.0
      %3518 = vmatprep.subr.mxu0 0.0
      %3519 = vmatpush1.msra.mxu0 0.0
      %3520 = vmatprep.subr.mxu0 0.0
      %3521 = vmatpush1.msra.mxu0 0.0
      %3522 = vmatprep.subr.mxu0 0.0
      %3523 = vmatpush1.msra.mxu0 0.0
      %3524 = vmatprep.subr.mxu0 0.0
      %3525 = vmatpush1.msra.mxu0 0.0
      %3526 = vmatprep.subr.mxu0 0.0
      %3527 = vmatpush1.msra.mxu0 0.0
      %3528 = vmatprep.subr.mxu0 0.0
      %3529 = vmatpush1.msra.mxu0 0.0
      %3530 = vmatprep.subr.mxu0 0.0
      %3531 = vmatpush1.msra.mxu0 0.0
      %3532 = vmatprep.subr.mxu0 0.0
      %3533 = vmatpush1.msra.mxu0 0.0
      %3534 = vmatprep.subr.mxu0 0.0
      %3535 = vmatpush1.msra.mxu0 0.0
      %3536 = vmatprep.subr.mxu0 0.0
      %3537 = vmatpush1.msra.mxu0 0.0
      %3538 = vmatprep.subr.mxu0 0.0
      %3539 = vmatpush1.msra.mxu0 0.0
      %3540 = vmatprep.subr.mxu0 0.0
      %3541 = vmatpush1.msra.mxu0 0.0
      %3542 = vmatprep.subr.mxu0 0.0
      %3543 = vmatpush1.msra.mxu0 0.0
      %3544 = vmatprep.subr.mxu0 0.0
      %3545 = vmatpush1.msra.mxu0 0.0
      %3546 = vmatprep.subr.mxu0 0.0
      %3547 = vmatpush1.msra.mxu0 0.0
      %3548 = vmatprep.subr.mxu0 0.0
      %3549 = vmatpush1.msra.mxu0 0.0
      %3550 = vmatprep.subr.mxu0 0.0
      %3551 = vmatpush1.msra.mxu0 0.0
      %3552 = vmatprep.mubr.f32.mxu0 0.0
      %3553 = vmatmul.mubr.f32.gmra.mrb[0].mxu0 %v3390
      %v3554 = vpop.f32.mrb[0].mxu0
      %v3555 = vadd.f32 0.0, %v3554
      %v3556 = vpop.f32.mrb[0].mxu0
      %3557 = vmatprep.mubr.f32.mxu0 0.0
      %3558 = vmatmul.mubr.f32.gmra.mrb[0].mxu0 %v3393
      %v3559 = vpop.f32.mrb[0].mxu0
      %v3560 = vadd.f32 0.0, %v3559
      %v3561 = vpop.f32.mrb[0].mxu0
      %3562 = vmatprep.mubr.f32.mxu0 0.0
      %3563 = vmatmul.mubr.f32.gmra.mrb[0].mxu0 %v3396
      %v3564 = vpop.f32.mrb[0].mxu0
      %v3565 = vadd.f32 0.0, %v3564
      %v3566 = vpop.f32.mrb[0].mxu0
      %3567 = vmatprep.mubr.f32.mxu0 0.0
      %3568 = vmatmul.mubr.f32.gmra.mrb[0].mxu0 %v3399
      %v3569 = vpop.f32.mrb[0].mxu0
      %v3570 = vadd.f32 0.0, %v3569
      %v3571 = vpop.f32.mrb[0].mxu0
      %3572 = vmatprep.mubr.f32.mxu0 0.0
      %3573 = vmatmul.mubr.f32.gmra.mrb[0].mxu0 %v3402
      %v3574 = vpop.f32.mrb[0].mxu0
      %v3575 = vadd.f32 0.0, %v3574
      %v3576 = vpop.f32.mrb[0].mxu0
      %3577 = vmatprep.mubr.f32.mxu0 0.0
      %3578 = vmatmul.mubr.f32.gmra.mrb[0].mxu0 %v3405
      %v3579 = vpop.f32.mrb[0].mxu0
      %v3580 = vadd.f32 0.0, %v3579
      %v3581 = vpop.f32.mrb[0].mxu0
      %3582 = vmatprep.mubr.f32.mxu0 0.0
      %3583 = vmatmul.mubr.f32.gmra.mrb[0].mxu0 %v3408
      %v3584 = vpop.f32.mrb[0].mxu0
      %v3585 = vadd.f32 0.0, %v3584
      %v3586 = vpop.f32.mrb[0].mxu0
      %3587 = vmatprep.mubr.f32.mxu0 0.0
      %3588 = vmatmul.mubr.f32.gmra.mrb[0].mxu0 %v3411
      %v3589 = vpop.f32.mrb[0].mxu0
      %v3590 = vadd.f32 0.0, %v3589
      %v3591 = vpop.f32.mrb[0].mxu0
      %3592 = vmatprep.mubr.f32.mxu0 0.0
      %3593 = vmatmul.mubr.f32.gmra.mrb[0].mxu0 %v3414
      %v3594 = vpop.f32.mrb[0].mxu0
      %v3595 = vadd.f32 0.0, %v3594
      %v3596 = vpop.f32.mrb[0].mxu0
      %3597 = vmatprep.mubr.f32.mxu0 0.0
      %3598 = vmatmul.mubr.f32.gmra.mrb[0].mxu0 %v3417
      %v3599 = vpop.f32.mrb[0].mxu0
      %v3600 = vadd.f32 0.0, %v3599
      %v3601 = vpop.f32.mrb[0].mxu0
      %3602 = vmatprep.mubr.f32.mxu0 0.0
      %3603 = vmatmul.mubr.f32.gmra.mrb[0].mxu0 %v3420
      %v3604 = vpop.f32.mrb[0].mxu0
      %v3605 = vadd.f32 0.0, %v3604
      %v3606 = vpop.f32.mrb[0].mxu0
      %3607 = vmatprep.mubr.f32.mxu0 0.0
      %3608 = vmatmul.mubr.f32.gmra.mrb[0].mxu0 %v3423
      %v3609 = vpop.f32.mrb[0].mxu0
      %v3610 = vadd.f32 0.0, %v3609
      %v3611 = vpop.f32.mrb[0].mxu0
      %3612 = vmatprep.mubr.f32.mxu0 0.0
      %3613 = vmatmul.mubr.f32.gmra.mrb[0].mxu0 %v3426
      %v3614 = vpop.f32.mrb[0].mxu0
      %v3615 = vadd.f32 0.0, %v3614
      %v3616 = vpop.f32.mrb[0].mxu0
      %3617 = vmatprep.mubr.f32.mxu0 0.0
      %3618 = vmatmul.mubr.f32.gmra.mrb[0].mxu0 %v3429
      %v3619 = vpop.f32.mrb[0].mxu0
      %v3620 = vadd.f32 0.0, %v3619
      %v3621 = vpop.f32.mrb[0].mxu0
      %3622 = vmatprep.mubr.f32.mxu0 0.0
      %3623 = vmatmul.mubr.f32.gmra.mrb[0].mxu0 %v3432
      %v3624 = vpop.f32.mrb[0].mxu0
      %v3625 = vadd.f32 0.0, %v3624
      %v3626 = vpop.f32.mrb[0].mxu0
      %3627 = vmatprep.mubr.f32.mxu0 0.0
      %3628 = vmatmul.mubr.f32.gmra.mrb[0].mxu0 %v3435
      %v3629 = vpop.f32.mrb[0].mxu0
      %v3630 = vadd.f32 0.0, %v3629
      %v3631 = vpop.f32.mrb[0].mxu0
      %3632 = vmatprep.mubr.f32.mxu0 0.0
      %3633 = vmatmul.mubr.f32.gmra.mrb[0].mxu0 %v3438
      %v3634 = vpop.f32.mrb[0].mxu0
      %v3635 = vadd.f32 0.0, %v3634
      %v3636 = vpop.f32.mrb[0].mxu0
      %3637 = vmatprep.mubr.f32.mxu0 0.0
      %3638 = vmatmul.mubr.f32.gmra.mrb[0].mxu0 %v3441
      %v3639 = vpop.f32.mrb[0].mxu0
      %v3640 = vadd.f32 0.0, %v3639
      %v3641 = vpop.f32.mrb[0].mxu0
      %3642 = vmatprep.mubr.f32.mxu0 0.0
      %3643 = vmatmul.mubr.f32.gmra.mrb[0].mxu0 %v3444
      %v3644 = vpop.f32.mrb[0].mxu0
      %v3645 = vadd.f32 0.0, %v3644
      %v3646 = vpop.f32.mrb[0].mxu0
      %3647 = vmatprep.mubr.f32.mxu0 0.0
      %3648 = vmatmul.mubr.f32.gmra.mrb[0].mxu0 %v3447
      %v3649 = vpop.f32.mrb[0].mxu0
      %v3650 = vadd.f32 0.0, %v3649
      %v3651 = vpop.f32.mrb[0].mxu0
      %3652 = vmatprep.mubr.f32.mxu0 0.0
      %3653 = vmatmul.mubr.f32.gmra.mrb[0].mxu0 %v3450
      %v3654 = vpop.f32.mrb[0].mxu0
      %v3655 = vadd.f32 0.0, %v3654
      %v3656 = vpop.f32.mrb[0].mxu0
      %3657 = vmatprep.mubr.f32.mxu0 0.0
      %3658 = vmatmul.mubr.f32.gmra.mrb[0].mxu0 %v3453
      %v3659 = vpop.f32.mrb[0].mxu0
      %v3660 = vadd.f32 0.0, %v3659
      %v3661 = vpop.f32.mrb[0].mxu0
      %3662 = vmatprep.mubr.f32.mxu0 0.0
      %3663 = vmatmul.mubr.f32.gmra.mrb[0].mxu0 %v3456
      %v3664 = vpop.f32.mrb[0].mxu0
      %v3665 = vadd.f32 0.0, %v3664
      %v3666 = vpop.f32.mrb[0].mxu0
      %3667 = vmatprep.mubr.f32.mxu0 0.0
      %3668 = vmatmul.mubr.f32.gmra.mrb[0].mxu0 %v3459
      %v3669 = vpop.f32.mrb[0].mxu0
      %v3670 = vadd.f32 0.0, %v3669
      %v3671 = vpop.f32.mrb[0].mxu0
      %3672 = vmatprep.mubr.f32.mxu0 0.0
      %3673 = vmatmul.mubr.f32.gmra.mrb[0].mxu0 %v3462
      %v3674 = vpop.f32.mrb[0].mxu0
      %v3675 = vadd.f32 0.0, %v3674
      %v3676 = vpop.f32.mrb[0].mxu0
      %3677 = vmatprep.mubr.f32.mxu0 0.0
      %3678 = vmatmul.mubr.f32.gmra.mrb[0].mxu0 %v3465
      %v3679 = vpop.f32.mrb[0].mxu0
      %v3680 = vadd.f32 0.0, %v3679
      %v3681 = vpop.f32.mrb[0].mxu0
      %3682 = vmatprep.mubr.f32.mxu0 0.0
      %3683 = vmatmul.mubr.f32.gmra.mrb[0].mxu0 %v3468
      %v3684 = vpop.f32.mrb[0].mxu0
      %v3685 = vadd.f32 0.0, %v3684
      %v3686 = vpop.f32.mrb[0].mxu0
      %3687 = vmatprep.mubr.f32.mxu0 0.0
      %3688 = vmatmul.mubr.f32.gmra.mrb[0].mxu0 %v3471
      %v3689 = vpop.f32.mrb[0].mxu0
      %v3690 = vadd.f32 0.0, %v3689
      %v3691 = vpop.f32.mrb[0].mxu0
      %3692 = vmatprep.mubr.f32.mxu0 0.0
      %3693 = vmatmul.mubr.f32.gmra.mrb[0].mxu0 %v3474
      %v3694 = vpop.f32.mrb[0].mxu0
      %v3695 = vadd.f32 0.0, %v3694
      %v3696 = vpop.f32.mrb[0].mxu0
      %3697 = vmatprep.mubr.f32.mxu0 0.0
      %3698 = vmatmul.mubr.f32.gmra.mrb[0].mxu0 %v3477
      %v3699 = vpop.f32.mrb[0].mxu0
      %v3700 = vadd.f32 0.0, %v3699
      %v3701 = vpop.f32.mrb[0].mxu0
      %3702 = vmatprep.mubr.f32.mxu0 0.0
      %3703 = vmatmul.mubr.f32.gmra.mrb[0].mxu0 %v3480
      %v3704 = vpop.f32.mrb[0].mxu0
      %v3705 = vadd.f32 0.0, %v3704
      %v3706 = vpop.f32.mrb[0].mxu0
      %3707 = vmatprep.mubr.f32.mxu0 0.0
      %3708 = vmatmul.mubr.f32.gmra.mrb[0].mxu0 %v3483
      %v3709 = vpop.f32.mrb[0].mxu0
      %v3710 = vadd.f32 0.0, %v3709
      %v3711 = vpop.f32.mrb[0].mxu0
      %3712 = vdwg.mxu0
      %v3713 = vadd.f32 %v3323, %v3555
      %v3714 = vadd.f32 %v3324, %v3560
      %v3715 = vadd.f32 %v3325, %v3565
      %v3716 = vadd.f32 %v3326, %v3570
      %v3717 = vadd.f32 %v3327, %v3575
      %v3718 = vadd.f32 %v3328, %v3580
      %v3719 = vadd.f32 %v3329, %v3585
      %v3720 = vadd.f32 %v3330, %v3590
      %v3721 = vadd.f32 %v3331, %v3595
      %v3722 = vadd.f32 %v3332, %v3600
      %v3723 = vadd.f32 %v3333, %v3605
      %v3724 = vadd.f32 %v3334, %v3610
      %v3725 = vadd.f32 %v3335, %v3615
      %v3726 = vadd.f32 %v3336, %v3620
      %v3727 = vadd.f32 %v3337, %v3625
      %v3728 = vadd.f32 %v3338, %v3630
      %v3729 = vadd.f32 %v3339, %v3635
      %v3730 = vadd.f32 %v3340, %v3640
      %v3731 = vadd.f32 %v3341, %v3645
      %v3732 = vadd.f32 %v3342, %v3650
      %v3733 = vadd.f32 %v3343, %v3655
      %v3734 = vadd.f32 %v3344, %v3660
      %v3735 = vadd.f32 %v3345, %v3665
      %v3736 = vadd.f32 %v3346, %v3670
      %v3737 = vadd.f32 %v3347, %v3675
      %v3738 = vadd.f32 %v3348, %v3680
      %v3739 = vadd.f32 %v3349, %v3685
      %v3740 = vadd.f32 %v3350, %v3690
      %v3741 = vadd.f32 %v3351, %v3695
      %v3742 = vadd.f32 %v3352, %v3700
      %v3743 = vadd.f32 %v3353, %v3705
      %v3744 = vadd.f32 %v3354, %v3710
      %vm3745 = vcmp.ge.f32.partialorder %v3713, 0.0
      %vm3746 = vcmp.ge.f32.partialorder %v3714, 0.0
      %vm3747 = vcmp.ge.f32.partialorder %v3715, 0.0
      %vm3748 = vcmp.ge.f32.partialorder %v3716, 0.0
      %vm3749 = vcmp.ge.f32.partialorder %v3717, 0.0
      %vm3750 = vcmp.ge.f32.partialorder %v3718, 0.0
      %vm3751 = vcmp.ge.f32.partialorder %v3719, 0.0
      %vm3752 = vcmp.ge.f32.partialorder %v3720, 0.0
      %vm3753 = vcmp.ge.f32.partialorder %v3721, 0.0
      %vm3754 = vcmp.ge.f32.partialorder %v3722, 0.0
      %vm3755 = vcmp.ge.f32.partialorder %v3723, 0.0
      %vm3756 = vcmp.ge.f32.partialorder %v3724, 0.0
      %vm3757 = vcmp.ge.f32.partialorder %v3725, 0.0
      %vm3758 = vcmp.ge.f32.partialorder %v3726, 0.0
      %vm3759 = vcmp.ge.f32.partialorder %v3727, 0.0
      %vm3760 = vcmp.ge.f32.partialorder %v3728, 0.0
      %vm3761 = vcmp.ge.f32.partialorder %v3729, 0.0
      %vm3762 = vcmp.ge.f32.partialorder %v3730, 0.0
      %vm3763 = vcmp.ge.f32.partialorder %v3731, 0.0
      %vm3764 = vcmp.ge.f32.partialorder %v3732, 0.0
      %vm3765 = vcmp.ge.f32.partialorder %v3733, 0.0
      %vm3766 = vcmp.ge.f32.partialorder %v3734, 0.0
      %vm3767 = vcmp.ge.f32.partialorder %v3735, 0.0
      %vm3768 = vcmp.ge.f32.partialorder %v3736, 0.0
      %vm3769 = vcmp.ge.f32.partialorder %v3737, 0.0
      %vm3770 = vcmp.ge.f32.partialorder %v3738, 0.0
      %vm3771 = vcmp.ge.f32.partialorder %v3739, 0.0
      %vm3772 = vcmp.ge.f32.partialorder %v3740, 0.0
      %vm3773 = vcmp.ge.f32.partialorder %v3741, 0.0
      %vm3774 = vcmp.ge.f32.partialorder %v3742, 0.0
      %vm3775 = vcmp.ge.f32.partialorder %v3743, 0.0
      %vm3776 = vcmp.ge.f32.partialorder %v3744, 0.0
      %v3777 = vmul.f32 %v3713, 0.1
      %v3778 = vmul.f32 %v3714, 0.1
      %v3779 = vmul.f32 %v3715, 0.1
      %v3780 = vmul.f32 %v3716, 0.1
      %v3781 = vmul.f32 %v3717, 0.1
      %v3782 = vmul.f32 %v3718, 0.1
      %v3783 = vmul.f32 %v3719, 0.1
      %v3784 = vmul.f32 %v3720, 0.1
      %v3785 = vmul.f32 %v3721, 0.1
      %v3786 = vmul.f32 %v3722, 0.1
      %v3787 = vmul.f32 %v3723, 0.1
      %v3788 = vmul.f32 %v3724, 0.1
      %v3789 = vmul.f32 %v3725, 0.1
      %v3790 = vmul.f32 %v3726, 0.1
      %v3791 = vmul.f32 %v3727, 0.1
      %v3792 = vmul.f32 %v3728, 0.1
      %v3793 = vmul.f32 %v3729, 0.1
      %v3794 = vmul.f32 %v3730, 0.1
      %v3795 = vmul.f32 %v3731, 0.1
      %v3796 = vmul.f32 %v3732, 0.1
      %v3797 = vmul.f32 %v3733, 0.1
      %v3798 = vmul.f32 %v3734, 0.1
      %v3799 = vmul.f32 %v3735, 0.1
      %v3800 = vmul.f32 %v3736, 0.1
      %v3801 = vmul.f32 %v3737, 0.1
      %v3802 = vmul.f32 %v3738, 0.1
      %v3803 = vmul.f32 %v3739, 0.1
      %v3804 = vmul.f32 %v3740, 0.1
      %v3805 = vmul.f32 %v3741, 0.1
      %v3806 = vmul.f32 %v3742, 0.1
      %v3807 = vmul.f32 %v3743, 0.1
      %v3808 = vmul.f32 %v3744, 0.1
      %v3809 = vsel %vm3745, %v3713, %v3777
      %v3810 = vsel %vm3746, %v3714, %v3778
      %v3811 = vsel %vm3747, %v3715, %v3779
      %v3812 = vsel %vm3748, %v3716, %v3780
      %v3813 = vsel %vm3749, %v3717, %v3781
      %v3814 = vsel %vm3750, %v3718, %v3782
      %v3815 = vsel %vm3751, %v3719, %v3783
      %v3816 = vsel %vm3752, %v3720, %v3784
      %v3817 = vsel %vm3753, %v3721, %v3785
      %v3818 = vsel %vm3754, %v3722, %v3786
      %v3819 = vsel %vm3755, %v3723, %v3787
      %v3820 = vsel %vm3756, %v3724, %v3788
      %v3821 = vsel %vm3757, %v3725, %v3789
      %v3822 = vsel %vm3758, %v3726, %v3790
      %v3823 = vsel %vm3759, %v3727, %v3791
      %v3824 = vsel %vm3760, %v3728, %v3792
      %v3825 = vsel %vm3761, %v3729, %v3793
      %v3826 = vsel %vm3762, %v3730, %v3794
      %v3827 = vsel %vm3763, %v3731, %v3795
      %v3828 = vsel %vm3764, %v3732, %v3796
      %v3829 = vsel %vm3765, %v3733, %v3797
      %v3830 = vsel %vm3766, %v3734, %v3798
      %v3831 = vsel %vm3767, %v3735, %v3799
      %v3832 = vsel %vm3768, %v3736, %v3800
      %v3833 = vsel %vm3769, %v3737, %v3801
      %v3834 = vsel %vm3770, %v3738, %v3802
      %v3835 = vsel %vm3771, %v3739, %v3803
      %v3836 = vsel %vm3772, %v3740, %v3804
      %v3837 = vsel %vm3773, %v3741, %v3805
      %v3838 = vsel %vm3774, %v3742, %v3806
      %v3839 = vsel %vm3775, %v3743, %v3807
      %v3840 = vsel %vm3776, %v3744, %v3808
      %3841 = vst.msk [vmem:[#allocation2] sm:$0xff] %vm265, 0.0
      %3842 = vst.msk [vmem:[#allocation2 + $0x8] sm:$0xff] %vm265, 0.0
      %vm3843 = vcmask 27648
      %3844 = vst.msk [vmem:[#allocation2 + $0x10] sm:$0xf] %vm3843, 0.0
      %3845 = vst.msk [vmem:[#allocation2 + $0x18] sm:$0xff] %vm265, 0.0
      %3846 = vst.msk [vmem:[#allocation2 + $0x20] sm:$0xff] %vm265, 0.0
      %3847 = vst.msk [vmem:[#allocation2 + $0x28] sm:$0xf] %vm3843, 0.0
      %s3848 = scalar_lea.vmem [#allocation2], 432
      %3849 = vst.msk [vmem:[%s3848] sm:$0xff] %vm265, 0.0
      %3850 = vst.msk [vmem:[%s3848 + $0x8] sm:$0xff] %vm265, 0.0
      %3851 = vst.msk [vmem:[%s3848 + $0x10] sm:$0xf] %vm3843, 0.0
      %3852 = vst.msk [vmem:[%s3848 + $0x18] sm:$0xff] %vm265, 0.0
      %3853 = vst.msk [vmem:[%s3848 + $0x20] sm:$0xff] %vm265, 0.0
      %3854 = vst.msk [vmem:[%s3848 + $0x28] sm:$0xf] %vm3843, 0.0
      %s3855 = scalar_lea.vmem [#allocation2], 48
      %vm3856 = vcmask 25600
      %3857 = vst.msk [vmem:[%s3855] sm:$0x3] %vm3856, 0.0
      %3858 = vst.msk [vmem:[%s3855 + $0x18] sm:$0x3] %vm3856, 0.0
      %3859 = vst.msk [vmem:[%s3855 + $0x30] sm:$0x3] %vm3856, 0.0
      %3860 = vst.msk [vmem:[%s3855 + $0x48] sm:$0x3] %vm3856, 0.0
      %3861 = vst.msk [vmem:[%s3855 + $0x60] sm:$0x3] %vm3856, 0.0
      %3862 = vst.msk [vmem:[%s3855 + $0x78] sm:$0x3] %vm3856, 0.0
      %3863 = vst.msk [vmem:[%s3855 + $0x90] sm:$0x3] %vm3856, 0.0
      %3864 = vst.msk [vmem:[%s3855 + $0xa8] sm:$0x3] %vm3856, 0.0
      %3865 = vst.msk [vmem:[%s3855 + $0xc0] sm:$0x3] %vm3856, 0.0
      %3866 = vst.msk [vmem:[%s3855 + $0xd8] sm:$0x3] %vm3856, 0.0
      %3867 = vst.msk [vmem:[%s3855 + $0xf0] sm:$0x3] %vm3856, 0.0
      %3868 = vst.msk [vmem:[%s3855 + $0x108] sm:$0x3] %vm3856, 0.0
      %3869 = vst.msk [vmem:[%s3855 + $0x120] sm:$0x3] %vm3856, 0.0
      %3870 = vst.msk [vmem:[%s3855 + $0x138] sm:$0x3] %vm3856, 0.0
      %3871 = vst.msk [vmem:[%s3855 + $0x150] sm:$0x3] %vm3856, 0.0
      %3872 = vst.msk [vmem:[%s3855 + $0x168] sm:$0x3] %vm3856, 0.0
      %3873 = vst.msk [vmem:[%s3855 + $0x12] sm:$0x3] %vm3856, 0.0
      %3874 = vst.msk [vmem:[%s3855 + $0x2a] sm:$0x3] %vm3856, 0.0
      %3875 = vst.msk [vmem:[%s3855 + $0x42] sm:$0x3] %vm3856, 0.0
      %3876 = vst.msk [vmem:[%s3855 + $0x5a] sm:$0x3] %vm3856, 0.0
      %3877 = vst.msk [vmem:[%s3855 + $0x72] sm:$0x3] %vm3856, 0.0
      %3878 = vst.msk [vmem:[%s3855 + $0x8a] sm:$0x3] %vm3856, 0.0
      %3879 = vst.msk [vmem:[%s3855 + $0xa2] sm:$0x3] %vm3856, 0.0
      %3880 = vst.msk [vmem:[%s3855 + $0xba] sm:$0x3] %vm3856, 0.0
      %3881 = vst.msk [vmem:[%s3855 + $0xd2] sm:$0x3] %vm3856, 0.0
      %3882 = vst.msk [vmem:[%s3855 + $0xea] sm:$0x3] %vm3856, 0.0
      %3883 = vst.msk [vmem:[%s3855 + $0x102] sm:$0x3] %vm3856, 0.0
      %3884 = vst.msk [vmem:[%s3855 + $0x11a] sm:$0x3] %vm3856, 0.0
      %3885 = vst.msk [vmem:[%s3855 + $0x132] sm:$0x3] %vm3856, 0.0
      %3886 = vst.msk [vmem:[%s3855 + $0x14a] sm:$0x3] %vm3856, 0.0
      %3887 = vst.msk [vmem:[%s3855 + $0x162] sm:$0x3] %vm3856, 0.0
      %3888 = vst.msk [vmem:[%s3855 + $0x17a] sm:$0x3] %vm3856, 0.0
      %3889 = vst.msk [vmem:[%s3855 + $0x2] sm:$0xff] %vm265, %v3809
      %3890 = vst.msk [vmem:[%s3855 + $0xa] sm:$0xff] %vm265, %v3810
      %3891 = vst.msk [vmem:[%s3855 + $0x1a] sm:$0xff] %vm265, %v3811
      %3892 = vst.msk [vmem:[%s3855 + $0x22] sm:$0xff] %vm265, %v3812
      %3893 = vst.msk [vmem:[%s3855 + $0x32] sm:$0xff] %vm265, %v3813
      %3894 = vst.msk [vmem:[%s3855 + $0x3a] sm:$0xff] %vm265, %v3814
      %3895 = vst.msk [vmem:[%s3855 + $0x4a] sm:$0xff] %vm265, %v3815
      %3896 = vst.msk [vmem:[%s3855 + $0x52] sm:$0xff] %vm265, %v3816
      %3897 = vst.msk [vmem:[%s3855 + $0x62] sm:$0xff] %vm265, %v3817
      %3898 = vst.msk [vmem:[%s3855 + $0x6a] sm:$0xff] %vm265, %v3818
      %3899 = vst.msk [vmem:[%s3855 + $0x7a] sm:$0xff] %vm265, %v3819
      %3900 = vst.msk [vmem:[%s3855 + $0x82] sm:$0xff] %vm265, %v3820
      %3901 = vst.msk [vmem:[%s3855 + $0x92] sm:$0xff] %vm265, %v3821
      %3902 = vst.msk [vmem:[%s3855 + $0x9a] sm:$0xff] %vm265, %v3822
      %3903 = vst.msk [vmem:[%s3855 + $0xaa] sm:$0xff] %vm265, %v3823
      %3904 = vst.msk [vmem:[%s3855 + $0xb2] sm:$0xff] %vm265, %v3824
      %3905 = vst.msk [vmem:[%s3855 + $0xc2] sm:$0xff] %vm265, %v3825
      %3906 = vst.msk [vmem:[%s3855 + $0xca] sm:$0xff] %vm265, %v3826
      %3907 = vst.msk [vmem:[%s3855 + $0xda] sm:$0xff] %vm265, %v3827
      %3908 = vst.msk [vmem:[%s3855 + $0xe2] sm:$0xff] %vm265, %v3828
      %3909 = vst.msk [vmem:[%s3855 + $0xf2] sm:$0xff] %vm265, %v3829
      %3910 = vst.msk [vmem:[%s3855 + $0xfa] sm:$0xff] %vm265, %v3830
      %3911 = vst.msk [vmem:[%s3855 + $0x10a] sm:$0xff] %vm265, %v3831
      %3912 = vst.msk [vmem:[%s3855 + $0x112] sm:$0xff] %vm265, %v3832
      %3913 = vst.msk [vmem:[%s3855 + $0x122] sm:$0xff] %vm265, %v3833
      %3914 = vst.msk [vmem:[%s3855 + $0x12a] sm:$0xff] %vm265, %v3834
      %3915 = vst.msk [vmem:[%s3855 + $0x13a] sm:$0xff] %vm265, %v3835
      %3916 = vst.msk [vmem:[%s3855 + $0x142] sm:$0xff] %vm265, %v3836
      %3917 = vst.msk [vmem:[%s3855 + $0x152] sm:$0xff] %vm265, %v3837
      %3918 = vst.msk [vmem:[%s3855 + $0x15a] sm:$0xff] %vm265, %v3838
      %3919 = vst.msk [vmem:[%s3855 + $0x16a] sm:$0xff] %vm265, %v3839
      %3920 = vst.msk [vmem:[%s3855 + $0x172] sm:$0xff] %vm265, %v3840
      %v3921 = vld [vmem:[%s1403 + $0x1] sm:$0xff]
      %v3922 = vld [vmem:[%s1403 + $0x9] sm:$0xff]
      %v3923 = vld [vmem:[%s1403 + $0x19] sm:$0xff]
      %v3924 = vld [vmem:[%s1403 + $0x21] sm:$0xff]
      %v3925 = vld [vmem:[%s1403 + $0x31] sm:$0xff]
      %v3926 = vld [vmem:[%s1403 + $0x39] sm:$0xff]
      %v3927 = vld [vmem:[%s1403 + $0x49] sm:$0xff]
      %v3928 = vld [vmem:[%s1403 + $0x51] sm:$0xff]
      %v3929 = vld [vmem:[%s1403 + $0x61] sm:$0xff]
      %v3930 = vld [vmem:[%s1403 + $0x69] sm:$0xff]
      %v3931 = vld [vmem:[%s1403 + $0x79] sm:$0xff]
      %v3932 = vld [vmem:[%s1403 + $0x81] sm:$0xff]
      %v3933 = vld [vmem:[%s1403 + $0x91] sm:$0xff]
      %v3934 = vld [vmem:[%s1403 + $0x99] sm:$0xff]
      %v3935 = vld [vmem:[%s1403 + $0xa9] sm:$0xff]
      %v3936 = vld [vmem:[%s1403 + $0xb1] sm:$0xff]
      %v3937 = vld [vmem:[%s1403 + $0xc1] sm:$0xff]
      %v3938 = vld [vmem:[%s1403 + $0xc9] sm:$0xff]
      %v3939 = vld [vmem:[%s1403 + $0xd9] sm:$0xff]
      %v3940 = vld [vmem:[%s1403 + $0xe1] sm:$0xff]
      %v3941 = vld [vmem:[%s1403 + $0xf1] sm:$0xff]
      %v3942 = vld [vmem:[%s1403 + $0xf9] sm:$0xff]
      %v3943 = vld [vmem:[%s1403 + $0x109] sm:$0xff]
      %v3944 = vld [vmem:[%s1403 + $0x111] sm:$0xff]
      %v3945 = vld [vmem:[%s1403 + $0x121] sm:$0xff]
      %v3946 = vld [vmem:[%s1403 + $0x129] sm:$0xff]
      %v3947 = vld [vmem:[%s1403 + $0x139] sm:$0xff]
      %v3948 = vld [vmem:[%s1403 + $0x141] sm:$0xff]
      %v3949 = vld [vmem:[%s1403 + $0x151] sm:$0xff]
      %v3950 = vld [vmem:[%s1403 + $0x159] sm:$0xff]
      %v3951 = vld [vmem:[%s1403 + $0x169] sm:$0xff]
      %v3952 = vld [vmem:[%s1403 + $0x171] sm:$0xff]
      %v3953 = vld [vmem:[%s4] sm:$0x1]
      %v3955 = vlaneseq
      %v3956 = vshrl.u32 %v3955, 7
      %v3957 = vsub.s32 0, %v3956
      %v3958 = vrot.slane %v3953, %v3957
      %v3960 = vadd.f32 %v3921, %v3958
      %v3961 = vadd.f32 %v3922, %v3958
      %v3962 = vadd.f32 %v3923, %v3958
      %v3963 = vadd.f32 %v3924, %v3958
      %v3964 = vadd.f32 %v3925, %v3958
      %v3965 = vadd.f32 %v3926, %v3958
      %v3966 = vadd.f32 %v3927, %v3958
      %v3967 = vadd.f32 %v3928, %v3958
      %v3968 = vadd.f32 %v3929, %v3958
      %v3969 = vadd.f32 %v3930, %v3958
      %v3970 = vadd.f32 %v3931, %v3958
      %v3971 = vadd.f32 %v3932, %v3958
      %v3972 = vadd.f32 %v3933, %v3958
      %v3973 = vadd.f32 %v3934, %v3958
      %v3974 = vadd.f32 %v3935, %v3958
      %v3975 = vadd.f32 %v3936, %v3958
      %v3976 = vadd.f32 %v3937, %v3958
      %v3977 = vadd.f32 %v3938, %v3958
      %v3978 = vadd.f32 %v3939, %v3958
      %v3979 = vadd.f32 %v3940, %v3958
      %v3980 = vadd.f32 %v3941, %v3958
      %v3981 = vadd.f32 %v3942, %v3958
      %v3982 = vadd.f32 %v3943, %v3958
      %v3983 = vadd.f32 %v3944, %v3958
      %v3984 = vadd.f32 %v3945, %v3958
      %v3985 = vadd.f32 %v3946, %v3958
      %v3986 = vadd.f32 %v3947, %v3958
      %v3987 = vadd.f32 %v3948, %v3958
      %v3988 = vadd.f32 %v3949, %v3958
      %v3989 = vadd.f32 %v3950, %v3958
      %v3990 = vadd.f32 %v3951, %v3958
      %v3991 = vadd.f32 %v3952, %v3958
      %v3992 = vld [vmem:[#allocation2] sm:$0xff]
      %v3993 = vld [vmem:[#allocation2 + $0x8] sm:$0xff]
      %v3994 = vld [vmem:[#allocation2 + $0x18] sm:$0xff]
      %v3995 = vld [vmem:[#allocation2 + $0x20] sm:$0xff]
      %v3996 = vld [vmem:[#allocation2 + $0x30] sm:$0xff]
      %v3997 = vld [vmem:[#allocation2 + $0x38] sm:$0xff]
      %v3998 = vld [vmem:[#allocation2 + $0x48] sm:$0xff]
      %v3999 = vld [vmem:[#allocation2 + $0x50] sm:$0xff]
      %v4000 = vld [vmem:[#allocation2 + $0x60] sm:$0xff]
      %v4001 = vld [vmem:[#allocation2 + $0x68] sm:$0xff]
      %v4002 = vld [vmem:[#allocation2 + $0x78] sm:$0xff]
      %v4003 = vld [vmem:[#allocation2 + $0x80] sm:$0xff]
      %v4004 = vld [vmem:[#allocation2 + $0x90] sm:$0xff]
      %v4005 = vld [vmem:[#allocation2 + $0x98] sm:$0xff]
      %v4006 = vld [vmem:[#allocation2 + $0xa8] sm:$0xff]
      %v4007 = vld [vmem:[#allocation2 + $0xb0] sm:$0xff]
      %v4008 = vld [vmem:[#allocation2 + $0xc0] sm:$0xff]
      %v4009 = vld [vmem:[#allocation2 + $0xc8] sm:$0xff]
      %v4010 = vld [vmem:[#allocation2 + $0xd8] sm:$0xff]
      %v4011 = vld [vmem:[#allocation2 + $0xe0] sm:$0xff]
      %v4012 = vld [vmem:[#allocation2 + $0xf0] sm:$0xff]
      %v4013 = vld [vmem:[#allocation2 + $0xf8] sm:$0xff]
      %v4014 = vld [vmem:[#allocation2 + $0x108] sm:$0xff]
      %v4015 = vld [vmem:[#allocation2 + $0x110] sm:$0xff]
      %v4016 = vld [vmem:[#allocation2 + $0x120] sm:$0xff]
      %v4017 = vld [vmem:[#allocation2 + $0x128] sm:$0xff]
      %v4018 = vld [vmem:[#allocation2 + $0x138] sm:$0xff]
      %v4019 = vld [vmem:[#allocation2 + $0x140] sm:$0xff]
      %v4020 = vld [vmem:[#allocation2 + $0x150] sm:$0xff]
      %v4021 = vld [vmem:[#allocation2 + $0x158] sm:$0xff]
      %v4022 = vld [vmem:[#allocation2 + $0x168] sm:$0xff]
      %v4023 = vld [vmem:[#allocation2 + $0x170] sm:$0xff]
      %v4024 = vld [vmem:[%s3] sm:$0xf]
      %v4026 = vsel %vm265, %v3992, 0
      %v4029 = vsel %vm265, %v3993, 0
      %v4032 = vsel %vm265, %v3994, 0
      %v4035 = vsel %vm265, %v3995, 0
      %v4038 = vsel %vm265, %v3996, 0
      %v4041 = vsel %vm265, %v3997, 0
      %v4044 = vsel %vm265, %v3998, 0
      %v4047 = vsel %vm265, %v3999, 0
      %v4050 = vsel %vm265, %v4000, 0
      %v4053 = vsel %vm265, %v4001, 0
      %v4056 = vsel %vm265, %v4002, 0
      %v4059 = vsel %vm265, %v4003, 0
      %v4062 = vsel %vm265, %v4004, 0
      %v4065 = vsel %vm265, %v4005, 0
      %v4068 = vsel %vm265, %v4006, 0
      %v4071 = vsel %vm265, %v4007, 0
      %v4074 = vsel %vm265, %v4008, 0
      %v4077 = vsel %vm265, %v4009, 0
      %v4080 = vsel %vm265, %v4010, 0
      %v4083 = vsel %vm265, %v4011, 0
      %v4086 = vsel %vm265, %v4012, 0
      %v4089 = vsel %vm265, %v4013, 0
      %v4092 = vsel %vm265, %v4014, 0
      %v4095 = vsel %vm265, %v4015, 0
      %v4098 = vsel %vm265, %v4016, 0
      %v4101 = vsel %vm265, %v4017, 0
      %v4104 = vsel %vm265, %v4018, 0
      %v4107 = vsel %vm265, %v4019, 0
      %v4110 = vsel %vm265, %v4020, 0
      %v4113 = vsel %vm265, %v4021, 0
      %v4116 = vsel %vm265, %v4022, 0
      %v4119 = vsel %vm265, %v4023, 0
      %v4122 = vsel %vm362, %v4024, 0
      %4124 = vmatprep.subr.mxu0 0.0
      %4125 = vmatpush1.msra.mxu0 %v4122
      %4126 = vmatprep.subr.mxu0 0.0
      %4127 = vmatpush1.msra.mxu0 0.0
      %4128 = vmatprep.subr.mxu0 0.0
      %4129 = vmatpush1.msra.mxu0 0.0
      %4130 = vmatprep.subr.mxu0 0.0
      %4131 = vmatpush1.msra.mxu0 0.0
      %4132 = vmatprep.subr.mxu0 0.0
      %4133 = vmatpush1.msra.mxu0 0.0
      %4134 = vmatprep.subr.mxu0 0.0
      %4135 = vmatpush1.msra.mxu0 0.0
      %4136 = vmatprep.subr.mxu0 0.0
      %4137 = vmatpush1.msra.mxu0 0.0
      %4138 = vmatprep.subr.mxu0 0.0
      %4139 = vmatpush1.msra.mxu0 0.0
      %4140 = vmatprep.subr.mxu0 0.0
      %4141 = vmatpush1.msra.mxu0 0.0
      %4142 = vmatprep.subr.mxu0 0.0
      %4143 = vmatpush1.msra.mxu0 0.0
      %4144 = vmatprep.subr.mxu0 0.0
      %4145 = vmatpush1.msra.mxu0 0.0
      %4146 = vmatprep.subr.mxu0 0.0
      %4147 = vmatpush1.msra.mxu0 0.0
      %4148 = vmatprep.subr.mxu0 0.0
      %4149 = vmatpush1.msra.mxu0 0.0
      %4150 = vmatprep.subr.mxu0 0.0
      %4151 = vmatpush1.msra.mxu0 0.0
      %4152 = vmatprep.subr.mxu0 0.0
      %4153 = vmatpush1.msra.mxu0 0.0
      %4154 = vmatprep.subr.mxu0 0.0
      %4155 = vmatpush1.msra.mxu0 0.0
      %4156 = vmatprep.subr.mxu0 0.0
      %4157 = vmatpush1.msra.mxu0 0.0
      %4158 = vmatprep.subr.mxu0 0.0
      %4159 = vmatpush1.msra.mxu0 0.0
      %4160 = vmatprep.subr.mxu0 0.0
      %4161 = vmatpush1.msra.mxu0 0.0
      %4162 = vmatprep.subr.mxu0 0.0
      %4163 = vmatpush1.msra.mxu0 0.0
      %4164 = vmatprep.subr.mxu0 0.0
      %4165 = vmatpush1.msra.mxu0 0.0
      %4166 = vmatprep.subr.mxu0 0.0
      %4167 = vmatpush1.msra.mxu0 0.0
      %4168 = vmatprep.subr.mxu0 0.0
      %4169 = vmatpush1.msra.mxu0 0.0
      %4170 = vmatprep.subr.mxu0 0.0
      %4171 = vmatpush1.msra.mxu0 0.0
      %4172 = vmatprep.subr.mxu0 0.0
      %4173 = vmatpush1.msra.mxu0 0.0
      %4174 = vmatprep.subr.mxu0 0.0
      %4175 = vmatpush1.msra.mxu0 0.0
      %4176 = vmatprep.subr.mxu0 0.0
      %4177 = vmatpush1.msra.mxu0 0.0
      %4178 = vmatprep.subr.mxu0 0.0
      %4179 = vmatpush1.msra.mxu0 0.0
      %4180 = vmatprep.subr.mxu0 0.0
      %4181 = vmatpush1.msra.mxu0 0.0
      %4182 = vmatprep.subr.mxu0 0.0
      %4183 = vmatpush1.msra.mxu0 0.0
      %4184 = vmatprep.subr.mxu0 0.0
      %4185 = vmatpush1.msra.mxu0 0.0
      %4186 = vmatprep.subr.mxu0 0.0
      %4187 = vmatpush1.msra.mxu0 0.0
      %4188 = vmatprep.mubr.f32.mxu0 0.0
      %4189 = vmatmul.mubr.f32.gmra.mrb[0].mxu0 %v4026
      %v4190 = vpop.f32.mrb[0].mxu0
      %v4191 = vadd.f32 0.0, %v4190
      %v4192 = vpop.f32.mrb[0].mxu0
      %4193 = vmatprep.mubr.f32.mxu0 0.0
      %4194 = vmatmul.mubr.f32.gmra.mrb[0].mxu0 %v4029
      %v4195 = vpop.f32.mrb[0].mxu0
      %v4196 = vadd.f32 0.0, %v4195
      %v4197 = vpop.f32.mrb[0].mxu0
      %4198 = vmatprep.mubr.f32.mxu0 0.0
      %4199 = vmatmul.mubr.f32.gmra.mrb[0].mxu0 %v4032
      %v4200 = vpop.f32.mrb[0].mxu0
      %v4201 = vadd.f32 0.0, %v4200
      %v4202 = vpop.f32.mrb[0].mxu0
      %4203 = vmatprep.mubr.f32.mxu0 0.0
      %4204 = vmatmul.mubr.f32.gmra.mrb[0].mxu0 %v4035
      %v4205 = vpop.f32.mrb[0].mxu0
      %v4206 = vadd.f32 0.0, %v4205
      %v4207 = vpop.f32.mrb[0].mxu0
      %4208 = vmatprep.mubr.f32.mxu0 0.0
      %4209 = vmatmul.mubr.f32.gmra.mrb[0].mxu0 %v4038
      %v4210 = vpop.f32.mrb[0].mxu0
      %v4211 = vadd.f32 0.0, %v4210
      %v4212 = vpop.f32.mrb[0].mxu0
      %4213 = vmatprep.mubr.f32.mxu0 0.0
      %4214 = vmatmul.mubr.f32.gmra.mrb[0].mxu0 %v4041
      %v4215 = vpop.f32.mrb[0].mxu0
      %v4216 = vadd.f32 0.0, %v4215
      %v4217 = vpop.f32.mrb[0].mxu0
      %4218 = vmatprep.mubr.f32.mxu0 0.0
      %4219 = vmatmul.mubr.f32.gmra.mrb[0].mxu0 %v4044
      %v4220 = vpop.f32.mrb[0].mxu0
      %v4221 = vadd.f32 0.0, %v4220
      %v4222 = vpop.f32.mrb[0].mxu0
      %4223 = vmatprep.mubr.f32.mxu0 0.0
      %4224 = vmatmul.mubr.f32.gmra.mrb[0].mxu0 %v4047
      %v4225 = vpop.f32.mrb[0].mxu0
      %v4226 = vadd.f32 0.0, %v4225
      %v4227 = vpop.f32.mrb[0].mxu0
      %4228 = vmatprep.mubr.f32.mxu0 0.0
      %4229 = vmatmul.mubr.f32.gmra.mrb[0].mxu0 %v4050
      %v4230 = vpop.f32.mrb[0].mxu0
      %v4231 = vadd.f32 0.0, %v4230
      %v4232 = vpop.f32.mrb[0].mxu0
      %4233 = vmatprep.mubr.f32.mxu0 0.0
      %4234 = vmatmul.mubr.f32.gmra.mrb[0].mxu0 %v4053
      %v4235 = vpop.f32.mrb[0].mxu0
      %v4236 = vadd.f32 0.0, %v4235
      %v4237 = vpop.f32.mrb[0].mxu0
      %4238 = vmatprep.mubr.f32.mxu0 0.0
      %4239 = vmatmul.mubr.f32.gmra.mrb[0].mxu0 %v4056
      %v4240 = vpop.f32.mrb[0].mxu0
      %v4241 = vadd.f32 0.0, %v4240
      %v4242 = vpop.f32.mrb[0].mxu0
      %4243 = vmatprep.mubr.f32.mxu0 0.0
      %4244 = vmatmul.mubr.f32.gmra.mrb[0].mxu0 %v4059
      %v4245 = vpop.f32.mrb[0].mxu0
      %v4246 = vadd.f32 0.0, %v4245
      %v4247 = vpop.f32.mrb[0].mxu0
      %4248 = vmatprep.mubr.f32.mxu0 0.0
      %4249 = vmatmul.mubr.f32.gmra.mrb[0].mxu0 %v4062
      %v4250 = vpop.f32.mrb[0].mxu0
      %v4251 = vadd.f32 0.0, %v4250
      %v4252 = vpop.f32.mrb[0].mxu0
      %4253 = vmatprep.mubr.f32.mxu0 0.0
      %4254 = vmatmul.mubr.f32.gmra.mrb[0].mxu0 %v4065
      %v4255 = vpop.f32.mrb[0].mxu0
      %v4256 = vadd.f32 0.0, %v4255
      %v4257 = vpop.f32.mrb[0].mxu0
      %4258 = vmatprep.mubr.f32.mxu0 0.0
      %4259 = vmatmul.mubr.f32.gmra.mrb[0].mxu0 %v4068
      %v4260 = vpop.f32.mrb[0].mxu0
      %v4261 = vadd.f32 0.0, %v4260
      %v4262 = vpop.f32.mrb[0].mxu0
      %4263 = vmatprep.mubr.f32.mxu0 0.0
      %4264 = vmatmul.mubr.f32.gmra.mrb[0].mxu0 %v4071
      %v4265 = vpop.f32.mrb[0].mxu0
      %v4266 = vadd.f32 0.0, %v4265
      %v4267 = vpop.f32.mrb[0].mxu0
      %4268 = vmatprep.mubr.f32.mxu0 0.0
      %4269 = vmatmul.mubr.f32.gmra.mrb[0].mxu0 %v4074
      %v4270 = vpop.f32.mrb[0].mxu0
      %v4271 = vadd.f32 0.0, %v4270
      %v4272 = vpop.f32.mrb[0].mxu0
      %4273 = vmatprep.mubr.f32.mxu0 0.0
      %4274 = vmatmul.mubr.f32.gmra.mrb[0].mxu0 %v4077
      %v4275 = vpop.f32.mrb[0].mxu0
      %v4276 = vadd.f32 0.0, %v4275
      %v4277 = vpop.f32.mrb[0].mxu0
      %4278 = vmatprep.mubr.f32.mxu0 0.0
      %4279 = vmatmul.mubr.f32.gmra.mrb[0].mxu0 %v4080
      %v4280 = vpop.f32.mrb[0].mxu0
      %v4281 = vadd.f32 0.0, %v4280
      %v4282 = vpop.f32.mrb[0].mxu0
      %4283 = vmatprep.mubr.f32.mxu0 0.0
      %4284 = vmatmul.mubr.f32.gmra.mrb[0].mxu0 %v4083
      %v4285 = vpop.f32.mrb[0].mxu0
      %v4286 = vadd.f32 0.0, %v4285
      %v4287 = vpop.f32.mrb[0].mxu0
      %4288 = vmatprep.mubr.f32.mxu0 0.0
      %4289 = vmatmul.mubr.f32.gmra.mrb[0].mxu0 %v4086
      %v4290 = vpop.f32.mrb[0].mxu0
      %v4291 = vadd.f32 0.0, %v4290
      %v4292 = vpop.f32.mrb[0].mxu0
      %4293 = vmatprep.mubr.f32.mxu0 0.0
      %4294 = vmatmul.mubr.f32.gmra.mrb[0].mxu0 %v4089
      %v4295 = vpop.f32.mrb[0].mxu0
      %v4296 = vadd.f32 0.0, %v4295
      %v4297 = vpop.f32.mrb[0].mxu0
      %4298 = vmatprep.mubr.f32.mxu0 0.0
      %4299 = vmatmul.mubr.f32.gmra.mrb[0].mxu0 %v4092
      %v4300 = vpop.f32.mrb[0].mxu0
      %v4301 = vadd.f32 0.0, %v4300
      %v4302 = vpop.f32.mrb[0].mxu0
      %4303 = vmatprep.mubr.f32.mxu0 0.0
      %4304 = vmatmul.mubr.f32.gmra.mrb[0].mxu0 %v4095
      %v4305 = vpop.f32.mrb[0].mxu0
      %v4306 = vadd.f32 0.0, %v4305
      %v4307 = vpop.f32.mrb[0].mxu0
      %4308 = vmatprep.mubr.f32.mxu0 0.0
      %4309 = vmatmul.mubr.f32.gmra.mrb[0].mxu0 %v4098
      %v4310 = vpop.f32.mrb[0].mxu0
      %v4311 = vadd.f32 0.0, %v4310
      %v4312 = vpop.f32.mrb[0].mxu0
      %4313 = vmatprep.mubr.f32.mxu0 0.0
      %4314 = vmatmul.mubr.f32.gmra.mrb[0].mxu0 %v4101
      %v4315 = vpop.f32.mrb[0].mxu0
      %v4316 = vadd.f32 0.0, %v4315
      %v4317 = vpop.f32.mrb[0].mxu0
      %4318 = vmatprep.mubr.f32.mxu0 0.0
      %4319 = vmatmul.mubr.f32.gmra.mrb[0].mxu0 %v4104
      %v4320 = vpop.f32.mrb[0].mxu0
      %v4321 = vadd.f32 0.0, %v4320
      %v4322 = vpop.f32.mrb[0].mxu0
      %4323 = vmatprep.mubr.f32.mxu0 0.0
      %4324 = vmatmul.mubr.f32.gmra.mrb[0].mxu0 %v4107
      %v4325 = vpop.f32.mrb[0].mxu0
      %v4326 = vadd.f32 0.0, %v4325
      %v4327 = vpop.f32.mrb[0].mxu0
      %4328 = vmatprep.mubr.f32.mxu0 0.0
      %4329 = vmatmul.mubr.f32.gmra.mrb[0].mxu0 %v4110
      %v4330 = vpop.f32.mrb[0].mxu0
      %v4331 = vadd.f32 0.0, %v4330
      %v4332 = vpop.f32.mrb[0].mxu0
      %4333 = vmatprep.mubr.f32.mxu0 0.0
      %4334 = vmatmul.mubr.f32.gmra.mrb[0].mxu0 %v4113
      %v4335 = vpop.f32.mrb[0].mxu0
      %v4336 = vadd.f32 0.0, %v4335
      %v4337 = vpop.f32.mrb[0].mxu0
      %4338 = vmatprep.mubr.f32.mxu0 0.0
      %4339 = vmatmul.mubr.f32.gmra.mrb[0].mxu0 %v4116
      %v4340 = vpop.f32.mrb[0].mxu0
      %v4341 = vadd.f32 0.0, %v4340
      %v4342 = vpop.f32.mrb[0].mxu0
      %4343 = vmatprep.mubr.f32.mxu0 0.0
      %4344 = vmatmul.mubr.f32.gmra.mrb[0].mxu0 %v4119
      %v4345 = vpop.f32.mrb[0].mxu0
      %v4346 = vadd.f32 0.0, %v4345
      %v4347 = vpop.f32.mrb[0].mxu0
      %4348 = vdwg.mxu0
      %v4349 = vadd.f32 %v3960, %v4191
      %v4350 = vadd.f32 %v3961, %v4196
      %v4351 = vadd.f32 %v3962, %v4201
      %v4352 = vadd.f32 %v3963, %v4206
      %v4353 = vadd.f32 %v3964, %v4211
      %v4354 = vadd.f32 %v3965, %v4216
      %v4355 = vadd.f32 %v3966, %v4221
      %v4356 = vadd.f32 %v3967, %v4226
      %v4357 = vadd.f32 %v3968, %v4231
      %v4358 = vadd.f32 %v3969, %v4236
      %v4359 = vadd.f32 %v3970, %v4241
      %v4360 = vadd.f32 %v3971, %v4246
      %v4361 = vadd.f32 %v3972, %v4251
      %v4362 = vadd.f32 %v3973, %v4256
      %v4363 = vadd.f32 %v3974, %v4261
      %v4364 = vadd.f32 %v3975, %v4266
      %v4365 = vadd.f32 %v3976, %v4271
      %v4366 = vadd.f32 %v3977, %v4276
      %v4367 = vadd.f32 %v3978, %v4281
      %v4368 = vadd.f32 %v3979, %v4286
      %v4369 = vadd.f32 %v3980, %v4291
      %v4370 = vadd.f32 %v3981, %v4296
      %v4371 = vadd.f32 %v3982, %v4301
      %v4372 = vadd.f32 %v3983, %v4306
      %v4373 = vadd.f32 %v3984, %v4311
      %v4374 = vadd.f32 %v3985, %v4316
      %v4375 = vadd.f32 %v3986, %v4321
      %v4376 = vadd.f32 %v3987, %v4326
      %v4377 = vadd.f32 %v3988, %v4331
      %v4378 = vadd.f32 %v3989, %v4336
      %v4379 = vadd.f32 %v3990, %v4341
      %v4380 = vadd.f32 %v3991, %v4346
      %v4381 = vld [vmem:[#allocation2 + $0x2] sm:$0xff]
      %v4382 = vld [vmem:[#allocation2 + $0xa] sm:$0xff]
      %v4383 = vld [vmem:[#allocation2 + $0x1a] sm:$0xff]
      %v4384 = vld [vmem:[#allocation2 + $0x22] sm:$0xff]
      %v4385 = vld [vmem:[#allocation2 + $0x32] sm:$0xff]
      %v4386 = vld [vmem:[#allocation2 + $0x3a] sm:$0xff]
      %v4387 = vld [vmem:[#allocation2 + $0x4a] sm:$0xff]
      %v4388 = vld [vmem:[#allocation2 + $0x52] sm:$0xff]
      %v4389 = vld [vmem:[#allocation2 + $0x62] sm:$0xff]
      %v4390 = vld [vmem:[#allocation2 + $0x6a] sm:$0xff]
      %v4391 = vld [vmem:[#allocation2 + $0x7a] sm:$0xff]
      %v4392 = vld [vmem:[#allocation2 + $0x82] sm:$0xff]
      %v4393 = vld [vmem:[#allocation2 + $0x92] sm:$0xff]
      %v4394 = vld [vmem:[#allocation2 + $0x9a] sm:$0xff]
      %v4395 = vld [vmem:[#allocation2 + $0xaa] sm:$0xff]
      %v4396 = vld [vmem:[#allocation2 + $0xb2] sm:$0xff]
      %v4397 = vld [vmem:[#allocation2 + $0xc2] sm:$0xff]
      %v4398 = vld [vmem:[#allocation2 + $0xca] sm:$0xff]
      %v4399 = vld [vmem:[#allocation2 + $0xda] sm:$0xff]
      %v4400 = vld [vmem:[#allocation2 + $0xe2] sm:$0xff]
      %v4401 = vld [vmem:[#allocation2 + $0xf2] sm:$0xff]
      %v4402 = vld [vmem:[#allocation2 + $0xfa] sm:$0xff]
      %v4403 = vld [vmem:[#allocation2 + $0x10a] sm:$0xff]
      %v4404 = vld [vmem:[#allocation2 + $0x112] sm:$0xff]
      %v4405 = vld [vmem:[#allocation2 + $0x122] sm:$0xff]
      %v4406 = vld [vmem:[#allocation2 + $0x12a] sm:$0xff]
      %v4407 = vld [vmem:[#allocation2 + $0x13a] sm:$0xff]
      %v4408 = vld [vmem:[#allocation2 + $0x142] sm:$0xff]
      %v4409 = vld [vmem:[#allocation2 + $0x152] sm:$0xff]
      %v4410 = vld [vmem:[#allocation2 + $0x15a] sm:$0xff]
      %v4411 = vld [vmem:[#allocation2 + $0x16a] sm:$0xff]
      %v4412 = vld [vmem:[#allocation2 + $0x172] sm:$0xff]
      %s4413 = scalar_lea.vmem %s3, 4
      %v4414 = vld [vmem:[%s4413] sm:$0xf]
      %v4416 = vsel %vm265, %v4381, 0
      %v4419 = vsel %vm265, %v4382, 0
      %v4422 = vsel %vm265, %v4383, 0
      %v4425 = vsel %vm265, %v4384, 0
      %v4428 = vsel %vm265, %v4385, 0
      %v4431 = vsel %vm265, %v4386, 0
      %v4434 = vsel %vm265, %v4387, 0
      %v4437 = vsel %vm265, %v4388, 0
      %v4440 = vsel %vm265, %v4389, 0
      %v4443 = vsel %vm265, %v4390, 0
      %v4446 = vsel %vm265, %v4391, 0
      %v4449 = vsel %vm265, %v4392, 0
      %v4452 = vsel %vm265, %v4393, 0
      %v4455 = vsel %vm265, %v4394, 0
      %v4458 = vsel %vm265, %v4395, 0
      %v4461 = vsel %vm265, %v4396, 0
      %v4464 = vsel %vm265, %v4397, 0
      %v4467 = vsel %vm265, %v4398, 0
      %v4470 = vsel %vm265, %v4399, 0
      %v4473 = vsel %vm265, %v4400, 0
      %v4476 = vsel %vm265, %v4401, 0
      %v4479 = vsel %vm265, %v4402, 0
      %v4482 = vsel %vm265, %v4403, 0
      %v4485 = vsel %vm265, %v4404, 0
      %v4488 = vsel %vm265, %v4405, 0
      %v4491 = vsel %vm265, %v4406, 0
      %v4494 = vsel %vm265, %v4407, 0
      %v4497 = vsel %vm265, %v4408, 0
      %v4500 = vsel %vm265, %v4409, 0
      %v4503 = vsel %vm265, %v4410, 0
      %v4506 = vsel %vm265, %v4411, 0
      %v4509 = vsel %vm265, %v4412, 0
      %v4512 = vsel %vm362, %v4414, 0
      %4514 = vmatprep.subr.mxu0 0.0
      %4515 = vmatpush1.msra.mxu0 %v4512
      %4516 = vmatprep.subr.mxu0 0.0
      %4517 = vmatpush1.msra.mxu0 0.0
      %4518 = vmatprep.subr.mxu0 0.0
      %4519 = vmatpush1.msra.mxu0 0.0
      %4520 = vmatprep.subr.mxu0 0.0
      %4521 = vmatpush1.msra.mxu0 0.0
      %4522 = vmatprep.subr.mxu0 0.0
      %4523 = vmatpush1.msra.mxu0 0.0
      %4524 = vmatprep.subr.mxu0 0.0
      %4525 = vmatpush1.msra.mxu0 0.0
      %4526 = vmatprep.subr.mxu0 0.0
      %4527 = vmatpush1.msra.mxu0 0.0
      %4528 = vmatprep.subr.mxu0 0.0
      %4529 = vmatpush1.msra.mxu0 0.0
      %4530 = vmatprep.subr.mxu0 0.0
      %4531 = vmatpush1.msra.mxu0 0.0
      %4532 = vmatprep.subr.mxu0 0.0
      %4533 = vmatpush1.msra.mxu0 0.0
      %4534 = vmatprep.subr.mxu0 0.0
      %4535 = vmatpush1.msra.mxu0 0.0
      %4536 = vmatprep.subr.mxu0 0.0
      %4537 = vmatpush1.msra.mxu0 0.0
      %4538 = vmatprep.subr.mxu0 0.0
      %4539 = vmatpush1.msra.mxu0 0.0
      %4540 = vmatprep.subr.mxu0 0.0
      %4541 = vmatpush1.msra.mxu0 0.0
      %4542 = vmatprep.subr.mxu0 0.0
      %4543 = vmatpush1.msra.mxu0 0.0
      %4544 = vmatprep.subr.mxu0 0.0
      %4545 = vmatpush1.msra.mxu0 0.0
      %4546 = vmatprep.subr.mxu0 0.0
      %4547 = vmatpush1.msra.mxu0 0.0
      %4548 = vmatprep.subr.mxu0 0.0
      %4549 = vmatpush1.msra.mxu0 0.0
      %4550 = vmatprep.subr.mxu0 0.0
      %4551 = vmatpush1.msra.mxu0 0.0
      %4552 = vmatprep.subr.mxu0 0.0
      %4553 = vmatpush1.msra.mxu0 0.0
      %4554 = vmatprep.subr.mxu0 0.0
      %4555 = vmatpush1.msra.mxu0 0.0
      %4556 = vmatprep.subr.mxu0 0.0
      %4557 = vmatpush1.msra.mxu0 0.0
      %4558 = vmatprep.subr.mxu0 0.0
      %4559 = vmatpush1.msra.mxu0 0.0
      %4560 = vmatprep.subr.mxu0 0.0
      %4561 = vmatpush1.msra.mxu0 0.0
      %4562 = vmatprep.subr.mxu0 0.0
      %4563 = vmatpush1.msra.mxu0 0.0
      %4564 = vmatprep.subr.mxu0 0.0
      %4565 = vmatpush1.msra.mxu0 0.0
      %4566 = vmatprep.subr.mxu0 0.0
      %4567 = vmatpush1.msra.mxu0 0.0
      %4568 = vmatprep.subr.mxu0 0.0
      %4569 = vmatpush1.msra.mxu0 0.0
      %4570 = vmatprep.subr.mxu0 0.0
      %4571 = vmatpush1.msra.mxu0 0.0
      %4572 = vmatprep.subr.mxu0 0.0
      %4573 = vmatpush1.msra.mxu0 0.0
      %4574 = vmatprep.subr.mxu0 0.0
      %4575 = vmatpush1.msra.mxu0 0.0
      %4576 = vmatprep.subr.mxu0 0.0
      %4577 = vmatpush1.msra.mxu0 0.0
      %4578 = vmatprep.mubr.f32.mxu0 0.0
      %4579 = vmatmul.mubr.f32.gmra.mrb[0].mxu0 %v4416
      %v4580 = vpop.f32.mrb[0].mxu0
      %v4581 = vadd.f32 0.0, %v4580
      %v4582 = vpop.f32.mrb[0].mxu0
      %4583 = vmatprep.mubr.f32.mxu0 0.0
      %4584 = vmatmul.mubr.f32.gmra.mrb[0].mxu0 %v4419
      %v4585 = vpop.f32.mrb[0].mxu0
      %v4586 = vadd.f32 0.0, %v4585
      %v4587 = vpop.f32.mrb[0].mxu0
      %4588 = vmatprep.mubr.f32.mxu0 0.0
      %4589 = vmatmul.mubr.f32.gmra.mrb[0].mxu0 %v4422
      %v4590 = vpop.f32.mrb[0].mxu0
      %v4591 = vadd.f32 0.0, %v4590
      %v4592 = vpop.f32.mrb[0].mxu0
      %4593 = vmatprep.mubr.f32.mxu0 0.0
      %4594 = vmatmul.mubr.f32.gmra.mrb[0].mxu0 %v4425
      %v4595 = vpop.f32.mrb[0].mxu0
      %v4596 = vadd.f32 0.0, %v4595
      %v4597 = vpop.f32.mrb[0].mxu0
      %4598 = vmatprep.mubr.f32.mxu0 0.0
      %4599 = vmatmul.mubr.f32.gmra.mrb[0].mxu0 %v4428
      %v4600 = vpop.f32.mrb[0].mxu0
      %v4601 = vadd.f32 0.0, %v4600
      %v4602 = vpop.f32.mrb[0].mxu0
      %4603 = vmatprep.mubr.f32.mxu0 0.0
      %4604 = vmatmul.mubr.f32.gmra.mrb[0].mxu0 %v4431
      %v4605 = vpop.f32.mrb[0].mxu0
      %v4606 = vadd.f32 0.0, %v4605
      %v4607 = vpop.f32.mrb[0].mxu0
      %4608 = vmatprep.mubr.f32.mxu0 0.0
      %4609 = vmatmul.mubr.f32.gmra.mrb[0].mxu0 %v4434
      %v4610 = vpop.f32.mrb[0].mxu0
      %v4611 = vadd.f32 0.0, %v4610
      %v4612 = vpop.f32.mrb[0].mxu0
      %4613 = vmatprep.mubr.f32.mxu0 0.0
      %4614 = vmatmul.mubr.f32.gmra.mrb[0].mxu0 %v4437
      %v4615 = vpop.f32.mrb[0].mxu0
      %v4616 = vadd.f32 0.0, %v4615
      %v4617 = vpop.f32.mrb[0].mxu0
      %4618 = vmatprep.mubr.f32.mxu0 0.0
      %4619 = vmatmul.mubr.f32.gmra.mrb[0].mxu0 %v4440
      %v4620 = vpop.f32.mrb[0].mxu0
      %v4621 = vadd.f32 0.0, %v4620
      %v4622 = vpop.f32.mrb[0].mxu0
      %4623 = vmatprep.mubr.f32.mxu0 0.0
      %4624 = vmatmul.mubr.f32.gmra.mrb[0].mxu0 %v4443
      %v4625 = vpop.f32.mrb[0].mxu0
      %v4626 = vadd.f32 0.0, %v4625
      %v4627 = vpop.f32.mrb[0].mxu0
      %4628 = vmatprep.mubr.f32.mxu0 0.0
      %4629 = vmatmul.mubr.f32.gmra.mrb[0].mxu0 %v4446
      %v4630 = vpop.f32.mrb[0].mxu0
      %v4631 = vadd.f32 0.0, %v4630
      %v4632 = vpop.f32.mrb[0].mxu0
      %4633 = vmatprep.mubr.f32.mxu0 0.0
      %4634 = vmatmul.mubr.f32.gmra.mrb[0].mxu0 %v4449
      %v4635 = vpop.f32.mrb[0].mxu0
      %v4636 = vadd.f32 0.0, %v4635
      %v4637 = vpop.f32.mrb[0].mxu0
      %4638 = vmatprep.mubr.f32.mxu0 0.0
      %4639 = vmatmul.mubr.f32.gmra.mrb[0].mxu0 %v4452
      %v4640 = vpop.f32.mrb[0].mxu0
      %v4641 = vadd.f32 0.0, %v4640
      %v4642 = vpop.f32.mrb[0].mxu0
      %4643 = vmatprep.mubr.f32.mxu0 0.0
      %4644 = vmatmul.mubr.f32.gmra.mrb[0].mxu0 %v4455
      %v4645 = vpop.f32.mrb[0].mxu0
      %v4646 = vadd.f32 0.0, %v4645
      %v4647 = vpop.f32.mrb[0].mxu0
      %4648 = vmatprep.mubr.f32.mxu0 0.0
      %4649 = vmatmul.mubr.f32.gmra.mrb[0].mxu0 %v4458
      %v4650 = vpop.f32.mrb[0].mxu0
      %v4651 = vadd.f32 0.0, %v4650
      %v4652 = vpop.f32.mrb[0].mxu0
      %4653 = vmatprep.mubr.f32.mxu0 0.0
      %4654 = vmatmul.mubr.f32.gmra.mrb[0].mxu0 %v4461
      %v4655 = vpop.f32.mrb[0].mxu0
      %v4656 = vadd.f32 0.0, %v4655
      %v4657 = vpop.f32.mrb[0].mxu0
      %4658 = vmatprep.mubr.f32.mxu0 0.0
      %4659 = vmatmul.mubr.f32.gmra.mrb[0].mxu0 %v4464
      %v4660 = vpop.f32.mrb[0].mxu0
      %v4661 = vadd.f32 0.0, %v4660
      %v4662 = vpop.f32.mrb[0].mxu0
      %4663 = vmatprep.mubr.f32.mxu0 0.0
      %4664 = vmatmul.mubr.f32.gmra.mrb[0].mxu0 %v4467
      %v4665 = vpop.f32.mrb[0].mxu0
      %v4666 = vadd.f32 0.0, %v4665
      %v4667 = vpop.f32.mrb[0].mxu0
      %4668 = vmatprep.mubr.f32.mxu0 0.0
      %4669 = vmatmul.mubr.f32.gmra.mrb[0].mxu0 %v4470
      %v4670 = vpop.f32.mrb[0].mxu0
      %v4671 = vadd.f32 0.0, %v4670
      %v4672 = vpop.f32.mrb[0].mxu0
      %4673 = vmatprep.mubr.f32.mxu0 0.0
      %4674 = vmatmul.mubr.f32.gmra.mrb[0].mxu0 %v4473
      %v4675 = vpop.f32.mrb[0].mxu0
      %v4676 = vadd.f32 0.0, %v4675
      %v4677 = vpop.f32.mrb[0].mxu0
      %4678 = vmatprep.mubr.f32.mxu0 0.0
      %4679 = vmatmul.mubr.f32.gmra.mrb[0].mxu0 %v4476
      %v4680 = vpop.f32.mrb[0].mxu0
      %v4681 = vadd.f32 0.0, %v4680
      %v4682 = vpop.f32.mrb[0].mxu0
      %4683 = vmatprep.mubr.f32.mxu0 0.0
      %4684 = vmatmul.mubr.f32.gmra.mrb[0].mxu0 %v4479
      %v4685 = vpop.f32.mrb[0].mxu0
      %v4686 = vadd.f32 0.0, %v4685
      %v4687 = vpop.f32.mrb[0].mxu0
      %4688 = vmatprep.mubr.f32.mxu0 0.0
      %4689 = vmatmul.mubr.f32.gmra.mrb[0].mxu0 %v4482
      %v4690 = vpop.f32.mrb[0].mxu0
      %v4691 = vadd.f32 0.0, %v4690
      %v4692 = vpop.f32.mrb[0].mxu0
      %4693 = vmatprep.mubr.f32.mxu0 0.0
      %4694 = vmatmul.mubr.f32.gmra.mrb[0].mxu0 %v4485
      %v4695 = vpop.f32.mrb[0].mxu0
      %v4696 = vadd.f32 0.0, %v4695
      %v4697 = vpop.f32.mrb[0].mxu0
      %4698 = vmatprep.mubr.f32.mxu0 0.0
      %4699 = vmatmul.mubr.f32.gmra.mrb[0].mxu0 %v4488
      %v4700 = vpop.f32.mrb[0].mxu0
      %v4701 = vadd.f32 0.0, %v4700
      %v4702 = vpop.f32.mrb[0].mxu0
      %4703 = vmatprep.mubr.f32.mxu0 0.0
      %4704 = vmatmul.mubr.f32.gmra.mrb[0].mxu0 %v4491
      %v4705 = vpop.f32.mrb[0].mxu0
      %v4706 = vadd.f32 0.0, %v4705
      %v4707 = vpop.f32.mrb[0].mxu0
      %4708 = vmatprep.mubr.f32.mxu0 0.0
      %4709 = vmatmul.mubr.f32.gmra.mrb[0].mxu0 %v4494
      %v4710 = vpop.f32.mrb[0].mxu0
      %v4711 = vadd.f32 0.0, %v4710
      %v4712 = vpop.f32.mrb[0].mxu0
      %4713 = vmatprep.mubr.f32.mxu0 0.0
      %4714 = vmatmul.mubr.f32.gmra.mrb[0].mxu0 %v4497
      %v4715 = vpop.f32.mrb[0].mxu0
      %v4716 = vadd.f32 0.0, %v4715
      %v4717 = vpop.f32.mrb[0].mxu0
      %4718 = vmatprep.mubr.f32.mxu0 0.0
      %4719 = vmatmul.mubr.f32.gmra.mrb[0].mxu0 %v4500
      %v4720 = vpop.f32.mrb[0].mxu0
      %v4721 = vadd.f32 0.0, %v4720
      %v4722 = vpop.f32.mrb[0].mxu0
      %4723 = vmatprep.mubr.f32.mxu0 0.0
      %4724 = vmatmul.mubr.f32.gmra.mrb[0].mxu0 %v4503
      %v4725 = vpop.f32.mrb[0].mxu0
      %v4726 = vadd.f32 0.0, %v4725
      %v4727 = vpop.f32.mrb[0].mxu0
      %4728 = vmatprep.mubr.f32.mxu0 0.0
      %4729 = vmatmul.mubr.f32.gmra.mrb[0].mxu0 %v4506
      %v4730 = vpop.f32.mrb[0].mxu0
      %v4731 = vadd.f32 0.0, %v4730
      %v4732 = vpop.f32.mrb[0].mxu0
      %4733 = vmatprep.mubr.f32.mxu0 0.0
      %4734 = vmatmul.mubr.f32.gmra.mrb[0].mxu0 %v4509
      %v4735 = vpop.f32.mrb[0].mxu0
      %v4736 = vadd.f32 0.0, %v4735
      %v4737 = vpop.f32.mrb[0].mxu0
      %4738 = vdwg.mxu0
      %v4739 = vadd.f32 %v4349, %v4581
      %v4740 = vadd.f32 %v4350, %v4586
      %v4741 = vadd.f32 %v4351, %v4591
      %v4742 = vadd.f32 %v4352, %v4596
      %v4743 = vadd.f32 %v4353, %v4601
      %v4744 = vadd.f32 %v4354, %v4606
      %v4745 = vadd.f32 %v4355, %v4611
      %v4746 = vadd.f32 %v4356, %v4616
      %v4747 = vadd.f32 %v4357, %v4621
      %v4748 = vadd.f32 %v4358, %v4626
      %v4749 = vadd.f32 %v4359, %v4631
      %v4750 = vadd.f32 %v4360, %v4636
      %v4751 = vadd.f32 %v4361, %v4641
      %v4752 = vadd.f32 %v4362, %v4646
      %v4753 = vadd.f32 %v4363, %v4651
      %v4754 = vadd.f32 %v4364, %v4656
      %v4755 = vadd.f32 %v4365, %v4661
      %v4756 = vadd.f32 %v4366, %v4666
      %v4757 = vadd.f32 %v4367, %v4671
      %v4758 = vadd.f32 %v4368, %v4676
      %v4759 = vadd.f32 %v4369, %v4681
      %v4760 = vadd.f32 %v4370, %v4686
      %v4761 = vadd.f32 %v4371, %v4691
      %v4762 = vadd.f32 %v4372, %v4696
      %v4763 = vadd.f32 %v4373, %v4701
      %v4764 = vadd.f32 %v4374, %v4706
      %v4765 = vadd.f32 %v4375, %v4711
      %v4766 = vadd.f32 %v4376, %v4716
      %v4767 = vadd.f32 %v4377, %v4721
      %v4768 = vadd.f32 %v4378, %v4726
      %v4769 = vadd.f32 %v4379, %v4731
      %v4770 = vadd.f32 %v4380, %v4736
      %v4771 = vld [vmem:[#allocation2 + $0x4] sm:$0xff]
      %v4772 = vld [vmem:[#allocation2 + $0xc] sm:$0xff]
      %v4773 = vld [vmem:[#allocation2 + $0x1c] sm:$0xff]
      %v4774 = vld [vmem:[#allocation2 + $0x24] sm:$0xff]
      %v4775 = vld [vmem:[#allocation2 + $0x34] sm:$0xff]
      %v4776 = vld [vmem:[#allocation2 + $0x3c] sm:$0xff]
      %v4777 = vld [vmem:[#allocation2 + $0x4c] sm:$0xff]
      %v4778 = vld [vmem:[#allocation2 + $0x54] sm:$0xff]
      %v4779 = vld [vmem:[#allocation2 + $0x64] sm:$0xff]
      %v4780 = vld [vmem:[#allocation2 + $0x6c] sm:$0xff]
      %v4781 = vld [vmem:[#allocation2 + $0x7c] sm:$0xff]
      %v4782 = vld [vmem:[#allocation2 + $0x84] sm:$0xff]
      %v4783 = vld [vmem:[#allocation2 + $0x94] sm:$0xff]
      %v4784 = vld [vmem:[#allocation2 + $0x9c] sm:$0xff]
      %v4785 = vld [vmem:[#allocation2 + $0xac] sm:$0xff]
      %v4786 = vld [vmem:[#allocation2 + $0xb4] sm:$0xff]
      %v4787 = vld [vmem:[#allocation2 + $0xc4] sm:$0xff]
      %v4788 = vld [vmem:[#allocation2 + $0xcc] sm:$0xff]
      %v4789 = vld [vmem:[#allocation2 + $0xdc] sm:$0xff]
      %v4790 = vld [vmem:[#allocation2 + $0xe4] sm:$0xff]
      %v4791 = vld [vmem:[#allocation2 + $0xf4] sm:$0xff]
      %v4792 = vld [vmem:[#allocation2 + $0xfc] sm:$0xff]
      %v4793 = vld [vmem:[#allocation2 + $0x10c] sm:$0xff]
      %v4794 = vld [vmem:[#allocation2 + $0x114] sm:$0xff]
      %v4795 = vld [vmem:[#allocation2 + $0x124] sm:$0xff]
      %v4796 = vld [vmem:[#allocation2 + $0x12c] sm:$0xff]
      %v4797 = vld [vmem:[#allocation2 + $0x13c] sm:$0xff]
      %v4798 = vld [vmem:[#allocation2 + $0x144] sm:$0xff]
      %v4799 = vld [vmem:[#allocation2 + $0x154] sm:$0xff]
      %v4800 = vld [vmem:[#allocation2 + $0x15c] sm:$0xff]
      %v4801 = vld [vmem:[#allocation2 + $0x16c] sm:$0xff]
      %v4802 = vld [vmem:[#allocation2 + $0x174] sm:$0xff]
      %s4803 = scalar_lea.vmem %s3, 8
      %v4804 = vld [vmem:[%s4803] sm:$0xf]
      %v4806 = vsel %vm265, %v4771, 0
      %v4809 = vsel %vm265, %v4772, 0
      %v4812 = vsel %vm265, %v4773, 0
      %v4815 = vsel %vm265, %v4774, 0
      %v4818 = vsel %vm265, %v4775, 0
      %v4821 = vsel %vm265, %v4776, 0
      %v4824 = vsel %vm265, %v4777, 0
      %v4827 = vsel %vm265, %v4778, 0
      %v4830 = vsel %vm265, %v4779, 0
      %v4833 = vsel %vm265, %v4780, 0
      %v4836 = vsel %vm265, %v4781, 0
      %v4839 = vsel %vm265, %v4782, 0
      %v4842 = vsel %vm265, %v4783, 0
      %v4845 = vsel %vm265, %v4784, 0
      %v4848 = vsel %vm265, %v4785, 0
      %v4851 = vsel %vm265, %v4786, 0
      %v4854 = vsel %vm265, %v4787, 0
      %v4857 = vsel %vm265, %v4788, 0
      %v4860 = vsel %vm265, %v4789, 0
      %v4863 = vsel %vm265, %v4790, 0
      %v4866 = vsel %vm265, %v4791, 0
      %v4869 = vsel %vm265, %v4792, 0
      %v4872 = vsel %vm265, %v4793, 0
      %v4875 = vsel %vm265, %v4794, 0
      %v4878 = vsel %vm265, %v4795, 0
      %v4881 = vsel %vm265, %v4796, 0
      %v4884 = vsel %vm265, %v4797, 0
      %v4887 = vsel %vm265, %v4798, 0
      %v4890 = vsel %vm265, %v4799, 0
      %v4893 = vsel %vm265, %v4800, 0
      %v4896 = vsel %vm265, %v4801, 0
      %v4899 = vsel %vm265, %v4802, 0
      %v4902 = vsel %vm362, %v4804, 0
      %4904 = vmatprep.subr.mxu0 0.0
      %4905 = vmatpush1.msra.mxu0 %v4902
      %4906 = vmatprep.subr.mxu0 0.0
      %4907 = vmatpush1.msra.mxu0 0.0
      %4908 = vmatprep.subr.mxu0 0.0
      %4909 = vmatpush1.msra.mxu0 0.0
      %4910 = vmatprep.subr.mxu0 0.0
      %4911 = vmatpush1.msra.mxu0 0.0
      %4912 = vmatprep.subr.mxu0 0.0
      %4913 = vmatpush1.msra.mxu0 0.0
      %4914 = vmatprep.subr.mxu0 0.0
      %4915 = vmatpush1.msra.mxu0 0.0
      %4916 = vmatprep.subr.mxu0 0.0
      %4917 = vmatpush1.msra.mxu0 0.0
      %4918 = vmatprep.subr.mxu0 0.0
      %4919 = vmatpush1.msra.mxu0 0.0
      %4920 = vmatprep.subr.mxu0 0.0
      %4921 = vmatpush1.msra.mxu0 0.0
      %4922 = vmatprep.subr.mxu0 0.0
      %4923 = vmatpush1.msra.mxu0 0.0
      %4924 = vmatprep.subr.mxu0 0.0
      %4925 = vmatpush1.msra.mxu0 0.0
      %4926 = vmatprep.subr.mxu0 0.0
      %4927 = vmatpush1.msra.mxu0 0.0
      %4928 = vmatprep.subr.mxu0 0.0
      %4929 = vmatpush1.msra.mxu0 0.0
      %4930 = vmatprep.subr.mxu0 0.0
      %4931 = vmatpush1.msra.mxu0 0.0
      %4932 = vmatprep.subr.mxu0 0.0
      %4933 = vmatpush1.msra.mxu0 0.0
      %4934 = vmatprep.subr.mxu0 0.0
      %4935 = vmatpush1.msra.mxu0 0.0
      %4936 = vmatprep.subr.mxu0 0.0
      %4937 = vmatpush1.msra.mxu0 0.0
      %4938 = vmatprep.subr.mxu0 0.0
      %4939 = vmatpush1.msra.mxu0 0.0
      %4940 = vmatprep.subr.mxu0 0.0
      %4941 = vmatpush1.msra.mxu0 0.0
      %4942 = vmatprep.subr.mxu0 0.0
      %4943 = vmatpush1.msra.mxu0 0.0
      %4944 = vmatprep.subr.mxu0 0.0
      %4945 = vmatpush1.msra.mxu0 0.0
      %4946 = vmatprep.subr.mxu0 0.0
      %4947 = vmatpush1.msra.mxu0 0.0
      %4948 = vmatprep.subr.mxu0 0.0
      %4949 = vmatpush1.msra.mxu0 0.0
      %4950 = vmatprep.subr.mxu0 0.0
      %4951 = vmatpush1.msra.mxu0 0.0
      %4952 = vmatprep.subr.mxu0 0.0
      %4953 = vmatpush1.msra.mxu0 0.0
      %4954 = vmatprep.subr.mxu0 0.0
      %4955 = vmatpush1.msra.mxu0 0.0
      %4956 = vmatprep.subr.mxu0 0.0
      %4957 = vmatpush1.msra.mxu0 0.0
      %4958 = vmatprep.subr.mxu0 0.0
      %4959 = vmatpush1.msra.mxu0 0.0
      %4960 = vmatprep.subr.mxu0 0.0
      %4961 = vmatpush1.msra.mxu0 0.0
      %4962 = vmatprep.subr.mxu0 0.0
      %4963 = vmatpush1.msra.mxu0 0.0
      %4964 = vmatprep.subr.mxu0 0.0
      %4965 = vmatpush1.msra.mxu0 0.0
      %4966 = vmatprep.subr.mxu0 0.0
      %4967 = vmatpush1.msra.mxu0 0.0
      %4968 = vmatprep.mubr.f32.mxu0 0.0
      %4969 = vmatmul.mubr.f32.gmra.mrb[0].mxu0 %v4806
      %v4970 = vpop.f32.mrb[0].mxu0
      %v4971 = vadd.f32 0.0, %v4970
      %v4972 = vpop.f32.mrb[0].mxu0
      %4973 = vmatprep.mubr.f32.mxu0 0.0
      %4974 = vmatmul.mubr.f32.gmra.mrb[0].mxu0 %v4809
      %v4975 = vpop.f32.mrb[0].mxu0
      %v4976 = vadd.f32 0.0, %v4975
      %v4977 = vpop.f32.mrb[0].mxu0
      %4978 = vmatprep.mubr.f32.mxu0 0.0
      %4979 = vmatmul.mubr.f32.gmra.mrb[0].mxu0 %v4812
      %v4980 = vpop.f32.mrb[0].mxu0
      %v4981 = vadd.f32 0.0, %v4980
      %v4982 = vpop.f32.mrb[0].mxu0
      %4983 = vmatprep.mubr.f32.mxu0 0.0
      %4984 = vmatmul.mubr.f32.gmra.mrb[0].mxu0 %v4815
      %v4985 = vpop.f32.mrb[0].mxu0
      %v4986 = vadd.f32 0.0, %v4985
      %v4987 = vpop.f32.mrb[0].mxu0
      %4988 = vmatprep.mubr.f32.mxu0 0.0
      %4989 = vmatmul.mubr.f32.gmra.mrb[0].mxu0 %v4818
      %v4990 = vpop.f32.mrb[0].mxu0
      %v4991 = vadd.f32 0.0, %v4990
      %v4992 = vpop.f32.mrb[0].mxu0
      %4993 = vmatprep.mubr.f32.mxu0 0.0
      %4994 = vmatmul.mubr.f32.gmra.mrb[0].mxu0 %v4821
      %v4995 = vpop.f32.mrb[0].mxu0
      %v4996 = vadd.f32 0.0, %v4995
      %v4997 = vpop.f32.mrb[0].mxu0
      %4998 = vmatprep.mubr.f32.mxu0 0.0
      %4999 = vmatmul.mubr.f32.gmra.mrb[0].mxu0 %v4824
      %v5000 = vpop.f32.mrb[0].mxu0
      %v5001 = vadd.f32 0.0, %v5000
      %v5002 = vpop.f32.mrb[0].mxu0
      %5003 = vmatprep.mubr.f32.mxu0 0.0
      %5004 = vmatmul.mubr.f32.gmra.mrb[0].mxu0 %v4827
      %v5005 = vpop.f32.mrb[0].mxu0
      %v5006 = vadd.f32 0.0, %v5005
      %v5007 = vpop.f32.mrb[0].mxu0
      %5008 = vmatprep.mubr.f32.mxu0 0.0
      %5009 = vmatmul.mubr.f32.gmra.mrb[0].mxu0 %v4830
      %v5010 = vpop.f32.mrb[0].mxu0
      %v5011 = vadd.f32 0.0, %v5010
      %v5012 = vpop.f32.mrb[0].mxu0
      %5013 = vmatprep.mubr.f32.mxu0 0.0
      %5014 = vmatmul.mubr.f32.gmra.mrb[0].mxu0 %v4833
      %v5015 = vpop.f32.mrb[0].mxu0
      %v5016 = vadd.f32 0.0, %v5015
      %v5017 = vpop.f32.mrb[0].mxu0
      %5018 = vmatprep.mubr.f32.mxu0 0.0
      %5019 = vmatmul.mubr.f32.gmra.mrb[0].mxu0 %v4836
      %v5020 = vpop.f32.mrb[0].mxu0
      %v5021 = vadd.f32 0.0, %v5020
      %v5022 = vpop.f32.mrb[0].mxu0
      %5023 = vmatprep.mubr.f32.mxu0 0.0
      %5024 = vmatmul.mubr.f32.gmra.mrb[0].mxu0 %v4839
      %v5025 = vpop.f32.mrb[0].mxu0
      %v5026 = vadd.f32 0.0, %v5025
      %v5027 = vpop.f32.mrb[0].mxu0
      %5028 = vmatprep.mubr.f32.mxu0 0.0
      %5029 = vmatmul.mubr.f32.gmra.mrb[0].mxu0 %v4842
      %v5030 = vpop.f32.mrb[0].mxu0
      %v5031 = vadd.f32 0.0, %v5030
      %v5032 = vpop.f32.mrb[0].mxu0
      %5033 = vmatprep.mubr.f32.mxu0 0.0
      %5034 = vmatmul.mubr.f32.gmra.mrb[0].mxu0 %v4845
      %v5035 = vpop.f32.mrb[0].mxu0
      %v5036 = vadd.f32 0.0, %v5035
      %v5037 = vpop.f32.mrb[0].mxu0
      %5038 = vmatprep.mubr.f32.mxu0 0.0
      %5039 = vmatmul.mubr.f32.gmra.mrb[0].mxu0 %v4848
      %v5040 = vpop.f32.mrb[0].mxu0
      %v5041 = vadd.f32 0.0, %v5040
      %v5042 = vpop.f32.mrb[0].mxu0
      %5043 = vmatprep.mubr.f32.mxu0 0.0
      %5044 = vmatmul.mubr.f32.gmra.mrb[0].mxu0 %v4851
      %v5045 = vpop.f32.mrb[0].mxu0
      %v5046 = vadd.f32 0.0, %v5045
      %v5047 = vpop.f32.mrb[0].mxu0
      %5048 = vmatprep.mubr.f32.mxu0 0.0
      %5049 = vmatmul.mubr.f32.gmra.mrb[0].mxu0 %v4854
      %v5050 = vpop.f32.mrb[0].mxu0
      %v5051 = vadd.f32 0.0, %v5050
      %v5052 = vpop.f32.mrb[0].mxu0
      %5053 = vmatprep.mubr.f32.mxu0 0.0
      %5054 = vmatmul.mubr.f32.gmra.mrb[0].mxu0 %v4857
      %v5055 = vpop.f32.mrb[0].mxu0
      %v5056 = vadd.f32 0.0, %v5055
      %v5057 = vpop.f32.mrb[0].mxu0
      %5058 = vmatprep.mubr.f32.mxu0 0.0
      %5059 = vmatmul.mubr.f32.gmra.mrb[0].mxu0 %v4860
      %v5060 = vpop.f32.mrb[0].mxu0
      %v5061 = vadd.f32 0.0, %v5060
      %v5062 = vpop.f32.mrb[0].mxu0
      %5063 = vmatprep.mubr.f32.mxu0 0.0
      %5064 = vmatmul.mubr.f32.gmra.mrb[0].mxu0 %v4863
      %v5065 = vpop.f32.mrb[0].mxu0
      %v5066 = vadd.f32 0.0, %v5065
      %v5067 = vpop.f32.mrb[0].mxu0
      %5068 = vmatprep.mubr.f32.mxu0 0.0
      %5069 = vmatmul.mubr.f32.gmra.mrb[0].mxu0 %v4866
      %v5070 = vpop.f32.mrb[0].mxu0
      %v5071 = vadd.f32 0.0, %v5070
      %v5072 = vpop.f32.mrb[0].mxu0
      %5073 = vmatprep.mubr.f32.mxu0 0.0
      %5074 = vmatmul.mubr.f32.gmra.mrb[0].mxu0 %v4869
      %v5075 = vpop.f32.mrb[0].mxu0
      %v5076 = vadd.f32 0.0, %v5075
      %v5077 = vpop.f32.mrb[0].mxu0
      %5078 = vmatprep.mubr.f32.mxu0 0.0
      %5079 = vmatmul.mubr.f32.gmra.mrb[0].mxu0 %v4872
      %v5080 = vpop.f32.mrb[0].mxu0
      %v5081 = vadd.f32 0.0, %v5080
      %v5082 = vpop.f32.mrb[0].mxu0
      %5083 = vmatprep.mubr.f32.mxu0 0.0
      %5084 = vmatmul.mubr.f32.gmra.mrb[0].mxu0 %v4875
      %v5085 = vpop.f32.mrb[0].mxu0
      %v5086 = vadd.f32 0.0, %v5085
      %v5087 = vpop.f32.mrb[0].mxu0
      %5088 = vmatprep.mubr.f32.mxu0 0.0
      %5089 = vmatmul.mubr.f32.gmra.mrb[0].mxu0 %v4878
      %v5090 = vpop.f32.mrb[0].mxu0
      %v5091 = vadd.f32 0.0, %v5090
      %v5092 = vpop.f32.mrb[0].mxu0
      %5093 = vmatprep.mubr.f32.mxu0 0.0
      %5094 = vmatmul.mubr.f32.gmra.mrb[0].mxu0 %v4881
      %v5095 = vpop.f32.mrb[0].mxu0
      %v5096 = vadd.f32 0.0, %v5095
      %v5097 = vpop.f32.mrb[0].mxu0
      %5098 = vmatprep.mubr.f32.mxu0 0.0
      %5099 = vmatmul.mubr.f32.gmra.mrb[0].mxu0 %v4884
      %v5100 = vpop.f32.mrb[0].mxu0
      %v5101 = vadd.f32 0.0, %v5100
      %v5102 = vpop.f32.mrb[0].mxu0
      %5103 = vmatprep.mubr.f32.mxu0 0.0
      %5104 = vmatmul.mubr.f32.gmra.mrb[0].mxu0 %v4887
      %v5105 = vpop.f32.mrb[0].mxu0
      %v5106 = vadd.f32 0.0, %v5105
      %v5107 = vpop.f32.mrb[0].mxu0
      %5108 = vmatprep.mubr.f32.mxu0 0.0
      %5109 = vmatmul.mubr.f32.gmra.mrb[0].mxu0 %v4890
      %v5110 = vpop.f32.mrb[0].mxu0
      %v5111 = vadd.f32 0.0, %v5110
      %v5112 = vpop.f32.mrb[0].mxu0
      %5113 = vmatprep.mubr.f32.mxu0 0.0
      %5114 = vmatmul.mubr.f32.gmra.mrb[0].mxu0 %v4893
      %v5115 = vpop.f32.mrb[0].mxu0
      %v5116 = vadd.f32 0.0, %v5115
      %v5117 = vpop.f32.mrb[0].mxu0
      %5118 = vmatprep.mubr.f32.mxu0 0.0
      %5119 = vmatmul.mubr.f32.gmra.mrb[0].mxu0 %v4896
      %v5120 = vpop.f32.mrb[0].mxu0
      %v5121 = vadd.f32 0.0, %v5120
      %v5122 = vpop.f32.mrb[0].mxu0
      %5123 = vmatprep.mubr.f32.mxu0 0.0
      %5124 = vmatmul.mubr.f32.gmra.mrb[0].mxu0 %v4899
      %v5125 = vpop.f32.mrb[0].mxu0
      %v5126 = vadd.f32 0.0, %v5125
      %v5127 = vpop.f32.mrb[0].mxu0
      %5128 = vdwg.mxu0
      %v5129 = vadd.f32 %v4739, %v4971
      %v5130 = vadd.f32 %v4740, %v4976
      %v5131 = vadd.f32 %v4741, %v4981
      %v5132 = vadd.f32 %v4742, %v4986
      %v5133 = vadd.f32 %v4743, %v4991
      %v5134 = vadd.f32 %v4744, %v4996
      %v5135 = vadd.f32 %v4745, %v5001
      %v5136 = vadd.f32 %v4746, %v5006
      %v5137 = vadd.f32 %v4747, %v5011
      %v5138 = vadd.f32 %v4748, %v5016
      %v5139 = vadd.f32 %v4749, %v5021
      %v5140 = vadd.f32 %v4750, %v5026
      %v5141 = vadd.f32 %v4751, %v5031
      %v5142 = vadd.f32 %v4752, %v5036
      %v5143 = vadd.f32 %v4753, %v5041
      %v5144 = vadd.f32 %v4754, %v5046
      %v5145 = vadd.f32 %v4755, %v5051
      %v5146 = vadd.f32 %v4756, %v5056
      %v5147 = vadd.f32 %v4757, %v5061
      %v5148 = vadd.f32 %v4758, %v5066
      %v5149 = vadd.f32 %v4759, %v5071
      %v5150 = vadd.f32 %v4760, %v5076
      %v5151 = vadd.f32 %v4761, %v5081
      %v5152 = vadd.f32 %v4762, %v5086
      %v5153 = vadd.f32 %v4763, %v5091
      %v5154 = vadd.f32 %v4764, %v5096
      %v5155 = vadd.f32 %v4765, %v5101
      %v5156 = vadd.f32 %v4766, %v5106
      %v5157 = vadd.f32 %v4767, %v5111
      %v5158 = vadd.f32 %v4768, %v5116
      %v5159 = vadd.f32 %v4769, %v5121
      %v5160 = vadd.f32 %v4770, %v5126
      %v5161 = vld [vmem:[%s3855] sm:$0xff]
      %v5162 = vld [vmem:[%s3855 + $0x8] sm:$0xff]
      %v5163 = vld [vmem:[%s3855 + $0x18] sm:$0xff]
      %v5164 = vld [vmem:[%s3855 + $0x20] sm:$0xff]
      %v5165 = vld [vmem:[%s3855 + $0x30] sm:$0xff]
      %v5166 = vld [vmem:[%s3855 + $0x38] sm:$0xff]
      %v5167 = vld [vmem:[%s3855 + $0x48] sm:$0xff]
      %v5168 = vld [vmem:[%s3855 + $0x50] sm:$0xff]
      %v5169 = vld [vmem:[%s3855 + $0x60] sm:$0xff]
      %v5170 = vld [vmem:[%s3855 + $0x68] sm:$0xff]
      %v5171 = vld [vmem:[%s3855 + $0x78] sm:$0xff]
      %v5172 = vld [vmem:[%s3855 + $0x80] sm:$0xff]
      %v5173 = vld [vmem:[%s3855 + $0x90] sm:$0xff]
      %v5174 = vld [vmem:[%s3855 + $0x98] sm:$0xff]
      %v5175 = vld [vmem:[%s3855 + $0xa8] sm:$0xff]
      %v5176 = vld [vmem:[%s3855 + $0xb0] sm:$0xff]
      %v5177 = vld [vmem:[%s3855 + $0xc0] sm:$0xff]
      %v5178 = vld [vmem:[%s3855 + $0xc8] sm:$0xff]
      %v5179 = vld [vmem:[%s3855 + $0xd8] sm:$0xff]
      %v5180 = vld [vmem:[%s3855 + $0xe0] sm:$0xff]
      %v5181 = vld [vmem:[%s3855 + $0xf0] sm:$0xff]
      %v5182 = vld [vmem:[%s3855 + $0xf8] sm:$0xff]
      %v5183 = vld [vmem:[%s3855 + $0x108] sm:$0xff]
      %v5184 = vld [vmem:[%s3855 + $0x110] sm:$0xff]
      %v5185 = vld [vmem:[%s3855 + $0x120] sm:$0xff]
      %v5186 = vld [vmem:[%s3855 + $0x128] sm:$0xff]
      %v5187 = vld [vmem:[%s3855 + $0x138] sm:$0xff]
      %v5188 = vld [vmem:[%s3855 + $0x140] sm:$0xff]
      %v5189 = vld [vmem:[%s3855 + $0x150] sm:$0xff]
      %v5190 = vld [vmem:[%s3855 + $0x158] sm:$0xff]
      %v5191 = vld [vmem:[%s3855 + $0x168] sm:$0xff]
      %v5192 = vld [vmem:[%s3855 + $0x170] sm:$0xff]
      %s5193 = scalar_lea.vmem %s3, 12
      %v5194 = vld [vmem:[%s5193] sm:$0xf]
      %v5196 = vsel %vm265, %v5161, 0
      %v5199 = vsel %vm265, %v5162, 0
      %v5202 = vsel %vm265, %v5163, 0
      %v5205 = vsel %vm265, %v5164, 0
      %v5208 = vsel %vm265, %v5165, 0
      %v5211 = vsel %vm265, %v5166, 0
      %v5214 = vsel %vm265, %v5167, 0
      %v5217 = vsel %vm265, %v5168, 0
      %v5220 = vsel %vm265, %v5169, 0
      %v5223 = vsel %vm265, %v5170, 0
      %v5226 = vsel %vm265, %v5171, 0
      %v5229 = vsel %vm265, %v5172, 0
      %v5232 = vsel %vm265, %v5173, 0
      %v5235 = vsel %vm265, %v5174, 0
      %v5238 = vsel %vm265, %v5175, 0
      %v5241 = vsel %vm265, %v5176, 0
      %v5244 = vsel %vm265, %v5177, 0
      %v5247 = vsel %vm265, %v5178, 0
      %v5250 = vsel %vm265, %v5179, 0
      %v5253 = vsel %vm265, %v5180, 0
      %v5256 = vsel %vm265, %v5181, 0
      %v5259 = vsel %vm265, %v5182, 0
      %v5262 = vsel %vm265, %v5183, 0
      %v5265 = vsel %vm265, %v5184, 0
      %v5268 = vsel %vm265, %v5185, 0
      %v5271 = vsel %vm265, %v5186, 0
      %v5274 = vsel %vm265, %v5187, 0
      %v5277 = vsel %vm265, %v5188, 0
      %v5280 = vsel %vm265, %v5189, 0
      %v5283 = vsel %vm265, %v5190, 0
      %v5286 = vsel %vm265, %v5191, 0
      %v5289 = vsel %vm265, %v5192, 0
      %v5292 = vsel %vm362, %v5194, 0
      %5294 = vmatprep.subr.mxu0 0.0
      %5295 = vmatpush1.msra.mxu0 %v5292
      %5296 = vmatprep.subr.mxu0 0.0
      %5297 = vmatpush1.msra.mxu0 0.0
      %5298 = vmatprep.subr.mxu0 0.0
      %5299 = vmatpush1.msra.mxu0 0.0
      %5300 = vmatprep.subr.mxu0 0.0
      %5301 = vmatpush1.msra.mxu0 0.0
      %5302 = vmatprep.subr.mxu0 0.0
      %5303 = vmatpush1.msra.mxu0 0.0
      %5304 = vmatprep.subr.mxu0 0.0
      %5305 = vmatpush1.msra.mxu0 0.0
      %5306 = vmatprep.subr.mxu0 0.0
      %5307 = vmatpush1.msra.mxu0 0.0
      %5308 = vmatprep.subr.mxu0 0.0
      %5309 = vmatpush1.msra.mxu0 0.0
      %5310 = vmatprep.subr.mxu0 0.0
      %5311 = vmatpush1.msra.mxu0 0.0
      %5312 = vmatprep.subr.mxu0 0.0
      %5313 = vmatpush1.msra.mxu0 0.0
      %5314 = vmatprep.subr.mxu0 0.0
      %5315 = vmatpush1.msra.mxu0 0.0
      %5316 = vmatprep.subr.mxu0 0.0
      %5317 = vmatpush1.msra.mxu0 0.0
      %5318 = vmatprep.subr.mxu0 0.0
      %5319 = vmatpush1.msra.mxu0 0.0
      %5320 = vmatprep.subr.mxu0 0.0
      %5321 = vmatpush1.msra.mxu0 0.0
      %5322 = vmatprep.subr.mxu0 0.0
      %5323 = vmatpush1.msra.mxu0 0.0
      %5324 = vmatprep.subr.mxu0 0.0
      %5325 = vmatpush1.msra.mxu0 0.0
      %5326 = vmatprep.subr.mxu0 0.0
      %5327 = vmatpush1.msra.mxu0 0.0
      %5328 = vmatprep.subr.mxu0 0.0
      %5329 = vmatpush1.msra.mxu0 0.0
      %5330 = vmatprep.subr.mxu0 0.0
      %5331 = vmatpush1.msra.mxu0 0.0
      %5332 = vmatprep.subr.mxu0 0.0
      %5333 = vmatpush1.msra.mxu0 0.0
      %5334 = vmatprep.subr.mxu0 0.0
      %5335 = vmatpush1.msra.mxu0 0.0
      %5336 = vmatprep.subr.mxu0 0.0
      %5337 = vmatpush1.msra.mxu0 0.0
      %5338 = vmatprep.subr.mxu0 0.0
      %5339 = vmatpush1.msra.mxu0 0.0
      %5340 = vmatprep.subr.mxu0 0.0
      %5341 = vmatpush1.msra.mxu0 0.0
      %5342 = vmatprep.subr.mxu0 0.0
      %5343 = vmatpush1.msra.mxu0 0.0
      %5344 = vmatprep.subr.mxu0 0.0
      %5345 = vmatpush1.msra.mxu0 0.0
      %5346 = vmatprep.subr.mxu0 0.0
      %5347 = vmatpush1.msra.mxu0 0.0
      %5348 = vmatprep.subr.mxu0 0.0
      %5349 = vmatpush1.msra.mxu0 0.0
      %5350 = vmatprep.subr.mxu0 0.0
      %5351 = vmatpush1.msra.mxu0 0.0
      %5352 = vmatprep.subr.mxu0 0.0
      %5353 = vmatpush1.msra.mxu0 0.0
      %5354 = vmatprep.subr.mxu0 0.0
      %5355 = vmatpush1.msra.mxu0 0.0
      %5356 = vmatprep.subr.mxu0 0.0
      %5357 = vmatpush1.msra.mxu0 0.0
      %5358 = vmatprep.mubr.f32.mxu0 0.0
      %5359 = vmatmul.mubr.f32.gmra.mrb[0].mxu0 %v5196
      %v5360 = vpop.f32.mrb[0].mxu0
      %v5361 = vadd.f32 0.0, %v5360
      %v5362 = vpop.f32.mrb[0].mxu0
      %5363 = vmatprep.mubr.f32.mxu0 0.0
      %5364 = vmatmul.mubr.f32.gmra.mrb[0].mxu0 %v5199
      %v5365 = vpop.f32.mrb[0].mxu0
      %v5366 = vadd.f32 0.0, %v5365
      %v5367 = vpop.f32.mrb[0].mxu0
      %5368 = vmatprep.mubr.f32.mxu0 0.0
      %5369 = vmatmul.mubr.f32.gmra.mrb[0].mxu0 %v5202
      %v5370 = vpop.f32.mrb[0].mxu0
      %v5371 = vadd.f32 0.0, %v5370
      %v5372 = vpop.f32.mrb[0].mxu0
      %5373 = vmatprep.mubr.f32.mxu0 0.0
      %5374 = vmatmul.mubr.f32.gmra.mrb[0].mxu0 %v5205
      %v5375 = vpop.f32.mrb[0].mxu0
      %v5376 = vadd.f32 0.0, %v5375
      %v5377 = vpop.f32.mrb[0].mxu0
      %5378 = vmatprep.mubr.f32.mxu0 0.0
      %5379 = vmatmul.mubr.f32.gmra.mrb[0].mxu0 %v5208
      %v5380 = vpop.f32.mrb[0].mxu0
      %v5381 = vadd.f32 0.0, %v5380
      %v5382 = vpop.f32.mrb[0].mxu0
      %5383 = vmatprep.mubr.f32.mxu0 0.0
      %5384 = vmatmul.mubr.f32.gmra.mrb[0].mxu0 %v5211
      %v5385 = vpop.f32.mrb[0].mxu0
      %v5386 = vadd.f32 0.0, %v5385
      %v5387 = vpop.f32.mrb[0].mxu0
      %5388 = vmatprep.mubr.f32.mxu0 0.0
      %5389 = vmatmul.mubr.f32.gmra.mrb[0].mxu0 %v5214
      %v5390 = vpop.f32.mrb[0].mxu0
      %v5391 = vadd.f32 0.0, %v5390
      %v5392 = vpop.f32.mrb[0].mxu0
      %5393 = vmatprep.mubr.f32.mxu0 0.0
      %5394 = vmatmul.mubr.f32.gmra.mrb[0].mxu0 %v5217
      %v5395 = vpop.f32.mrb[0].mxu0
      %v5396 = vadd.f32 0.0, %v5395
      %v5397 = vpop.f32.mrb[0].mxu0
      %5398 = vmatprep.mubr.f32.mxu0 0.0
      %5399 = vmatmul.mubr.f32.gmra.mrb[0].mxu0 %v5220
      %v5400 = vpop.f32.mrb[0].mxu0
      %v5401 = vadd.f32 0.0, %v5400
      %v5402 = vpop.f32.mrb[0].mxu0
      %5403 = vmatprep.mubr.f32.mxu0 0.0
      %5404 = vmatmul.mubr.f32.gmra.mrb[0].mxu0 %v5223
      %v5405 = vpop.f32.mrb[0].mxu0
      %v5406 = vadd.f32 0.0, %v5405
      %v5407 = vpop.f32.mrb[0].mxu0
      %5408 = vmatprep.mubr.f32.mxu0 0.0
      %5409 = vmatmul.mubr.f32.gmra.mrb[0].mxu0 %v5226
      %v5410 = vpop.f32.mrb[0].mxu0
      %v5411 = vadd.f32 0.0, %v5410
      %v5412 = vpop.f32.mrb[0].mxu0
      %5413 = vmatprep.mubr.f32.mxu0 0.0
      %5414 = vmatmul.mubr.f32.gmra.mrb[0].mxu0 %v5229
      %v5415 = vpop.f32.mrb[0].mxu0
      %v5416 = vadd.f32 0.0, %v5415
      %v5417 = vpop.f32.mrb[0].mxu0
      %5418 = vmatprep.mubr.f32.mxu0 0.0
      %5419 = vmatmul.mubr.f32.gmra.mrb[0].mxu0 %v5232
      %v5420 = vpop.f32.mrb[0].mxu0
      %v5421 = vadd.f32 0.0, %v5420
      %v5422 = vpop.f32.mrb[0].mxu0
      %5423 = vmatprep.mubr.f32.mxu0 0.0
      %5424 = vmatmul.mubr.f32.gmra.mrb[0].mxu0 %v5235
      %v5425 = vpop.f32.mrb[0].mxu0
      %v5426 = vadd.f32 0.0, %v5425
      %v5427 = vpop.f32.mrb[0].mxu0
      %5428 = vmatprep.mubr.f32.mxu0 0.0
      %5429 = vmatmul.mubr.f32.gmra.mrb[0].mxu0 %v5238
      %v5430 = vpop.f32.mrb[0].mxu0
      %v5431 = vadd.f32 0.0, %v5430
      %v5432 = vpop.f32.mrb[0].mxu0
      %5433 = vmatprep.mubr.f32.mxu0 0.0
      %5434 = vmatmul.mubr.f32.gmra.mrb[0].mxu0 %v5241
      %v5435 = vpop.f32.mrb[0].mxu0
      %v5436 = vadd.f32 0.0, %v5435
      %v5437 = vpop.f32.mrb[0].mxu0
      %5438 = vmatprep.mubr.f32.mxu0 0.0
      %5439 = vmatmul.mubr.f32.gmra.mrb[0].mxu0 %v5244
      %v5440 = vpop.f32.mrb[0].mxu0
      %v5441 = vadd.f32 0.0, %v5440
      %v5442 = vpop.f32.mrb[0].mxu0
      %5443 = vmatprep.mubr.f32.mxu0 0.0
      %5444 = vmatmul.mubr.f32.gmra.mrb[0].mxu0 %v5247
      %v5445 = vpop.f32.mrb[0].mxu0
      %v5446 = vadd.f32 0.0, %v5445
      %v5447 = vpop.f32.mrb[0].mxu0
      %5448 = vmatprep.mubr.f32.mxu0 0.0
      %5449 = vmatmul.mubr.f32.gmra.mrb[0].mxu0 %v5250
      %v5450 = vpop.f32.mrb[0].mxu0
      %v5451 = vadd.f32 0.0, %v5450
      %v5452 = vpop.f32.mrb[0].mxu0
      %5453 = vmatprep.mubr.f32.mxu0 0.0
      %5454 = vmatmul.mubr.f32.gmra.mrb[0].mxu0 %v5253
      %v5455 = vpop.f32.mrb[0].mxu0
      %v5456 = vadd.f32 0.0, %v5455
      %v5457 = vpop.f32.mrb[0].mxu0
      %5458 = vmatprep.mubr.f32.mxu0 0.0
      %5459 = vmatmul.mubr.f32.gmra.mrb[0].mxu0 %v5256
      %v5460 = vpop.f32.mrb[0].mxu0
      %v5461 = vadd.f32 0.0, %v5460
      %v5462 = vpop.f32.mrb[0].mxu0
      %5463 = vmatprep.mubr.f32.mxu0 0.0
      %5464 = vmatmul.mubr.f32.gmra.mrb[0].mxu0 %v5259
      %v5465 = vpop.f32.mrb[0].mxu0
      %v5466 = vadd.f32 0.0, %v5465
      %v5467 = vpop.f32.mrb[0].mxu0
      %5468 = vmatprep.mubr.f32.mxu0 0.0
      %5469 = vmatmul.mubr.f32.gmra.mrb[0].mxu0 %v5262
      %v5470 = vpop.f32.mrb[0].mxu0
      %v5471 = vadd.f32 0.0, %v5470
      %v5472 = vpop.f32.mrb[0].mxu0
      %5473 = vmatprep.mubr.f32.mxu0 0.0
      %5474 = vmatmul.mubr.f32.gmra.mrb[0].mxu0 %v5265
      %v5475 = vpop.f32.mrb[0].mxu0
      %v5476 = vadd.f32 0.0, %v5475
      %v5477 = vpop.f32.mrb[0].mxu0
      %5478 = vmatprep.mubr.f32.mxu0 0.0
      %5479 = vmatmul.mubr.f32.gmra.mrb[0].mxu0 %v5268
      %v5480 = vpop.f32.mrb[0].mxu0
      %v5481 = vadd.f32 0.0, %v5480
      %v5482 = vpop.f32.mrb[0].mxu0
      %5483 = vmatprep.mubr.f32.mxu0 0.0
      %5484 = vmatmul.mubr.f32.gmra.mrb[0].mxu0 %v5271
      %v5485 = vpop.f32.mrb[0].mxu0
      %v5486 = vadd.f32 0.0, %v5485
      %v5487 = vpop.f32.mrb[0].mxu0
      %5488 = vmatprep.mubr.f32.mxu0 0.0
      %5489 = vmatmul.mubr.f32.gmra.mrb[0].mxu0 %v5274
      %v5490 = vpop.f32.mrb[0].mxu0
      %v5491 = vadd.f32 0.0, %v5490
      %v5492 = vpop.f32.mrb[0].mxu0
      %5493 = vmatprep.mubr.f32.mxu0 0.0
      %5494 = vmatmul.mubr.f32.gmra.mrb[0].mxu0 %v5277
      %v5495 = vpop.f32.mrb[0].mxu0
      %v5496 = vadd.f32 0.0, %v5495
      %v5497 = vpop.f32.mrb[0].mxu0
      %5498 = vmatprep.mubr.f32.mxu0 0.0
      %5499 = vmatmul.mubr.f32.gmra.mrb[0].mxu0 %v5280
      %v5500 = vpop.f32.mrb[0].mxu0
      %v5501 = vadd.f32 0.0, %v5500
      %v5502 = vpop.f32.mrb[0].mxu0
      %5503 = vmatprep.mubr.f32.mxu0 0.0
      %5504 = vmatmul.mubr.f32.gmra.mrb[0].mxu0 %v5283
      %v5505 = vpop.f32.mrb[0].mxu0
      %v5506 = vadd.f32 0.0, %v5505
      %v5507 = vpop.f32.mrb[0].mxu0
      %5508 = vmatprep.mubr.f32.mxu0 0.0
      %5509 = vmatmul.mubr.f32.gmra.mrb[0].mxu0 %v5286
      %v5510 = vpop.f32.mrb[0].mxu0
      %v5511 = vadd.f32 0.0, %v5510
      %v5512 = vpop.f32.mrb[0].mxu0
      %5513 = vmatprep.mubr.f32.mxu0 0.0
      %5514 = vmatmul.mubr.f32.gmra.mrb[0].mxu0 %v5289
      %v5515 = vpop.f32.mrb[0].mxu0
      %v5516 = vadd.f32 0.0, %v5515
      %v5517 = vpop.f32.mrb[0].mxu0
      %5518 = vdwg.mxu0
      %v5519 = vadd.f32 %v5129, %v5361
      %v5520 = vadd.f32 %v5130, %v5366
      %v5521 = vadd.f32 %v5131, %v5371
      %v5522 = vadd.f32 %v5132, %v5376
      %v5523 = vadd.f32 %v5133, %v5381
      %v5524 = vadd.f32 %v5134, %v5386
      %v5525 = vadd.f32 %v5135, %v5391
      %v5526 = vadd.f32 %v5136, %v5396
      %v5527 = vadd.f32 %v5137, %v5401
      %v5528 = vadd.f32 %v5138, %v5406
      %v5529 = vadd.f32 %v5139, %v5411
      %v5530 = vadd.f32 %v5140, %v5416
      %v5531 = vadd.f32 %v5141, %v5421
      %v5532 = vadd.f32 %v5142, %v5426
      %v5533 = vadd.f32 %v5143, %v5431
      %v5534 = vadd.f32 %v5144, %v5436
      %v5535 = vadd.f32 %v5145, %v5441
      %v5536 = vadd.f32 %v5146, %v5446
      %v5537 = vadd.f32 %v5147, %v5451
      %v5538 = vadd.f32 %v5148, %v5456
      %v5539 = vadd.f32 %v5149, %v5461
      %v5540 = vadd.f32 %v5150, %v5466
      %v5541 = vadd.f32 %v5151, %v5471
      %v5542 = vadd.f32 %v5152, %v5476
      %v5543 = vadd.f32 %v5153, %v5481
      %v5544 = vadd.f32 %v5154, %v5486
      %v5545 = vadd.f32 %v5155, %v5491
      %v5546 = vadd.f32 %v5156, %v5496
      %v5547 = vadd.f32 %v5157, %v5501
      %v5548 = vadd.f32 %v5158, %v5506
      %v5549 = vadd.f32 %v5159, %v5511
      %v5550 = vadd.f32 %v5160, %v5516
      %v5551 = vld [vmem:[%s3855 + $0x2] sm:$0xff]
      %v5552 = vld [vmem:[%s3855 + $0xa] sm:$0xff]
      %v5553 = vld [vmem:[%s3855 + $0x1a] sm:$0xff]
      %v5554 = vld [vmem:[%s3855 + $0x22] sm:$0xff]
      %v5555 = vld [vmem:[%s3855 + $0x32] sm:$0xff]
      %v5556 = vld [vmem:[%s3855 + $0x3a] sm:$0xff]
      %v5557 = vld [vmem:[%s3855 + $0x4a] sm:$0xff]
      %v5558 = vld [vmem:[%s3855 + $0x52] sm:$0xff]
      %v5559 = vld [vmem:[%s3855 + $0x62] sm:$0xff]
      %v5560 = vld [vmem:[%s3855 + $0x6a] sm:$0xff]
      %v5561 = vld [vmem:[%s3855 + $0x7a] sm:$0xff]
      %v5562 = vld [vmem:[%s3855 + $0x82] sm:$0xff]
      %v5563 = vld [vmem:[%s3855 + $0x92] sm:$0xff]
      %v5564 = vld [vmem:[%s3855 + $0x9a] sm:$0xff]
      %v5565 = vld [vmem:[%s3855 + $0xaa] sm:$0xff]
      %v5566 = vld [vmem:[%s3855 + $0xb2] sm:$0xff]
      %v5567 = vld [vmem:[%s3855 + $0xc2] sm:$0xff]
      %v5568 = vld [vmem:[%s3855 + $0xca] sm:$0xff]
      %v5569 = vld [vmem:[%s3855 + $0xda] sm:$0xff]
      %v5570 = vld [vmem:[%s3855 + $0xe2] sm:$0xff]
      %v5571 = vld [vmem:[%s3855 + $0xf2] sm:$0xff]
      %v5572 = vld [vmem:[%s3855 + $0xfa] sm:$0xff]
      %v5573 = vld [vmem:[%s3855 + $0x10a] sm:$0xff]
      %v5574 = vld [vmem:[%s3855 + $0x112] sm:$0xff]
      %v5575 = vld [vmem:[%s3855 + $0x122] sm:$0xff]
      %v5576 = vld [vmem:[%s3855 + $0x12a] sm:$0xff]
      %v5577 = vld [vmem:[%s3855 + $0x13a] sm:$0xff]
      %v5578 = vld [vmem:[%s3855 + $0x142] sm:$0xff]
      %v5579 = vld [vmem:[%s3855 + $0x152] sm:$0xff]
      %v5580 = vld [vmem:[%s3855 + $0x15a] sm:$0xff]
      %v5581 = vld [vmem:[%s3855 + $0x16a] sm:$0xff]
      %v5582 = vld [vmem:[%s3855 + $0x172] sm:$0xff]
      %s5583 = scalar_lea.vmem %s3, 16
      %v5584 = vld [vmem:[%s5583] sm:$0xf]
      %v5586 = vsel %vm265, %v5551, 0
      %v5589 = vsel %vm265, %v5552, 0
      %v5592 = vsel %vm265, %v5553, 0
      %v5595 = vsel %vm265, %v5554, 0
      %v5598 = vsel %vm265, %v5555, 0
      %v5601 = vsel %vm265, %v5556, 0
      %v5604 = vsel %vm265, %v5557, 0
      %v5607 = vsel %vm265, %v5558, 0
      %v5610 = vsel %vm265, %v5559, 0
      %v5613 = vsel %vm265, %v5560, 0
      %v5616 = vsel %vm265, %v5561, 0
      %v5619 = vsel %vm265, %v5562, 0
      %v5622 = vsel %vm265, %v5563, 0
      %v5625 = vsel %vm265, %v5564, 0
      %v5628 = vsel %vm265, %v5565, 0
      %v5631 = vsel %vm265, %v5566, 0
      %v5634 = vsel %vm265, %v5567, 0
      %v5637 = vsel %vm265, %v5568, 0
      %v5640 = vsel %vm265, %v5569, 0
      %v5643 = vsel %vm265, %v5570, 0
      %v5646 = vsel %vm265, %v5571, 0
      %v5649 = vsel %vm265, %v5572, 0
      %v5652 = vsel %vm265, %v5573, 0
      %v5655 = vsel %vm265, %v5574, 0
      %v5658 = vsel %vm265, %v5575, 0
      %v5661 = vsel %vm265, %v5576, 0
      %v5664 = vsel %vm265, %v5577, 0
      %v5667 = vsel %vm265, %v5578, 0
      %v5670 = vsel %vm265, %v5579, 0
      %v5673 = vsel %vm265, %v5580, 0
      %v5676 = vsel %vm265, %v5581, 0
      %v5679 = vsel %vm265, %v5582, 0
      %v5682 = vsel %vm362, %v5584, 0
      %5684 = vmatprep.subr.mxu0 0.0
      %5685 = vmatpush1.msra.mxu0 %v5682
      %5686 = vmatprep.subr.mxu0 0.0
      %5687 = vmatpush1.msra.mxu0 0.0
      %5688 = vmatprep.subr.mxu0 0.0
      %5689 = vmatpush1.msra.mxu0 0.0
      %5690 = vmatprep.subr.mxu0 0.0
      %5691 = vmatpush1.msra.mxu0 0.0
      %5692 = vmatprep.subr.mxu0 0.0
      %5693 = vmatpush1.msra.mxu0 0.0
      %5694 = vmatprep.subr.mxu0 0.0
      %5695 = vmatpush1.msra.mxu0 0.0
      %5696 = vmatprep.subr.mxu0 0.0
      %5697 = vmatpush1.msra.mxu0 0.0
      %5698 = vmatprep.subr.mxu0 0.0
      %5699 = vmatpush1.msra.mxu0 0.0
      %5700 = vmatprep.subr.mxu0 0.0
      %5701 = vmatpush1.msra.mxu0 0.0
      %5702 = vmatprep.subr.mxu0 0.0
      %5703 = vmatpush1.msra.mxu0 0.0
      %5704 = vmatprep.subr.mxu0 0.0
      %5705 = vmatpush1.msra.mxu0 0.0
      %5706 = vmatprep.subr.mxu0 0.0
      %5707 = vmatpush1.msra.mxu0 0.0
      %5708 = vmatprep.subr.mxu0 0.0
      %5709 = vmatpush1.msra.mxu0 0.0
      %5710 = vmatprep.subr.mxu0 0.0
      %5711 = vmatpush1.msra.mxu0 0.0
      %5712 = vmatprep.subr.mxu0 0.0
      %5713 = vmatpush1.msra.mxu0 0.0
      %5714 = vmatprep.subr.mxu0 0.0
      %5715 = vmatpush1.msra.mxu0 0.0
      %5716 = vmatprep.subr.mxu0 0.0
      %5717 = vmatpush1.msra.mxu0 0.0
      %5718 = vmatprep.subr.mxu0 0.0
      %5719 = vmatpush1.msra.mxu0 0.0
      %5720 = vmatprep.subr.mxu0 0.0
      %5721 = vmatpush1.msra.mxu0 0.0
      %5722 = vmatprep.subr.mxu0 0.0
      %5723 = vmatpush1.msra.mxu0 0.0
      %5724 = vmatprep.subr.mxu0 0.0
      %5725 = vmatpush1.msra.mxu0 0.0
      %5726 = vmatprep.subr.mxu0 0.0
      %5727 = vmatpush1.msra.mxu0 0.0
      %5728 = vmatprep.subr.mxu0 0.0
      %5729 = vmatpush1.msra.mxu0 0.0
      %5730 = vmatprep.subr.mxu0 0.0
      %5731 = vmatpush1.msra.mxu0 0.0
      %5732 = vmatprep.subr.mxu0 0.0
      %5733 = vmatpush1.msra.mxu0 0.0
      %5734 = vmatprep.subr.mxu0 0.0
      %5735 = vmatpush1.msra.mxu0 0.0
      %5736 = vmatprep.subr.mxu0 0.0
      %5737 = vmatpush1.msra.mxu0 0.0
      %5738 = vmatprep.subr.mxu0 0.0
      %5739 = vmatpush1.msra.mxu0 0.0
      %5740 = vmatprep.subr.mxu0 0.0
      %5741 = vmatpush1.msra.mxu0 0.0
      %5742 = vmatprep.subr.mxu0 0.0
      %5743 = vmatpush1.msra.mxu0 0.0
      %5744 = vmatprep.subr.mxu0 0.0
      %5745 = vmatpush1.msra.mxu0 0.0
      %5746 = vmatprep.subr.mxu0 0.0
      %5747 = vmatpush1.msra.mxu0 0.0
      %5748 = vmatprep.mubr.f32.mxu0 0.0
      %5749 = vmatmul.mubr.f32.gmra.mrb[0].mxu0 %v5586
      %v5750 = vpop.f32.mrb[0].mxu0
      %v5751 = vadd.f32 0.0, %v5750
      %v5752 = vpop.f32.mrb[0].mxu0
      %5753 = vmatprep.mubr.f32.mxu0 0.0
      %5754 = vmatmul.mubr.f32.gmra.mrb[0].mxu0 %v5589
      %v5755 = vpop.f32.mrb[0].mxu0
      %v5756 = vadd.f32 0.0, %v5755
      %v5757 = vpop.f32.mrb[0].mxu0
      %5758 = vmatprep.mubr.f32.mxu0 0.0
      %5759 = vmatmul.mubr.f32.gmra.mrb[0].mxu0 %v5592
      %v5760 = vpop.f32.mrb[0].mxu0
      %v5761 = vadd.f32 0.0, %v5760
      %v5762 = vpop.f32.mrb[0].mxu0
      %5763 = vmatprep.mubr.f32.mxu0 0.0
      %5764 = vmatmul.mubr.f32.gmra.mrb[0].mxu0 %v5595
      %v5765 = vpop.f32.mrb[0].mxu0
      %v5766 = vadd.f32 0.0, %v5765
      %v5767 = vpop.f32.mrb[0].mxu0
      %5768 = vmatprep.mubr.f32.mxu0 0.0
      %5769 = vmatmul.mubr.f32.gmra.mrb[0].mxu0 %v5598
      %v5770 = vpop.f32.mrb[0].mxu0
      %v5771 = vadd.f32 0.0, %v5770
      %v5772 = vpop.f32.mrb[0].mxu0
      %5773 = vmatprep.mubr.f32.mxu0 0.0
      %5774 = vmatmul.mubr.f32.gmra.mrb[0].mxu0 %v5601
      %v5775 = vpop.f32.mrb[0].mxu0
      %v5776 = vadd.f32 0.0, %v5775
      %v5777 = vpop.f32.mrb[0].mxu0
      %5778 = vmatprep.mubr.f32.mxu0 0.0
      %5779 = vmatmul.mubr.f32.gmra.mrb[0].mxu0 %v5604
      %v5780 = vpop.f32.mrb[0].mxu0
      %v5781 = vadd.f32 0.0, %v5780
      %v5782 = vpop.f32.mrb[0].mxu0
      %5783 = vmatprep.mubr.f32.mxu0 0.0
      %5784 = vmatmul.mubr.f32.gmra.mrb[0].mxu0 %v5607
      %v5785 = vpop.f32.mrb[0].mxu0
      %v5786 = vadd.f32 0.0, %v5785
      %v5787 = vpop.f32.mrb[0].mxu0
      %5788 = vmatprep.mubr.f32.mxu0 0.0
      %5789 = vmatmul.mubr.f32.gmra.mrb[0].mxu0 %v5610
      %v5790 = vpop.f32.mrb[0].mxu0
      %v5791 = vadd.f32 0.0, %v5790
      %v5792 = vpop.f32.mrb[0].mxu0
      %5793 = vmatprep.mubr.f32.mxu0 0.0
      %5794 = vmatmul.mubr.f32.gmra.mrb[0].mxu0 %v5613
      %v5795 = vpop.f32.mrb[0].mxu0
      %v5796 = vadd.f32 0.0, %v5795
      %v5797 = vpop.f32.mrb[0].mxu0
      %5798 = vmatprep.mubr.f32.mxu0 0.0
      %5799 = vmatmul.mubr.f32.gmra.mrb[0].mxu0 %v5616
      %v5800 = vpop.f32.mrb[0].mxu0
      %v5801 = vadd.f32 0.0, %v5800
      %v5802 = vpop.f32.mrb[0].mxu0
      %5803 = vmatprep.mubr.f32.mxu0 0.0
      %5804 = vmatmul.mubr.f32.gmra.mrb[0].mxu0 %v5619
      %v5805 = vpop.f32.mrb[0].mxu0
      %v5806 = vadd.f32 0.0, %v5805
      %v5807 = vpop.f32.mrb[0].mxu0
      %5808 = vmatprep.mubr.f32.mxu0 0.0
      %5809 = vmatmul.mubr.f32.gmra.mrb[0].mxu0 %v5622
      %v5810 = vpop.f32.mrb[0].mxu0
      %v5811 = vadd.f32 0.0, %v5810
      %v5812 = vpop.f32.mrb[0].mxu0
      %5813 = vmatprep.mubr.f32.mxu0 0.0
      %5814 = vmatmul.mubr.f32.gmra.mrb[0].mxu0 %v5625
      %v5815 = vpop.f32.mrb[0].mxu0
      %v5816 = vadd.f32 0.0, %v5815
      %v5817 = vpop.f32.mrb[0].mxu0
      %5818 = vmatprep.mubr.f32.mxu0 0.0
      %5819 = vmatmul.mubr.f32.gmra.mrb[0].mxu0 %v5628
      %v5820 = vpop.f32.mrb[0].mxu0
      %v5821 = vadd.f32 0.0, %v5820
      %v5822 = vpop.f32.mrb[0].mxu0
      %5823 = vmatprep.mubr.f32.mxu0 0.0
      %5824 = vmatmul.mubr.f32.gmra.mrb[0].mxu0 %v5631
      %v5825 = vpop.f32.mrb[0].mxu0
      %v5826 = vadd.f32 0.0, %v5825
      %v5827 = vpop.f32.mrb[0].mxu0
      %5828 = vmatprep.mubr.f32.mxu0 0.0
      %5829 = vmatmul.mubr.f32.gmra.mrb[0].mxu0 %v5634
      %v5830 = vpop.f32.mrb[0].mxu0
      %v5831 = vadd.f32 0.0, %v5830
      %v5832 = vpop.f32.mrb[0].mxu0
      %5833 = vmatprep.mubr.f32.mxu0 0.0
      %5834 = vmatmul.mubr.f32.gmra.mrb[0].mxu0 %v5637
      %v5835 = vpop.f32.mrb[0].mxu0
      %v5836 = vadd.f32 0.0, %v5835
      %v5837 = vpop.f32.mrb[0].mxu0
      %5838 = vmatprep.mubr.f32.mxu0 0.0
      %5839 = vmatmul.mubr.f32.gmra.mrb[0].mxu0 %v5640
      %v5840 = vpop.f32.mrb[0].mxu0
      %v5841 = vadd.f32 0.0, %v5840
      %v5842 = vpop.f32.mrb[0].mxu0
      %5843 = vmatprep.mubr.f32.mxu0 0.0
      %5844 = vmatmul.mubr.f32.gmra.mrb[0].mxu0 %v5643
      %v5845 = vpop.f32.mrb[0].mxu0
      %v5846 = vadd.f32 0.0, %v5845
      %v5847 = vpop.f32.mrb[0].mxu0
      %5848 = vmatprep.mubr.f32.mxu0 0.0
      %5849 = vmatmul.mubr.f32.gmra.mrb[0].mxu0 %v5646
      %v5850 = vpop.f32.mrb[0].mxu0
      %v5851 = vadd.f32 0.0, %v5850
      %v5852 = vpop.f32.mrb[0].mxu0
      %5853 = vmatprep.mubr.f32.mxu0 0.0
      %5854 = vmatmul.mubr.f32.gmra.mrb[0].mxu0 %v5649
      %v5855 = vpop.f32.mrb[0].mxu0
      %v5856 = vadd.f32 0.0, %v5855
      %v5857 = vpop.f32.mrb[0].mxu0
      %5858 = vmatprep.mubr.f32.mxu0 0.0
      %5859 = vmatmul.mubr.f32.gmra.mrb[0].mxu0 %v5652
      %v5860 = vpop.f32.mrb[0].mxu0
      %v5861 = vadd.f32 0.0, %v5860
      %v5862 = vpop.f32.mrb[0].mxu0
      %5863 = vmatprep.mubr.f32.mxu0 0.0
      %5864 = vmatmul.mubr.f32.gmra.mrb[0].mxu0 %v5655
      %v5865 = vpop.f32.mrb[0].mxu0
      %v5866 = vadd.f32 0.0, %v5865
      %v5867 = vpop.f32.mrb[0].mxu0
      %5868 = vmatprep.mubr.f32.mxu0 0.0
      %5869 = vmatmul.mubr.f32.gmra.mrb[0].mxu0 %v5658
      %v5870 = vpop.f32.mrb[0].mxu0
      %v5871 = vadd.f32 0.0, %v5870
      %v5872 = vpop.f32.mrb[0].mxu0
      %5873 = vmatprep.mubr.f32.mxu0 0.0
      %5874 = vmatmul.mubr.f32.gmra.mrb[0].mxu0 %v5661
      %v5875 = vpop.f32.mrb[0].mxu0
      %v5876 = vadd.f32 0.0, %v5875
      %v5877 = vpop.f32.mrb[0].mxu0
      %5878 = vmatprep.mubr.f32.mxu0 0.0
      %5879 = vmatmul.mubr.f32.gmra.mrb[0].mxu0 %v5664
      %v5880 = vpop.f32.mrb[0].mxu0
      %v5881 = vadd.f32 0.0, %v5880
      %v5882 = vpop.f32.mrb[0].mxu0
      %5883 = vmatprep.mubr.f32.mxu0 0.0
      %5884 = vmatmul.mubr.f32.gmra.mrb[0].mxu0 %v5667
      %v5885 = vpop.f32.mrb[0].mxu0
      %v5886 = vadd.f32 0.0, %v5885
      %v5887 = vpop.f32.mrb[0].mxu0
      %5888 = vmatprep.mubr.f32.mxu0 0.0
      %5889 = vmatmul.mubr.f32.gmra.mrb[0].mxu0 %v5670
      %v5890 = vpop.f32.mrb[0].mxu0
      %v5891 = vadd.f32 0.0, %v5890
      %v5892 = vpop.f32.mrb[0].mxu0
      %5893 = vmatprep.mubr.f32.mxu0 0.0
      %5894 = vmatmul.mubr.f32.gmra.mrb[0].mxu0 %v5673
      %v5895 = vpop.f32.mrb[0].mxu0
      %v5896 = vadd.f32 0.0, %v5895
      %v5897 = vpop.f32.mrb[0].mxu0
      %5898 = vmatprep.mubr.f32.mxu0 0.0
      %5899 = vmatmul.mubr.f32.gmra.mrb[0].mxu0 %v5676
      %v5900 = vpop.f32.mrb[0].mxu0
      %v5901 = vadd.f32 0.0, %v5900
      %v5902 = vpop.f32.mrb[0].mxu0
      %5903 = vmatprep.mubr.f32.mxu0 0.0
      %5904 = vmatmul.mubr.f32.gmra.mrb[0].mxu0 %v5679
      %v5905 = vpop.f32.mrb[0].mxu0
      %v5906 = vadd.f32 0.0, %v5905
      %v5907 = vpop.f32.mrb[0].mxu0
      %5908 = vdwg.mxu0
      %v5909 = vadd.f32 %v5519, %v5751
      %v5910 = vadd.f32 %v5520, %v5756
      %v5911 = vadd.f32 %v5521, %v5761
      %v5912 = vadd.f32 %v5522, %v5766
      %v5913 = vadd.f32 %v5523, %v5771
      %v5914 = vadd.f32 %v5524, %v5776
      %v5915 = vadd.f32 %v5525, %v5781
      %v5916 = vadd.f32 %v5526, %v5786
      %v5917 = vadd.f32 %v5527, %v5791
      %v5918 = vadd.f32 %v5528, %v5796
      %v5919 = vadd.f32 %v5529, %v5801
      %v5920 = vadd.f32 %v5530, %v5806
      %v5921 = vadd.f32 %v5531, %v5811
      %v5922 = vadd.f32 %v5532, %v5816
      %v5923 = vadd.f32 %v5533, %v5821
      %v5924 = vadd.f32 %v5534, %v5826
      %v5925 = vadd.f32 %v5535, %v5831
      %v5926 = vadd.f32 %v5536, %v5836
      %v5927 = vadd.f32 %v5537, %v5841
      %v5928 = vadd.f32 %v5538, %v5846
      %v5929 = vadd.f32 %v5539, %v5851
      %v5930 = vadd.f32 %v5540, %v5856
      %v5931 = vadd.f32 %v5541, %v5861
      %v5932 = vadd.f32 %v5542, %v5866
      %v5933 = vadd.f32 %v5543, %v5871
      %v5934 = vadd.f32 %v5544, %v5876
      %v5935 = vadd.f32 %v5545, %v5881
      %v5936 = vadd.f32 %v5546, %v5886
      %v5937 = vadd.f32 %v5547, %v5891
      %v5938 = vadd.f32 %v5548, %v5896
      %v5939 = vadd.f32 %v5549, %v5901
      %v5940 = vadd.f32 %v5550, %v5906
      %v5941 = vld [vmem:[%s3855 + $0x4] sm:$0xff]
      %v5942 = vld [vmem:[%s3855 + $0xc] sm:$0xff]
      %v5943 = vld [vmem:[%s3855 + $0x1c] sm:$0xff]
      %v5944 = vld [vmem:[%s3855 + $0x24] sm:$0xff]
      %v5945 = vld [vmem:[%s3855 + $0x34] sm:$0xff]
      %v5946 = vld [vmem:[%s3855 + $0x3c] sm:$0xff]
      %v5947 = vld [vmem:[%s3855 + $0x4c] sm:$0xff]
      %v5948 = vld [vmem:[%s3855 + $0x54] sm:$0xff]
      %v5949 = vld [vmem:[%s3855 + $0x64] sm:$0xff]
      %v5950 = vld [vmem:[%s3855 + $0x6c] sm:$0xff]
      %v5951 = vld [vmem:[%s3855 + $0x7c] sm:$0xff]
      %v5952 = vld [vmem:[%s3855 + $0x84] sm:$0xff]
      %v5953 = vld [vmem:[%s3855 + $0x94] sm:$0xff]
      %v5954 = vld [vmem:[%s3855 + $0x9c] sm:$0xff]
      %v5955 = vld [vmem:[%s3855 + $0xac] sm:$0xff]
      %v5956 = vld [vmem:[%s3855 + $0xb4] sm:$0xff]
      %v5957 = vld [vmem:[%s3855 + $0xc4] sm:$0xff]
      %v5958 = vld [vmem:[%s3855 + $0xcc] sm:$0xff]
      %v5959 = vld [vmem:[%s3855 + $0xdc] sm:$0xff]
      %v5960 = vld [vmem:[%s3855 + $0xe4] sm:$0xff]
      %v5961 = vld [vmem:[%s3855 + $0xf4] sm:$0xff]
      %v5962 = vld [vmem:[%s3855 + $0xfc] sm:$0xff]
      %v5963 = vld [vmem:[%s3855 + $0x10c] sm:$0xff]
      %v5964 = vld [vmem:[%s3855 + $0x114] sm:$0xff]
      %v5965 = vld [vmem:[%s3855 + $0x124] sm:$0xff]
      %v5966 = vld [vmem:[%s3855 + $0x12c] sm:$0xff]
      %v5967 = vld [vmem:[%s3855 + $0x13c] sm:$0xff]
      %v5968 = vld [vmem:[%s3855 + $0x144] sm:$0xff]
      %v5969 = vld [vmem:[%s3855 + $0x154] sm:$0xff]
      %v5970 = vld [vmem:[%s3855 + $0x15c] sm:$0xff]
      %v5971 = vld [vmem:[%s3855 + $0x16c] sm:$0xff]
      %v5972 = vld [vmem:[%s3855 + $0x174] sm:$0xff]
      %s5973 = scalar_lea.vmem %s3, 20
      %v5974 = vld [vmem:[%s5973] sm:$0xf]
      %v5976 = vsel %vm265, %v5941, 0
      %v5979 = vsel %vm265, %v5942, 0
      %v5982 = vsel %vm265, %v5943, 0
      %v5985 = vsel %vm265, %v5944, 0
      %v5988 = vsel %vm265, %v5945, 0
      %v5991 = vsel %vm265, %v5946, 0
      %v5994 = vsel %vm265, %v5947, 0
      %v5997 = vsel %vm265, %v5948, 0
      %v6000 = vsel %vm265, %v5949, 0
      %v6003 = vsel %vm265, %v5950, 0
      %v6006 = vsel %vm265, %v5951, 0
      %v6009 = vsel %vm265, %v5952, 0
      %v6012 = vsel %vm265, %v5953, 0
      %v6015 = vsel %vm265, %v5954, 0
      %v6018 = vsel %vm265, %v5955, 0
      %v6021 = vsel %vm265, %v5956, 0
      %v6024 = vsel %vm265, %v5957, 0
      %v6027 = vsel %vm265, %v5958, 0
      %v6030 = vsel %vm265, %v5959, 0
      %v6033 = vsel %vm265, %v5960, 0
      %v6036 = vsel %vm265, %v5961, 0
      %v6039 = vsel %vm265, %v5962, 0
      %v6042 = vsel %vm265, %v5963, 0
      %v6045 = vsel %vm265, %v5964, 0
      %v6048 = vsel %vm265, %v5965, 0
      %v6051 = vsel %vm265, %v5966, 0
      %v6054 = vsel %vm265, %v5967, 0
      %v6057 = vsel %vm265, %v5968, 0
      %v6060 = vsel %vm265, %v5969, 0
      %v6063 = vsel %vm265, %v5970, 0
      %v6066 = vsel %vm265, %v5971, 0
      %v6069 = vsel %vm265, %v5972, 0
      %v6072 = vsel %vm362, %v5974, 0
      %6074 = vmatprep.subr.mxu0 0.0
      %6075 = vmatpush1.msra.mxu0 %v6072
      %6076 = vmatprep.subr.mxu0 0.0
      %6077 = vmatpush1.msra.mxu0 0.0
      %6078 = vmatprep.subr.mxu0 0.0
      %6079 = vmatpush1.msra.mxu0 0.0
      %6080 = vmatprep.subr.mxu0 0.0
      %6081 = vmatpush1.msra.mxu0 0.0
      %6082 = vmatprep.subr.mxu0 0.0
      %6083 = vmatpush1.msra.mxu0 0.0
      %6084 = vmatprep.subr.mxu0 0.0
      %6085 = vmatpush1.msra.mxu0 0.0
      %6086 = vmatprep.subr.mxu0 0.0
      %6087 = vmatpush1.msra.mxu0 0.0
      %6088 = vmatprep.subr.mxu0 0.0
      %6089 = vmatpush1.msra.mxu0 0.0
      %6090 = vmatprep.subr.mxu0 0.0
      %6091 = vmatpush1.msra.mxu0 0.0
      %6092 = vmatprep.subr.mxu0 0.0
      %6093 = vmatpush1.msra.mxu0 0.0
      %6094 = vmatprep.subr.mxu0 0.0
      %6095 = vmatpush1.msra.mxu0 0.0
      %6096 = vmatprep.subr.mxu0 0.0
      %6097 = vmatpush1.msra.mxu0 0.0
      %6098 = vmatprep.subr.mxu0 0.0
      %6099 = vmatpush1.msra.mxu0 0.0
      %6100 = vmatprep.subr.mxu0 0.0
      %6101 = vmatpush1.msra.mxu0 0.0
      %6102 = vmatprep.subr.mxu0 0.0
      %6103 = vmatpush1.msra.mxu0 0.0
      %6104 = vmatprep.subr.mxu0 0.0
      %6105 = vmatpush1.msra.mxu0 0.0
      %6106 = vmatprep.subr.mxu0 0.0
      %6107 = vmatpush1.msra.mxu0 0.0
      %6108 = vmatprep.subr.mxu0 0.0
      %6109 = vmatpush1.msra.mxu0 0.0
      %6110 = vmatprep.subr.mxu0 0.0
      %6111 = vmatpush1.msra.mxu0 0.0
      %6112 = vmatprep.subr.mxu0 0.0
      %6113 = vmatpush1.msra.mxu0 0.0
      %6114 = vmatprep.subr.mxu0 0.0
      %6115 = vmatpush1.msra.mxu0 0.0
      %6116 = vmatprep.subr.mxu0 0.0
      %6117 = vmatpush1.msra.mxu0 0.0
      %6118 = vmatprep.subr.mxu0 0.0
      %6119 = vmatpush1.msra.mxu0 0.0
      %6120 = vmatprep.subr.mxu0 0.0
      %6121 = vmatpush1.msra.mxu0 0.0
      %6122 = vmatprep.subr.mxu0 0.0
      %6123 = vmatpush1.msra.mxu0 0.0
      %6124 = vmatprep.subr.mxu0 0.0
      %6125 = vmatpush1.msra.mxu0 0.0
      %6126 = vmatprep.subr.mxu0 0.0
      %6127 = vmatpush1.msra.mxu0 0.0
      %6128 = vmatprep.subr.mxu0 0.0
      %6129 = vmatpush1.msra.mxu0 0.0
      %6130 = vmatprep.subr.mxu0 0.0
      %6131 = vmatpush1.msra.mxu0 0.0
      %6132 = vmatprep.subr.mxu0 0.0
      %6133 = vmatpush1.msra.mxu0 0.0
      %6134 = vmatprep.subr.mxu0 0.0
      %6135 = vmatpush1.msra.mxu0 0.0
      %6136 = vmatprep.subr.mxu0 0.0
      %6137 = vmatpush1.msra.mxu0 0.0
      %6138 = vmatprep.mubr.f32.mxu0 0.0
      %6139 = vmatmul.mubr.f32.gmra.mrb[0].mxu0 %v5976
      %v6140 = vpop.f32.mrb[0].mxu0
      %v6141 = vadd.f32 0.0, %v6140
      %v6142 = vpop.f32.mrb[0].mxu0
      %6143 = vmatprep.mubr.f32.mxu0 0.0
      %6144 = vmatmul.mubr.f32.gmra.mrb[0].mxu0 %v5979
      %v6145 = vpop.f32.mrb[0].mxu0
      %v6146 = vadd.f32 0.0, %v6145
      %v6147 = vpop.f32.mrb[0].mxu0
      %6148 = vmatprep.mubr.f32.mxu0 0.0
      %6149 = vmatmul.mubr.f32.gmra.mrb[0].mxu0 %v5982
      %v6150 = vpop.f32.mrb[0].mxu0
      %v6151 = vadd.f32 0.0, %v6150
      %v6152 = vpop.f32.mrb[0].mxu0
      %6153 = vmatprep.mubr.f32.mxu0 0.0
      %6154 = vmatmul.mubr.f32.gmra.mrb[0].mxu0 %v5985
      %v6155 = vpop.f32.mrb[0].mxu0
      %v6156 = vadd.f32 0.0, %v6155
      %v6157 = vpop.f32.mrb[0].mxu0
      %6158 = vmatprep.mubr.f32.mxu0 0.0
      %6159 = vmatmul.mubr.f32.gmra.mrb[0].mxu0 %v5988
      %v6160 = vpop.f32.mrb[0].mxu0
      %v6161 = vadd.f32 0.0, %v6160
      %v6162 = vpop.f32.mrb[0].mxu0
      %6163 = vmatprep.mubr.f32.mxu0 0.0
      %6164 = vmatmul.mubr.f32.gmra.mrb[0].mxu0 %v5991
      %v6165 = vpop.f32.mrb[0].mxu0
      %v6166 = vadd.f32 0.0, %v6165
      %v6167 = vpop.f32.mrb[0].mxu0
      %6168 = vmatprep.mubr.f32.mxu0 0.0
      %6169 = vmatmul.mubr.f32.gmra.mrb[0].mxu0 %v5994
      %v6170 = vpop.f32.mrb[0].mxu0
      %v6171 = vadd.f32 0.0, %v6170
      %v6172 = vpop.f32.mrb[0].mxu0
      %6173 = vmatprep.mubr.f32.mxu0 0.0
      %6174 = vmatmul.mubr.f32.gmra.mrb[0].mxu0 %v5997
      %v6175 = vpop.f32.mrb[0].mxu0
      %v6176 = vadd.f32 0.0, %v6175
      %v6177 = vpop.f32.mrb[0].mxu0
      %6178 = vmatprep.mubr.f32.mxu0 0.0
      %6179 = vmatmul.mubr.f32.gmra.mrb[0].mxu0 %v6000
      %v6180 = vpop.f32.mrb[0].mxu0
      %v6181 = vadd.f32 0.0, %v6180
      %v6182 = vpop.f32.mrb[0].mxu0
      %6183 = vmatprep.mubr.f32.mxu0 0.0
      %6184 = vmatmul.mubr.f32.gmra.mrb[0].mxu0 %v6003
      %v6185 = vpop.f32.mrb[0].mxu0
      %v6186 = vadd.f32 0.0, %v6185
      %v6187 = vpop.f32.mrb[0].mxu0
      %6188 = vmatprep.mubr.f32.mxu0 0.0
      %6189 = vmatmul.mubr.f32.gmra.mrb[0].mxu0 %v6006
      %v6190 = vpop.f32.mrb[0].mxu0
      %v6191 = vadd.f32 0.0, %v6190
      %v6192 = vpop.f32.mrb[0].mxu0
      %6193 = vmatprep.mubr.f32.mxu0 0.0
      %6194 = vmatmul.mubr.f32.gmra.mrb[0].mxu0 %v6009
      %v6195 = vpop.f32.mrb[0].mxu0
      %v6196 = vadd.f32 0.0, %v6195
      %v6197 = vpop.f32.mrb[0].mxu0
      %6198 = vmatprep.mubr.f32.mxu0 0.0
      %6199 = vmatmul.mubr.f32.gmra.mrb[0].mxu0 %v6012
      %v6200 = vpop.f32.mrb[0].mxu0
      %v6201 = vadd.f32 0.0, %v6200
      %v6202 = vpop.f32.mrb[0].mxu0
      %6203 = vmatprep.mubr.f32.mxu0 0.0
      %6204 = vmatmul.mubr.f32.gmra.mrb[0].mxu0 %v6015
      %v6205 = vpop.f32.mrb[0].mxu0
      %v6206 = vadd.f32 0.0, %v6205
      %v6207 = vpop.f32.mrb[0].mxu0
      %6208 = vmatprep.mubr.f32.mxu0 0.0
      %6209 = vmatmul.mubr.f32.gmra.mrb[0].mxu0 %v6018
      %v6210 = vpop.f32.mrb[0].mxu0
      %v6211 = vadd.f32 0.0, %v6210
      %v6212 = vpop.f32.mrb[0].mxu0
      %6213 = vmatprep.mubr.f32.mxu0 0.0
      %6214 = vmatmul.mubr.f32.gmra.mrb[0].mxu0 %v6021
      %v6215 = vpop.f32.mrb[0].mxu0
      %v6216 = vadd.f32 0.0, %v6215
      %v6217 = vpop.f32.mrb[0].mxu0
      %6218 = vmatprep.mubr.f32.mxu0 0.0
      %6219 = vmatmul.mubr.f32.gmra.mrb[0].mxu0 %v6024
      %v6220 = vpop.f32.mrb[0].mxu0
      %v6221 = vadd.f32 0.0, %v6220
      %v6222 = vpop.f32.mrb[0].mxu0
      %6223 = vmatprep.mubr.f32.mxu0 0.0
      %6224 = vmatmul.mubr.f32.gmra.mrb[0].mxu0 %v6027
      %v6225 = vpop.f32.mrb[0].mxu0
      %v6226 = vadd.f32 0.0, %v6225
      %v6227 = vpop.f32.mrb[0].mxu0
      %6228 = vmatprep.mubr.f32.mxu0 0.0
      %6229 = vmatmul.mubr.f32.gmra.mrb[0].mxu0 %v6030
      %v6230 = vpop.f32.mrb[0].mxu0
      %v6231 = vadd.f32 0.0, %v6230
      %v6232 = vpop.f32.mrb[0].mxu0
      %6233 = vmatprep.mubr.f32.mxu0 0.0
      %6234 = vmatmul.mubr.f32.gmra.mrb[0].mxu0 %v6033
      %v6235 = vpop.f32.mrb[0].mxu0
      %v6236 = vadd.f32 0.0, %v6235
      %v6237 = vpop.f32.mrb[0].mxu0
      %6238 = vmatprep.mubr.f32.mxu0 0.0
      %6239 = vmatmul.mubr.f32.gmra.mrb[0].mxu0 %v6036
      %v6240 = vpop.f32.mrb[0].mxu0
      %v6241 = vadd.f32 0.0, %v6240
      %v6242 = vpop.f32.mrb[0].mxu0
      %6243 = vmatprep.mubr.f32.mxu0 0.0
      %6244 = vmatmul.mubr.f32.gmra.mrb[0].mxu0 %v6039
      %v6245 = vpop.f32.mrb[0].mxu0
      %v6246 = vadd.f32 0.0, %v6245
      %v6247 = vpop.f32.mrb[0].mxu0
      %6248 = vmatprep.mubr.f32.mxu0 0.0
      %6249 = vmatmul.mubr.f32.gmra.mrb[0].mxu0 %v6042
      %v6250 = vpop.f32.mrb[0].mxu0
      %v6251 = vadd.f32 0.0, %v6250
      %v6252 = vpop.f32.mrb[0].mxu0
      %6253 = vmatprep.mubr.f32.mxu0 0.0
      %6254 = vmatmul.mubr.f32.gmra.mrb[0].mxu0 %v6045
      %v6255 = vpop.f32.mrb[0].mxu0
      %v6256 = vadd.f32 0.0, %v6255
      %v6257 = vpop.f32.mrb[0].mxu0
      %6258 = vmatprep.mubr.f32.mxu0 0.0
      %6259 = vmatmul.mubr.f32.gmra.mrb[0].mxu0 %v6048
      %v6260 = vpop.f32.mrb[0].mxu0
      %v6261 = vadd.f32 0.0, %v6260
      %v6262 = vpop.f32.mrb[0].mxu0
      %6263 = vmatprep.mubr.f32.mxu0 0.0
      %6264 = vmatmul.mubr.f32.gmra.mrb[0].mxu0 %v6051
      %v6265 = vpop.f32.mrb[0].mxu0
      %v6266 = vadd.f32 0.0, %v6265
      %v6267 = vpop.f32.mrb[0].mxu0
      %6268 = vmatprep.mubr.f32.mxu0 0.0
      %6269 = vmatmul.mubr.f32.gmra.mrb[0].mxu0 %v6054
      %v6270 = vpop.f32.mrb[0].mxu0
      %v6271 = vadd.f32 0.0, %v6270
      %v6272 = vpop.f32.mrb[0].mxu0
      %6273 = vmatprep.mubr.f32.mxu0 0.0
      %6274 = vmatmul.mubr.f32.gmra.mrb[0].mxu0 %v6057
      %v6275 = vpop.f32.mrb[0].mxu0
      %v6276 = vadd.f32 0.0, %v6275
      %v6277 = vpop.f32.mrb[0].mxu0
      %6278 = vmatprep.mubr.f32.mxu0 0.0
      %6279 = vmatmul.mubr.f32.gmra.mrb[0].mxu0 %v6060
      %v6280 = vpop.f32.mrb[0].mxu0
      %v6281 = vadd.f32 0.0, %v6280
      %v6282 = vpop.f32.mrb[0].mxu0
      %6283 = vmatprep.mubr.f32.mxu0 0.0
      %6284 = vmatmul.mubr.f32.gmra.mrb[0].mxu0 %v6063
      %v6285 = vpop.f32.mrb[0].mxu0
      %v6286 = vadd.f32 0.0, %v6285
      %v6287 = vpop.f32.mrb[0].mxu0
      %6288 = vmatprep.mubr.f32.mxu0 0.0
      %6289 = vmatmul.mubr.f32.gmra.mrb[0].mxu0 %v6066
      %v6290 = vpop.f32.mrb[0].mxu0
      %v6291 = vadd.f32 0.0, %v6290
      %v6292 = vpop.f32.mrb[0].mxu0
      %6293 = vmatprep.mubr.f32.mxu0 0.0
      %6294 = vmatmul.mubr.f32.gmra.mrb[0].mxu0 %v6069
      %v6295 = vpop.f32.mrb[0].mxu0
      %v6296 = vadd.f32 0.0, %v6295
      %v6297 = vpop.f32.mrb[0].mxu0
      %6298 = vdwg.mxu0
      %v6299 = vadd.f32 %v5909, %v6141
      %v6300 = vadd.f32 %v5910, %v6146
      %v6301 = vadd.f32 %v5911, %v6151
      %v6302 = vadd.f32 %v5912, %v6156
      %v6303 = vadd.f32 %v5913, %v6161
      %v6304 = vadd.f32 %v5914, %v6166
      %v6305 = vadd.f32 %v5915, %v6171
      %v6306 = vadd.f32 %v5916, %v6176
      %v6307 = vadd.f32 %v5917, %v6181
      %v6308 = vadd.f32 %v5918, %v6186
      %v6309 = vadd.f32 %v5919, %v6191
      %v6310 = vadd.f32 %v5920, %v6196
      %v6311 = vadd.f32 %v5921, %v6201
      %v6312 = vadd.f32 %v5922, %v6206
      %v6313 = vadd.f32 %v5923, %v6211
      %v6314 = vadd.f32 %v5924, %v6216
      %v6315 = vadd.f32 %v5925, %v6221
      %v6316 = vadd.f32 %v5926, %v6226
      %v6317 = vadd.f32 %v5927, %v6231
      %v6318 = vadd.f32 %v5928, %v6236
      %v6319 = vadd.f32 %v5929, %v6241
      %v6320 = vadd.f32 %v5930, %v6246
      %v6321 = vadd.f32 %v5931, %v6251
      %v6322 = vadd.f32 %v5932, %v6256
      %v6323 = vadd.f32 %v5933, %v6261
      %v6324 = vadd.f32 %v5934, %v6266
      %v6325 = vadd.f32 %v5935, %v6271
      %v6326 = vadd.f32 %v5936, %v6276
      %v6327 = vadd.f32 %v5937, %v6281
      %v6328 = vadd.f32 %v5938, %v6286
      %v6329 = vadd.f32 %v5939, %v6291
      %v6330 = vadd.f32 %v5940, %v6296
      %s6331 = scalar_lea.vmem [#allocation2], 96
      %v6332 = vld [vmem:[%s6331] sm:$0xff]
      %v6333 = vld [vmem:[%s6331 + $0x8] sm:$0xff]
      %v6334 = vld [vmem:[%s6331 + $0x18] sm:$0xff]
      %v6335 = vld [vmem:[%s6331 + $0x20] sm:$0xff]
      %v6336 = vld [vmem:[%s6331 + $0x30] sm:$0xff]
      %v6337 = vld [vmem:[%s6331 + $0x38] sm:$0xff]
      %v6338 = vld [vmem:[%s6331 + $0x48] sm:$0xff]
      %v6339 = vld [vmem:[%s6331 + $0x50] sm:$0xff]
      %v6340 = vld [vmem:[%s6331 + $0x60] sm:$0xff]
      %v6341 = vld [vmem:[%s6331 + $0x68] sm:$0xff]
      %v6342 = vld [vmem:[%s6331 + $0x78] sm:$0xff]
      %v6343 = vld [vmem:[%s6331 + $0x80] sm:$0xff]
      %v6344 = vld [vmem:[%s6331 + $0x90] sm:$0xff]
      %v6345 = vld [vmem:[%s6331 + $0x98] sm:$0xff]
      %v6346 = vld [vmem:[%s6331 + $0xa8] sm:$0xff]
      %v6347 = vld [vmem:[%s6331 + $0xb0] sm:$0xff]
      %v6348 = vld [vmem:[%s6331 + $0xc0] sm:$0xff]
      %v6349 = vld [vmem:[%s6331 + $0xc8] sm:$0xff]
      %v6350 = vld [vmem:[%s6331 + $0xd8] sm:$0xff]
      %v6351 = vld [vmem:[%s6331 + $0xe0] sm:$0xff]
      %v6352 = vld [vmem:[%s6331 + $0xf0] sm:$0xff]
      %v6353 = vld [vmem:[%s6331 + $0xf8] sm:$0xff]
      %v6354 = vld [vmem:[%s6331 + $0x108] sm:$0xff]
      %v6355 = vld [vmem:[%s6331 + $0x110] sm:$0xff]
      %v6356 = vld [vmem:[%s6331 + $0x120] sm:$0xff]
      %v6357 = vld [vmem:[%s6331 + $0x128] sm:$0xff]
      %v6358 = vld [vmem:[%s6331 + $0x138] sm:$0xff]
      %v6359 = vld [vmem:[%s6331 + $0x140] sm:$0xff]
      %v6360 = vld [vmem:[%s6331 + $0x150] sm:$0xff]
      %v6361 = vld [vmem:[%s6331 + $0x158] sm:$0xff]
      %v6362 = vld [vmem:[%s6331 + $0x168] sm:$0xff]
      %v6363 = vld [vmem:[%s6331 + $0x170] sm:$0xff]
      %s6364 = scalar_lea.vmem %s3, 24
      %v6365 = vld [vmem:[%s6364] sm:$0xf]
      %v6367 = vsel %vm265, %v6332, 0
      %v6370 = vsel %vm265, %v6333, 0
      %v6373 = vsel %vm265, %v6334, 0
      %v6376 = vsel %vm265, %v6335, 0
      %v6379 = vsel %vm265, %v6336, 0
      %v6382 = vsel %vm265, %v6337, 0
      %v6385 = vsel %vm265, %v6338, 0
      %v6388 = vsel %vm265, %v6339, 0
      %v6391 = vsel %vm265, %v6340, 0
      %v6394 = vsel %vm265, %v6341, 0
      %v6397 = vsel %vm265, %v6342, 0
      %v6400 = vsel %vm265, %v6343, 0
      %v6403 = vsel %vm265, %v6344, 0
      %v6406 = vsel %vm265, %v6345, 0
      %v6409 = vsel %vm265, %v6346, 0
      %v6412 = vsel %vm265, %v6347, 0
      %v6415 = vsel %vm265, %v6348, 0
      %v6418 = vsel %vm265, %v6349, 0
      %v6421 = vsel %vm265, %v6350, 0
      %v6424 = vsel %vm265, %v6351, 0
      %v6427 = vsel %vm265, %v6352, 0
      %v6430 = vsel %vm265, %v6353, 0
      %v6433 = vsel %vm265, %v6354, 0
      %v6436 = vsel %vm265, %v6355, 0
      %v6439 = vsel %vm265, %v6356, 0
      %v6442 = vsel %vm265, %v6357, 0
      %v6445 = vsel %vm265, %v6358, 0
      %v6448 = vsel %vm265, %v6359, 0
      %v6451 = vsel %vm265, %v6360, 0
      %v6454 = vsel %vm265, %v6361, 0
      %v6457 = vsel %vm265, %v6362, 0
      %v6460 = vsel %vm265, %v6363, 0
      %v6463 = vsel %vm362, %v6365, 0
      %6465 = vmatprep.subr.mxu0 0.0
      %6466 = vmatpush1.msra.mxu0 %v6463
      %6467 = vmatprep.subr.mxu0 0.0
      %6468 = vmatpush1.msra.mxu0 0.0
      %6469 = vmatprep.subr.mxu0 0.0
      %6470 = vmatpush1.msra.mxu0 0.0
      %6471 = vmatprep.subr.mxu0 0.0
      %6472 = vmatpush1.msra.mxu0 0.0
      %6473 = vmatprep.subr.mxu0 0.0
      %6474 = vmatpush1.msra.mxu0 0.0
      %6475 = vmatprep.subr.mxu0 0.0
      %6476 = vmatpush1.msra.mxu0 0.0
      %6477 = vmatprep.subr.mxu0 0.0
      %6478 = vmatpush1.msra.mxu0 0.0
      %6479 = vmatprep.subr.mxu0 0.0
      %6480 = vmatpush1.msra.mxu0 0.0
      %6481 = vmatprep.subr.mxu0 0.0
      %6482 = vmatpush1.msra.mxu0 0.0
      %6483 = vmatprep.subr.mxu0 0.0
      %6484 = vmatpush1.msra.mxu0 0.0
      %6485 = vmatprep.subr.mxu0 0.0
      %6486 = vmatpush1.msra.mxu0 0.0
      %6487 = vmatprep.subr.mxu0 0.0
      %6488 = vmatpush1.msra.mxu0 0.0
      %6489 = vmatprep.subr.mxu0 0.0
      %6490 = vmatpush1.msra.mxu0 0.0
      %6491 = vmatprep.subr.mxu0 0.0
      %6492 = vmatpush1.msra.mxu0 0.0
      %6493 = vmatprep.subr.mxu0 0.0
      %6494 = vmatpush1.msra.mxu0 0.0
      %6495 = vmatprep.subr.mxu0 0.0
      %6496 = vmatpush1.msra.mxu0 0.0
      %6497 = vmatprep.subr.mxu0 0.0
      %6498 = vmatpush1.msra.mxu0 0.0
      %6499 = vmatprep.subr.mxu0 0.0
      %6500 = vmatpush1.msra.mxu0 0.0
      %6501 = vmatprep.subr.mxu0 0.0
      %6502 = vmatpush1.msra.mxu0 0.0
      %6503 = vmatprep.subr.mxu0 0.0
      %6504 = vmatpush1.msra.mxu0 0.0
      %6505 = vmatprep.subr.mxu0 0.0
      %6506 = vmatpush1.msra.mxu0 0.0
      %6507 = vmatprep.subr.mxu0 0.0
      %6508 = vmatpush1.msra.mxu0 0.0
      %6509 = vmatprep.subr.mxu0 0.0
      %6510 = vmatpush1.msra.mxu0 0.0
      %6511 = vmatprep.subr.mxu0 0.0
      %6512 = vmatpush1.msra.mxu0 0.0
      %6513 = vmatprep.subr.mxu0 0.0
      %6514 = vmatpush1.msra.mxu0 0.0
      %6515 = vmatprep.subr.mxu0 0.0
      %6516 = vmatpush1.msra.mxu0 0.0
      %6517 = vmatprep.subr.mxu0 0.0
      %6518 = vmatpush1.msra.mxu0 0.0
      %6519 = vmatprep.subr.mxu0 0.0
      %6520 = vmatpush1.msra.mxu0 0.0
      %6521 = vmatprep.subr.mxu0 0.0
      %6522 = vmatpush1.msra.mxu0 0.0
      %6523 = vmatprep.subr.mxu0 0.0
      %6524 = vmatpush1.msra.mxu0 0.0
      %6525 = vmatprep.subr.mxu0 0.0
      %6526 = vmatpush1.msra.mxu0 0.0
      %6527 = vmatprep.subr.mxu0 0.0
      %6528 = vmatpush1.msra.mxu0 0.0
      %6529 = vmatprep.mubr.f32.mxu0 0.0
      %6530 = vmatmul.mubr.f32.gmra.mrb[0].mxu0 %v6367
      %v6531 = vpop.f32.mrb[0].mxu0
      %v6532 = vadd.f32 0.0, %v6531
      %v6533 = vpop.f32.mrb[0].mxu0
      %6534 = vmatprep.mubr.f32.mxu0 0.0
      %6535 = vmatmul.mubr.f32.gmra.mrb[0].mxu0 %v6370
      %v6536 = vpop.f32.mrb[0].mxu0
      %v6537 = vadd.f32 0.0, %v6536
      %v6538 = vpop.f32.mrb[0].mxu0
      %6539 = vmatprep.mubr.f32.mxu0 0.0
      %6540 = vmatmul.mubr.f32.gmra.mrb[0].mxu0 %v6373
      %v6541 = vpop.f32.mrb[0].mxu0
      %v6542 = vadd.f32 0.0, %v6541
      %v6543 = vpop.f32.mrb[0].mxu0
      %6544 = vmatprep.mubr.f32.mxu0 0.0
      %6545 = vmatmul.mubr.f32.gmra.mrb[0].mxu0 %v6376
      %v6546 = vpop.f32.mrb[0].mxu0
      %v6547 = vadd.f32 0.0, %v6546
      %v6548 = vpop.f32.mrb[0].mxu0
      %6549 = vmatprep.mubr.f32.mxu0 0.0
      %6550 = vmatmul.mubr.f32.gmra.mrb[0].mxu0 %v6379
      %v6551 = vpop.f32.mrb[0].mxu0
      %v6552 = vadd.f32 0.0, %v6551
      %v6553 = vpop.f32.mrb[0].mxu0
      %6554 = vmatprep.mubr.f32.mxu0 0.0
      %6555 = vmatmul.mubr.f32.gmra.mrb[0].mxu0 %v6382
      %v6556 = vpop.f32.mrb[0].mxu0
      %v6557 = vadd.f32 0.0, %v6556
      %v6558 = vpop.f32.mrb[0].mxu0
      %6559 = vmatprep.mubr.f32.mxu0 0.0
      %6560 = vmatmul.mubr.f32.gmra.mrb[0].mxu0 %v6385
      %v6561 = vpop.f32.mrb[0].mxu0
      %v6562 = vadd.f32 0.0, %v6561
      %v6563 = vpop.f32.mrb[0].mxu0
      %6564 = vmatprep.mubr.f32.mxu0 0.0
      %6565 = vmatmul.mubr.f32.gmra.mrb[0].mxu0 %v6388
      %v6566 = vpop.f32.mrb[0].mxu0
      %v6567 = vadd.f32 0.0, %v6566
      %v6568 = vpop.f32.mrb[0].mxu0
      %6569 = vmatprep.mubr.f32.mxu0 0.0
      %6570 = vmatmul.mubr.f32.gmra.mrb[0].mxu0 %v6391
      %v6571 = vpop.f32.mrb[0].mxu0
      %v6572 = vadd.f32 0.0, %v6571
      %v6573 = vpop.f32.mrb[0].mxu0
      %6574 = vmatprep.mubr.f32.mxu0 0.0
      %6575 = vmatmul.mubr.f32.gmra.mrb[0].mxu0 %v6394
      %v6576 = vpop.f32.mrb[0].mxu0
      %v6577 = vadd.f32 0.0, %v6576
      %v6578 = vpop.f32.mrb[0].mxu0
      %6579 = vmatprep.mubr.f32.mxu0 0.0
      %6580 = vmatmul.mubr.f32.gmra.mrb[0].mxu0 %v6397
      %v6581 = vpop.f32.mrb[0].mxu0
      %v6582 = vadd.f32 0.0, %v6581
      %v6583 = vpop.f32.mrb[0].mxu0
      %6584 = vmatprep.mubr.f32.mxu0 0.0
      %6585 = vmatmul.mubr.f32.gmra.mrb[0].mxu0 %v6400
      %v6586 = vpop.f32.mrb[0].mxu0
      %v6587 = vadd.f32 0.0, %v6586
      %v6588 = vpop.f32.mrb[0].mxu0
      %6589 = vmatprep.mubr.f32.mxu0 0.0
      %6590 = vmatmul.mubr.f32.gmra.mrb[0].mxu0 %v6403
      %v6591 = vpop.f32.mrb[0].mxu0
      %v6592 = vadd.f32 0.0, %v6591
      %v6593 = vpop.f32.mrb[0].mxu0
      %6594 = vmatprep.mubr.f32.mxu0 0.0
      %6595 = vmatmul.mubr.f32.gmra.mrb[0].mxu0 %v6406
      %v6596 = vpop.f32.mrb[0].mxu0
      %v6597 = vadd.f32 0.0, %v6596
      %v6598 = vpop.f32.mrb[0].mxu0
      %6599 = vmatprep.mubr.f32.mxu0 0.0
      %6600 = vmatmul.mubr.f32.gmra.mrb[0].mxu0 %v6409
      %v6601 = vpop.f32.mrb[0].mxu0
      %v6602 = vadd.f32 0.0, %v6601
      %v6603 = vpop.f32.mrb[0].mxu0
      %6604 = vmatprep.mubr.f32.mxu0 0.0
      %6605 = vmatmul.mubr.f32.gmra.mrb[0].mxu0 %v6412
      %v6606 = vpop.f32.mrb[0].mxu0
      %v6607 = vadd.f32 0.0, %v6606
      %v6608 = vpop.f32.mrb[0].mxu0
      %6609 = vmatprep.mubr.f32.mxu0 0.0
      %6610 = vmatmul.mubr.f32.gmra.mrb[0].mxu0 %v6415
      %v6611 = vpop.f32.mrb[0].mxu0
      %v6612 = vadd.f32 0.0, %v6611
      %v6613 = vpop.f32.mrb[0].mxu0
      %6614 = vmatprep.mubr.f32.mxu0 0.0
      %6615 = vmatmul.mubr.f32.gmra.mrb[0].mxu0 %v6418
      %v6616 = vpop.f32.mrb[0].mxu0
      %v6617 = vadd.f32 0.0, %v6616
      %v6618 = vpop.f32.mrb[0].mxu0
      %6619 = vmatprep.mubr.f32.mxu0 0.0
      %6620 = vmatmul.mubr.f32.gmra.mrb[0].mxu0 %v6421
      %v6621 = vpop.f32.mrb[0].mxu0
      %v6622 = vadd.f32 0.0, %v6621
      %v6623 = vpop.f32.mrb[0].mxu0
      %6624 = vmatprep.mubr.f32.mxu0 0.0
      %6625 = vmatmul.mubr.f32.gmra.mrb[0].mxu0 %v6424
      %v6626 = vpop.f32.mrb[0].mxu0
      %v6627 = vadd.f32 0.0, %v6626
      %v6628 = vpop.f32.mrb[0].mxu0
      %6629 = vmatprep.mubr.f32.mxu0 0.0
      %6630 = vmatmul.mubr.f32.gmra.mrb[0].mxu0 %v6427
      %v6631 = vpop.f32.mrb[0].mxu0
      %v6632 = vadd.f32 0.0, %v6631
      %v6633 = vpop.f32.mrb[0].mxu0
      %6634 = vmatprep.mubr.f32.mxu0 0.0
      %6635 = vmatmul.mubr.f32.gmra.mrb[0].mxu0 %v6430
      %v6636 = vpop.f32.mrb[0].mxu0
      %v6637 = vadd.f32 0.0, %v6636
      %v6638 = vpop.f32.mrb[0].mxu0
      %6639 = vmatprep.mubr.f32.mxu0 0.0
      %6640 = vmatmul.mubr.f32.gmra.mrb[0].mxu0 %v6433
      %v6641 = vpop.f32.mrb[0].mxu0
      %v6642 = vadd.f32 0.0, %v6641
      %v6643 = vpop.f32.mrb[0].mxu0
      %6644 = vmatprep.mubr.f32.mxu0 0.0
      %6645 = vmatmul.mubr.f32.gmra.mrb[0].mxu0 %v6436
      %v6646 = vpop.f32.mrb[0].mxu0
      %v6647 = vadd.f32 0.0, %v6646
      %v6648 = vpop.f32.mrb[0].mxu0
      %6649 = vmatprep.mubr.f32.mxu0 0.0
      %6650 = vmatmul.mubr.f32.gmra.mrb[0].mxu0 %v6439
      %v6651 = vpop.f32.mrb[0].mxu0
      %v6652 = vadd.f32 0.0, %v6651
      %v6653 = vpop.f32.mrb[0].mxu0
      %6654 = vmatprep.mubr.f32.mxu0 0.0
      %6655 = vmatmul.mubr.f32.gmra.mrb[0].mxu0 %v6442
      %v6656 = vpop.f32.mrb[0].mxu0
      %v6657 = vadd.f32 0.0, %v6656
      %v6658 = vpop.f32.mrb[0].mxu0
      %6659 = vmatprep.mubr.f32.mxu0 0.0
      %6660 = vmatmul.mubr.f32.gmra.mrb[0].mxu0 %v6445
      %v6661 = vpop.f32.mrb[0].mxu0
      %v6662 = vadd.f32 0.0, %v6661
      %v6663 = vpop.f32.mrb[0].mxu0
      %6664 = vmatprep.mubr.f32.mxu0 0.0
      %6665 = vmatmul.mubr.f32.gmra.mrb[0].mxu0 %v6448
      %v6666 = vpop.f32.mrb[0].mxu0
      %v6667 = vadd.f32 0.0, %v6666
      %v6668 = vpop.f32.mrb[0].mxu0
      %6669 = vmatprep.mubr.f32.mxu0 0.0
      %6670 = vmatmul.mubr.f32.gmra.mrb[0].mxu0 %v6451
      %v6671 = vpop.f32.mrb[0].mxu0
      %v6672 = vadd.f32 0.0, %v6671
      %v6673 = vpop.f32.mrb[0].mxu0
      %6674 = vmatprep.mubr.f32.mxu0 0.0
      %6675 = vmatmul.mubr.f32.gmra.mrb[0].mxu0 %v6454
      %v6676 = vpop.f32.mrb[0].mxu0
      %v6677 = vadd.f32 0.0, %v6676
      %v6678 = vpop.f32.mrb[0].mxu0
      %6679 = vmatprep.mubr.f32.mxu0 0.0
      %6680 = vmatmul.mubr.f32.gmra.mrb[0].mxu0 %v6457
      %v6681 = vpop.f32.mrb[0].mxu0
      %v6682 = vadd.f32 0.0, %v6681
      %v6683 = vpop.f32.mrb[0].mxu0
      %6684 = vmatprep.mubr.f32.mxu0 0.0
      %6685 = vmatmul.mubr.f32.gmra.mrb[0].mxu0 %v6460
      %v6686 = vpop.f32.mrb[0].mxu0
      %v6687 = vadd.f32 0.0, %v6686
      %v6688 = vpop.f32.mrb[0].mxu0
      %6689 = vdwg.mxu0
      %v6690 = vadd.f32 %v6299, %v6532
      %v6691 = vadd.f32 %v6300, %v6537
      %v6692 = vadd.f32 %v6301, %v6542
      %v6693 = vadd.f32 %v6302, %v6547
      %v6694 = vadd.f32 %v6303, %v6552
      %v6695 = vadd.f32 %v6304, %v6557
      %v6696 = vadd.f32 %v6305, %v6562
      %v6697 = vadd.f32 %v6306, %v6567
      %v6698 = vadd.f32 %v6307, %v6572
      %v6699 = vadd.f32 %v6308, %v6577
      %v6700 = vadd.f32 %v6309, %v6582
      %v6701 = vadd.f32 %v6310, %v6587
      %v6702 = vadd.f32 %v6311, %v6592
      %v6703 = vadd.f32 %v6312, %v6597
      %v6704 = vadd.f32 %v6313, %v6602
      %v6705 = vadd.f32 %v6314, %v6607
      %v6706 = vadd.f32 %v6315, %v6612
      %v6707 = vadd.f32 %v6316, %v6617
      %v6708 = vadd.f32 %v6317, %v6622
      %v6709 = vadd.f32 %v6318, %v6627
      %v6710 = vadd.f32 %v6319, %v6632
      %v6711 = vadd.f32 %v6320, %v6637
      %v6712 = vadd.f32 %v6321, %v6642
      %v6713 = vadd.f32 %v6322, %v6647
      %v6714 = vadd.f32 %v6323, %v6652
      %v6715 = vadd.f32 %v6324, %v6657
      %v6716 = vadd.f32 %v6325, %v6662
      %v6717 = vadd.f32 %v6326, %v6667
      %v6718 = vadd.f32 %v6327, %v6672
      %v6719 = vadd.f32 %v6328, %v6677
      %v6720 = vadd.f32 %v6329, %v6682
      %v6721 = vadd.f32 %v6330, %v6687
      %v6722 = vld [vmem:[%s6331 + $0x2] sm:$0xff]
      %v6723 = vld [vmem:[%s6331 + $0xa] sm:$0xff]
      %v6724 = vld [vmem:[%s6331 + $0x1a] sm:$0xff]
      %v6725 = vld [vmem:[%s6331 + $0x22] sm:$0xff]
      %v6726 = vld [vmem:[%s6331 + $0x32] sm:$0xff]
      %v6727 = vld [vmem:[%s6331 + $0x3a] sm:$0xff]
      %v6728 = vld [vmem:[%s6331 + $0x4a] sm:$0xff]
      %v6729 = vld [vmem:[%s6331 + $0x52] sm:$0xff]
      %v6730 = vld [vmem:[%s6331 + $0x62] sm:$0xff]
      %v6731 = vld [vmem:[%s6331 + $0x6a] sm:$0xff]
      %v6732 = vld [vmem:[%s6331 + $0x7a] sm:$0xff]
      %v6733 = vld [vmem:[%s6331 + $0x82] sm:$0xff]
      %v6734 = vld [vmem:[%s6331 + $0x92] sm:$0xff]
      %v6735 = vld [vmem:[%s6331 + $0x9a] sm:$0xff]
      %v6736 = vld [vmem:[%s6331 + $0xaa] sm:$0xff]
      %v6737 = vld [vmem:[%s6331 + $0xb2] sm:$0xff]
      %v6738 = vld [vmem:[%s6331 + $0xc2] sm:$0xff]
      %v6739 = vld [vmem:[%s6331 + $0xca] sm:$0xff]
      %v6740 = vld [vmem:[%s6331 + $0xda] sm:$0xff]
      %v6741 = vld [vmem:[%s6331 + $0xe2] sm:$0xff]
      %v6742 = vld [vmem:[%s6331 + $0xf2] sm:$0xff]
      %v6743 = vld [vmem:[%s6331 + $0xfa] sm:$0xff]
      %v6744 = vld [vmem:[%s6331 + $0x10a] sm:$0xff]
      %v6745 = vld [vmem:[%s6331 + $0x112] sm:$0xff]
      %v6746 = vld [vmem:[%s6331 + $0x122] sm:$0xff]
      %v6747 = vld [vmem:[%s6331 + $0x12a] sm:$0xff]
      %v6748 = vld [vmem:[%s6331 + $0x13a] sm:$0xff]
      %v6749 = vld [vmem:[%s6331 + $0x142] sm:$0xff]
      %v6750 = vld [vmem:[%s6331 + $0x152] sm:$0xff]
      %v6751 = vld [vmem:[%s6331 + $0x15a] sm:$0xff]
      %v6752 = vld [vmem:[%s6331 + $0x16a] sm:$0xff]
      %v6753 = vld [vmem:[%s6331 + $0x172] sm:$0xff]
      %s6754 = scalar_lea.vmem %s3, 28
      %v6755 = vld [vmem:[%s6754] sm:$0xf]
      %v6757 = vsel %vm265, %v6722, 0
      %v6760 = vsel %vm265, %v6723, 0
      %v6763 = vsel %vm265, %v6724, 0
      %v6766 = vsel %vm265, %v6725, 0
      %v6769 = vsel %vm265, %v6726, 0
      %v6772 = vsel %vm265, %v6727, 0
      %v6775 = vsel %vm265, %v6728, 0
      %v6778 = vsel %vm265, %v6729, 0
      %v6781 = vsel %vm265, %v6730, 0
      %v6784 = vsel %vm265, %v6731, 0
      %v6787 = vsel %vm265, %v6732, 0
      %v6790 = vsel %vm265, %v6733, 0
      %v6793 = vsel %vm265, %v6734, 0
      %v6796 = vsel %vm265, %v6735, 0
      %v6799 = vsel %vm265, %v6736, 0
      %v6802 = vsel %vm265, %v6737, 0
      %v6805 = vsel %vm265, %v6738, 0
      %v6808 = vsel %vm265, %v6739, 0
      %v6811 = vsel %vm265, %v6740, 0
      %v6814 = vsel %vm265, %v6741, 0
      %v6817 = vsel %vm265, %v6742, 0
      %v6820 = vsel %vm265, %v6743, 0
      %v6823 = vsel %vm265, %v6744, 0
      %v6826 = vsel %vm265, %v6745, 0
      %v6829 = vsel %vm265, %v6746, 0
      %v6832 = vsel %vm265, %v6747, 0
      %v6835 = vsel %vm265, %v6748, 0
      %v6838 = vsel %vm265, %v6749, 0
      %v6841 = vsel %vm265, %v6750, 0
      %v6844 = vsel %vm265, %v6751, 0
      %v6847 = vsel %vm265, %v6752, 0
      %v6850 = vsel %vm265, %v6753, 0
      %v6853 = vsel %vm362, %v6755, 0
      %6855 = vmatprep.subr.mxu0 0.0
      %6856 = vmatpush1.msra.mxu0 %v6853
      %6857 = vmatprep.subr.mxu0 0.0
      %6858 = vmatpush1.msra.mxu0 0.0
      %6859 = vmatprep.subr.mxu0 0.0
      %6860 = vmatpush1.msra.mxu0 0.0
      %6861 = vmatprep.subr.mxu0 0.0
      %6862 = vmatpush1.msra.mxu0 0.0
      %6863 = vmatprep.subr.mxu0 0.0
      %6864 = vmatpush1.msra.mxu0 0.0
      %6865 = vmatprep.subr.mxu0 0.0
      %6866 = vmatpush1.msra.mxu0 0.0
      %6867 = vmatprep.subr.mxu0 0.0
      %6868 = vmatpush1.msra.mxu0 0.0
      %6869 = vmatprep.subr.mxu0 0.0
      %6870 = vmatpush1.msra.mxu0 0.0
      %6871 = vmatprep.subr.mxu0 0.0
      %6872 = vmatpush1.msra.mxu0 0.0
      %6873 = vmatprep.subr.mxu0 0.0
      %6874 = vmatpush1.msra.mxu0 0.0
      %6875 = vmatprep.subr.mxu0 0.0
      %6876 = vmatpush1.msra.mxu0 0.0
      %6877 = vmatprep.subr.mxu0 0.0
      %6878 = vmatpush1.msra.mxu0 0.0
      %6879 = vmatprep.subr.mxu0 0.0
      %6880 = vmatpush1.msra.mxu0 0.0
      %6881 = vmatprep.subr.mxu0 0.0
      %6882 = vmatpush1.msra.mxu0 0.0
      %6883 = vmatprep.subr.mxu0 0.0
      %6884 = vmatpush1.msra.mxu0 0.0
      %6885 = vmatprep.subr.mxu0 0.0
      %6886 = vmatpush1.msra.mxu0 0.0
      %6887 = vmatprep.subr.mxu0 0.0
      %6888 = vmatpush1.msra.mxu0 0.0
      %6889 = vmatprep.subr.mxu0 0.0
      %6890 = vmatpush1.msra.mxu0 0.0
      %6891 = vmatprep.subr.mxu0 0.0
      %6892 = vmatpush1.msra.mxu0 0.0
      %6893 = vmatprep.subr.mxu0 0.0
      %6894 = vmatpush1.msra.mxu0 0.0
      %6895 = vmatprep.subr.mxu0 0.0
      %6896 = vmatpush1.msra.mxu0 0.0
      %6897 = vmatprep.subr.mxu0 0.0
      %6898 = vmatpush1.msra.mxu0 0.0
      %6899 = vmatprep.subr.mxu0 0.0
      %6900 = vmatpush1.msra.mxu0 0.0
      %6901 = vmatprep.subr.mxu0 0.0
      %6902 = vmatpush1.msra.mxu0 0.0
      %6903 = vmatprep.subr.mxu0 0.0
      %6904 = vmatpush1.msra.mxu0 0.0
      %6905 = vmatprep.subr.mxu0 0.0
      %6906 = vmatpush1.msra.mxu0 0.0
      %6907 = vmatprep.subr.mxu0 0.0
      %6908 = vmatpush1.msra.mxu0 0.0
      %6909 = vmatprep.subr.mxu0 0.0
      %6910 = vmatpush1.msra.mxu0 0.0
      %6911 = vmatprep.subr.mxu0 0.0
      %6912 = vmatpush1.msra.mxu0 0.0
      %6913 = vmatprep.subr.mxu0 0.0
      %6914 = vmatpush1.msra.mxu0 0.0
      %6915 = vmatprep.subr.mxu0 0.0
      %6916 = vmatpush1.msra.mxu0 0.0
      %6917 = vmatprep.subr.mxu0 0.0
      %6918 = vmatpush1.msra.mxu0 0.0
      %6919 = vmatprep.mubr.f32.mxu0 0.0
      %6920 = vmatmul.mubr.f32.gmra.mrb[0].mxu0 %v6757
      %v6921 = vpop.f32.mrb[0].mxu0
      %v6922 = vadd.f32 0.0, %v6921
      %v6923 = vpop.f32.mrb[0].mxu0
      %6924 = vmatprep.mubr.f32.mxu0 0.0
      %6925 = vmatmul.mubr.f32.gmra.mrb[0].mxu0 %v6760
      %v6926 = vpop.f32.mrb[0].mxu0
      %v6927 = vadd.f32 0.0, %v6926
      %v6928 = vpop.f32.mrb[0].mxu0
      %6929 = vmatprep.mubr.f32.mxu0 0.0
      %6930 = vmatmul.mubr.f32.gmra.mrb[0].mxu0 %v6763
      %v6931 = vpop.f32.mrb[0].mxu0
      %v6932 = vadd.f32 0.0, %v6931
      %v6933 = vpop.f32.mrb[0].mxu0
      %6934 = vmatprep.mubr.f32.mxu0 0.0
      %6935 = vmatmul.mubr.f32.gmra.mrb[0].mxu0 %v6766
      %v6936 = vpop.f32.mrb[0].mxu0
      %v6937 = vadd.f32 0.0, %v6936
      %v6938 = vpop.f32.mrb[0].mxu0
      %6939 = vmatprep.mubr.f32.mxu0 0.0
      %6940 = vmatmul.mubr.f32.gmra.mrb[0].mxu0 %v6769
      %v6941 = vpop.f32.mrb[0].mxu0
      %v6942 = vadd.f32 0.0, %v6941
      %v6943 = vpop.f32.mrb[0].mxu0
      %6944 = vmatprep.mubr.f32.mxu0 0.0
      %6945 = vmatmul.mubr.f32.gmra.mrb[0].mxu0 %v6772
      %v6946 = vpop.f32.mrb[0].mxu0
      %v6947 = vadd.f32 0.0, %v6946
      %v6948 = vpop.f32.mrb[0].mxu0
      %6949 = vmatprep.mubr.f32.mxu0 0.0
      %6950 = vmatmul.mubr.f32.gmra.mrb[0].mxu0 %v6775
      %v6951 = vpop.f32.mrb[0].mxu0
      %v6952 = vadd.f32 0.0, %v6951
      %v6953 = vpop.f32.mrb[0].mxu0
      %6954 = vmatprep.mubr.f32.mxu0 0.0
      %6955 = vmatmul.mubr.f32.gmra.mrb[0].mxu0 %v6778
      %v6956 = vpop.f32.mrb[0].mxu0
      %v6957 = vadd.f32 0.0, %v6956
      %v6958 = vpop.f32.mrb[0].mxu0
      %6959 = vmatprep.mubr.f32.mxu0 0.0
      %6960 = vmatmul.mubr.f32.gmra.mrb[0].mxu0 %v6781
      %v6961 = vpop.f32.mrb[0].mxu0
      %v6962 = vadd.f32 0.0, %v6961
      %v6963 = vpop.f32.mrb[0].mxu0
      %6964 = vmatprep.mubr.f32.mxu0 0.0
      %6965 = vmatmul.mubr.f32.gmra.mrb[0].mxu0 %v6784
      %v6966 = vpop.f32.mrb[0].mxu0
      %v6967 = vadd.f32 0.0, %v6966
      %v6968 = vpop.f32.mrb[0].mxu0
      %6969 = vmatprep.mubr.f32.mxu0 0.0
      %6970 = vmatmul.mubr.f32.gmra.mrb[0].mxu0 %v6787
      %v6971 = vpop.f32.mrb[0].mxu0
      %v6972 = vadd.f32 0.0, %v6971
      %v6973 = vpop.f32.mrb[0].mxu0
      %6974 = vmatprep.mubr.f32.mxu0 0.0
      %6975 = vmatmul.mubr.f32.gmra.mrb[0].mxu0 %v6790
      %v6976 = vpop.f32.mrb[0].mxu0
      %v6977 = vadd.f32 0.0, %v6976
      %v6978 = vpop.f32.mrb[0].mxu0
      %6979 = vmatprep.mubr.f32.mxu0 0.0
      %6980 = vmatmul.mubr.f32.gmra.mrb[0].mxu0 %v6793
      %v6981 = vpop.f32.mrb[0].mxu0
      %v6982 = vadd.f32 0.0, %v6981
      %v6983 = vpop.f32.mrb[0].mxu0
      %6984 = vmatprep.mubr.f32.mxu0 0.0
      %6985 = vmatmul.mubr.f32.gmra.mrb[0].mxu0 %v6796
      %v6986 = vpop.f32.mrb[0].mxu0
      %v6987 = vadd.f32 0.0, %v6986
      %v6988 = vpop.f32.mrb[0].mxu0
      %6989 = vmatprep.mubr.f32.mxu0 0.0
      %6990 = vmatmul.mubr.f32.gmra.mrb[0].mxu0 %v6799
      %v6991 = vpop.f32.mrb[0].mxu0
      %v6992 = vadd.f32 0.0, %v6991
      %v6993 = vpop.f32.mrb[0].mxu0
      %6994 = vmatprep.mubr.f32.mxu0 0.0
      %6995 = vmatmul.mubr.f32.gmra.mrb[0].mxu0 %v6802
      %v6996 = vpop.f32.mrb[0].mxu0
      %v6997 = vadd.f32 0.0, %v6996
      %v6998 = vpop.f32.mrb[0].mxu0
      %6999 = vmatprep.mubr.f32.mxu0 0.0
      %7000 = vmatmul.mubr.f32.gmra.mrb[0].mxu0 %v6805
      %v7001 = vpop.f32.mrb[0].mxu0
      %v7002 = vadd.f32 0.0, %v7001
      %v7003 = vpop.f32.mrb[0].mxu0
      %7004 = vmatprep.mubr.f32.mxu0 0.0
      %7005 = vmatmul.mubr.f32.gmra.mrb[0].mxu0 %v6808
      %v7006 = vpop.f32.mrb[0].mxu0
      %v7007 = vadd.f32 0.0, %v7006
      %v7008 = vpop.f32.mrb[0].mxu0
      %7009 = vmatprep.mubr.f32.mxu0 0.0
      %7010 = vmatmul.mubr.f32.gmra.mrb[0].mxu0 %v6811
      %v7011 = vpop.f32.mrb[0].mxu0
      %v7012 = vadd.f32 0.0, %v7011
      %v7013 = vpop.f32.mrb[0].mxu0
      %7014 = vmatprep.mubr.f32.mxu0 0.0
      %7015 = vmatmul.mubr.f32.gmra.mrb[0].mxu0 %v6814
      %v7016 = vpop.f32.mrb[0].mxu0
      %v7017 = vadd.f32 0.0, %v7016
      %v7018 = vpop.f32.mrb[0].mxu0
      %7019 = vmatprep.mubr.f32.mxu0 0.0
      %7020 = vmatmul.mubr.f32.gmra.mrb[0].mxu0 %v6817
      %v7021 = vpop.f32.mrb[0].mxu0
      %v7022 = vadd.f32 0.0, %v7021
      %v7023 = vpop.f32.mrb[0].mxu0
      %7024 = vmatprep.mubr.f32.mxu0 0.0
      %7025 = vmatmul.mubr.f32.gmra.mrb[0].mxu0 %v6820
      %v7026 = vpop.f32.mrb[0].mxu0
      %v7027 = vadd.f32 0.0, %v7026
      %v7028 = vpop.f32.mrb[0].mxu0
      %7029 = vmatprep.mubr.f32.mxu0 0.0
      %7030 = vmatmul.mubr.f32.gmra.mrb[0].mxu0 %v6823
      %v7031 = vpop.f32.mrb[0].mxu0
      %v7032 = vadd.f32 0.0, %v7031
      %v7033 = vpop.f32.mrb[0].mxu0
      %7034 = vmatprep.mubr.f32.mxu0 0.0
      %7035 = vmatmul.mubr.f32.gmra.mrb[0].mxu0 %v6826
      %v7036 = vpop.f32.mrb[0].mxu0
      %v7037 = vadd.f32 0.0, %v7036
      %v7038 = vpop.f32.mrb[0].mxu0
      %7039 = vmatprep.mubr.f32.mxu0 0.0
      %7040 = vmatmul.mubr.f32.gmra.mrb[0].mxu0 %v6829
      %v7041 = vpop.f32.mrb[0].mxu0
      %v7042 = vadd.f32 0.0, %v7041
      %v7043 = vpop.f32.mrb[0].mxu0
      %7044 = vmatprep.mubr.f32.mxu0 0.0
      %7045 = vmatmul.mubr.f32.gmra.mrb[0].mxu0 %v6832
      %v7046 = vpop.f32.mrb[0].mxu0
      %v7047 = vadd.f32 0.0, %v7046
      %v7048 = vpop.f32.mrb[0].mxu0
      %7049 = vmatprep.mubr.f32.mxu0 0.0
      %7050 = vmatmul.mubr.f32.gmra.mrb[0].mxu0 %v6835
      %v7051 = vpop.f32.mrb[0].mxu0
      %v7052 = vadd.f32 0.0, %v7051
      %v7053 = vpop.f32.mrb[0].mxu0
      %7054 = vmatprep.mubr.f32.mxu0 0.0
      %7055 = vmatmul.mubr.f32.gmra.mrb[0].mxu0 %v6838
      %v7056 = vpop.f32.mrb[0].mxu0
      %v7057 = vadd.f32 0.0, %v7056
      %v7058 = vpop.f32.mrb[0].mxu0
      %7059 = vmatprep.mubr.f32.mxu0 0.0
      %7060 = vmatmul.mubr.f32.gmra.mrb[0].mxu0 %v6841
      %v7061 = vpop.f32.mrb[0].mxu0
      %v7062 = vadd.f32 0.0, %v7061
      %v7063 = vpop.f32.mrb[0].mxu0
      %7064 = vmatprep.mubr.f32.mxu0 0.0
      %7065 = vmatmul.mubr.f32.gmra.mrb[0].mxu0 %v6844
      %v7066 = vpop.f32.mrb[0].mxu0
      %v7067 = vadd.f32 0.0, %v7066
      %v7068 = vpop.f32.mrb[0].mxu0
      %7069 = vmatprep.mubr.f32.mxu0 0.0
      %7070 = vmatmul.mubr.f32.gmra.mrb[0].mxu0 %v6847
      %v7071 = vpop.f32.mrb[0].mxu0
      %v7072 = vadd.f32 0.0, %v7071
      %v7073 = vpop.f32.mrb[0].mxu0
      %7074 = vmatprep.mubr.f32.mxu0 0.0
      %7075 = vmatmul.mubr.f32.gmra.mrb[0].mxu0 %v6850
      %v7076 = vpop.f32.mrb[0].mxu0
      %v7077 = vadd.f32 0.0, %v7076
      %v7078 = vpop.f32.mrb[0].mxu0
      %7079 = vdwg.mxu0
      %v7080 = vadd.f32 %v6690, %v6922
      %v7081 = vadd.f32 %v6691, %v6927
      %v7082 = vadd.f32 %v6692, %v6932
      %v7083 = vadd.f32 %v6693, %v6937
      %v7084 = vadd.f32 %v6694, %v6942
      %v7085 = vadd.f32 %v6695, %v6947
      %v7086 = vadd.f32 %v6696, %v6952
      %v7087 = vadd.f32 %v6697, %v6957
      %v7088 = vadd.f32 %v6698, %v6962
      %v7089 = vadd.f32 %v6699, %v6967
      %v7090 = vadd.f32 %v6700, %v6972
      %v7091 = vadd.f32 %v6701, %v6977
      %v7092 = vadd.f32 %v6702, %v6982
      %v7093 = vadd.f32 %v6703, %v6987
      %v7094 = vadd.f32 %v6704, %v6992
      %v7095 = vadd.f32 %v6705, %v6997
      %v7096 = vadd.f32 %v6706, %v7002
      %v7097 = vadd.f32 %v6707, %v7007
      %v7098 = vadd.f32 %v6708, %v7012
      %v7099 = vadd.f32 %v6709, %v7017
      %v7100 = vadd.f32 %v6710, %v7022
      %v7101 = vadd.f32 %v6711, %v7027
      %v7102 = vadd.f32 %v6712, %v7032
      %v7103 = vadd.f32 %v6713, %v7037
      %v7104 = vadd.f32 %v6714, %v7042
      %v7105 = vadd.f32 %v6715, %v7047
      %v7106 = vadd.f32 %v6716, %v7052
      %v7107 = vadd.f32 %v6717, %v7057
      %v7108 = vadd.f32 %v6718, %v7062
      %v7109 = vadd.f32 %v6719, %v7067
      %v7110 = vadd.f32 %v6720, %v7072
      %v7111 = vadd.f32 %v6721, %v7077
      %v7112 = vld [vmem:[%s6331 + $0x4] sm:$0xff]
      %v7113 = vld [vmem:[%s6331 + $0xc] sm:$0xff]
      %v7114 = vld [vmem:[%s6331 + $0x1c] sm:$0xff]
      %v7115 = vld [vmem:[%s6331 + $0x24] sm:$0xff]
      %v7116 = vld [vmem:[%s6331 + $0x34] sm:$0xff]
      %v7117 = vld [vmem:[%s6331 + $0x3c] sm:$0xff]
      %v7118 = vld [vmem:[%s6331 + $0x4c] sm:$0xff]
      %v7119 = vld [vmem:[%s6331 + $0x54] sm:$0xff]
      %v7120 = vld [vmem:[%s6331 + $0x64] sm:$0xff]
      %v7121 = vld [vmem:[%s6331 + $0x6c] sm:$0xff]
      %v7122 = vld [vmem:[%s6331 + $0x7c] sm:$0xff]
      %v7123 = vld [vmem:[%s6331 + $0x84] sm:$0xff]
      %v7124 = vld [vmem:[%s6331 + $0x94] sm:$0xff]
      %v7125 = vld [vmem:[%s6331 + $0x9c] sm:$0xff]
      %v7126 = vld [vmem:[%s6331 + $0xac] sm:$0xff]
      %v7127 = vld [vmem:[%s6331 + $0xb4] sm:$0xff]
      %v7128 = vld [vmem:[%s6331 + $0xc4] sm:$0xff]
      %v7129 = vld [vmem:[%s6331 + $0xcc] sm:$0xff]
      %v7130 = vld [vmem:[%s6331 + $0xdc] sm:$0xff]
      %v7131 = vld [vmem:[%s6331 + $0xe4] sm:$0xff]
      %v7132 = vld [vmem:[%s6331 + $0xf4] sm:$0xff]
      %v7133 = vld [vmem:[%s6331 + $0xfc] sm:$0xff]
      %v7134 = vld [vmem:[%s6331 + $0x10c] sm:$0xff]
      %v7135 = vld [vmem:[%s6331 + $0x114] sm:$0xff]
      %v7136 = vld [vmem:[%s6331 + $0x124] sm:$0xff]
      %v7137 = vld [vmem:[%s6331 + $0x12c] sm:$0xff]
      %v7138 = vld [vmem:[%s6331 + $0x13c] sm:$0xff]
      %v7139 = vld [vmem:[%s6331 + $0x144] sm:$0xff]
      %v7140 = vld [vmem:[%s6331 + $0x154] sm:$0xff]
      %v7141 = vld [vmem:[%s6331 + $0x15c] sm:$0xff]
      %v7142 = vld [vmem:[%s6331 + $0x16c] sm:$0xff]
      %v7143 = vld [vmem:[%s6331 + $0x174] sm:$0xff]
      %s7144 = scalar_lea.vmem %s3, 32
      %v7145 = vld [vmem:[%s7144] sm:$0xf]
      %v7147 = vsel %vm265, %v7112, 0
      %v7150 = vsel %vm265, %v7113, 0
      %v7153 = vsel %vm265, %v7114, 0
      %v7156 = vsel %vm265, %v7115, 0
      %v7159 = vsel %vm265, %v7116, 0
      %v7162 = vsel %vm265, %v7117, 0
      %v7165 = vsel %vm265, %v7118, 0
      %v7168 = vsel %vm265, %v7119, 0
      %v7171 = vsel %vm265, %v7120, 0
      %v7174 = vsel %vm265, %v7121, 0
      %v7177 = vsel %vm265, %v7122, 0
      %v7180 = vsel %vm265, %v7123, 0
      %v7183 = vsel %vm265, %v7124, 0
      %v7186 = vsel %vm265, %v7125, 0
      %v7189 = vsel %vm265, %v7126, 0
      %v7192 = vsel %vm265, %v7127, 0
      %v7195 = vsel %vm265, %v7128, 0
      %v7198 = vsel %vm265, %v7129, 0
      %v7201 = vsel %vm265, %v7130, 0
      %v7204 = vsel %vm265, %v7131, 0
      %v7207 = vsel %vm265, %v7132, 0
      %v7210 = vsel %vm265, %v7133, 0
      %v7213 = vsel %vm265, %v7134, 0
      %v7216 = vsel %vm265, %v7135, 0
      %v7219 = vsel %vm265, %v7136, 0
      %v7222 = vsel %vm265, %v7137, 0
      %v7225 = vsel %vm265, %v7138, 0
      %v7228 = vsel %vm265, %v7139, 0
      %v7231 = vsel %vm265, %v7140, 0
      %v7234 = vsel %vm265, %v7141, 0
      %v7237 = vsel %vm265, %v7142, 0
      %v7240 = vsel %vm265, %v7143, 0
      %v7243 = vsel %vm362, %v7145, 0
      %7245 = vmatprep.subr.mxu0 0.0
      %7246 = vmatpush1.msra.mxu0 %v7243
      %7247 = vmatprep.subr.mxu0 0.0
      %7248 = vmatpush1.msra.mxu0 0.0
      %7249 = vmatprep.subr.mxu0 0.0
      %7250 = vmatpush1.msra.mxu0 0.0
      %7251 = vmatprep.subr.mxu0 0.0
      %7252 = vmatpush1.msra.mxu0 0.0
      %7253 = vmatprep.subr.mxu0 0.0
      %7254 = vmatpush1.msra.mxu0 0.0
      %7255 = vmatprep.subr.mxu0 0.0
      %7256 = vmatpush1.msra.mxu0 0.0
      %7257 = vmatprep.subr.mxu0 0.0
      %7258 = vmatpush1.msra.mxu0 0.0
      %7259 = vmatprep.subr.mxu0 0.0
      %7260 = vmatpush1.msra.mxu0 0.0
      %7261 = vmatprep.subr.mxu0 0.0
      %7262 = vmatpush1.msra.mxu0 0.0
      %7263 = vmatprep.subr.mxu0 0.0
      %7264 = vmatpush1.msra.mxu0 0.0
      %7265 = vmatprep.subr.mxu0 0.0
      %7266 = vmatpush1.msra.mxu0 0.0
      %7267 = vmatprep.subr.mxu0 0.0
      %7268 = vmatpush1.msra.mxu0 0.0
      %7269 = vmatprep.subr.mxu0 0.0
      %7270 = vmatpush1.msra.mxu0 0.0
      %7271 = vmatprep.subr.mxu0 0.0
      %7272 = vmatpush1.msra.mxu0 0.0
      %7273 = vmatprep.subr.mxu0 0.0
      %7274 = vmatpush1.msra.mxu0 0.0
      %7275 = vmatprep.subr.mxu0 0.0
      %7276 = vmatpush1.msra.mxu0 0.0
      %7277 = vmatprep.subr.mxu0 0.0
      %7278 = vmatpush1.msra.mxu0 0.0
      %7279 = vmatprep.subr.mxu0 0.0
      %7280 = vmatpush1.msra.mxu0 0.0
      %7281 = vmatprep.subr.mxu0 0.0
      %7282 = vmatpush1.msra.mxu0 0.0
      %7283 = vmatprep.subr.mxu0 0.0
      %7284 = vmatpush1.msra.mxu0 0.0
      %7285 = vmatprep.subr.mxu0 0.0
      %7286 = vmatpush1.msra.mxu0 0.0
      %7287 = vmatprep.subr.mxu0 0.0
      %7288 = vmatpush1.msra.mxu0 0.0
      %7289 = vmatprep.subr.mxu0 0.0
      %7290 = vmatpush1.msra.mxu0 0.0
      %7291 = vmatprep.subr.mxu0 0.0
      %7292 = vmatpush1.msra.mxu0 0.0
      %7293 = vmatprep.subr.mxu0 0.0
      %7294 = vmatpush1.msra.mxu0 0.0
      %7295 = vmatprep.subr.mxu0 0.0
      %7296 = vmatpush1.msra.mxu0 0.0
      %7297 = vmatprep.subr.mxu0 0.0
      %7298 = vmatpush1.msra.mxu0 0.0
      %7299 = vmatprep.subr.mxu0 0.0
      %7300 = vmatpush1.msra.mxu0 0.0
      %7301 = vmatprep.subr.mxu0 0.0
      %7302 = vmatpush1.msra.mxu0 0.0
      %7303 = vmatprep.subr.mxu0 0.0
      %7304 = vmatpush1.msra.mxu0 0.0
      %7305 = vmatprep.subr.mxu0 0.0
      %7306 = vmatpush1.msra.mxu0 0.0
      %7307 = vmatprep.subr.mxu0 0.0
      %7308 = vmatpush1.msra.mxu0 0.0
      %7309 = vmatprep.mubr.f32.mxu0 0.0
      %7310 = vmatmul.mubr.f32.gmra.mrb[0].mxu0 %v7147
      %v7311 = vpop.f32.mrb[0].mxu0
      %v7312 = vadd.f32 0.0, %v7311
      %v7313 = vpop.f32.mrb[0].mxu0
      %7314 = vmatprep.mubr.f32.mxu0 0.0
      %7315 = vmatmul.mubr.f32.gmra.mrb[0].mxu0 %v7150
      %v7316 = vpop.f32.mrb[0].mxu0
      %v7317 = vadd.f32 0.0, %v7316
      %v7318 = vpop.f32.mrb[0].mxu0
      %7319 = vmatprep.mubr.f32.mxu0 0.0
      %7320 = vmatmul.mubr.f32.gmra.mrb[0].mxu0 %v7153
      %v7321 = vpop.f32.mrb[0].mxu0
      %v7322 = vadd.f32 0.0, %v7321
      %v7323 = vpop.f32.mrb[0].mxu0
      %7324 = vmatprep.mubr.f32.mxu0 0.0
      %7325 = vmatmul.mubr.f32.gmra.mrb[0].mxu0 %v7156
      %v7326 = vpop.f32.mrb[0].mxu0
      %v7327 = vadd.f32 0.0, %v7326
      %v7328 = vpop.f32.mrb[0].mxu0
      %7329 = vmatprep.mubr.f32.mxu0 0.0
      %7330 = vmatmul.mubr.f32.gmra.mrb[0].mxu0 %v7159
      %v7331 = vpop.f32.mrb[0].mxu0
      %v7332 = vadd.f32 0.0, %v7331
      %v7333 = vpop.f32.mrb[0].mxu0
      %7334 = vmatprep.mubr.f32.mxu0 0.0
      %7335 = vmatmul.mubr.f32.gmra.mrb[0].mxu0 %v7162
      %v7336 = vpop.f32.mrb[0].mxu0
      %v7337 = vadd.f32 0.0, %v7336
      %v7338 = vpop.f32.mrb[0].mxu0
      %7339 = vmatprep.mubr.f32.mxu0 0.0
      %7340 = vmatmul.mubr.f32.gmra.mrb[0].mxu0 %v7165
      %v7341 = vpop.f32.mrb[0].mxu0
      %v7342 = vadd.f32 0.0, %v7341
      %v7343 = vpop.f32.mrb[0].mxu0
      %7344 = vmatprep.mubr.f32.mxu0 0.0
      %7345 = vmatmul.mubr.f32.gmra.mrb[0].mxu0 %v7168
      %v7346 = vpop.f32.mrb[0].mxu0
      %v7347 = vadd.f32 0.0, %v7346
      %v7348 = vpop.f32.mrb[0].mxu0
      %7349 = vmatprep.mubr.f32.mxu0 0.0
      %7350 = vmatmul.mubr.f32.gmra.mrb[0].mxu0 %v7171
      %v7351 = vpop.f32.mrb[0].mxu0
      %v7352 = vadd.f32 0.0, %v7351
      %v7353 = vpop.f32.mrb[0].mxu0
      %7354 = vmatprep.mubr.f32.mxu0 0.0
      %7355 = vmatmul.mubr.f32.gmra.mrb[0].mxu0 %v7174
      %v7356 = vpop.f32.mrb[0].mxu0
      %v7357 = vadd.f32 0.0, %v7356
      %v7358 = vpop.f32.mrb[0].mxu0
      %7359 = vmatprep.mubr.f32.mxu0 0.0
      %7360 = vmatmul.mubr.f32.gmra.mrb[0].mxu0 %v7177
      %v7361 = vpop.f32.mrb[0].mxu0
      %v7362 = vadd.f32 0.0, %v7361
      %v7363 = vpop.f32.mrb[0].mxu0
      %7364 = vmatprep.mubr.f32.mxu0 0.0
      %7365 = vmatmul.mubr.f32.gmra.mrb[0].mxu0 %v7180
      %v7366 = vpop.f32.mrb[0].mxu0
      %v7367 = vadd.f32 0.0, %v7366
      %v7368 = vpop.f32.mrb[0].mxu0
      %7369 = vmatprep.mubr.f32.mxu0 0.0
      %7370 = vmatmul.mubr.f32.gmra.mrb[0].mxu0 %v7183
      %v7371 = vpop.f32.mrb[0].mxu0
      %v7372 = vadd.f32 0.0, %v7371
      %v7373 = vpop.f32.mrb[0].mxu0
      %7374 = vmatprep.mubr.f32.mxu0 0.0
      %7375 = vmatmul.mubr.f32.gmra.mrb[0].mxu0 %v7186
      %v7376 = vpop.f32.mrb[0].mxu0
      %v7377 = vadd.f32 0.0, %v7376
      %v7378 = vpop.f32.mrb[0].mxu0
      %7379 = vmatprep.mubr.f32.mxu0 0.0
      %7380 = vmatmul.mubr.f32.gmra.mrb[0].mxu0 %v7189
      %v7381 = vpop.f32.mrb[0].mxu0
      %v7382 = vadd.f32 0.0, %v7381
      %v7383 = vpop.f32.mrb[0].mxu0
      %7384 = vmatprep.mubr.f32.mxu0 0.0
      %7385 = vmatmul.mubr.f32.gmra.mrb[0].mxu0 %v7192
      %v7386 = vpop.f32.mrb[0].mxu0
      %v7387 = vadd.f32 0.0, %v7386
      %v7388 = vpop.f32.mrb[0].mxu0
      %7389 = vmatprep.mubr.f32.mxu0 0.0
      %7390 = vmatmul.mubr.f32.gmra.mrb[0].mxu0 %v7195
      %v7391 = vpop.f32.mrb[0].mxu0
      %v7392 = vadd.f32 0.0, %v7391
      %v7393 = vpop.f32.mrb[0].mxu0
      %7394 = vmatprep.mubr.f32.mxu0 0.0
      %7395 = vmatmul.mubr.f32.gmra.mrb[0].mxu0 %v7198
      %v7396 = vpop.f32.mrb[0].mxu0
      %v7397 = vadd.f32 0.0, %v7396
      %v7398 = vpop.f32.mrb[0].mxu0
      %7399 = vmatprep.mubr.f32.mxu0 0.0
      %7400 = vmatmul.mubr.f32.gmra.mrb[0].mxu0 %v7201
      %v7401 = vpop.f32.mrb[0].mxu0
      %v7402 = vadd.f32 0.0, %v7401
      %v7403 = vpop.f32.mrb[0].mxu0
      %7404 = vmatprep.mubr.f32.mxu0 0.0
      %7405 = vmatmul.mubr.f32.gmra.mrb[0].mxu0 %v7204
      %v7406 = vpop.f32.mrb[0].mxu0
      %v7407 = vadd.f32 0.0, %v7406
      %v7408 = vpop.f32.mrb[0].mxu0
      %7409 = vmatprep.mubr.f32.mxu0 0.0
      %7410 = vmatmul.mubr.f32.gmra.mrb[0].mxu0 %v7207
      %v7411 = vpop.f32.mrb[0].mxu0
      %v7412 = vadd.f32 0.0, %v7411
      %v7413 = vpop.f32.mrb[0].mxu0
      %7414 = vmatprep.mubr.f32.mxu0 0.0
      %7415 = vmatmul.mubr.f32.gmra.mrb[0].mxu0 %v7210
      %v7416 = vpop.f32.mrb[0].mxu0
      %v7417 = vadd.f32 0.0, %v7416
      %v7418 = vpop.f32.mrb[0].mxu0
      %7419 = vmatprep.mubr.f32.mxu0 0.0
      %7420 = vmatmul.mubr.f32.gmra.mrb[0].mxu0 %v7213
      %v7421 = vpop.f32.mrb[0].mxu0
      %v7422 = vadd.f32 0.0, %v7421
      %v7423 = vpop.f32.mrb[0].mxu0
      %7424 = vmatprep.mubr.f32.mxu0 0.0
      %7425 = vmatmul.mubr.f32.gmra.mrb[0].mxu0 %v7216
      %v7426 = vpop.f32.mrb[0].mxu0
      %v7427 = vadd.f32 0.0, %v7426
      %v7428 = vpop.f32.mrb[0].mxu0
      %7429 = vmatprep.mubr.f32.mxu0 0.0
      %7430 = vmatmul.mubr.f32.gmra.mrb[0].mxu0 %v7219
      %v7431 = vpop.f32.mrb[0].mxu0
      %v7432 = vadd.f32 0.0, %v7431
      %v7433 = vpop.f32.mrb[0].mxu0
      %7434 = vmatprep.mubr.f32.mxu0 0.0
      %7435 = vmatmul.mubr.f32.gmra.mrb[0].mxu0 %v7222
      %v7436 = vpop.f32.mrb[0].mxu0
      %v7437 = vadd.f32 0.0, %v7436
      %v7438 = vpop.f32.mrb[0].mxu0
      %7439 = vmatprep.mubr.f32.mxu0 0.0
      %7440 = vmatmul.mubr.f32.gmra.mrb[0].mxu0 %v7225
      %v7441 = vpop.f32.mrb[0].mxu0
      %v7442 = vadd.f32 0.0, %v7441
      %v7443 = vpop.f32.mrb[0].mxu0
      %7444 = vmatprep.mubr.f32.mxu0 0.0
      %7445 = vmatmul.mubr.f32.gmra.mrb[0].mxu0 %v7228
      %v7446 = vpop.f32.mrb[0].mxu0
      %v7447 = vadd.f32 0.0, %v7446
      %v7448 = vpop.f32.mrb[0].mxu0
      %7449 = vmatprep.mubr.f32.mxu0 0.0
      %7450 = vmatmul.mubr.f32.gmra.mrb[0].mxu0 %v7231
      %v7451 = vpop.f32.mrb[0].mxu0
      %v7452 = vadd.f32 0.0, %v7451
      %v7453 = vpop.f32.mrb[0].mxu0
      %7454 = vmatprep.mubr.f32.mxu0 0.0
      %7455 = vmatmul.mubr.f32.gmra.mrb[0].mxu0 %v7234
      %v7456 = vpop.f32.mrb[0].mxu0
      %v7457 = vadd.f32 0.0, %v7456
      %v7458 = vpop.f32.mrb[0].mxu0
      %7459 = vmatprep.mubr.f32.mxu0 0.0
      %7460 = vmatmul.mubr.f32.gmra.mrb[0].mxu0 %v7237
      %v7461 = vpop.f32.mrb[0].mxu0
      %v7462 = vadd.f32 0.0, %v7461
      %v7463 = vpop.f32.mrb[0].mxu0
      %7464 = vmatprep.mubr.f32.mxu0 0.0
      %7465 = vmatmul.mubr.f32.gmra.mrb[0].mxu0 %v7240
      %v7466 = vpop.f32.mrb[0].mxu0
      %v7467 = vadd.f32 0.0, %v7466
      %v7468 = vpop.f32.mrb[0].mxu0
      %7469 = vdwg.mxu0
      %v7470 = vadd.f32 %v7080, %v7312
      %v7471 = vadd.f32 %v7081, %v7317
      %v7472 = vadd.f32 %v7082, %v7322
      %v7473 = vadd.f32 %v7083, %v7327
      %v7474 = vadd.f32 %v7084, %v7332
      %v7475 = vadd.f32 %v7085, %v7337
      %v7476 = vadd.f32 %v7086, %v7342
      %v7477 = vadd.f32 %v7087, %v7347
      %v7478 = vadd.f32 %v7088, %v7352
      %v7479 = vadd.f32 %v7089, %v7357
      %v7480 = vadd.f32 %v7090, %v7362
      %v7481 = vadd.f32 %v7091, %v7367
      %v7482 = vadd.f32 %v7092, %v7372
      %v7483 = vadd.f32 %v7093, %v7377
      %v7484 = vadd.f32 %v7094, %v7382
      %v7485 = vadd.f32 %v7095, %v7387
      %v7486 = vadd.f32 %v7096, %v7392
      %v7487 = vadd.f32 %v7097, %v7397
      %v7488 = vadd.f32 %v7098, %v7402
      %v7489 = vadd.f32 %v7099, %v7407
      %v7490 = vadd.f32 %v7100, %v7412
      %v7491 = vadd.f32 %v7101, %v7417
      %v7492 = vadd.f32 %v7102, %v7422
      %v7493 = vadd.f32 %v7103, %v7427
      %v7494 = vadd.f32 %v7104, %v7432
      %v7495 = vadd.f32 %v7105, %v7437
      %v7496 = vadd.f32 %v7106, %v7442
      %v7497 = vadd.f32 %v7107, %v7447
      %v7498 = vadd.f32 %v7108, %v7452
      %v7499 = vadd.f32 %v7109, %v7457
      %v7500 = vadd.f32 %v7110, %v7462
      %v7501 = vadd.f32 %v7111, %v7467
      %7502 = vst.msk [vmem:[%s224] sm:$0xff] %vm265, %v7470
      %7503 = vst.msk [vmem:[%s224 + $0x8] sm:$0xff] %vm265, %v7471
      %7504 = vst.msk [vmem:[%s224 + $0x10] sm:$0xff] %vm265, %v7472
      %7505 = vst.msk [vmem:[%s224 + $0x18] sm:$0xff] %vm265, %v7473
      %7506 = vst.msk [vmem:[%s224 + $0x20] sm:$0xff] %vm265, %v7474
      %7507 = vst.msk [vmem:[%s224 + $0x28] sm:$0xff] %vm265, %v7475
      %7508 = vst.msk [vmem:[%s224 + $0x30] sm:$0xff] %vm265, %v7476
      %7509 = vst.msk [vmem:[%s224 + $0x38] sm:$0xff] %vm265, %v7477
      %7510 = vst.msk [vmem:[%s224 + $0x40] sm:$0xff] %vm265, %v7478
      %7511 = vst.msk [vmem:[%s224 + $0x48] sm:$0xff] %vm265, %v7479
      %7512 = vst.msk [vmem:[%s224 + $0x50] sm:$0xff] %vm265, %v7480
      %7513 = vst.msk [vmem:[%s224 + $0x58] sm:$0xff] %vm265, %v7481
      %7514 = vst.msk [vmem:[%s224 + $0x60] sm:$0xff] %vm265, %v7482
      %7515 = vst.msk [vmem:[%s224 + $0x68] sm:$0xff] %vm265, %v7483
      %7516 = vst.msk [vmem:[%s224 + $0x70] sm:$0xff] %vm265, %v7484
      %7517 = vst.msk [vmem:[%s224 + $0x78] sm:$0xff] %vm265, %v7485
      %7518 = vst.msk [vmem:[%s224 + $0x80] sm:$0xff] %vm265, %v7486
      %7519 = vst.msk [vmem:[%s224 + $0x88] sm:$0xff] %vm265, %v7487
      %7520 = vst.msk [vmem:[%s224 + $0x90] sm:$0xff] %vm265, %v7488
      %7521 = vst.msk [vmem:[%s224 + $0x98] sm:$0xff] %vm265, %v7489
      %7522 = vst.msk [vmem:[%s224 + $0xa0] sm:$0xff] %vm265, %v7490
      %7523 = vst.msk [vmem:[%s224 + $0xa8] sm:$0xff] %vm265, %v7491
      %7524 = vst.msk [vmem:[%s224 + $0xb0] sm:$0xff] %vm265, %v7492
      %7525 = vst.msk [vmem:[%s224 + $0xb8] sm:$0xff] %vm265, %v7493
      %7526 = vst.msk [vmem:[%s224 + $0xc0] sm:$0xff] %vm265, %v7494
      %7527 = vst.msk [vmem:[%s224 + $0xc8] sm:$0xff] %vm265, %v7495
      %7528 = vst.msk [vmem:[%s224 + $0xd0] sm:$0xff] %vm265, %v7496
      %7529 = vst.msk [vmem:[%s224 + $0xd8] sm:$0xff] %vm265, %v7497
      %7530 = vst.msk [vmem:[%s224 + $0xe0] sm:$0xff] %vm265, %v7498
      %7531 = vst.msk [vmem:[%s224 + $0xe8] sm:$0xff] %vm265, %v7499
      %7532 = vst.msk [vmem:[%s224 + $0xf0] sm:$0xff] %vm265, %v7500
      %7533 = vst.msk [vmem:[%s224 + $0xf8] sm:$0xff] %vm265, %v7501
      %p7534 = scmp.lt.s32.totalorder %s16, 1
      %s7535 = scalar_select %p7534, %s16, 1
      %s7536 = smul.addr %s7535, 32
      %s7537 = smul.addr %s7536, 8
      %s7538 = scalar_lea.vmem %s5, %s7537
      // Predicated region
      $region41: #{tpu_custom_call.1} parent=39 // pred_check
        %p7539 = pneg %p144
      $region42: #{tpu_custom_call.1} parent=39 // pred_check_branch
        %7541 = sbr.rel (%p7539) target = $region44
      $region43: #{tpu_custom_call.1} parent=39 // pred_region
        _
      $region44: #{tpu_custom_call.1} parent=39 // pred_fallthru
        _
    $region40: #{tpu_custom_call.1} parent=5 // pred_fallthru
      _
    %p7542 = scmp.le.s32.totalorder 2, %s11
    // Predicated region
    $region45: #{tpu_custom_call.1} parent=5 // pred_check
      %p7543 = pneg %p7542
    $region46: #{tpu_custom_call.1} parent=5 // pred_check_branch
      %7545 = sbr.rel (%p7543) target = $region48
    $region47: #{tpu_custom_call.1} parent=5 // pred_region
      %s7546 = ssub.s32 %s11, 2
      // Predicated region
      $region49: #{tpu_custom_call.1} parent=47 // pred_check
        %p7547 = pneg %p150
      $region50: #{tpu_custom_call.1} parent=47 // pred_check_branch
        %7549 = sbr.rel (%p7547) target = $region52
      $region51: #{tpu_custom_call.1} parent=47 // pred_region
        %p7550 = scmp.lt.s32.totalorder %s17, 1
        %s7551 = scalar_select %p7550, %s17, 1
        %s7552 = smul.addr %s7551, 32
        %s7553 = smul.addr %s7552, 8
        %s7554 = scalar_lea.vmem %s5, %s7553
      $region52: #{tpu_custom_call.1} parent=47 // pred_fallthru
        _
    $region48: #{tpu_custom_call.1} parent=5 // pred_fallthru
      _
  $region6: #{tpu_custom_call.1} parent=0 // loop_footer
    %s15 = sadd.s32 1, %s11
  $region7: #{tpu_custom_call.1} parent=0 // loop_footer_branch
    %10 = sbr.rel target = $region3
  $region8: #{tpu_custom_call.1} parent=0 // loop_exit
    _

</llo_original>
